<compile_context>
chip_gen: v6e
topology: v6e:2x2x1
jax: 0.10.0
libtpu: 0.0.40
codegen_flags: <defaults>
</compile_context>

<pallas_src>
import functools

import jax
import jax.numpy as jnp
from jax import lax
from jax.experimental import pallas as pl
from jax.experimental.pallas import tpu as pltpu

LRELU_SLOPE = 0.2
MATMUL_DTYPE = jnp.bfloat16     # MXU operand dtype (accumulation stays f32)


# --------------------------------------------------------------------------
# Fused kernel: one (batch, H-tile) grid step computes both convs by
# tap-accumulation into a single combined (Com+Coe)-wide output slab.
# --------------------------------------------------------------------------
def _simple_madf_kernel(m_ref, e_ref, wmf_ref, wee_ref, b_ref, out_ref,
                        *, K, tile_h, Wo, activation):
    # m_ref   : [1, Hp, Wp, Cm]        bf16 zero-padded mask-path input
    # e_ref   : [1, Hp, Wp, Ce]        bf16 zero-padded e-path input
    # wmf_ref : [K*K, Cm, Com+Coe]     bf16 per-tap fused weight [wm | wem]
    # wee_ref : [K*K, Ce, Com+Coe]     bf16 per-tap weight [0 | wee]
    # b_ref   : [1, Com+Coe]           f32 concatenated bias [bm | be]
    # out_ref : [1, tile_h, Wo, Com+Coe] f32 combined output slab
    row0 = pl.multiple_of(pl.program_id(1) * tile_h, tile_h)
    M = tile_h * Wo
    Ctot = out_ref.shape[-1]

    acc = jnp.zeros((M, Ctot), jnp.float32)
    # Static unroll over the K*K taps (scratch-free im2col).  Each tap is a
    # direct ref slice (no halo slab live value) feeding one MXU matmul.
    for kh in range(K):
        for kw in range(K):
            t = kh * K + kw
            xm = m_ref[0, pl.ds(row0 + kh, tile_h), kw:kw + Wo, :]
            acc += jnp.dot(xm.reshape(M, xm.shape[-1]), wmf_ref[t],
                           preferred_element_type=jnp.float32)
            xe = e_ref[0, pl.ds(row0 + kh, tile_h), kw:kw + Wo, :]
            acc += jnp.dot(xe.reshape(M, xe.shape[-1]), wee_ref[t],
                           preferred_element_type=jnp.float32)

    acc = acc + b_ref[...]
    if activation == "relu":
        acc = jnp.maximum(acc, 0.0)
    else:  # 'lrelu' as a single max (no compare+select)
        acc = jnp.maximum(acc, LRELU_SLOPE * acc)

    out_ref[...] = acc.reshape(1, tile_h, Wo, Ctot).astype(out_ref.dtype)


def _pick_tile_h(Ho, Wo, target_m=256):
    """Smallest divisor of Ho giving matmul M = tile_h*Wo >= target_m."""
    for t in range(1, Ho + 1):
        if Ho % t == 0 and t * Wo >= target_m:
            return t
    return Ho


@functools.partial(jax.jit,
                   static_argnames=("kernel_size", "padding", "tile_h",
                                    "activation", "out_channels_m"))
def simple_madf_forward(m_l_1, e_l_1, wmf, wee, bias, *, kernel_size, padding,
                        tile_h, activation, out_channels_m):
    """NCHW in -> (NCHW, NCHW) out; single fused pallas_call inside."""
    K, p = kernel_size, padding
    N, Cm, H, W = m_l_1.shape
    Ce = e_l_1.shape[1]
    Ctot = wmf.shape[-1]
    Com = out_channels_m
    Hp, Wp = H + 2 * p, W + 2 * p
    Ho, Wo = Hp - K + 1, Wp - K + 1
    assert Ho % tile_h == 0, (Ho, tile_h)
    n_h = Ho // tile_h

    # NCHW -> NHWC (+ zero pad + bf16 cast): one fused XLA op per input.
    m_nhwc = jnp.pad(jnp.transpose(m_l_1, (0, 2, 3, 1)),
                     ((0, 0), (p, p), (p, p), (0, 0))).astype(MATMUL_DTYPE)
    e_nhwc = jnp.pad(jnp.transpose(e_l_1, (0, 2, 3, 1)),
                     ((0, 0), (p, p), (p, p), (0, 0))).astype(MATMUL_DTYPE)

    kernel = functools.partial(_simple_madf_kernel, K=K, tile_h=tile_h, Wo=Wo,
                               activation=activation)

    flops = 2 * N * Ho * Wo * K * K * (Cm + Ce) * Ctot
    bytes_accessed = ((m_nhwc.size + e_nhwc.size + wmf.size + wee.size) * 2
                      + bias.size * 4 + N * Ho * Wo * Ctot * 4)

    out = pl.pallas_call(
        kernel,
        out_shape=jax.ShapeDtypeStruct((N, Ho, Wo, Ctot), jnp.float32),
        grid=(N, n_h),
        in_specs=[
            pl.BlockSpec((1, Hp, Wp, Cm), lambda n, h: (n, 0, 0, 0)),
            pl.BlockSpec((1, Hp, Wp, Ce), lambda n, h: (n, 0, 0, 0)),
            pl.BlockSpec((K * K, Cm, Ctot), lambda n, h: (0, 0, 0)),
            pl.BlockSpec((K * K, Ce, Ctot), lambda n, h: (0, 0, 0)),
            pl.BlockSpec((1, Ctot), lambda n, h: (0, 0)),
        ],
        out_specs=pl.BlockSpec((1, tile_h, Wo, Ctot),
                               lambda n, h: (n, h, 0, 0)),
        compiler_params=pltpu.CompilerParams(
            dimension_semantics=("parallel", "parallel"),
            vmem_limit_bytes=32 * 1024 * 1024),
        cost_estimate=pl.CostEstimate(flops=flops, transcendentals=0,
                                      bytes_accessed=bytes_accessed),
    )(m_nhwc, e_nhwc, wmf, wee, bias)

    # NHWC -> NCHW; the m/e channel split fuses with the transpose in XLA.
    out_nchw = jnp.transpose(out, (0, 3, 1, 2))
    return out_nchw[:, :Com], out_nchw[:, Com:]


# --------------------------------------------------------------------------
# SimpleMADF wrapper with deterministic synthetic parameters (PyTorch shapes).
# --------------------------------------------------------------------------
class SimpleMADFPallas:
    def __init__(self, key, in_channels_m, out_channels_m, in_channels_e,
                 out_channels_e, kernel_size, stride, padding,
                 activation="relu", norm="none"):
        assert stride == 1, "only stride=1 implemented"          # TODO(synk): stride>1
        assert norm == "none", "only norm='none' implemented"    # TODO(synk): 'bn'/'in'
        assert activation in ("relu", "lrelu")
        self.kernel_size, self.stride, self.padding = kernel_size, stride, padding
        self.activation = activation
        self.out_channels_m = out_channels_m

        K = kernel_size
        Cm, Ce = in_channels_m, in_channels_e
        Com, Coe = out_channels_m, out_channels_e
        k1, k2, k3, k4 = jax.random.split(key, 4)

        # conv_m weight [Com, Cm, K, K] + bias (PyTorch Conv2d uniform init)
        fan_m = Cm * K * K
        bound_m = 1.0 / jnp.sqrt(jnp.float32(fan_m))
        self.wm = jax.random.uniform(k1, (Com, Cm, K, K), jnp.float32,
                                     -bound_m, bound_m)
        self.bm = jax.random.uniform(k2, (Com,), jnp.float32, -bound_m, bound_m)

        # conv_e weight [Coe, Ce+Cm, K, K] + bias; input = cat((e, m), dim=C)
        fan_e = (Ce + Cm) * K * K
        bound_e = 1.0 / jnp.sqrt(jnp.float32(fan_e))
        self.we = jax.random.uniform(k3, (Coe, Ce + Cm, K, K), jnp.float32,
                                     -bound_e, bound_e)
        self.be = jax.random.uniform(k4, (Coe,), jnp.float32, -bound_e, bound_e)

        # Per-tap fused weight layouts (bf16 MXU operands).
        #   wmf[t, c, :]      = [ wm[:, c, kh, kw] | we[:, Ce+c, kh, kw] ]
        #   wee_pad[t, c, :]  = [ 0 (Com cols)     | we[:,     c, kh, kw] ]
        wm_t = jnp.transpose(self.wm, (2, 3, 1, 0)).reshape(K * K, Cm, Com)
        wem_t = jnp.transpose(self.we[:, Ce:], (2, 3, 1, 0)).reshape(K * K, Cm, Coe)
        wee_t = jnp.transpose(self.we[:, :Ce], (2, 3, 1, 0)).reshape(K * K, Ce, Coe)
        self.wmf = jnp.concatenate([wm_t, wem_t], axis=-1).astype(MATMUL_DTYPE)
        self.wee_pad = jnp.concatenate(
            [jnp.zeros((K * K, Ce, Com), jnp.float32), wee_t],
            axis=-1).astype(MATMUL_DTYPE)
        self.bias = jnp.concatenate([self.bm, self.be]).reshape(1, -1)

    def __call__(self, m_l_1, e_l_1):
        H, W = m_l_1.shape[2], m_l_1.shape[3]
        Ho = (H + 2 * self.padding - self.kernel_size) // self.stride + 1
        Wo = (W + 2 * self.padding - self.kernel_size) // self.stride + 1
        tile_h = _pick_tile_h(Ho, Wo)
        return simple_madf_forward(
            m_l_1, e_l_1, self.wmf, self.wee_pad, self.bias,
            kernel_size=self.kernel_size, padding=self.padding,
            tile_h=tile_h, activation=self.activation,
            out_channels_m=self.out_channels_m)


# --------------------------------------------------------------------------
# Pure-JAX (lax.conv) reference mirroring the kernel's bf16-operand /
# f32-accumulate mixed precision, for correctness checking.
# --------------------------------------------------------------------------
def reference_forward(blk, m_l_1, e_l_1):
    dn = ("NCHW", "OIHW", "NCHW")
    pad = [(blk.padding, blk.padding)] * 2

    def act(x):
        if blk.activation == "relu":
            return jnp.maximum(x, 0.0)
        return jnp.maximum(x, LRELU_SLOPE * x)

    m_conv = lax.conv_general_dilated(
        m_l_1.astype(MATMUL_DTYPE), blk.wm.astype(MATMUL_DTYPE),
        window_strides=(blk.stride,) * 2, padding=pad, dimension_numbers=dn,
        preferred_element_type=jnp.float32)
    m_l = act(m_conv + blk.bm.reshape(1, -1, 1, 1))

    e_in = jnp.concatenate([e_l_1, m_l_1], axis=1)   # torch.cat((e, m), dim=1)
    e_conv = lax.conv_general_dilated(
        e_in.astype(MATMUL_DTYPE), blk.we.astype(MATMUL_DTYPE),
        window_strides=(blk.stride,) * 2, padding=pad, dimension_numbers=dn,
        preferred_element_type=jnp.float32)
    e_l = act(e_conv + blk.be.reshape(1, -1, 1, 1))
    return m_l, e_l


if __name__ == "__main__":
    key = jax.random.PRNGKey(0)
    kp, km, ke = jax.random.split(key, 3)

    # Small MADF-like instantiation (k=3, s=1, p=1):
    #   m_l_1: [2, 16, 16, 16], e_l_1: [2, 32, 16, 16]
    #   -> m_l: [2, 32, 16, 16], e_l: [2, 64, 16, 16]
    blk = SimpleMADFPallas(
        kp, in_channels_m=16, out_channels_m=32,
        in_channels_e=32, out_channels_e=64,
        kernel_size=3, stride=1, padding=1,
        activation="relu", norm="none")

    m_l_1 = jax.random.normal(km, (2, 16, 16, 16), jnp.float32)
    e_l_1 = jax.random.normal(ke, (2, 32, 16, 16), jnp.float32)

    m_l, e_l = jax.block_until_ready(blk(m_l_1, e_l_1))
    m_ref, e_ref = jax.block_until_ready(reference_forward(blk, m_l_1, e_l_1))

    assert m_l.shape == (2, 32, 16, 16), m_l.shape
    assert e_l.shape == (2, 64, 16, 16), e_l.shape
    for name, got, want in (("m_l", m_l, m_ref), ("e_l", e_l, e_ref)):
        if not jnp.allclose(got, want, rtol=2e-3, atol=2e-3):
            raise AssertionError(
                f"{name} mismatch vs JAX reference, "
                f"max abs diff={float(jnp.max(jnp.abs(got - want)))}")

    print("KERNEL_OK")
</pallas_src>

<mosaic_0001>
module attributes {stable_mosaic.version = 11 : i64} {
  func.func @_simple_madf_kernel(%arg0: i32, %arg1: i32, %arg2: memref<1x18x18x16xbf16, #tpu.memory_space<vmem>>, %arg3: memref<1x18x18x32xbf16, #tpu.memory_space<vmem>>, %arg4: memref<9x16x96xbf16, #tpu.memory_space<vmem>>, %arg5: memref<9x32x96xbf16, #tpu.memory_space<vmem>>, %arg6: memref<1x96xf32, #tpu.memory_space<vmem>>, %arg7: memref<1x16x16x96xf32, #tpu.memory_space<vmem>>) attributes {dimension_semantics = [#tpu.dimension_semantics<parallel>, #tpu.dimension_semantics<parallel>], iteration_bounds = array<i64: 2, 1>, scalar_prefetch = 0 : i64, scratch_operands = 0 : i64, tpu.core_type = #tpu.core_type<tc>, window_params = [{transform_indices = @transform_0, window_bounds = array<i64: 1, 18, 18, 16>}, {transform_indices = @transform_1, window_bounds = array<i64: 1, 18, 18, 32>}, {pipeline_mode = #tpu.pipeline_mode<synchronous>, transform_indices = @transform_2, window_bounds = array<i64: 9, 16, 96>}, {pipeline_mode = #tpu.pipeline_mode<synchronous>, transform_indices = @transform_3, window_bounds = array<i64: 9, 32, 96>}, {pipeline_mode = #tpu.pipeline_mode<synchronous>, transform_indices = @transform_4, window_bounds = array<i64: 1, 96>}, {transform_indices = @transform_5, window_bounds = array<i64: 1, 16, 16, 96>}]} {
    %c16_i32 = arith.constant 16 : i32
    %0 = arith.muli %arg1, %c16_i32 : i32
    %1 = tpu.assume_multiple %0, 16 : i32
    %cst = arith.constant 0.000000e+00 : f32
    %2 = vector.broadcast %cst : f32 to vector<256x96xf32>
    %c0_i32 = arith.constant 0 : i32
    %3 = arith.addi %1, %c0_i32 : i32
    %c0 = arith.constant 0 : index
    %4 = arith.index_cast %3 : i32 to index
    %c0_0 = arith.constant 0 : index
    %c0_1 = arith.constant 0 : index
    %5 = vector.load %arg2[%c0, %4, %c0_0, %c0_1] : memref<1x18x18x16xbf16, #tpu.memory_space<vmem>>, vector<1x16x16x16xbf16>
    %6 = vector.shape_cast %5 : vector<1x16x16x16xbf16> to vector<16x16x16xbf16>
    %7 = vector.shape_cast %6 : vector<16x16x16xbf16> to vector<256x16xbf16>
    %c0_2 = arith.constant 0 : index
    %c0_3 = arith.constant 0 : index
    %c0_4 = arith.constant 0 : index
    %8 = vector.load %arg4[%c0_2, %c0_3, %c0_4] : memref<9x16x96xbf16, #tpu.memory_space<vmem>>, vector<1x16x96xbf16>
    %9 = vector.shape_cast %8 : vector<1x16x96xbf16> to vector<16x96xbf16>
    %cst_5 = arith.constant dense<0.000000e+00> : vector<256x96xf32>
    %10 = tpu.matmul %7, %9, %cst_5 {dimension_numbers = #tpu.dot_dimension_numbers<[1], [0], [0], [1], [0, 0, 1, 1], [], []>} : vector<256x16xbf16>, vector<16x96xbf16>, vector<256x96xf32> -> vector<256x96xf32>
    %11 = arith.addf %2, %10 : vector<256x96xf32>
    %c0_i32_6 = arith.constant 0 : i32
    %12 = arith.addi %1, %c0_i32_6 : i32
    %c0_7 = arith.constant 0 : index
    %13 = arith.index_cast %12 : i32 to index
    %c0_8 = arith.constant 0 : index
    %c0_9 = arith.constant 0 : index
    %14 = vector.load %arg3[%c0_7, %13, %c0_8, %c0_9] : memref<1x18x18x32xbf16, #tpu.memory_space<vmem>>, vector<1x16x16x32xbf16>
    %15 = vector.shape_cast %14 : vector<1x16x16x32xbf16> to vector<16x16x32xbf16>
    %16 = vector.shape_cast %15 : vector<16x16x32xbf16> to vector<256x32xbf16>
    %c0_10 = arith.constant 0 : index
    %c0_11 = arith.constant 0 : index
    %c0_12 = arith.constant 0 : index
    %17 = vector.load %arg5[%c0_10, %c0_11, %c0_12] : memref<9x32x96xbf16, #tpu.memory_space<vmem>>, vector<1x32x96xbf16>
    %18 = vector.shape_cast %17 : vector<1x32x96xbf16> to vector<32x96xbf16>
    %cst_13 = arith.constant dense<0.000000e+00> : vector<256x96xf32>
    %19 = tpu.matmul %16, %18, %cst_13 {dimension_numbers = #tpu.dot_dimension_numbers<[1], [0], [0], [1], [0, 0, 1, 1], [], []>} : vector<256x32xbf16>, vector<32x96xbf16>, vector<256x96xf32> -> vector<256x96xf32>
    %20 = arith.addf %11, %19 : vector<256x96xf32>
    %c0_i32_14 = arith.constant 0 : i32
    %21 = arith.addi %1, %c0_i32_14 : i32
    %c0_15 = arith.constant 0 : index
    %22 = arith.index_cast %21 : i32 to index
    %c1 = arith.constant 1 : index
    %c0_16 = arith.constant 0 : index
    %23 = vector.load %arg2[%c0_15, %22, %c1, %c0_16] : memref<1x18x18x16xbf16, #tpu.memory_space<vmem>>, vector<1x16x16x16xbf16>
    %24 = vector.shape_cast %23 : vector<1x16x16x16xbf16> to vector<16x16x16xbf16>
    %25 = vector.shape_cast %24 : vector<16x16x16xbf16> to vector<256x16xbf16>
    %c1_17 = arith.constant 1 : index
    %c0_18 = arith.constant 0 : index
    %c0_19 = arith.constant 0 : index
    %26 = vector.load %arg4[%c1_17, %c0_18, %c0_19] : memref<9x16x96xbf16, #tpu.memory_space<vmem>>, vector<1x16x96xbf16>
    %27 = vector.shape_cast %26 : vector<1x16x96xbf16> to vector<16x96xbf16>
    %cst_20 = arith.constant dense<0.000000e+00> : vector<256x96xf32>
    %28 = tpu.matmul %25, %27, %cst_20 {dimension_numbers = #tpu.dot_dimension_numbers<[1], [0], [0], [1], [0, 0, 1, 1], [], []>} : vector<256x16xbf16>, vector<16x96xbf16>, vector<256x96xf32> -> vector<256x96xf32>
    %29 = arith.addf %20, %28 : vector<256x96xf32>
    %c0_i32_21 = arith.constant 0 : i32
    %30 = arith.addi %1, %c0_i32_21 : i32
    %c0_22 = arith.constant 0 : index
    %31 = arith.index_cast %30 : i32 to index
    %c1_23 = arith.constant 1 : index
    %c0_24 = arith.constant 0 : index
    %32 = vector.load %arg3[%c0_22, %31, %c1_23, %c0_24] : memref<1x18x18x32xbf16, #tpu.memory_space<vmem>>, vector<1x16x16x32xbf16>
    %33 = vector.shape_cast %32 : vector<1x16x16x32xbf16> to vector<16x16x32xbf16>
    %34 = vector.shape_cast %33 : vector<16x16x32xbf16> to vector<256x32xbf16>
    %c1_25 = arith.constant 1 : index
    %c0_26 = arith.constant 0 : index
    %c0_27 = arith.constant 0 : index
    %35 = vector.load %arg5[%c1_25, %c0_26, %c0_27] : memref<9x32x96xbf16, #tpu.memory_space<vmem>>, vector<1x32x96xbf16>
    %36 = vector.shape_cast %35 : vector<1x32x96xbf16> to vector<32x96xbf16>
    %cst_28 = arith.constant dense<0.000000e+00> : vector<256x96xf32>
    %37 = tpu.matmul %34, %36, %cst_28 {dimension_numbers = #tpu.dot_dimension_numbers<[1], [0], [0], [1], [0, 0, 1, 1], [], []>} : vector<256x32xbf16>, vector<32x96xbf16>, vector<256x96xf32> -> vector<256x96xf32>
    %38 = arith.addf %29, %37 : vector<256x96xf32>
    %c0_i32_29 = arith.constant 0 : i32
    %39 = arith.addi %1, %c0_i32_29 : i32
    %c0_30 = arith.constant 0 : index
    %40 = arith.index_cast %39 : i32 to index
    %c2 = arith.constant 2 : index
    %c0_31 = arith.constant 0 : index
    %41 = vector.load %arg2[%c0_30, %40, %c2, %c0_31] : memref<1x18x18x16xbf16, #tpu.memory_space<vmem>>, vector<1x16x16x16xbf16>
    %42 = vector.shape_cast %41 : vector<1x16x16x16xbf16> to vector<16x16x16xbf16>
    %43 = vector.shape_cast %42 : vector<16x16x16xbf16> to vector<256x16xbf16>
    %c2_32 = arith.constant 2 : index
    %c0_33 = arith.constant 0 : index
    %c0_34 = arith.constant 0 : index
    %44 = vector.load %arg4[%c2_32, %c0_33, %c0_34] : memref<9x16x96xbf16, #tpu.memory_space<vmem>>, vector<1x16x96xbf16>
    %45 = vector.shape_cast %44 : vector<1x16x96xbf16> to vector<16x96xbf16>
    %cst_35 = arith.constant dense<0.000000e+00> : vector<256x96xf32>
    %46 = tpu.matmul %43, %45, %cst_35 {dimension_numbers = #tpu.dot_dimension_numbers<[1], [0], [0], [1], [0, 0, 1, 1], [], []>} : vector<256x16xbf16>, vector<16x96xbf16>, vector<256x96xf32> -> vector<256x96xf32>
    %47 = arith.addf %38, %46 : vector<256x96xf32>
    %c0_i32_36 = arith.constant 0 : i32
    %48 = arith.addi %1, %c0_i32_36 : i32
    %c0_37 = arith.constant 0 : index
    %49 = arith.index_cast %48 : i32 to index
    %c2_38 = arith.constant 2 : index
    %c0_39 = arith.constant 0 : index
    %50 = vector.load %arg3[%c0_37, %49, %c2_38, %c0_39] : memref<1x18x18x32xbf16, #tpu.memory_space<vmem>>, vector<1x16x16x32xbf16>
    %51 = vector.shape_cast %50 : vector<1x16x16x32xbf16> to vector<16x16x32xbf16>
    %52 = vector.shape_cast %51 : vector<16x16x32xbf16> to vector<256x32xbf16>
    %c2_40 = arith.constant 2 : index
    %c0_41 = arith.constant 0 : index
    %c0_42 = arith.constant 0 : index
    %53 = vector.load %arg5[%c2_40, %c0_41, %c0_42] : memref<9x32x96xbf16, #tpu.memory_space<vmem>>, vector<1x32x96xbf16>
    %54 = vector.shape_cast %53 : vector<1x32x96xbf16> to vector<32x96xbf16>
    %cst_43 = arith.constant dense<0.000000e+00> : vector<256x96xf32>
    %55 = tpu.matmul %52, %54, %cst_43 {dimension_numbers = #tpu.dot_dimension_numbers<[1], [0], [0], [1], [0, 0, 1, 1], [], []>} : vector<256x32xbf16>, vector<32x96xbf16>, vector<256x96xf32> -> vector<256x96xf32>
    %56 = arith.addf %47, %55 : vector<256x96xf32>
    %c1_i32 = arith.constant 1 : i32
    %57 = arith.addi %1, %c1_i32 : i32
    %c0_44 = arith.constant 0 : index
    %58 = arith.index_cast %57 : i32 to index
    %c0_45 = arith.constant 0 : index
    %c0_46 = arith.constant 0 : index
    %59 = vector.load %arg2[%c0_44, %58, %c0_45, %c0_46] : memref<1x18x18x16xbf16, #tpu.memory_space<vmem>>, vector<1x16x16x16xbf16>
    %60 = vector.shape_cast %59 : vector<1x16x16x16xbf16> to vector<16x16x16xbf16>
    %61 = vector.shape_cast %60 : vector<16x16x16xbf16> to vector<256x16xbf16>
    %c3 = arith.constant 3 : index
    %c0_47 = arith.constant 0 : index
    %c0_48 = arith.constant 0 : index
    %62 = vector.load %arg4[%c3, %c0_47, %c0_48] : memref<9x16x96xbf16, #tpu.memory_space<vmem>>, vector<1x16x96xbf16>
    %63 = vector.shape_cast %62 : vector<1x16x96xbf16> to vector<16x96xbf16>
    %cst_49 = arith.constant dense<0.000000e+00> : vector<256x96xf32>
    %64 = tpu.matmul %61, %63, %cst_49 {dimension_numbers = #tpu.dot_dimension_numbers<[1], [0], [0], [1], [0, 0, 1, 1], [], []>} : vector<256x16xbf16>, vector<16x96xbf16>, vector<256x96xf32> -> vector<256x96xf32>
    %65 = arith.addf %56, %64 : vector<256x96xf32>
    %c1_i32_50 = arith.constant 1 : i32
    %66 = arith.addi %1, %c1_i32_50 : i32
    %c0_51 = arith.constant 0 : index
    %67 = arith.index_cast %66 : i32 to index
    %c0_52 = arith.constant 0 : index
    %c0_53 = arith.constant 0 : index
    %68 = vector.load %arg3[%c0_51, %67, %c0_52, %c0_53] : memref<1x18x18x32xbf16, #tpu.memory_space<vmem>>, vector<1x16x16x32xbf16>
    %69 = vector.shape_cast %68 : vector<1x16x16x32xbf16> to vector<16x16x32xbf16>
    %70 = vector.shape_cast %69 : vector<16x16x32xbf16> to vector<256x32xbf16>
    %c3_54 = arith.constant 3 : index
    %c0_55 = arith.constant 0 : index
    %c0_56 = arith.constant 0 : index
    %71 = vector.load %arg5[%c3_54, %c0_55, %c0_56] : memref<9x32x96xbf16, #tpu.memory_space<vmem>>, vector<1x32x96xbf16>
    %72 = vector.shape_cast %71 : vector<1x32x96xbf16> to vector<32x96xbf16>
    %cst_57 = arith.constant dense<0.000000e+00> : vector<256x96xf32>
    %73 = tpu.matmul %70, %72, %cst_57 {dimension_numbers = #tpu.dot_dimension_numbers<[1], [0], [0], [1], [0, 0, 1, 1], [], []>} : vector<256x32xbf16>, vector<32x96xbf16>, vector<256x96xf32> -> vector<256x96xf32>
    %74 = arith.addf %65, %73 : vector<256x96xf32>
    %c1_i32_58 = arith.constant 1 : i32
    %75 = arith.addi %1, %c1_i32_58 : i32
    %c0_59 = arith.constant 0 : index
    %76 = arith.index_cast %75 : i32 to index
    %c1_60 = arith.constant 1 : index
    %c0_61 = arith.constant 0 : index
    %77 = vector.load %arg2[%c0_59, %76, %c1_60, %c0_61] : memref<1x18x18x16xbf16, #tpu.memory_space<vmem>>, vector<1x16x16x16xbf16>
    %78 = vector.shape_cast %77 : vector<1x16x16x16xbf16> to vector<16x16x16xbf16>
    %79 = vector.shape_cast %78 : vector<16x16x16xbf16> to vector<256x16xbf16>
    %c4 = arith.constant 4 : index
    %c0_62 = arith.constant 0 : index
    %c0_63 = arith.constant 0 : index
    %80 = vector.load %arg4[%c4, %c0_62, %c0_63] : memref<9x16x96xbf16, #tpu.memory_space<vmem>>, vector<1x16x96xbf16>
    %81 = vector.shape_cast %80 : vector<1x16x96xbf16> to vector<16x96xbf16>
    %cst_64 = arith.constant dense<0.000000e+00> : vector<256x96xf32>
    %82 = tpu.matmul %79, %81, %cst_64 {dimension_numbers = #tpu.dot_dimension_numbers<[1], [0], [0], [1], [0, 0, 1, 1], [], []>} : vector<256x16xbf16>, vector<16x96xbf16>, vector<256x96xf32> -> vector<256x96xf32>
    %83 = arith.addf %74, %82 : vector<256x96xf32>
    %c1_i32_65 = arith.constant 1 : i32
    %84 = arith.addi %1, %c1_i32_65 : i32
    %c0_66 = arith.constant 0 : index
    %85 = arith.index_cast %84 : i32 to index
    %c1_67 = arith.constant 1 : index
    %c0_68 = arith.constant 0 : index
    %86 = vector.load %arg3[%c0_66, %85, %c1_67, %c0_68] : memref<1x18x18x32xbf16, #tpu.memory_space<vmem>>, vector<1x16x16x32xbf16>
    %87 = vector.shape_cast %86 : vector<1x16x16x32xbf16> to vector<16x16x32xbf16>
    %88 = vector.shape_cast %87 : vector<16x16x32xbf16> to vector<256x32xbf16>
    %c4_69 = arith.constant 4 : index
    %c0_70 = arith.constant 0 : index
    %c0_71 = arith.constant 0 : index
    %89 = vector.load %arg5[%c4_69, %c0_70, %c0_71] : memref<9x32x96xbf16, #tpu.memory_space<vmem>>, vector<1x32x96xbf16>
    %90 = vector.shape_cast %89 : vector<1x32x96xbf16> to vector<32x96xbf16>
    %cst_72 = arith.constant dense<0.000000e+00> : vector<256x96xf32>
    %91 = tpu.matmul %88, %90, %cst_72 {dimension_numbers = #tpu.dot_dimension_numbers<[1], [0], [0], [1], [0, 0, 1, 1], [], []>} : vector<256x32xbf16>, vector<32x96xbf16>, vector<256x96xf32> -> vector<256x96xf32>
    %92 = arith.addf %83, %91 : vector<256x96xf32>
    %c1_i32_73 = arith.constant 1 : i32
    %93 = arith.addi %1, %c1_i32_73 : i32
    %c0_74 = arith.constant 0 : index
    %94 = arith.index_cast %93 : i32 to index
    %c2_75 = arith.constant 2 : index
    %c0_76 = arith.constant 0 : index
    %95 = vector.load %arg2[%c0_74, %94, %c2_75, %c0_76] : memref<1x18x18x16xbf16, #tpu.memory_space<vmem>>, vector<1x16x16x16xbf16>
    %96 = vector.shape_cast %95 : vector<1x16x16x16xbf16> to vector<16x16x16xbf16>
    %97 = vector.shape_cast %96 : vector<16x16x16xbf16> to vector<256x16xbf16>
    %c5 = arith.constant 5 : index
    %c0_77 = arith.constant 0 : index
    %c0_78 = arith.constant 0 : index
    %98 = vector.load %arg4[%c5, %c0_77, %c0_78] : memref<9x16x96xbf16, #tpu.memory_space<vmem>>, vector<1x16x96xbf16>
    %99 = vector.shape_cast %98 : vector<1x16x96xbf16> to vector<16x96xbf16>
    %cst_79 = arith.constant dense<0.000000e+00> : vector<256x96xf32>
    %100 = tpu.matmul %97, %99, %cst_79 {dimension_numbers = #tpu.dot_dimension_numbers<[1], [0], [0], [1], [0, 0, 1, 1], [], []>} : vector<256x16xbf16>, vector<16x96xbf16>, vector<256x96xf32> -> vector<256x96xf32>
    %101 = arith.addf %92, %100 : vector<256x96xf32>
    %c1_i32_80 = arith.constant 1 : i32
    %102 = arith.addi %1, %c1_i32_80 : i32
    %c0_81 = arith.constant 0 : index
    %103 = arith.index_cast %102 : i32 to index
    %c2_82 = arith.constant 2 : index
    %c0_83 = arith.constant 0 : index
    %104 = vector.load %arg3[%c0_81, %103, %c2_82, %c0_83] : memref<1x18x18x32xbf16, #tpu.memory_space<vmem>>, vector<1x16x16x32xbf16>
    %105 = vector.shape_cast %104 : vector<1x16x16x32xbf16> to vector<16x16x32xbf16>
    %106 = vector.shape_cast %105 : vector<16x16x32xbf16> to vector<256x32xbf16>
    %c5_84 = arith.constant 5 : index
    %c0_85 = arith.constant 0 : index
    %c0_86 = arith.constant 0 : index
    %107 = vector.load %arg5[%c5_84, %c0_85, %c0_86] : memref<9x32x96xbf16, #tpu.memory_space<vmem>>, vector<1x32x96xbf16>
    %108 = vector.shape_cast %107 : vector<1x32x96xbf16> to vector<32x96xbf16>
    %cst_87 = arith.constant dense<0.000000e+00> : vector<256x96xf32>
    %109 = tpu.matmul %106, %108, %cst_87 {dimension_numbers = #tpu.dot_dimension_numbers<[1], [0], [0], [1], [0, 0, 1, 1], [], []>} : vector<256x32xbf16>, vector<32x96xbf16>, vector<256x96xf32> -> vector<256x96xf32>
    %110 = arith.addf %101, %109 : vector<256x96xf32>
    %c2_i32 = arith.constant 2 : i32
    %111 = arith.addi %1, %c2_i32 : i32
    %c0_88 = arith.constant 0 : index
    %112 = arith.index_cast %111 : i32 to index
    %c0_89 = arith.constant 0 : index
    %c0_90 = arith.constant 0 : index
    %113 = vector.load %arg2[%c0_88, %112, %c0_89, %c0_90] : memref<1x18x18x16xbf16, #tpu.memory_space<vmem>>, vector<1x16x16x16xbf16>
    %114 = vector.shape_cast %113 : vector<1x16x16x16xbf16> to vector<16x16x16xbf16>
    %115 = vector.shape_cast %114 : vector<16x16x16xbf16> to vector<256x16xbf16>
    %c6 = arith.constant 6 : index
    %c0_91 = arith.constant 0 : index
    %c0_92 = arith.constant 0 : index
    %116 = vector.load %arg4[%c6, %c0_91, %c0_92] : memref<9x16x96xbf16, #tpu.memory_space<vmem>>, vector<1x16x96xbf16>
    %117 = vector.shape_cast %116 : vector<1x16x96xbf16> to vector<16x96xbf16>
    %cst_93 = arith.constant dense<0.000000e+00> : vector<256x96xf32>
    %118 = tpu.matmul %115, %117, %cst_93 {dimension_numbers = #tpu.dot_dimension_numbers<[1], [0], [0], [1], [0, 0, 1, 1], [], []>} : vector<256x16xbf16>, vector<16x96xbf16>, vector<256x96xf32> -> vector<256x96xf32>
    %119 = arith.addf %110, %118 : vector<256x96xf32>
    %c2_i32_94 = arith.constant 2 : i32
    %120 = arith.addi %1, %c2_i32_94 : i32
    %c0_95 = arith.constant 0 : index
    %121 = arith.index_cast %120 : i32 to index
    %c0_96 = arith.constant 0 : index
    %c0_97 = arith.constant 0 : index
    %122 = vector.load %arg3[%c0_95, %121, %c0_96, %c0_97] : memref<1x18x18x32xbf16, #tpu.memory_space<vmem>>, vector<1x16x16x32xbf16>
    %123 = vector.shape_cast %122 : vector<1x16x16x32xbf16> to vector<16x16x32xbf16>
    %124 = vector.shape_cast %123 : vector<16x16x32xbf16> to vector<256x32xbf16>
    %c6_98 = arith.constant 6 : index
    %c0_99 = arith.constant 0 : index
    %c0_100 = arith.constant 0 : index
    %125 = vector.load %arg5[%c6_98, %c0_99, %c0_100] : memref<9x32x96xbf16, #tpu.memory_space<vmem>>, vector<1x32x96xbf16>
    %126 = vector.shape_cast %125 : vector<1x32x96xbf16> to vector<32x96xbf16>
    %cst_101 = arith.constant dense<0.000000e+00> : vector<256x96xf32>
    %127 = tpu.matmul %124, %126, %cst_101 {dimension_numbers = #tpu.dot_dimension_numbers<[1], [0], [0], [1], [0, 0, 1, 1], [], []>} : vector<256x32xbf16>, vector<32x96xbf16>, vector<256x96xf32> -> vector<256x96xf32>
    %128 = arith.addf %119, %127 : vector<256x96xf32>
    %c2_i32_102 = arith.constant 2 : i32
    %129 = arith.addi %1, %c2_i32_102 : i32
    %c0_103 = arith.constant 0 : index
    %130 = arith.index_cast %129 : i32 to index
    %c1_104 = arith.constant 1 : index
    %c0_105 = arith.constant 0 : index
    %131 = vector.load %arg2[%c0_103, %130, %c1_104, %c0_105] : memref<1x18x18x16xbf16, #tpu.memory_space<vmem>>, vector<1x16x16x16xbf16>
    %132 = vector.shape_cast %131 : vector<1x16x16x16xbf16> to vector<16x16x16xbf16>
    %133 = vector.shape_cast %132 : vector<16x16x16xbf16> to vector<256x16xbf16>
    %c7 = arith.constant 7 : index
    %c0_106 = arith.constant 0 : index
    %c0_107 = arith.constant 0 : index
    %134 = vector.load %arg4[%c7, %c0_106, %c0_107] : memref<9x16x96xbf16, #tpu.memory_space<vmem>>, vector<1x16x96xbf16>
    %135 = vector.shape_cast %134 : vector<1x16x96xbf16> to vector<16x96xbf16>
    %cst_108 = arith.constant dense<0.000000e+00> : vector<256x96xf32>
    %136 = tpu.matmul %133, %135, %cst_108 {dimension_numbers = #tpu.dot_dimension_numbers<[1], [0], [0], [1], [0, 0, 1, 1], [], []>} : vector<256x16xbf16>, vector<16x96xbf16>, vector<256x96xf32> -> vector<256x96xf32>
    %137 = arith.addf %128, %136 : vector<256x96xf32>
    %c2_i32_109 = arith.constant 2 : i32
    %138 = arith.addi %1, %c2_i32_109 : i32
    %c0_110 = arith.constant 0 : index
    %139 = arith.index_cast %138 : i32 to index
    %c1_111 = arith.constant 1 : index
    %c0_112 = arith.constant 0 : index
    %140 = vector.load %arg3[%c0_110, %139, %c1_111, %c0_112] : memref<1x18x18x32xbf16, #tpu.memory_space<vmem>>, vector<1x16x16x32xbf16>
    %141 = vector.shape_cast %140 : vector<1x16x16x32xbf16> to vector<16x16x32xbf16>
    %142 = vector.shape_cast %141 : vector<16x16x32xbf16> to vector<256x32xbf16>
    %c7_113 = arith.constant 7 : index
    %c0_114 = arith.constant 0 : index
    %c0_115 = arith.constant 0 : index
    %143 = vector.load %arg5[%c7_113, %c0_114, %c0_115] : memref<9x32x96xbf16, #tpu.memory_space<vmem>>, vector<1x32x96xbf16>
    %144 = vector.shape_cast %143 : vector<1x32x96xbf16> to vector<32x96xbf16>
    %cst_116 = arith.constant dense<0.000000e+00> : vector<256x96xf32>
    %145 = tpu.matmul %142, %144, %cst_116 {dimension_numbers = #tpu.dot_dimension_numbers<[1], [0], [0], [1], [0, 0, 1, 1], [], []>} : vector<256x32xbf16>, vector<32x96xbf16>, vector<256x96xf32> -> vector<256x96xf32>
    %146 = arith.addf %137, %145 : vector<256x96xf32>
    %c2_i32_117 = arith.constant 2 : i32
    %147 = arith.addi %1, %c2_i32_117 : i32
    %c0_118 = arith.constant 0 : index
    %148 = arith.index_cast %147 : i32 to index
    %c2_119 = arith.constant 2 : index
    %c0_120 = arith.constant 0 : index
    %149 = vector.load %arg2[%c0_118, %148, %c2_119, %c0_120] : memref<1x18x18x16xbf16, #tpu.memory_space<vmem>>, vector<1x16x16x16xbf16>
    %150 = vector.shape_cast %149 : vector<1x16x16x16xbf16> to vector<16x16x16xbf16>
    %151 = vector.shape_cast %150 : vector<16x16x16xbf16> to vector<256x16xbf16>
    %c8 = arith.constant 8 : index
    %c0_121 = arith.constant 0 : index
    %c0_122 = arith.constant 0 : index
    %152 = vector.load %arg4[%c8, %c0_121, %c0_122] : memref<9x16x96xbf16, #tpu.memory_space<vmem>>, vector<1x16x96xbf16>
    %153 = vector.shape_cast %152 : vector<1x16x96xbf16> to vector<16x96xbf16>
    %cst_123 = arith.constant dense<0.000000e+00> : vector<256x96xf32>
    %154 = tpu.matmul %151, %153, %cst_123 {dimension_numbers = #tpu.dot_dimension_numbers<[1], [0], [0], [1], [0, 0, 1, 1], [], []>} : vector<256x16xbf16>, vector<16x96xbf16>, vector<256x96xf32> -> vector<256x96xf32>
    %155 = arith.addf %146, %154 : vector<256x96xf32>
    %c2_i32_124 = arith.constant 2 : i32
    %156 = arith.addi %1, %c2_i32_124 : i32
    %c0_125 = arith.constant 0 : index
    %157 = arith.index_cast %156 : i32 to index
    %c2_126 = arith.constant 2 : index
    %c0_127 = arith.constant 0 : index
    %158 = vector.load %arg3[%c0_125, %157, %c2_126, %c0_127] : memref<1x18x18x32xbf16, #tpu.memory_space<vmem>>, vector<1x16x16x32xbf16>
    %159 = vector.shape_cast %158 : vector<1x16x16x32xbf16> to vector<16x16x32xbf16>
    %160 = vector.shape_cast %159 : vector<16x16x32xbf16> to vector<256x32xbf16>
    %c8_128 = arith.constant 8 : index
    %c0_129 = arith.constant 0 : index
    %c0_130 = arith.constant 0 : index
    %161 = vector.load %arg5[%c8_128, %c0_129, %c0_130] : memref<9x32x96xbf16, #tpu.memory_space<vmem>>, vector<1x32x96xbf16>
    %162 = vector.shape_cast %161 : vector<1x32x96xbf16> to vector<32x96xbf16>
    %cst_131 = arith.constant dense<0.000000e+00> : vector<256x96xf32>
    %163 = tpu.matmul %160, %162, %cst_131 {dimension_numbers = #tpu.dot_dimension_numbers<[1], [0], [0], [1], [0, 0, 1, 1], [], []>} : vector<256x32xbf16>, vector<32x96xbf16>, vector<256x96xf32> -> vector<256x96xf32>
    %164 = arith.addf %155, %163 : vector<256x96xf32>
    %c0_132 = arith.constant 0 : index
    %c0_133 = arith.constant 0 : index
    %165 = vector.load %arg6[%c0_132, %c0_133] : memref<1x96xf32, #tpu.memory_space<vmem>>, vector<1x96xf32>
    %166 = vector.broadcast %165 : vector<1x96xf32> to vector<256x96xf32>
    %167 = arith.addf %164, %166 : vector<256x96xf32>
    %cst_134 = arith.constant 0.000000e+00 : f32
    %168 = vector.broadcast %cst_134 : f32 to vector<256x96xf32>
    %169 = arith.maximumf %167, %168 : vector<256x96xf32>
    %170 = vector.shape_cast %169 : vector<256x96xf32> to vector<1x16x16x96xf32>
    %c0_135 = arith.constant 0 : index
    %c0_136 = arith.constant 0 : index
    %c0_137 = arith.constant 0 : index
    %c0_138 = arith.constant 0 : index
    %171 = vector.load %arg7[%c0_135, %c0_136, %c0_137, %c0_138] : memref<1x16x16x96xf32, #tpu.memory_space<vmem>>, vector<1x16x16x96xf32>
    tpu.vector_store %arg7[%c0_135, %c0_136, %c0_137, %c0_138], %170 {strides = array<i32>} : memref<1x16x16x96xf32, #tpu.memory_space<vmem>>, vector<1x16x16x96xf32>,
    return
  }
  func.func @transform_0(%arg0: i32, %arg1: i32) -> (i32, i32, i32, i32) {
    %c0_i32 = arith.constant 0 : i32
    %c0_i32_0 = arith.constant 0 : i32
    %c0_i32_1 = arith.constant 0 : i32
    %c0_i32_2 = arith.constant 0 : i32
    return %arg0, %c0_i32, %c0_i32_0, %c0_i32_1 : i32, i32, i32, i32
  }
  func.func @transform_1(%arg0: i32, %arg1: i32) -> (i32, i32, i32, i32) {
    %c0_i32 = arith.constant 0 : i32
    %c0_i32_0 = arith.constant 0 : i32
    %c0_i32_1 = arith.constant 0 : i32
    %c0_i32_2 = arith.constant 0 : i32
    return %arg0, %c0_i32, %c0_i32_0, %c0_i32_1 : i32, i32, i32, i32
  }
  func.func @transform_2(%arg0: i32, %arg1: i32) -> (i32, i32, i32) {
    %c0_i32 = arith.constant 0 : i32
    %c0_i32_0 = arith.constant 0 : i32
    %c0_i32_1 = arith.constant 0 : i32
    %c0_i32_2 = arith.constant 0 : i32
    return %c0_i32, %c0_i32_0, %c0_i32_1 : i32, i32, i32
  }
  func.func @transform_3(%arg0: i32, %arg1: i32) -> (i32, i32, i32) {
    %c0_i32 = arith.constant 0 : i32
    %c0_i32_0 = arith.constant 0 : i32
    %c0_i32_1 = arith.constant 0 : i32
    %c0_i32_2 = arith.constant 0 : i32
    return %c0_i32, %c0_i32_0, %c0_i32_1 : i32, i32, i32
  }
  func.func @transform_4(%arg0: i32, %arg1: i32) -> (i32, i32) {
    %c0_i32 = arith.constant 0 : i32
    %c0_i32_0 = arith.constant 0 : i32
    %c0_i32_1 = arith.constant 0 : i32
    return %c0_i32, %c0_i32_0 : i32, i32
  }
  func.func @transform_5(%arg0: i32, %arg1: i32) -> (i32, i32, i32, i32) {
    %c0_i32 = arith.constant 0 : i32
    %c0_i32_0 = arith.constant 0 : i32
    %c0_i32_1 = arith.constant 0 : i32
    return %arg0, %arg1, %c0_i32, %c0_i32_0 : i32, i32, i32, i32
  }
}

</mosaic_0001>

<llo_original>
// kernel: simple_madf_forward.1
$region0: #{simple_madf_forward.1}
  #allocation0 [shape = 'u32[]', space=smem, size = 0x4, offset = 0x4, fixed_abs, tag = 'smem constant byte address 0x4 - core index']
  #allocation1 [shape = 'u32[144,128]{1,0:T(1,128)}', space=vmem, size = 0x12000, scoped, tag = 'internal scratch']
  %s0 = inlined_call_operand.vmem [shape: bf16[2,18,18,16], index: 0, kind: input, shape index: {}]
  %s1 = inlined_call_operand.vmem [shape: bf16[2,18,18,32], index: 1, kind: input, shape index: {}]
  %s2 = inlined_call_operand.vmem [shape: bf16[9,16,96], index: 2, kind: input, shape index: {}]
  %s3 = inlined_call_operand.vmem [shape: bf16[9,32,96], index: 3, kind: input, shape index: {}]
  %s4 = inlined_call_operand.vmem [shape: f32[1,96], index: 4, kind: input, shape index: {}]
  %s5 = inlined_call_operand.vmem [shape: f32[2,16,16,96], index: 5, kind: output, shape index: {}]
  %s6 = sld [smem:[#allocation0]]
  $region53: #{simple_madf_forward.1} parent=0
    _
  %s8 = ssub.s32 1, %s6
  %s9 = scalar_select 0, %s8, %s6
  loop: start=0, step=1, limit=4
  $region2: #{simple_madf_forward.1} parent=0 // loop_pre_header
    _
  $region3: #{simple_madf_forward.1} parent=0 // loop_header
    %s11 = sphi 0, %s15
    %p12 = scmp.ge.s32.totalorder %s11, 4
    %s18 = sphi 0, %s30
    %s19 = sphi 0, %s26
    %s20 = sphi 0, %s18
    %s21 = sphi 0, %s19
    %s22 = sphi 0, %s20
    %s23 = sphi 0, %s21
    %s33 = sphi 0, %s35
    %s36 = sphi 0, %s33
    %s37 = sphi 0, %s36
    %s53 = sphi 0, %s37
    %s59 = sphi 0, %s61
    %s62 = sphi 0, %s59
    %s63 = sphi 0, %s62
    %s79 = sphi 0, %s63
    %s83 = sphi 0, %s83
    %s85 = sphi 0, %s83
    %s86 = sphi 0, %s85
    %s100 = sphi 0, %s86
    %s104 = sphi 0, %s104
    %s106 = sphi 0, %s104
    %s107 = sphi 0, %s106
    %s121 = sphi 0, %s107
    %s125 = sphi 0, %s125
    %s127 = sphi 0, %s125
    %s128 = sphi 0, %s127
    %s142 = sphi 0, %s128
    %s150 = sphi 0, %s152
    %s153 = sphi 0, %s150
    %s154 = sphi 0, %s153
    %s170 = sphi 0, %s154
  $region4: #{simple_madf_forward.1} parent=0 // loop_header_branch
    %14 = sbr.rel (%p12) target = $region8
  $region5: #{simple_madf_forward.1} parent=0 // loop_body
    %s16 = ssub.s32 %s11, 1
    %s17 = ssub.s32 %s11, 2
    %s24 = sadd.s32 1, %s19
    %p25 = scmp.ge.s32.totalorder %s24, 1
    %s26 = scalar_select %p25, 0, %s24
    %s27 = sadd.s32 1, %s18
    %s28 = scalar_select %p25, %s27, %s18
    %p29 = scmp.ge.s32.totalorder %s28, 2
    %s30 = scalar_select %p29, 0, %s28
    %s31 = ssub.s32 %s18, %s30
    %p32 = scmp.eq.s32.totalorder %s31, 0
    %s34 = sadd.s32 %s33, 1
    %s35 = scalar_select %p32, %s33, %s34
    %p38 = pneg %p32
    %p39 = scmp.eq.s32.totalorder %s11, 1
    %p40 = por %p38, %p39
    %p41 = scmp.ne.s32.totalorder %s33, %s36
    %p42 = scmp.eq.s32.totalorder %s11, 0
    %p43 = por %p41, %p42
    %p44 = scmp.ne.s32.totalorder %s33, %s36
    %p45 = scmp.eq.s32.totalorder %s16, 1
    %p46 = por %p44, %p45
    %p47 = scmp.ne.s32.totalorder %s36, %s37
    %p48 = scmp.eq.s32.totalorder %s16, 0
    %p49 = por %p47, %p48
    %p50 = scmp.ne.s32.totalorder %s36, %s37
    %p51 = scmp.eq.s32.totalorder %s17, 1
    %p52 = por %p50, %p51
    %p54 = scmp.ne.s32.totalorder %s37, %s53
    %p55 = scmp.eq.s32.totalorder %s17, 0
    %p56 = por %p54, %p55
    %s57 = ssub.s32 %s18, %s30
    %p58 = scmp.eq.s32.totalorder %s57, 0
    %s60 = sadd.s32 %s59, 1
    %s61 = scalar_select %p58, %s59, %s60
    %p64 = pneg %p58
    %p65 = scmp.eq.s32.totalorder %s11, 1
    %p66 = por %p64, %p65
    %p67 = scmp.ne.s32.totalorder %s59, %s62
    %p68 = scmp.eq.s32.totalorder %s11, 0
    %p69 = por %p67, %p68
    %p70 = scmp.ne.s32.totalorder %s59, %s62
    %p71 = scmp.eq.s32.totalorder %s16, 1
    %p72 = por %p70, %p71
    %p73 = scmp.ne.s32.totalorder %s62, %s63
    %p74 = scmp.eq.s32.totalorder %s16, 0
    %p75 = por %p73, %p74
    %p76 = scmp.ne.s32.totalorder %s62, %s63
    %p77 = scmp.eq.s32.totalorder %s17, 1
    %p78 = por %p76, %p77
    %p80 = scmp.ne.s32.totalorder %s63, %s79
    %p81 = scmp.eq.s32.totalorder %s17, 0
    %p82 = por %p80, %p81
    %s84 = sadd.s32 %s83, 1
    %p87 = scmp.eq.s32.totalorder %s11, 1
    %p88 = scmp.ne.s32.totalorder %s83, %s85
    %p89 = scmp.eq.s32.totalorder %s11, 0
    %p90 = por %p88, %p89
    %p91 = scmp.ne.s32.totalorder %s83, %s85
    %p92 = scmp.eq.s32.totalorder %s16, 1
    %p93 = por %p91, %p92
    %p94 = scmp.ne.s32.totalorder %s85, %s86
    %p95 = scmp.eq.s32.totalorder %s16, 0
    %p96 = por %p94, %p95
    %p97 = scmp.ne.s32.totalorder %s85, %s86
    %p98 = scmp.eq.s32.totalorder %s17, 1
    %p99 = por %p97, %p98
    %p101 = scmp.ne.s32.totalorder %s86, %s100
    %p102 = scmp.eq.s32.totalorder %s17, 0
    %p103 = por %p101, %p102
    %s105 = sadd.s32 %s104, 1
    %p108 = scmp.eq.s32.totalorder %s11, 1
    %p109 = scmp.ne.s32.totalorder %s104, %s106
    %p110 = scmp.eq.s32.totalorder %s11, 0
    %p111 = por %p109, %p110
    %p112 = scmp.ne.s32.totalorder %s104, %s106
    %p113 = scmp.eq.s32.totalorder %s16, 1
    %p114 = por %p112, %p113
    %p115 = scmp.ne.s32.totalorder %s106, %s107
    %p116 = scmp.eq.s32.totalorder %s16, 0
    %p117 = por %p115, %p116
    %p118 = scmp.ne.s32.totalorder %s106, %s107
    %p119 = scmp.eq.s32.totalorder %s17, 1
    %p120 = por %p118, %p119
    %p122 = scmp.ne.s32.totalorder %s107, %s121
    %p123 = scmp.eq.s32.totalorder %s17, 0
    %p124 = por %p122, %p123
    %s126 = sadd.s32 %s125, 1
    %p129 = scmp.eq.s32.totalorder %s11, 1
    %p130 = scmp.ne.s32.totalorder %s125, %s127
    %p131 = scmp.eq.s32.totalorder %s11, 0
    %p132 = por %p130, %p131
    %p133 = scmp.ne.s32.totalorder %s125, %s127
    %p134 = scmp.eq.s32.totalorder %s16, 1
    %p135 = por %p133, %p134
    %p136 = scmp.ne.s32.totalorder %s127, %s128
    %p137 = scmp.eq.s32.totalorder %s16, 0
    %p138 = por %p136, %p137
    %p139 = scmp.ne.s32.totalorder %s127, %s128
    %p140 = scmp.eq.s32.totalorder %s17, 1
    %p141 = por %p139, %p140
    %p143 = scmp.ne.s32.totalorder %s128, %s142
    %p144 = scmp.eq.s32.totalorder %s17, 0
    %p145 = por %p143, %p144
    %s146 = ssub.s32 %s18, %s30
    %s147 = ssub.s32 %s19, %s26
    %s148 = sor.u32 %s146, %s147
    %p149 = scmp.eq.s32.totalorder %s148, 0
    %s151 = sadd.s32 %s150, 1
    %s152 = scalar_select %p149, %s150, %s151
    %p155 = pneg %p149
    %p156 = scmp.eq.s32.totalorder %s11, 1
    %p157 = por %p155, %p156
    %p158 = scmp.ne.s32.totalorder %s150, %s153
    %p159 = scmp.eq.s32.totalorder %s11, 0
    %p160 = por %p158, %p159
    %p161 = scmp.ne.s32.totalorder %s150, %s153
    %p162 = scmp.eq.s32.totalorder %s16, 1
    %p163 = por %p161, %p162
    %p164 = scmp.ne.s32.totalorder %s153, %s154
    %p165 = scmp.eq.s32.totalorder %s16, 0
    %p166 = por %p164, %p165
    %p167 = scmp.ne.s32.totalorder %s153, %s154
    %p168 = scmp.eq.s32.totalorder %s17, 1
    %p169 = por %p167, %p168
    %p171 = scmp.ne.s32.totalorder %s154, %s170
    %p172 = scmp.eq.s32.totalorder %s17, 0
    %p173 = por %p171, %p172
    %p174 = scmp.le.s32.totalorder 1, %s11
    %p175 = scmp.lt.s32.totalorder %s11, 3
    %p176 = pnand %p174, %p175
    %p177 = pneg %p176
    // Predicated region
    $region9: #{simple_madf_forward.1} parent=5 // pred_check
      _
    $region10: #{simple_madf_forward.1} parent=5 // pred_check_branch
      %179 = sbr.rel (%p176) target = $region12
    $region11: #{simple_madf_forward.1} parent=5 // pred_region
      %s180 = ssub.s32 %s11, 1
      // Predicated region
      $region13: #{simple_madf_forward.1} parent=11 // pred_check
        %p181 = pneg %p96
      $region14: #{simple_madf_forward.1} parent=11 // pred_check_branch
        %183 = sbr.rel (%p181) target = $region16
      $region15: #{simple_madf_forward.1} parent=11 // pred_region
        _
      $region16: #{simple_madf_forward.1} parent=11 // pred_fallthru
        _
      // Predicated region
      $region17: #{simple_madf_forward.1} parent=11 // pred_check
        %p184 = pneg %p117
      $region18: #{simple_madf_forward.1} parent=11 // pred_check_branch
        %186 = sbr.rel (%p184) target = $region20
      $region19: #{simple_madf_forward.1} parent=11 // pred_region
        _
      $region20: #{simple_madf_forward.1} parent=11 // pred_fallthru
        _
      // Predicated region
      $region21: #{simple_madf_forward.1} parent=11 // pred_check
        %p187 = pneg %p138
      $region22: #{simple_madf_forward.1} parent=11 // pred_check_branch
        %189 = sbr.rel (%p187) target = $region24
      $region23: #{simple_madf_forward.1} parent=11 // pred_region
        _
      $region24: #{simple_madf_forward.1} parent=11 // pred_fallthru
        _
    $region12: #{simple_madf_forward.1} parent=5 // pred_fallthru
      _
    %p190 = scmp.lt.s32.totalorder %s11, 2
    // Predicated region
    $region25: #{simple_madf_forward.1} parent=5 // pred_check
      %p191 = pneg %p190
    $region26: #{simple_madf_forward.1} parent=5 // pred_check_branch
      %193 = sbr.rel (%p191) target = $region28
    $region27: #{simple_madf_forward.1} parent=5 // pred_region
      // Predicated region
      $region29: #{simple_madf_forward.1} parent=27 // pred_check
        %p194 = pneg %p43
      $region30: #{simple_madf_forward.1} parent=27 // pred_check_branch
        %196 = sbr.rel (%p194) target = $region32
      $region31: #{simple_madf_forward.1} parent=27 // pred_region
        %p197 = scmp.lt.s32.totalorder %s18, 1
        %s198 = scalar_select %p197, %s18, 1
        %s199 = smul.addr %s198, 54
        %s200 = smul.addr %s199, 4
        %s201 = scalar_lea.vmem %s0, %s200
      $region32: #{simple_madf_forward.1} parent=27 // pred_fallthru
        _
      // Predicated region
      $region33: #{simple_madf_forward.1} parent=27 // pred_check
        %p202 = pneg %p69
      $region34: #{simple_madf_forward.1} parent=27 // pred_check_branch
        %204 = sbr.rel (%p202) target = $region36
      $region35: #{simple_madf_forward.1} parent=27 // pred_region
        %p205 = scmp.lt.s32.totalorder %s18, 1
        %s206 = scalar_select %p205, %s18, 1
        %s207 = smul.addr %s206, 54
        %s208 = smul.addr %s207, 4
        %s209 = scalar_lea.vmem %s1, %s208
      $region36: #{simple_madf_forward.1} parent=27 // pred_fallthru
        _
    $region28: #{simple_madf_forward.1} parent=5 // pred_fallthru
      _
    %p210 = scmp.le.s32.totalorder 1, %s11
    %p211 = scmp.lt.s32.totalorder %s11, 3
    %p212 = pnand %p210, %p211
    %p213 = pneg %p212
    // Predicated region
    $region37: #{simple_madf_forward.1} parent=5 // pred_check
      _
    $region38: #{simple_madf_forward.1} parent=5 // pred_check_branch
      %215 = sbr.rel (%p212) target = $region40
    $region39: #{simple_madf_forward.1} parent=5 // pred_region
      %s216 = ssub.s32 %s11, 1
      %p217 = scmp.lt.s32.totalorder %s20, 1
      %s218 = scalar_select %p217, %s20, 1
      %s219 = smul.addr %s218, 54
      %s220 = smul.addr %s219, 4
      %s221 = scalar_lea.vmem %s0, %s220
      %p222 = pneg %p49
      %p223 = pneg %p46
      %p224 = scmp.lt.s32.totalorder %s20, 1
      %s225 = scalar_select %p224, %s20, 1
      %s226 = smul.addr %s225, 54
      %s227 = smul.addr %s226, 4
      %s228 = scalar_lea.vmem %s1, %s227
      %p229 = pneg %p75
      %p230 = pneg %p72
      %p231 = pneg %p96
      %p232 = pneg %p93
      %p233 = pneg %p117
      %p234 = pneg %p114
      %p235 = pneg %p138
      %p236 = pneg %p135
      %p237 = pneg %p166
      %p238 = pneg %p163
      %s239 = smul.u32 16, %s21
      %p240 = scmp.lt.s32.totalorder %s20, 1
      %s241 = scalar_select %p240, %s20, 1
      %p242 = scmp.lt.s32.totalorder %s239, 15
      %s243 = scalar_select %p242, %s239, 15
      %s244 = smul.addr %s243, 2
      %s245 = smul.addr %s241, 32
      %s246 = sadd.s32 %s244, %s245
      %s247 = smul.addr %s246, 8
      %s248 = scalar_lea.vmem %s5, %s247
      %p249 = scmp.lt.s32.totalorder %s20, 1
      %s250 = scalar_select %p249, %s20, 1
      %s251 = smul.addr %s250, 54
      %s252 = smul.addr %s251, 4
      %s253 = scalar_lea.vmem %s0, %s252
      %p254 = scmp.lt.s32.totalorder %s20, 1
      %s255 = scalar_select %p254, %s20, 1
      %s256 = smul.addr %s255, 54
      %s257 = smul.addr %s256, 4
      %s258 = scalar_lea.vmem %s1, %s257
      %s259 = smul.u32 16, %s21
      %p260 = scmp.lt.s32.totalorder %s20, 1
      %s261 = scalar_select %p260, %s20, 1
      %p262 = scmp.lt.s32.totalorder %s259, 15
      %s263 = scalar_select %p262, %s259, 15
      %s264 = smul.addr %s263, 2
      %s265 = smul.addr %s261, 32
      %s266 = sadd.s32 %s264, %s265
      %s267 = smul.addr %s266, 8
      %s268 = scalar_lea.vmem %s5, %s267
      %s269 = smul.u32 16, %s21
      %s271 = smul.u32 %s21, 16
      %s272 = smul.u32 %s271, 3
      %s273 = smul.addr %s272, 4
      %s274 = scalar_lea.vmem %s253, %s273
      %v275 = vld [vmem:[%s274] sm:$0xf]
      %v276 = vld [vmem:[%s274 + $0x4] sm:$0xf]
      %v277 = vld [vmem:[%s274 + $0xc] sm:$0xf]
      %v278 = vld [vmem:[%s274 + $0x10] sm:$0xf]
      %v279 = vld [vmem:[%s274 + $0x18] sm:$0xf]
      %v280 = vld [vmem:[%s274 + $0x1c] sm:$0xf]
      %v281 = vld [vmem:[%s274 + $0x24] sm:$0xf]
      %v282 = vld [vmem:[%s274 + $0x28] sm:$0xf]
      %v283 = vld [vmem:[%s274 + $0x30] sm:$0xf]
      %v284 = vld [vmem:[%s274 + $0x34] sm:$0xf]
      %v285 = vld [vmem:[%s274 + $0x3c] sm:$0xf]
      %v286 = vld [vmem:[%s274 + $0x40] sm:$0xf]
      %v287 = vld [vmem:[%s274 + $0x48] sm:$0xf]
      %v288 = vld [vmem:[%s274 + $0x4c] sm:$0xf]
      %v289 = vld [vmem:[%s274 + $0x54] sm:$0xf]
      %v290 = vld [vmem:[%s274 + $0x58] sm:$0xf]
      %v291 = vld [vmem:[%s274 + $0x60] sm:$0xf]
      %v292 = vld [vmem:[%s274 + $0x64] sm:$0xf]
      %v293 = vld [vmem:[%s274 + $0x6c] sm:$0xf]
      %v294 = vld [vmem:[%s274 + $0x70] sm:$0xf]
      %v295 = vld [vmem:[%s274 + $0x78] sm:$0xf]
      %v296 = vld [vmem:[%s274 + $0x7c] sm:$0xf]
      %v297 = vld [vmem:[%s274 + $0x84] sm:$0xf]
      %v298 = vld [vmem:[%s274 + $0x88] sm:$0xf]
      %v299 = vld [vmem:[%s274 + $0x90] sm:$0xf]
      %v300 = vld [vmem:[%s274 + $0x94] sm:$0xf]
      %v301 = vld [vmem:[%s274 + $0x9c] sm:$0xf]
      %v302 = vld [vmem:[%s274 + $0xa0] sm:$0xf]
      %v303 = vld [vmem:[%s274 + $0xa8] sm:$0xf]
      %v304 = vld [vmem:[%s274 + $0xac] sm:$0xf]
      %v305 = vld [vmem:[%s274 + $0xb4] sm:$0xf]
      %v306 = vld [vmem:[%s274 + $0xb8] sm:$0xf]
      %v307 = vld [vmem:[%s2] sm:$0xf]
      %v308 = vld [vmem:[%s2 + $0x4] sm:$0xf]
      %s309 = smul.addr %s272, 4
      %s310 = scalar_lea.vmem %s258, %s309
      %v311 = vld [vmem:[%s310] sm:$0xf]
      %v312 = vld [vmem:[%s310 + $0x4] sm:$0xf]
      %v313 = vld [vmem:[%s310 + $0xc] sm:$0xf]
      %v314 = vld [vmem:[%s310 + $0x10] sm:$0xf]
      %v315 = vld [vmem:[%s310 + $0x18] sm:$0xf]
      %v316 = vld [vmem:[%s310 + $0x1c] sm:$0xf]
      %v317 = vld [vmem:[%s310 + $0x24] sm:$0xf]
      %v318 = vld [vmem:[%s310 + $0x28] sm:$0xf]
      %v319 = vld [vmem:[%s310 + $0x30] sm:$0xf]
      %v320 = vld [vmem:[%s310 + $0x34] sm:$0xf]
      %v321 = vld [vmem:[%s310 + $0x3c] sm:$0xf]
      %v322 = vld [vmem:[%s310 + $0x40] sm:$0xf]
      %v323 = vld [vmem:[%s310 + $0x48] sm:$0xf]
      %v324 = vld [vmem:[%s310 + $0x4c] sm:$0xf]
      %v325 = vld [vmem:[%s310 + $0x54] sm:$0xf]
      %v326 = vld [vmem:[%s310 + $0x58] sm:$0xf]
      %v327 = vld [vmem:[%s310 + $0x60] sm:$0xf]
      %v328 = vld [vmem:[%s310 + $0x64] sm:$0xf]
      %v329 = vld [vmem:[%s310 + $0x6c] sm:$0xf]
      %v330 = vld [vmem:[%s310 + $0x70] sm:$0xf]
      %v331 = vld [vmem:[%s310 + $0x78] sm:$0xf]
      %v332 = vld [vmem:[%s310 + $0x7c] sm:$0xf]
      %v333 = vld [vmem:[%s310 + $0x84] sm:$0xf]
      %v334 = vld [vmem:[%s310 + $0x88] sm:$0xf]
      %v335 = vld [vmem:[%s310 + $0x90] sm:$0xf]
      %v336 = vld [vmem:[%s310 + $0x94] sm:$0xf]
      %v337 = vld [vmem:[%s310 + $0x9c] sm:$0xf]
      %v338 = vld [vmem:[%s310 + $0xa0] sm:$0xf]
      %v339 = vld [vmem:[%s310 + $0xa8] sm:$0xf]
      %v340 = vld [vmem:[%s310 + $0xac] sm:$0xf]
      %v341 = vld [vmem:[%s310 + $0xb4] sm:$0xf]
      %v342 = vld [vmem:[%s310 + $0xb8] sm:$0xf]
      %v343 = vld [vmem:[%s3] sm:$0xf]
      %v344 = vld [vmem:[%s3 + $0x4] sm:$0xf]
      %v345 = vld [vmem:[%s3 + $0x8] sm:$0xf]
      %v346 = vld [vmem:[%s3 + $0xc] sm:$0xf]
      %v379 = vunpack.c.l.b16 %v311
      %v380 = vunpack.c.l.b16 %v312
      %v381 = vunpack.c.l.b16 %v313
      %v382 = vunpack.c.l.b16 %v314
      %v383 = vunpack.c.l.b16 %v315
      %v384 = vunpack.c.l.b16 %v316
      %v385 = vunpack.c.l.b16 %v317
      %v386 = vunpack.c.l.b16 %v318
      %v387 = vunpack.c.l.b16 %v319
      %v388 = vunpack.c.l.b16 %v320
      %v389 = vunpack.c.l.b16 %v321
      %v390 = vunpack.c.l.b16 %v322
      %v391 = vunpack.c.l.b16 %v323
      %v392 = vunpack.c.l.b16 %v324
      %v393 = vunpack.c.l.b16 %v325
      %v394 = vunpack.c.l.b16 %v326
      %v395 = vunpack.c.l.b16 %v327
      %v396 = vunpack.c.l.b16 %v328
      %v397 = vunpack.c.l.b16 %v329
      %v398 = vunpack.c.l.b16 %v330
      %v399 = vunpack.c.l.b16 %v331
      %v400 = vunpack.c.l.b16 %v332
      %v401 = vunpack.c.l.b16 %v333
      %v402 = vunpack.c.l.b16 %v334
      %v403 = vunpack.c.l.b16 %v335
      %v404 = vunpack.c.l.b16 %v336
      %v405 = vunpack.c.l.b16 %v337
      %v406 = vunpack.c.l.b16 %v338
      %v407 = vunpack.c.l.b16 %v339
      %v408 = vunpack.c.l.b16 %v340
      %v409 = vunpack.c.l.b16 %v341
      %v410 = vunpack.c.l.b16 %v342
      %v411 = vpack.c.b16 %v380, %v379
      %v412 = vpack.c.b16 %v382, %v381
      %v413 = vpack.c.b16 %v384, %v383
      %v414 = vpack.c.b16 %v386, %v385
      %v415 = vpack.c.b16 %v388, %v387
      %v416 = vpack.c.b16 %v390, %v389
      %v417 = vpack.c.b16 %v392, %v391
      %v418 = vpack.c.b16 %v394, %v393
      %v419 = vpack.c.b16 %v396, %v395
      %v420 = vpack.c.b16 %v398, %v397
      %v421 = vpack.c.b16 %v400, %v399
      %v422 = vpack.c.b16 %v402, %v401
      %v423 = vpack.c.b16 %v404, %v403
      %v424 = vpack.c.b16 %v406, %v405
      %v425 = vpack.c.b16 %v408, %v407
      %v426 = vpack.c.b16 %v410, %v409
      %v431 = vunpack.c.l.b16 %v343
      %v432 = vunpack.c.l.b16 %v344
      %v433 = vunpack.c.l.b16 %v345
      %v434 = vunpack.c.l.b16 %v346
      %v435 = vpack.c.b16 %v432, %v431
      %v436 = vpack.c.b16 %v434, %v433
      %vm439 = vcmask 261120
      %v441 = vsel %vm439, %v411, 0
      %v444 = vsel %vm439, %v412, 0
      %v447 = vsel %vm439, %v413, 0
      %v450 = vsel %vm439, %v414, 0
      %v453 = vsel %vm439, %v415, 0
      %v456 = vsel %vm439, %v416, 0
      %v459 = vsel %vm439, %v417, 0
      %v462 = vsel %vm439, %v418, 0
      %v465 = vsel %vm439, %v419, 0
      %v468 = vsel %vm439, %v420, 0
      %v471 = vsel %vm439, %v421, 0
      %v474 = vsel %vm439, %v422, 0
      %v477 = vsel %vm439, %v423, 0
      %v480 = vsel %vm439, %v424, 0
      %v483 = vsel %vm439, %v425, 0
      %v486 = vsel %vm439, %v426, 0
      %488 = vmatprep.subr.bf16.mxu0 0
      %489 = vmatpush1.bf16.msra.mxu0 0
      %490 = vmatprep.subr.bf16.mxu0 0
      %491 = vmatpush1.bf16.msra.mxu0 0
      %492 = vmatprep.subr.bf16.mxu0 0
      %493 = vmatpush1.bf16.msra.mxu0 0
      %494 = vmatprep.subr.bf16.mxu0 0
      %495 = vmatpush1.bf16.msra.mxu0 0
      %496 = vmatprep.subr.bf16.mxu0 0
      %497 = vmatpush1.bf16.msra.mxu0 0
      %498 = vmatprep.subr.bf16.mxu0 0
      %499 = vmatpush1.bf16.msra.mxu0 0
      %500 = vmatprep.subr.bf16.mxu0 0
      %501 = vmatpush1.bf16.msra.mxu0 %v436
      %502 = vmatprep.subr.bf16.mxu0 0
      %503 = vmatpush1.bf16.msra.mxu0 %v435
      %504 = vmatprep.subr.bf16.mxu0 0
      %505 = vmatpush2.bf16.msra.mxu0 0
      %506 = vmatprep.subr.bf16.mxu0 0
      %507 = vmatpush2.bf16.msra.mxu0 0
      %508 = vmatprep.subr.bf16.mxu0 0
      %509 = vmatpush2.bf16.msra.mxu0 0
      %510 = vmatprep.subr.bf16.mxu0 0
      %511 = vmatpush2.bf16.msra.mxu0 0
      %512 = vmatprep.subr.bf16.mxu0 0
      %513 = vmatpush2.bf16.msra.mxu0 0
      %514 = vmatprep.subr.bf16.mxu0 0
      %515 = vmatpush2.bf16.msra.mxu0 0
      %516 = vmatprep.subr.bf16.mxu0 0
      %517 = vmatpush2.bf16.msra.mxu0 0
      %518 = vmatprep.subr.bf16.mxu0 0
      %519 = vmatpush2.bf16.msra.mxu0 0
      %520 = vmatprep.mubr.bf16.mxu0 0
      %521 = vmatmul.mubr.bf16.gmra.mxu0 %v441
      %v522 = vpop.f32.mrf.mxu0
      %v523 = vadd.f32 0.0, %v522
      %v524 = vpop.f32.mrf.mxu0
      %v525 = vpop.f32.mrf.mxu0
      %v526 = vadd.f32 0.0, %v525
      %v527 = vpop.f32.mrf.mxu0
      %528 = vmatprep.mubr.bf16.mxu0 0
      %529 = vmatmul.mubr.bf16.gmra.mxu0 %v444
      %v530 = vpop.f32.mrf.mxu0
      %v531 = vadd.f32 0.0, %v530
      %v532 = vpop.f32.mrf.mxu0
      %v533 = vpop.f32.mrf.mxu0
      %v534 = vadd.f32 0.0, %v533
      %v535 = vpop.f32.mrf.mxu0
      %536 = vmatprep.mubr.bf16.mxu0 0
      %537 = vmatmul.mubr.bf16.gmra.mxu0 %v447
      %v538 = vpop.f32.mrf.mxu0
      %v539 = vadd.f32 0.0, %v538
      %v540 = vpop.f32.mrf.mxu0
      %v541 = vpop.f32.mrf.mxu0
      %v542 = vadd.f32 0.0, %v541
      %v543 = vpop.f32.mrf.mxu0
      %544 = vmatprep.mubr.bf16.mxu0 0
      %545 = vmatmul.mubr.bf16.gmra.mxu0 %v450
      %v546 = vpop.f32.mrf.mxu0
      %v547 = vadd.f32 0.0, %v546
      %v548 = vpop.f32.mrf.mxu0
      %v549 = vpop.f32.mrf.mxu0
      %v550 = vadd.f32 0.0, %v549
      %v551 = vpop.f32.mrf.mxu0
      %552 = vmatprep.mubr.bf16.mxu0 0
      %553 = vmatmul.mubr.bf16.gmra.mxu0 %v453
      %v554 = vpop.f32.mrf.mxu0
      %v555 = vadd.f32 0.0, %v554
      %v556 = vpop.f32.mrf.mxu0
      %v557 = vpop.f32.mrf.mxu0
      %v558 = vadd.f32 0.0, %v557
      %v559 = vpop.f32.mrf.mxu0
      %560 = vmatprep.mubr.bf16.mxu0 0
      %561 = vmatmul.mubr.bf16.gmra.mxu0 %v456
      %v562 = vpop.f32.mrf.mxu0
      %v563 = vadd.f32 0.0, %v562
      %v564 = vpop.f32.mrf.mxu0
      %v565 = vpop.f32.mrf.mxu0
      %v566 = vadd.f32 0.0, %v565
      %v567 = vpop.f32.mrf.mxu0
      %568 = vmatprep.mubr.bf16.mxu0 0
      %569 = vmatmul.mubr.bf16.gmra.mxu0 %v459
      %v570 = vpop.f32.mrf.mxu0
      %v571 = vadd.f32 0.0, %v570
      %v572 = vpop.f32.mrf.mxu0
      %v573 = vpop.f32.mrf.mxu0
      %v574 = vadd.f32 0.0, %v573
      %v575 = vpop.f32.mrf.mxu0
      %576 = vmatprep.mubr.bf16.mxu0 0
      %577 = vmatmul.mubr.bf16.gmra.mxu0 %v462
      %v578 = vpop.f32.mrf.mxu0
      %v579 = vadd.f32 0.0, %v578
      %v580 = vpop.f32.mrf.mxu0
      %v581 = vpop.f32.mrf.mxu0
      %v582 = vadd.f32 0.0, %v581
      %v583 = vpop.f32.mrf.mxu0
      %584 = vmatprep.mubr.bf16.mxu0 0
      %585 = vmatmul.mubr.bf16.gmra.mxu0 %v465
      %v586 = vpop.f32.mrf.mxu0
      %v587 = vadd.f32 0.0, %v586
      %v588 = vpop.f32.mrf.mxu0
      %v589 = vpop.f32.mrf.mxu0
      %v590 = vadd.f32 0.0, %v589
      %v591 = vpop.f32.mrf.mxu0
      %592 = vmatprep.mubr.bf16.mxu0 0
      %593 = vmatmul.mubr.bf16.gmra.mxu0 %v468
      %v594 = vpop.f32.mrf.mxu0
      %v595 = vadd.f32 0.0, %v594
      %v596 = vpop.f32.mrf.mxu0
      %v597 = vpop.f32.mrf.mxu0
      %v598 = vadd.f32 0.0, %v597
      %v599 = vpop.f32.mrf.mxu0
      %600 = vmatprep.mubr.bf16.mxu0 0
      %601 = vmatmul.mubr.bf16.gmra.mxu0 %v471
      %v602 = vpop.f32.mrf.mxu0
      %v603 = vadd.f32 0.0, %v602
      %v604 = vpop.f32.mrf.mxu0
      %v605 = vpop.f32.mrf.mxu0
      %v606 = vadd.f32 0.0, %v605
      %v607 = vpop.f32.mrf.mxu0
      %608 = vmatprep.mubr.bf16.mxu0 0
      %609 = vmatmul.mubr.bf16.gmra.mxu0 %v474
      %v610 = vpop.f32.mrf.mxu0
      %v611 = vadd.f32 0.0, %v610
      %v612 = vpop.f32.mrf.mxu0
      %v613 = vpop.f32.mrf.mxu0
      %v614 = vadd.f32 0.0, %v613
      %v615 = vpop.f32.mrf.mxu0
      %616 = vmatprep.mubr.bf16.mxu0 0
      %617 = vmatmul.mubr.bf16.gmra.mxu0 %v477
      %v618 = vpop.f32.mrf.mxu0
      %v619 = vadd.f32 0.0, %v618
      %v620 = vpop.f32.mrf.mxu0
      %v621 = vpop.f32.mrf.mxu0
      %v622 = vadd.f32 0.0, %v621
      %v623 = vpop.f32.mrf.mxu0
      %624 = vmatprep.mubr.bf16.mxu0 0
      %625 = vmatmul.mubr.bf16.gmra.mxu0 %v480
      %v626 = vpop.f32.mrf.mxu0
      %v627 = vadd.f32 0.0, %v626
      %v628 = vpop.f32.mrf.mxu0
      %v629 = vpop.f32.mrf.mxu0
      %v630 = vadd.f32 0.0, %v629
      %v631 = vpop.f32.mrf.mxu0
      %632 = vmatprep.mubr.bf16.mxu0 0
      %633 = vmatmul.mubr.bf16.gmra.mxu0 %v483
      %v634 = vpop.f32.mrf.mxu0
      %v635 = vadd.f32 0.0, %v634
      %v636 = vpop.f32.mrf.mxu0
      %v637 = vpop.f32.mrf.mxu0
      %v638 = vadd.f32 0.0, %v637
      %v639 = vpop.f32.mrf.mxu0
      %640 = vmatprep.mubr.bf16.mxu0 0
      %641 = vmatmul.mubr.bf16.gmra.mxu0 %v486
      %v642 = vpop.f32.mrf.mxu0
      %v643 = vadd.f32 0.0, %v642
      %v644 = vpop.f32.mrf.mxu0
      %v645 = vpop.f32.mrf.mxu0
      %v646 = vadd.f32 0.0, %v645
      %v647 = vpop.f32.mrf.mxu0
      %648 = vdwg.mxu0
      %v681 = vunpack.c.l.b16 %v275
      %v682 = vunpack.c.l.b16 %v276
      %v683 = vunpack.c.l.b16 %v277
      %v684 = vunpack.c.l.b16 %v278
      %v685 = vunpack.c.l.b16 %v279
      %v686 = vunpack.c.l.b16 %v280
      %v687 = vunpack.c.l.b16 %v281
      %v688 = vunpack.c.l.b16 %v282
      %v689 = vunpack.c.l.b16 %v283
      %v690 = vunpack.c.l.b16 %v284
      %v691 = vunpack.c.l.b16 %v285
      %v692 = vunpack.c.l.b16 %v286
      %v693 = vunpack.c.l.b16 %v287
      %v694 = vunpack.c.l.b16 %v288
      %v695 = vunpack.c.l.b16 %v289
      %v696 = vunpack.c.l.b16 %v290
      %v697 = vunpack.c.l.b16 %v291
      %v698 = vunpack.c.l.b16 %v292
      %v699 = vunpack.c.l.b16 %v293
      %v700 = vunpack.c.l.b16 %v294
      %v701 = vunpack.c.l.b16 %v295
      %v702 = vunpack.c.l.b16 %v296
      %v703 = vunpack.c.l.b16 %v297
      %v704 = vunpack.c.l.b16 %v298
      %v705 = vunpack.c.l.b16 %v299
      %v706 = vunpack.c.l.b16 %v300
      %v707 = vunpack.c.l.b16 %v301
      %v708 = vunpack.c.l.b16 %v302
      %v709 = vunpack.c.l.b16 %v303
      %v710 = vunpack.c.l.b16 %v304
      %v711 = vunpack.c.l.b16 %v305
      %v712 = vunpack.c.l.b16 %v306
      %v713 = vpack.c.b16 %v682, %v681
      %v714 = vpack.c.b16 %v684, %v683
      %v715 = vpack.c.b16 %v686, %v685
      %v716 = vpack.c.b16 %v688, %v687
      %v717 = vpack.c.b16 %v690, %v689
      %v718 = vpack.c.b16 %v692, %v691
      %v719 = vpack.c.b16 %v694, %v693
      %v720 = vpack.c.b16 %v696, %v695
      %v721 = vpack.c.b16 %v698, %v697
      %v722 = vpack.c.b16 %v700, %v699
      %v723 = vpack.c.b16 %v702, %v701
      %v724 = vpack.c.b16 %v704, %v703
      %v725 = vpack.c.b16 %v706, %v705
      %v726 = vpack.c.b16 %v708, %v707
      %v727 = vpack.c.b16 %v710, %v709
      %v728 = vpack.c.b16 %v712, %v711
      %v731 = vunpack.c.l.b16 %v307
      %v732 = vunpack.c.l.b16 %v308
      %v733 = vpack.c.b16 %v732, %v731
      %vm735 = vcmask 130048
      %v737 = vsel %vm735, %v713, 0
      %v740 = vsel %vm735, %v714, 0
      %v743 = vsel %vm735, %v715, 0
      %v746 = vsel %vm735, %v716, 0
      %v749 = vsel %vm735, %v717, 0
      %v752 = vsel %vm735, %v718, 0
      %v755 = vsel %vm735, %v719, 0
      %v758 = vsel %vm735, %v720, 0
      %v761 = vsel %vm735, %v721, 0
      %v764 = vsel %vm735, %v722, 0
      %v767 = vsel %vm735, %v723, 0
      %v770 = vsel %vm735, %v724, 0
      %v773 = vsel %vm735, %v725, 0
      %v776 = vsel %vm735, %v726, 0
      %v779 = vsel %vm735, %v727, 0
      %v782 = vsel %vm735, %v728, 0
      %784 = vmatprep.subr.bf16.mxu0 0
      %785 = vmatpush1.bf16.msra.mxu0 0
      %786 = vmatprep.subr.bf16.mxu0 0
      %787 = vmatpush1.bf16.msra.mxu0 0
      %788 = vmatprep.subr.bf16.mxu0 0
      %789 = vmatpush1.bf16.msra.mxu0 0
      %790 = vmatprep.subr.bf16.mxu0 0
      %791 = vmatpush1.bf16.msra.mxu0 0
      %792 = vmatprep.subr.bf16.mxu0 0
      %793 = vmatpush1.bf16.msra.mxu0 0
      %794 = vmatprep.subr.bf16.mxu0 0
      %795 = vmatpush1.bf16.msra.mxu0 0
      %796 = vmatprep.subr.bf16.mxu0 0
      %797 = vmatpush1.bf16.msra.mxu0 0
      %798 = vmatprep.subr.bf16.mxu0 0
      %799 = vmatpush1.bf16.msra.mxu0 %v733
      %800 = vmatprep.subr.bf16.mxu0 0
      %801 = vmatpush2.bf16.msra.mxu0 0
      %802 = vmatprep.subr.bf16.mxu0 0
      %803 = vmatpush2.bf16.msra.mxu0 0
      %804 = vmatprep.subr.bf16.mxu0 0
      %805 = vmatpush2.bf16.msra.mxu0 0
      %806 = vmatprep.subr.bf16.mxu0 0
      %807 = vmatpush2.bf16.msra.mxu0 0
      %808 = vmatprep.subr.bf16.mxu0 0
      %809 = vmatpush2.bf16.msra.mxu0 0
      %810 = vmatprep.subr.bf16.mxu0 0
      %811 = vmatpush2.bf16.msra.mxu0 0
      %812 = vmatprep.subr.bf16.mxu0 0
      %813 = vmatpush2.bf16.msra.mxu0 0
      %814 = vmatprep.subr.bf16.mxu0 0
      %815 = vmatpush2.bf16.msra.mxu0 0
      %816 = vmatprep.mubr.bf16.mxu0 0
      %817 = vmatmul.mubr.bf16.gmra.mxu0 %v737
      %v818 = vpop.f32.mrf.mxu0
      %v819 = vadd.f32 %v523, %v818
      %v820 = vpop.f32.mrf.mxu0
      %v821 = vpop.f32.mrf.mxu0
      %v822 = vadd.f32 %v526, %v821
      %v823 = vpop.f32.mrf.mxu0
      %824 = vmatprep.mubr.bf16.mxu0 0
      %825 = vmatmul.mubr.bf16.gmra.mxu0 %v740
      %v826 = vpop.f32.mrf.mxu0
      %v827 = vadd.f32 %v531, %v826
      %v828 = vpop.f32.mrf.mxu0
      %v829 = vpop.f32.mrf.mxu0
      %v830 = vadd.f32 %v534, %v829
      %v831 = vpop.f32.mrf.mxu0
      %832 = vmatprep.mubr.bf16.mxu0 0
      %833 = vmatmul.mubr.bf16.gmra.mxu0 %v743
      %v834 = vpop.f32.mrf.mxu0
      %v835 = vadd.f32 %v539, %v834
      %v836 = vpop.f32.mrf.mxu0
      %v837 = vpop.f32.mrf.mxu0
      %v838 = vadd.f32 %v542, %v837
      %v839 = vpop.f32.mrf.mxu0
      %840 = vmatprep.mubr.bf16.mxu0 0
      %841 = vmatmul.mubr.bf16.gmra.mxu0 %v746
      %v842 = vpop.f32.mrf.mxu0
      %v843 = vadd.f32 %v547, %v842
      %v844 = vpop.f32.mrf.mxu0
      %v845 = vpop.f32.mrf.mxu0
      %v846 = vadd.f32 %v550, %v845
      %v847 = vpop.f32.mrf.mxu0
      %848 = vmatprep.mubr.bf16.mxu0 0
      %849 = vmatmul.mubr.bf16.gmra.mxu0 %v749
      %v850 = vpop.f32.mrf.mxu0
      %v851 = vadd.f32 %v555, %v850
      %v852 = vpop.f32.mrf.mxu0
      %v853 = vpop.f32.mrf.mxu0
      %v854 = vadd.f32 %v558, %v853
      %v855 = vpop.f32.mrf.mxu0
      %856 = vmatprep.mubr.bf16.mxu0 0
      %857 = vmatmul.mubr.bf16.gmra.mxu0 %v752
      %v858 = vpop.f32.mrf.mxu0
      %v859 = vadd.f32 %v563, %v858
      %v860 = vpop.f32.mrf.mxu0
      %v861 = vpop.f32.mrf.mxu0
      %v862 = vadd.f32 %v566, %v861
      %v863 = vpop.f32.mrf.mxu0
      %864 = vmatprep.mubr.bf16.mxu0 0
      %865 = vmatmul.mubr.bf16.gmra.mxu0 %v755
      %v866 = vpop.f32.mrf.mxu0
      %v867 = vadd.f32 %v571, %v866
      %v868 = vpop.f32.mrf.mxu0
      %v869 = vpop.f32.mrf.mxu0
      %v870 = vadd.f32 %v574, %v869
      %v871 = vpop.f32.mrf.mxu0
      %872 = vmatprep.mubr.bf16.mxu0 0
      %873 = vmatmul.mubr.bf16.gmra.mxu0 %v758
      %v874 = vpop.f32.mrf.mxu0
      %v875 = vadd.f32 %v579, %v874
      %v876 = vpop.f32.mrf.mxu0
      %v877 = vpop.f32.mrf.mxu0
      %v878 = vadd.f32 %v582, %v877
      %v879 = vpop.f32.mrf.mxu0
      %880 = vmatprep.mubr.bf16.mxu0 0
      %881 = vmatmul.mubr.bf16.gmra.mxu0 %v761
      %v882 = vpop.f32.mrf.mxu0
      %v883 = vadd.f32 %v587, %v882
      %v884 = vpop.f32.mrf.mxu0
      %v885 = vpop.f32.mrf.mxu0
      %v886 = vadd.f32 %v590, %v885
      %v887 = vpop.f32.mrf.mxu0
      %888 = vmatprep.mubr.bf16.mxu0 0
      %889 = vmatmul.mubr.bf16.gmra.mxu0 %v764
      %v890 = vpop.f32.mrf.mxu0
      %v891 = vadd.f32 %v595, %v890
      %v892 = vpop.f32.mrf.mxu0
      %v893 = vpop.f32.mrf.mxu0
      %v894 = vadd.f32 %v598, %v893
      %v895 = vpop.f32.mrf.mxu0
      %896 = vmatprep.mubr.bf16.mxu0 0
      %897 = vmatmul.mubr.bf16.gmra.mxu0 %v767
      %v898 = vpop.f32.mrf.mxu0
      %v899 = vadd.f32 %v603, %v898
      %v900 = vpop.f32.mrf.mxu0
      %v901 = vpop.f32.mrf.mxu0
      %v902 = vadd.f32 %v606, %v901
      %v903 = vpop.f32.mrf.mxu0
      %904 = vmatprep.mubr.bf16.mxu0 0
      %905 = vmatmul.mubr.bf16.gmra.mxu0 %v770
      %v906 = vpop.f32.mrf.mxu0
      %v907 = vadd.f32 %v611, %v906
      %v908 = vpop.f32.mrf.mxu0
      %v909 = vpop.f32.mrf.mxu0
      %v910 = vadd.f32 %v614, %v909
      %v911 = vpop.f32.mrf.mxu0
      %912 = vmatprep.mubr.bf16.mxu0 0
      %913 = vmatmul.mubr.bf16.gmra.mxu0 %v773
      %v914 = vpop.f32.mrf.mxu0
      %v915 = vadd.f32 %v619, %v914
      %v916 = vpop.f32.mrf.mxu0
      %v917 = vpop.f32.mrf.mxu0
      %v918 = vadd.f32 %v622, %v917
      %v919 = vpop.f32.mrf.mxu0
      %920 = vmatprep.mubr.bf16.mxu0 0
      %921 = vmatmul.mubr.bf16.gmra.mxu0 %v776
      %v922 = vpop.f32.mrf.mxu0
      %v923 = vadd.f32 %v627, %v922
      %v924 = vpop.f32.mrf.mxu0
      %v925 = vpop.f32.mrf.mxu0
      %v926 = vadd.f32 %v630, %v925
      %v927 = vpop.f32.mrf.mxu0
      %928 = vmatprep.mubr.bf16.mxu0 0
      %929 = vmatmul.mubr.bf16.gmra.mxu0 %v779
      %v930 = vpop.f32.mrf.mxu0
      %v931 = vadd.f32 %v635, %v930
      %v932 = vpop.f32.mrf.mxu0
      %v933 = vpop.f32.mrf.mxu0
      %v934 = vadd.f32 %v638, %v933
      %v935 = vpop.f32.mrf.mxu0
      %936 = vmatprep.mubr.bf16.mxu0 0
      %937 = vmatmul.mubr.bf16.gmra.mxu0 %v782
      %v938 = vpop.f32.mrf.mxu0
      %v939 = vadd.f32 %v643, %v938
      %v940 = vpop.f32.mrf.mxu0
      %v941 = vpop.f32.mrf.mxu0
      %v942 = vadd.f32 %v646, %v941
      %v943 = vpop.f32.mrf.mxu0
      %944 = vdwg.mxu0
      %v945 = vld [vmem:[%s274] sm:$0xf]
      %v946 = vld [vmem:[%s274 + $0x4] sm:$0xf]
      %v947 = vld [vmem:[%s274 + $0x8] sm:$0x1]
      %v948 = vld [vmem:[%s274 + $0xc] sm:$0xf]
      %v949 = vld [vmem:[%s274 + $0x10] sm:$0xf]
      %v950 = vld [vmem:[%s274 + $0x14] sm:$0x1]
      %v951 = vld [vmem:[%s274 + $0x18] sm:$0xf]
      %v952 = vld [vmem:[%s274 + $0x1c] sm:$0xf]
      %v953 = vld [vmem:[%s274 + $0x20] sm:$0x1]
      %v954 = vld [vmem:[%s274 + $0x24] sm:$0xf]
      %v955 = vld [vmem:[%s274 + $0x28] sm:$0xf]
      %v956 = vld [vmem:[%s274 + $0x2c] sm:$0x1]
      %v957 = vld [vmem:[%s274 + $0x30] sm:$0xf]
      %v958 = vld [vmem:[%s274 + $0x34] sm:$0xf]
      %v959 = vld [vmem:[%s274 + $0x38] sm:$0x1]
      %v960 = vld [vmem:[%s274 + $0x3c] sm:$0xf]
      %v961 = vld [vmem:[%s274 + $0x40] sm:$0xf]
      %v962 = vld [vmem:[%s274 + $0x44] sm:$0x1]
      %v963 = vld [vmem:[%s274 + $0x48] sm:$0xf]
      %v964 = vld [vmem:[%s274 + $0x4c] sm:$0xf]
      %v965 = vld [vmem:[%s274 + $0x50] sm:$0x1]
      %v966 = vld [vmem:[%s274 + $0x54] sm:$0xf]
      %v967 = vld [vmem:[%s274 + $0x58] sm:$0xf]
      %v968 = vld [vmem:[%s274 + $0x5c] sm:$0x1]
      %v969 = vld [vmem:[%s274 + $0x60] sm:$0xf]
      %v970 = vld [vmem:[%s274 + $0x64] sm:$0xf]
      %v971 = vld [vmem:[%s274 + $0x68] sm:$0x1]
      %v972 = vld [vmem:[%s274 + $0x6c] sm:$0xf]
      %v973 = vld [vmem:[%s274 + $0x70] sm:$0xf]
      %v974 = vld [vmem:[%s274 + $0x74] sm:$0x1]
      %v975 = vld [vmem:[%s274 + $0x78] sm:$0xf]
      %v976 = vld [vmem:[%s274 + $0x7c] sm:$0xf]
      %v977 = vld [vmem:[%s274 + $0x80] sm:$0x1]
      %v978 = vld [vmem:[%s274 + $0x84] sm:$0xf]
      %v979 = vld [vmem:[%s274 + $0x88] sm:$0xf]
      %v980 = vld [vmem:[%s274 + $0x8c] sm:$0x1]
      %v981 = vld [vmem:[%s274 + $0x90] sm:$0xf]
      %v982 = vld [vmem:[%s274 + $0x94] sm:$0xf]
      %v983 = vld [vmem:[%s274 + $0x98] sm:$0x1]
      %v984 = vld [vmem:[%s274 + $0x9c] sm:$0xf]
      %v985 = vld [vmem:[%s274 + $0xa0] sm:$0xf]
      %v986 = vld [vmem:[%s274 + $0xa4] sm:$0x1]
      %v987 = vld [vmem:[%s274 + $0xa8] sm:$0xf]
      %v988 = vld [vmem:[%s274 + $0xac] sm:$0xf]
      %v989 = vld [vmem:[%s274 + $0xb0] sm:$0x1]
      %v990 = vld [vmem:[%s274 + $0xb4] sm:$0xf]
      %v991 = vld [vmem:[%s274 + $0xb8] sm:$0xf]
      %v992 = vld [vmem:[%s274 + $0xbc] sm:$0x1]
      %vm993 = vsmask.f32 3328
      %vm994 = vsmask.f32 7440
      %vm995 = vmor %vm993, %vm994
      %v997 = vshrl.u32 %v945, 16
      %v999 = vrot.slane %v997, 4
      %v1000 = vshll.u32 %v945, 16
      %v1002 = vrot.slane %v1000, 5
      %v1003 = vor.u32 %v999, %v1002
      %v1004 = vrot.slane %v1003, 4
      %v1006 = vshll.u32 %v946, 16
      %v1008 = vrot.slane %v1006, 5
      %v1009 = vsel %vm995, %v1004, %v1008
      %v1010 = vshrl.u32 %v946, 16
      %v1012 = vrot.slane %v1010, 4
      %v1013 = vor.u32 %v1012, %v1008
      %v1014 = vrot.slane %v1013, 4
      %v1016 = vshll.u32 %v947, 16
      %v1018 = vrot.slane %v1016, 5
      %v1019 = vsel %vm995, %v1014, %v1018
      %v1021 = vshrl.u32 %v948, 16
      %v1023 = vrot.slane %v1021, 4
      %v1024 = vshll.u32 %v948, 16
      %v1026 = vrot.slane %v1024, 5
      %v1027 = vor.u32 %v1023, %v1026
      %v1028 = vrot.slane %v1027, 4
      %v1030 = vshll.u32 %v949, 16
      %v1032 = vrot.slane %v1030, 5
      %v1033 = vsel %vm995, %v1028, %v1032
      %v1034 = vshrl.u32 %v949, 16
      %v1036 = vrot.slane %v1034, 4
      %v1037 = vor.u32 %v1036, %v1032
      %v1038 = vrot.slane %v1037, 4
      %v1040 = vshll.u32 %v950, 16
      %v1042 = vrot.slane %v1040, 5
      %v1043 = vsel %vm995, %v1038, %v1042
      %v1045 = vshrl.u32 %v951, 16
      %v1047 = vrot.slane %v1045, 4
      %v1048 = vshll.u32 %v951, 16
      %v1050 = vrot.slane %v1048, 5
      %v1051 = vor.u32 %v1047, %v1050
      %v1052 = vrot.slane %v1051, 4
      %v1054 = vshll.u32 %v952, 16
      %v1056 = vrot.slane %v1054, 5
      %v1057 = vsel %vm995, %v1052, %v1056
      %v1058 = vshrl.u32 %v952, 16
      %v1060 = vrot.slane %v1058, 4
      %v1061 = vor.u32 %v1060, %v1056
      %v1062 = vrot.slane %v1061, 4
      %v1064 = vshll.u32 %v953, 16
      %v1066 = vrot.slane %v1064, 5
      %v1067 = vsel %vm995, %v1062, %v1066
      %v1069 = vshrl.u32 %v954, 16
      %v1071 = vrot.slane %v1069, 4
      %v1072 = vshll.u32 %v954, 16
      %v1074 = vrot.slane %v1072, 5
      %v1075 = vor.u32 %v1071, %v1074
      %v1076 = vrot.slane %v1075, 4
      %v1078 = vshll.u32 %v955, 16
      %v1080 = vrot.slane %v1078, 5
      %v1081 = vsel %vm995, %v1076, %v1080
      %v1082 = vshrl.u32 %v955, 16
      %v1084 = vrot.slane %v1082, 4
      %v1085 = vor.u32 %v1084, %v1080
      %v1086 = vrot.slane %v1085, 4
      %v1088 = vshll.u32 %v956, 16
      %v1090 = vrot.slane %v1088, 5
      %v1091 = vsel %vm995, %v1086, %v1090
      %v1093 = vshrl.u32 %v957, 16
      %v1095 = vrot.slane %v1093, 4
      %v1096 = vshll.u32 %v957, 16
      %v1098 = vrot.slane %v1096, 5
      %v1099 = vor.u32 %v1095, %v1098
      %v1100 = vrot.slane %v1099, 4
      %v1102 = vshll.u32 %v958, 16
      %v1104 = vrot.slane %v1102, 5
      %v1105 = vsel %vm995, %v1100, %v1104
      %v1106 = vshrl.u32 %v958, 16
      %v1108 = vrot.slane %v1106, 4
      %v1109 = vor.u32 %v1108, %v1104
      %v1110 = vrot.slane %v1109, 4
      %v1112 = vshll.u32 %v959, 16
      %v1114 = vrot.slane %v1112, 5
      %v1115 = vsel %vm995, %v1110, %v1114
      %v1117 = vshrl.u32 %v960, 16
      %v1119 = vrot.slane %v1117, 4
      %v1120 = vshll.u32 %v960, 16
      %v1122 = vrot.slane %v1120, 5
      %v1123 = vor.u32 %v1119, %v1122
      %v1124 = vrot.slane %v1123, 4
      %v1126 = vshll.u32 %v961, 16
      %v1128 = vrot.slane %v1126, 5
      %v1129 = vsel %vm995, %v1124, %v1128
      %v1130 = vshrl.u32 %v961, 16
      %v1132 = vrot.slane %v1130, 4
      %v1133 = vor.u32 %v1132, %v1128
      %v1134 = vrot.slane %v1133, 4
      %v1136 = vshll.u32 %v962, 16
      %v1138 = vrot.slane %v1136, 5
      %v1139 = vsel %vm995, %v1134, %v1138
      %v1141 = vshrl.u32 %v963, 16
      %v1143 = vrot.slane %v1141, 4
      %v1144 = vshll.u32 %v963, 16
      %v1146 = vrot.slane %v1144, 5
      %v1147 = vor.u32 %v1143, %v1146
      %v1148 = vrot.slane %v1147, 4
      %v1150 = vshll.u32 %v964, 16
      %v1152 = vrot.slane %v1150, 5
      %v1153 = vsel %vm995, %v1148, %v1152
      %v1154 = vshrl.u32 %v964, 16
      %v1156 = vrot.slane %v1154, 4
      %v1157 = vor.u32 %v1156, %v1152
      %v1158 = vrot.slane %v1157, 4
      %v1160 = vshll.u32 %v965, 16
      %v1162 = vrot.slane %v1160, 5
      %v1163 = vsel %vm995, %v1158, %v1162
      %v1165 = vshrl.u32 %v966, 16
      %v1167 = vrot.slane %v1165, 4
      %v1168 = vshll.u32 %v966, 16
      %v1170 = vrot.slane %v1168, 5
      %v1171 = vor.u32 %v1167, %v1170
      %v1172 = vrot.slane %v1171, 4
      %v1174 = vshll.u32 %v967, 16
      %v1176 = vrot.slane %v1174, 5
      %v1177 = vsel %vm995, %v1172, %v1176
      %v1178 = vshrl.u32 %v967, 16
      %v1180 = vrot.slane %v1178, 4
      %v1181 = vor.u32 %v1180, %v1176
      %v1182 = vrot.slane %v1181, 4
      %v1184 = vshll.u32 %v968, 16
      %v1186 = vrot.slane %v1184, 5
      %v1187 = vsel %vm995, %v1182, %v1186
      %v1189 = vshrl.u32 %v969, 16
      %v1191 = vrot.slane %v1189, 4
      %v1192 = vshll.u32 %v969, 16
      %v1194 = vrot.slane %v1192, 5
      %v1195 = vor.u32 %v1191, %v1194
      %v1196 = vrot.slane %v1195, 4
      %v1198 = vshll.u32 %v970, 16
      %v1200 = vrot.slane %v1198, 5
      %v1201 = vsel %vm995, %v1196, %v1200
      %v1202 = vshrl.u32 %v970, 16
      %v1204 = vrot.slane %v1202, 4
      %v1205 = vor.u32 %v1204, %v1200
      %v1206 = vrot.slane %v1205, 4
      %v1208 = vshll.u32 %v971, 16
      %v1210 = vrot.slane %v1208, 5
      %v1211 = vsel %vm995, %v1206, %v1210
      %v1213 = vshrl.u32 %v972, 16
      %v1215 = vrot.slane %v1213, 4
      %v1216 = vshll.u32 %v972, 16
      %v1218 = vrot.slane %v1216, 5
      %v1219 = vor.u32 %v1215, %v1218
      %v1220 = vrot.slane %v1219, 4
      %v1222 = vshll.u32 %v973, 16
      %v1224 = vrot.slane %v1222, 5
      %v1225 = vsel %vm995, %v1220, %v1224
      %v1226 = vshrl.u32 %v973, 16
      %v1228 = vrot.slane %v1226, 4
      %v1229 = vor.u32 %v1228, %v1224
      %v1230 = vrot.slane %v1229, 4
      %v1232 = vshll.u32 %v974, 16
      %v1234 = vrot.slane %v1232, 5
      %v1235 = vsel %vm995, %v1230, %v1234
      %v1237 = vshrl.u32 %v975, 16
      %v1239 = vrot.slane %v1237, 4
      %v1240 = vshll.u32 %v975, 16
      %v1242 = vrot.slane %v1240, 5
      %v1243 = vor.u32 %v1239, %v1242
      %v1244 = vrot.slane %v1243, 4
      %v1246 = vshll.u32 %v976, 16
      %v1248 = vrot.slane %v1246, 5
      %v1249 = vsel %vm995, %v1244, %v1248
      %v1250 = vshrl.u32 %v976, 16
      %v1252 = vrot.slane %v1250, 4
      %v1253 = vor.u32 %v1252, %v1248
      %v1254 = vrot.slane %v1253, 4
      %v1256 = vshll.u32 %v977, 16
      %v1258 = vrot.slane %v1256, 5
      %v1259 = vsel %vm995, %v1254, %v1258
      %v1261 = vshrl.u32 %v978, 16
      %v1263 = vrot.slane %v1261, 4
      %v1264 = vshll.u32 %v978, 16
      %v1266 = vrot.slane %v1264, 5
      %v1267 = vor.u32 %v1263, %v1266
      %v1268 = vrot.slane %v1267, 4
      %v1270 = vshll.u32 %v979, 16
      %v1272 = vrot.slane %v1270, 5
      %v1273 = vsel %vm995, %v1268, %v1272
      %v1274 = vshrl.u32 %v979, 16
      %v1276 = vrot.slane %v1274, 4
      %v1277 = vor.u32 %v1276, %v1272
      %v1278 = vrot.slane %v1277, 4
      %v1280 = vshll.u32 %v980, 16
      %v1282 = vrot.slane %v1280, 5
      %v1283 = vsel %vm995, %v1278, %v1282
      %v1285 = vshrl.u32 %v981, 16
      %v1287 = vrot.slane %v1285, 4
      %v1288 = vshll.u32 %v981, 16
      %v1290 = vrot.slane %v1288, 5
      %v1291 = vor.u32 %v1287, %v1290
      %v1292 = vrot.slane %v1291, 4
      %v1294 = vshll.u32 %v982, 16
      %v1296 = vrot.slane %v1294, 5
      %v1297 = vsel %vm995, %v1292, %v1296
      %v1298 = vshrl.u32 %v982, 16
      %v1300 = vrot.slane %v1298, 4
      %v1301 = vor.u32 %v1300, %v1296
      %v1302 = vrot.slane %v1301, 4
      %v1304 = vshll.u32 %v983, 16
      %v1306 = vrot.slane %v1304, 5
      %v1307 = vsel %vm995, %v1302, %v1306
      %v1309 = vshrl.u32 %v984, 16
      %v1311 = vrot.slane %v1309, 4
      %v1312 = vshll.u32 %v984, 16
      %v1314 = vrot.slane %v1312, 5
      %v1315 = vor.u32 %v1311, %v1314
      %v1316 = vrot.slane %v1315, 4
      %v1318 = vshll.u32 %v985, 16
      %v1320 = vrot.slane %v1318, 5
      %v1321 = vsel %vm995, %v1316, %v1320
      %v1322 = vshrl.u32 %v985, 16
      %v1324 = vrot.slane %v1322, 4
      %v1325 = vor.u32 %v1324, %v1320
      %v1326 = vrot.slane %v1325, 4
      %v1328 = vshll.u32 %v986, 16
      %v1330 = vrot.slane %v1328, 5
      %v1331 = vsel %vm995, %v1326, %v1330
      %v1333 = vshrl.u32 %v987, 16
      %v1335 = vrot.slane %v1333, 4
      %v1336 = vshll.u32 %v987, 16
      %v1338 = vrot.slane %v1336, 5
      %v1339 = vor.u32 %v1335, %v1338
      %v1340 = vrot.slane %v1339, 4
      %v1342 = vshll.u32 %v988, 16
      %v1344 = vrot.slane %v1342, 5
      %v1345 = vsel %vm995, %v1340, %v1344
      %v1346 = vshrl.u32 %v988, 16
      %v1348 = vrot.slane %v1346, 4
      %v1349 = vor.u32 %v1348, %v1344
      %v1350 = vrot.slane %v1349, 4
      %v1352 = vshll.u32 %v989, 16
      %v1354 = vrot.slane %v1352, 5
      %v1355 = vsel %vm995, %v1350, %v1354
      %v1357 = vshrl.u32 %v990, 16
      %v1359 = vrot.slane %v1357, 4
      %v1360 = vshll.u32 %v990, 16
      %v1362 = vrot.slane %v1360, 5
      %v1363 = vor.u32 %v1359, %v1362
      %v1364 = vrot.slane %v1363, 4
      %v1366 = vshll.u32 %v991, 16
      %v1368 = vrot.slane %v1366, 5
      %v1369 = vsel %vm995, %v1364, %v1368
      %v1370 = vshrl.u32 %v991, 16
      %v1372 = vrot.slane %v1370, 4
      %v1373 = vor.u32 %v1372, %v1368
      %v1374 = vrot.slane %v1373, 4
      %v1376 = vshll.u32 %v992, 16
      %v1378 = vrot.slane %v1376, 5
      %v1379 = vsel %vm995, %v1374, %v1378
      %s1380 = scalar_lea.vmem %s2, 8
      %v1381 = vld [vmem:[%s1380] sm:$0xf]
      %v1382 = vld [vmem:[%s1380 + $0x4] sm:$0xf]
      %v1383 = vunpack.c.l.b16 %v1009
      %v1384 = vunpack.c.l.b16 %v1019
      %v1385 = vunpack.c.l.b16 %v1033
      %v1386 = vunpack.c.l.b16 %v1043
      %v1387 = vunpack.c.l.b16 %v1057
      %v1388 = vunpack.c.l.b16 %v1067
      %v1389 = vunpack.c.l.b16 %v1081
      %v1390 = vunpack.c.l.b16 %v1091
      %v1391 = vunpack.c.l.b16 %v1105
      %v1392 = vunpack.c.l.b16 %v1115
      %v1393 = vunpack.c.l.b16 %v1129
      %v1394 = vunpack.c.l.b16 %v1139
      %v1395 = vunpack.c.l.b16 %v1153
      %v1396 = vunpack.c.l.b16 %v1163
      %v1397 = vunpack.c.l.b16 %v1177
      %v1398 = vunpack.c.l.b16 %v1187
      %v1399 = vunpack.c.l.b16 %v1201
      %v1400 = vunpack.c.l.b16 %v1211
      %v1401 = vunpack.c.l.b16 %v1225
      %v1402 = vunpack.c.l.b16 %v1235
      %v1403 = vunpack.c.l.b16 %v1249
      %v1404 = vunpack.c.l.b16 %v1259
      %v1405 = vunpack.c.l.b16 %v1273
      %v1406 = vunpack.c.l.b16 %v1283
      %v1407 = vunpack.c.l.b16 %v1297
      %v1408 = vunpack.c.l.b16 %v1307
      %v1409 = vunpack.c.l.b16 %v1321
      %v1410 = vunpack.c.l.b16 %v1331
      %v1411 = vunpack.c.l.b16 %v1345
      %v1412 = vunpack.c.l.b16 %v1355
      %v1413 = vunpack.c.l.b16 %v1369
      %v1414 = vunpack.c.l.b16 %v1379
      %v1415 = vpack.c.b16 %v1384, %v1383
      %v1416 = vpack.c.b16 %v1386, %v1385
      %v1417 = vpack.c.b16 %v1388, %v1387
      %v1418 = vpack.c.b16 %v1390, %v1389
      %v1419 = vpack.c.b16 %v1392, %v1391
      %v1420 = vpack.c.b16 %v1394, %v1393
      %v1421 = vpack.c.b16 %v1396, %v1395
      %v1422 = vpack.c.b16 %v1398, %v1397
      %v1423 = vpack.c.b16 %v1400, %v1399
      %v1424 = vpack.c.b16 %v1402, %v1401
      %v1425 = vpack.c.b16 %v1404, %v1403
      %v1426 = vpack.c.b16 %v1406, %v1405
      %v1427 = vpack.c.b16 %v1408, %v1407
      %v1428 = vpack.c.b16 %v1410, %v1409
      %v1429 = vpack.c.b16 %v1412, %v1411
      %v1430 = vpack.c.b16 %v1414, %v1413
      %v1433 = vunpack.c.l.b16 %v1381
      %v1434 = vunpack.c.l.b16 %v1382
      %v1435 = vpack.c.b16 %v1434, %v1433
      %v1438 = vsel %vm735, %v1415, 0
      %v1441 = vsel %vm735, %v1416, 0
      %v1444 = vsel %vm735, %v1417, 0
      %v1447 = vsel %vm735, %v1418, 0
      %v1450 = vsel %vm735, %v1419, 0
      %v1453 = vsel %vm735, %v1420, 0
      %v1456 = vsel %vm735, %v1421, 0
      %v1459 = vsel %vm735, %v1422, 0
      %v1462 = vsel %vm735, %v1423, 0
      %v1465 = vsel %vm735, %v1424, 0
      %v1468 = vsel %vm735, %v1425, 0
      %v1471 = vsel %vm735, %v1426, 0
      %v1474 = vsel %vm735, %v1427, 0
      %v1477 = vsel %vm735, %v1428, 0
      %v1480 = vsel %vm735, %v1429, 0
      %v1483 = vsel %vm735, %v1430, 0
      %1485 = vmatprep.subr.bf16.mxu0 0
      %1486 = vmatpush1.bf16.msra.mxu0 0
      %1487 = vmatprep.subr.bf16.mxu0 0
      %1488 = vmatpush1.bf16.msra.mxu0 0
      %1489 = vmatprep.subr.bf16.mxu0 0
      %1490 = vmatpush1.bf16.msra.mxu0 0
      %1491 = vmatprep.subr.bf16.mxu0 0
      %1492 = vmatpush1.bf16.msra.mxu0 0
      %1493 = vmatprep.subr.bf16.mxu0 0
      %1494 = vmatpush1.bf16.msra.mxu0 0
      %1495 = vmatprep.subr.bf16.mxu0 0
      %1496 = vmatpush1.bf16.msra.mxu0 0
      %1497 = vmatprep.subr.bf16.mxu0 0
      %1498 = vmatpush1.bf16.msra.mxu0 0
      %1499 = vmatprep.subr.bf16.mxu0 0
      %1500 = vmatpush1.bf16.msra.mxu0 %v1435
      %1501 = vmatprep.subr.bf16.mxu0 0
      %1502 = vmatpush2.bf16.msra.mxu0 0
      %1503 = vmatprep.subr.bf16.mxu0 0
      %1504 = vmatpush2.bf16.msra.mxu0 0
      %1505 = vmatprep.subr.bf16.mxu0 0
      %1506 = vmatpush2.bf16.msra.mxu0 0
      %1507 = vmatprep.subr.bf16.mxu0 0
      %1508 = vmatpush2.bf16.msra.mxu0 0
      %1509 = vmatprep.subr.bf16.mxu0 0
      %1510 = vmatpush2.bf16.msra.mxu0 0
      %1511 = vmatprep.subr.bf16.mxu0 0
      %1512 = vmatpush2.bf16.msra.mxu0 0
      %1513 = vmatprep.subr.bf16.mxu0 0
      %1514 = vmatpush2.bf16.msra.mxu0 0
      %1515 = vmatprep.subr.bf16.mxu0 0
      %1516 = vmatpush2.bf16.msra.mxu0 0
      %1517 = vmatprep.mubr.bf16.mxu0 0
      %1518 = vmatmul.mubr.bf16.gmra.mxu0 %v1438
      %v1519 = vpop.f32.mrf.mxu0
      %v1520 = vadd.f32 0.0, %v1519
      %v1521 = vpop.f32.mrf.mxu0
      %v1522 = vpop.f32.mrf.mxu0
      %v1523 = vadd.f32 0.0, %v1522
      %v1524 = vpop.f32.mrf.mxu0
      %1525 = vmatprep.mubr.bf16.mxu0 0
      %1526 = vmatmul.mubr.bf16.gmra.mxu0 %v1441
      %v1527 = vpop.f32.mrf.mxu0
      %v1528 = vadd.f32 0.0, %v1527
      %v1529 = vpop.f32.mrf.mxu0
      %v1530 = vpop.f32.mrf.mxu0
      %v1531 = vadd.f32 0.0, %v1530
      %v1532 = vpop.f32.mrf.mxu0
      %1533 = vmatprep.mubr.bf16.mxu0 0
      %1534 = vmatmul.mubr.bf16.gmra.mxu0 %v1444
      %v1535 = vpop.f32.mrf.mxu0
      %v1536 = vadd.f32 0.0, %v1535
      %v1537 = vpop.f32.mrf.mxu0
      %v1538 = vpop.f32.mrf.mxu0
      %v1539 = vadd.f32 0.0, %v1538
      %v1540 = vpop.f32.mrf.mxu0
      %1541 = vmatprep.mubr.bf16.mxu0 0
      %1542 = vmatmul.mubr.bf16.gmra.mxu0 %v1447
      %v1543 = vpop.f32.mrf.mxu0
      %v1544 = vadd.f32 0.0, %v1543
      %v1545 = vpop.f32.mrf.mxu0
      %v1546 = vpop.f32.mrf.mxu0
      %v1547 = vadd.f32 0.0, %v1546
      %v1548 = vpop.f32.mrf.mxu0
      %1549 = vmatprep.mubr.bf16.mxu0 0
      %1550 = vmatmul.mubr.bf16.gmra.mxu0 %v1450
      %v1551 = vpop.f32.mrf.mxu0
      %v1552 = vadd.f32 0.0, %v1551
      %v1553 = vpop.f32.mrf.mxu0
      %v1554 = vpop.f32.mrf.mxu0
      %v1555 = vadd.f32 0.0, %v1554
      %v1556 = vpop.f32.mrf.mxu0
      %1557 = vmatprep.mubr.bf16.mxu0 0
      %1558 = vmatmul.mubr.bf16.gmra.mxu0 %v1453
      %v1559 = vpop.f32.mrf.mxu0
      %v1560 = vadd.f32 0.0, %v1559
      %v1561 = vpop.f32.mrf.mxu0
      %v1562 = vpop.f32.mrf.mxu0
      %v1563 = vadd.f32 0.0, %v1562
      %v1564 = vpop.f32.mrf.mxu0
      %1565 = vmatprep.mubr.bf16.mxu0 0
      %1566 = vmatmul.mubr.bf16.gmra.mxu0 %v1456
      %v1567 = vpop.f32.mrf.mxu0
      %v1568 = vadd.f32 0.0, %v1567
      %v1569 = vpop.f32.mrf.mxu0
      %v1570 = vpop.f32.mrf.mxu0
      %v1571 = vadd.f32 0.0, %v1570
      %v1572 = vpop.f32.mrf.mxu0
      %1573 = vmatprep.mubr.bf16.mxu0 0
      %1574 = vmatmul.mubr.bf16.gmra.mxu0 %v1459
      %v1575 = vpop.f32.mrf.mxu0
      %v1576 = vadd.f32 0.0, %v1575
      %v1577 = vpop.f32.mrf.mxu0
      %v1578 = vpop.f32.mrf.mxu0
      %v1579 = vadd.f32 0.0, %v1578
      %v1580 = vpop.f32.mrf.mxu0
      %1581 = vmatprep.mubr.bf16.mxu0 0
      %1582 = vmatmul.mubr.bf16.gmra.mxu0 %v1462
      %v1583 = vpop.f32.mrf.mxu0
      %v1584 = vadd.f32 0.0, %v1583
      %v1585 = vpop.f32.mrf.mxu0
      %v1586 = vpop.f32.mrf.mxu0
      %v1587 = vadd.f32 0.0, %v1586
      %v1588 = vpop.f32.mrf.mxu0
      %1589 = vmatprep.mubr.bf16.mxu0 0
      %1590 = vmatmul.mubr.bf16.gmra.mxu0 %v1465
      %v1591 = vpop.f32.mrf.mxu0
      %v1592 = vadd.f32 0.0, %v1591
      %v1593 = vpop.f32.mrf.mxu0
      %v1594 = vpop.f32.mrf.mxu0
      %v1595 = vadd.f32 0.0, %v1594
      %v1596 = vpop.f32.mrf.mxu0
      %1597 = vmatprep.mubr.bf16.mxu0 0
      %1598 = vmatmul.mubr.bf16.gmra.mxu0 %v1468
      %v1599 = vpop.f32.mrf.mxu0
      %v1600 = vadd.f32 0.0, %v1599
      %v1601 = vpop.f32.mrf.mxu0
      %v1602 = vpop.f32.mrf.mxu0
      %v1603 = vadd.f32 0.0, %v1602
      %v1604 = vpop.f32.mrf.mxu0
      %1605 = vmatprep.mubr.bf16.mxu0 0
      %1606 = vmatmul.mubr.bf16.gmra.mxu0 %v1471
      %v1607 = vpop.f32.mrf.mxu0
      %v1608 = vadd.f32 0.0, %v1607
      %v1609 = vpop.f32.mrf.mxu0
      %v1610 = vpop.f32.mrf.mxu0
      %v1611 = vadd.f32 0.0, %v1610
      %v1612 = vpop.f32.mrf.mxu0
      %1613 = vmatprep.mubr.bf16.mxu0 0
      %1614 = vmatmul.mubr.bf16.gmra.mxu0 %v1474
      %v1615 = vpop.f32.mrf.mxu0
      %v1616 = vadd.f32 0.0, %v1615
      %v1617 = vpop.f32.mrf.mxu0
      %v1618 = vpop.f32.mrf.mxu0
      %v1619 = vadd.f32 0.0, %v1618
      %v1620 = vpop.f32.mrf.mxu0
      %1621 = vmatprep.mubr.bf16.mxu0 0
      %1622 = vmatmul.mubr.bf16.gmra.mxu0 %v1477
      %v1623 = vpop.f32.mrf.mxu0
      %v1624 = vadd.f32 0.0, %v1623
      %v1625 = vpop.f32.mrf.mxu0
      %v1626 = vpop.f32.mrf.mxu0
      %v1627 = vadd.f32 0.0, %v1626
      %v1628 = vpop.f32.mrf.mxu0
      %1629 = vmatprep.mubr.bf16.mxu0 0
      %1630 = vmatmul.mubr.bf16.gmra.mxu0 %v1480
      %v1631 = vpop.f32.mrf.mxu0
      %v1632 = vadd.f32 0.0, %v1631
      %v1633 = vpop.f32.mrf.mxu0
      %v1634 = vpop.f32.mrf.mxu0
      %v1635 = vadd.f32 0.0, %v1634
      %v1636 = vpop.f32.mrf.mxu0
      %1637 = vmatprep.mubr.bf16.mxu0 0
      %1638 = vmatmul.mubr.bf16.gmra.mxu0 %v1483
      %v1639 = vpop.f32.mrf.mxu0
      %v1640 = vadd.f32 0.0, %v1639
      %v1641 = vpop.f32.mrf.mxu0
      %v1642 = vpop.f32.mrf.mxu0
      %v1643 = vadd.f32 0.0, %v1642
      %v1644 = vpop.f32.mrf.mxu0
      %1645 = vdwg.mxu0
      %v1646 = vadd.f32 %v819, %v1520
      %v1647 = vadd.f32 %v822, %v1523
      %v1648 = vadd.f32 %v827, %v1528
      %v1649 = vadd.f32 %v830, %v1531
      %v1650 = vadd.f32 %v835, %v1536
      %v1651 = vadd.f32 %v838, %v1539
      %v1652 = vadd.f32 %v843, %v1544
      %v1653 = vadd.f32 %v846, %v1547
      %v1654 = vadd.f32 %v851, %v1552
      %v1655 = vadd.f32 %v854, %v1555
      %v1656 = vadd.f32 %v859, %v1560
      %v1657 = vadd.f32 %v862, %v1563
      %v1658 = vadd.f32 %v867, %v1568
      %v1659 = vadd.f32 %v870, %v1571
      %v1660 = vadd.f32 %v875, %v1576
      %v1661 = vadd.f32 %v878, %v1579
      %v1662 = vadd.f32 %v883, %v1584
      %v1663 = vadd.f32 %v886, %v1587
      %v1664 = vadd.f32 %v891, %v1592
      %v1665 = vadd.f32 %v894, %v1595
      %v1666 = vadd.f32 %v899, %v1600
      %v1667 = vadd.f32 %v902, %v1603
      %v1668 = vadd.f32 %v907, %v1608
      %v1669 = vadd.f32 %v910, %v1611
      %v1670 = vadd.f32 %v915, %v1616
      %v1671 = vadd.f32 %v918, %v1619
      %v1672 = vadd.f32 %v923, %v1624
      %v1673 = vadd.f32 %v926, %v1627
      %v1674 = vadd.f32 %v931, %v1632
      %v1675 = vadd.f32 %v934, %v1635
      %v1676 = vadd.f32 %v939, %v1640
      %v1677 = vadd.f32 %v942, %v1643
      %v1678 = vld [vmem:[%s310] sm:$0xf]
      %v1679 = vld [vmem:[%s310 + $0x4] sm:$0xf]
      %v1680 = vld [vmem:[%s310 + $0x8] sm:$0x1]
      %v1681 = vld [vmem:[%s310 + $0xc] sm:$0xf]
      %v1682 = vld [vmem:[%s310 + $0x10] sm:$0xf]
      %v1683 = vld [vmem:[%s310 + $0x14] sm:$0x1]
      %v1684 = vld [vmem:[%s310 + $0x18] sm:$0xf]
      %v1685 = vld [vmem:[%s310 + $0x1c] sm:$0xf]
      %v1686 = vld [vmem:[%s310 + $0x20] sm:$0x1]
      %v1687 = vld [vmem:[%s310 + $0x24] sm:$0xf]
      %v1688 = vld [vmem:[%s310 + $0x28] sm:$0xf]
      %v1689 = vld [vmem:[%s310 + $0x2c] sm:$0x1]
      %v1690 = vld [vmem:[%s310 + $0x30] sm:$0xf]
      %v1691 = vld [vmem:[%s310 + $0x34] sm:$0xf]
      %v1692 = vld [vmem:[%s310 + $0x38] sm:$0x1]
      %v1693 = vld [vmem:[%s310 + $0x3c] sm:$0xf]
      %v1694 = vld [vmem:[%s310 + $0x40] sm:$0xf]
      %v1695 = vld [vmem:[%s310 + $0x44] sm:$0x1]
      %v1696 = vld [vmem:[%s310 + $0x48] sm:$0xf]
      %v1697 = vld [vmem:[%s310 + $0x4c] sm:$0xf]
      %v1698 = vld [vmem:[%s310 + $0x50] sm:$0x1]
      %v1699 = vld [vmem:[%s310 + $0x54] sm:$0xf]
      %v1700 = vld [vmem:[%s310 + $0x58] sm:$0xf]
      %v1701 = vld [vmem:[%s310 + $0x5c] sm:$0x1]
      %v1702 = vld [vmem:[%s310 + $0x60] sm:$0xf]
      %v1703 = vld [vmem:[%s310 + $0x64] sm:$0xf]
      %v1704 = vld [vmem:[%s310 + $0x68] sm:$0x1]
      %v1705 = vld [vmem:[%s310 + $0x6c] sm:$0xf]
      %v1706 = vld [vmem:[%s310 + $0x70] sm:$0xf]
      %v1707 = vld [vmem:[%s310 + $0x74] sm:$0x1]
      %v1708 = vld [vmem:[%s310 + $0x78] sm:$0xf]
      %v1709 = vld [vmem:[%s310 + $0x7c] sm:$0xf]
      %v1710 = vld [vmem:[%s310 + $0x80] sm:$0x1]
      %v1711 = vld [vmem:[%s310 + $0x84] sm:$0xf]
      %v1712 = vld [vmem:[%s310 + $0x88] sm:$0xf]
      %v1713 = vld [vmem:[%s310 + $0x8c] sm:$0x1]
      %v1714 = vld [vmem:[%s310 + $0x90] sm:$0xf]
      %v1715 = vld [vmem:[%s310 + $0x94] sm:$0xf]
      %v1716 = vld [vmem:[%s310 + $0x98] sm:$0x1]
      %v1717 = vld [vmem:[%s310 + $0x9c] sm:$0xf]
      %v1718 = vld [vmem:[%s310 + $0xa0] sm:$0xf]
      %v1719 = vld [vmem:[%s310 + $0xa4] sm:$0x1]
      %v1720 = vld [vmem:[%s310 + $0xa8] sm:$0xf]
      %v1721 = vld [vmem:[%s310 + $0xac] sm:$0xf]
      %v1722 = vld [vmem:[%s310 + $0xb0] sm:$0x1]
      %v1723 = vld [vmem:[%s310 + $0xb4] sm:$0xf]
      %v1724 = vld [vmem:[%s310 + $0xb8] sm:$0xf]
      %v1725 = vld [vmem:[%s310 + $0xbc] sm:$0x1]
      %v1727 = vshrl.u32 %v1678, 16
      %v1729 = vrot.slane %v1727, 4
      %v1730 = vshll.u32 %v1678, 16
      %v1732 = vrot.slane %v1730, 5
      %v1733 = vor.u32 %v1729, %v1732
      %v1734 = vrot.slane %v1733, 4
      %v1736 = vshll.u32 %v1679, 16
      %v1738 = vrot.slane %v1736, 5
      %v1739 = vsel %vm995, %v1734, %v1738
      %v1740 = vshrl.u32 %v1679, 16
      %v1742 = vrot.slane %v1740, 4
      %v1743 = vor.u32 %v1742, %v1738
      %v1744 = vrot.slane %v1743, 4
      %v1746 = vshll.u32 %v1680, 16
      %v1748 = vrot.slane %v1746, 5
      %v1749 = vsel %vm995, %v1744, %v1748
      %v1751 = vshrl.u32 %v1681, 16
      %v1753 = vrot.slane %v1751, 4
      %v1754 = vshll.u32 %v1681, 16
      %v1756 = vrot.slane %v1754, 5
      %v1757 = vor.u32 %v1753, %v1756
      %v1758 = vrot.slane %v1757, 4
      %v1760 = vshll.u32 %v1682, 16
      %v1762 = vrot.slane %v1760, 5
      %v1763 = vsel %vm995, %v1758, %v1762
      %v1764 = vshrl.u32 %v1682, 16
      %v1766 = vrot.slane %v1764, 4
      %v1767 = vor.u32 %v1766, %v1762
      %v1768 = vrot.slane %v1767, 4
      %v1770 = vshll.u32 %v1683, 16
      %v1772 = vrot.slane %v1770, 5
      %v1773 = vsel %vm995, %v1768, %v1772
      %v1775 = vshrl.u32 %v1684, 16
      %v1777 = vrot.slane %v1775, 4
      %v1778 = vshll.u32 %v1684, 16
      %v1780 = vrot.slane %v1778, 5
      %v1781 = vor.u32 %v1777, %v1780
      %v1782 = vrot.slane %v1781, 4
      %v1784 = vshll.u32 %v1685, 16
      %v1786 = vrot.slane %v1784, 5
      %v1787 = vsel %vm995, %v1782, %v1786
      %v1788 = vshrl.u32 %v1685, 16
      %v1790 = vrot.slane %v1788, 4
      %v1791 = vor.u32 %v1790, %v1786
      %v1792 = vrot.slane %v1791, 4
      %v1794 = vshll.u32 %v1686, 16
      %v1796 = vrot.slane %v1794, 5
      %v1797 = vsel %vm995, %v1792, %v1796
      %v1799 = vshrl.u32 %v1687, 16
      %v1801 = vrot.slane %v1799, 4
      %v1802 = vshll.u32 %v1687, 16
      %v1804 = vrot.slane %v1802, 5
      %v1805 = vor.u32 %v1801, %v1804
      %v1806 = vrot.slane %v1805, 4
      %v1808 = vshll.u32 %v1688, 16
      %v1810 = vrot.slane %v1808, 5
      %v1811 = vsel %vm995, %v1806, %v1810
      %v1812 = vshrl.u32 %v1688, 16
      %v1814 = vrot.slane %v1812, 4
      %v1815 = vor.u32 %v1814, %v1810
      %v1816 = vrot.slane %v1815, 4
      %v1818 = vshll.u32 %v1689, 16
      %v1820 = vrot.slane %v1818, 5
      %v1821 = vsel %vm995, %v1816, %v1820
      %v1823 = vshrl.u32 %v1690, 16
      %v1825 = vrot.slane %v1823, 4
      %v1826 = vshll.u32 %v1690, 16
      %v1828 = vrot.slane %v1826, 5
      %v1829 = vor.u32 %v1825, %v1828
      %v1830 = vrot.slane %v1829, 4
      %v1832 = vshll.u32 %v1691, 16
      %v1834 = vrot.slane %v1832, 5
      %v1835 = vsel %vm995, %v1830, %v1834
      %v1836 = vshrl.u32 %v1691, 16
      %v1838 = vrot.slane %v1836, 4
      %v1839 = vor.u32 %v1838, %v1834
      %v1840 = vrot.slane %v1839, 4
      %v1842 = vshll.u32 %v1692, 16
      %v1844 = vrot.slane %v1842, 5
      %v1845 = vsel %vm995, %v1840, %v1844
      %v1847 = vshrl.u32 %v1693, 16
      %v1849 = vrot.slane %v1847, 4
      %v1850 = vshll.u32 %v1693, 16
      %v1852 = vrot.slane %v1850, 5
      %v1853 = vor.u32 %v1849, %v1852
      %v1854 = vrot.slane %v1853, 4
      %v1856 = vshll.u32 %v1694, 16
      %v1858 = vrot.slane %v1856, 5
      %v1859 = vsel %vm995, %v1854, %v1858
      %v1860 = vshrl.u32 %v1694, 16
      %v1862 = vrot.slane %v1860, 4
      %v1863 = vor.u32 %v1862, %v1858
      %v1864 = vrot.slane %v1863, 4
      %v1866 = vshll.u32 %v1695, 16
      %v1868 = vrot.slane %v1866, 5
      %v1869 = vsel %vm995, %v1864, %v1868
      %v1871 = vshrl.u32 %v1696, 16
      %v1873 = vrot.slane %v1871, 4
      %v1874 = vshll.u32 %v1696, 16
      %v1876 = vrot.slane %v1874, 5
      %v1877 = vor.u32 %v1873, %v1876
      %v1878 = vrot.slane %v1877, 4
      %v1880 = vshll.u32 %v1697, 16
      %v1882 = vrot.slane %v1880, 5
      %v1883 = vsel %vm995, %v1878, %v1882
      %v1884 = vshrl.u32 %v1697, 16
      %v1886 = vrot.slane %v1884, 4
      %v1887 = vor.u32 %v1886, %v1882
      %v1888 = vrot.slane %v1887, 4
      %v1890 = vshll.u32 %v1698, 16
      %v1892 = vrot.slane %v1890, 5
      %v1893 = vsel %vm995, %v1888, %v1892
      %v1895 = vshrl.u32 %v1699, 16
      %v1897 = vrot.slane %v1895, 4
      %v1898 = vshll.u32 %v1699, 16
      %v1900 = vrot.slane %v1898, 5
      %v1901 = vor.u32 %v1897, %v1900
      %v1902 = vrot.slane %v1901, 4
      %v1904 = vshll.u32 %v1700, 16
      %v1906 = vrot.slane %v1904, 5
      %v1907 = vsel %vm995, %v1902, %v1906
      %v1908 = vshrl.u32 %v1700, 16
      %v1910 = vrot.slane %v1908, 4
      %v1911 = vor.u32 %v1910, %v1906
      %v1912 = vrot.slane %v1911, 4
      %v1914 = vshll.u32 %v1701, 16
      %v1916 = vrot.slane %v1914, 5
      %v1917 = vsel %vm995, %v1912, %v1916
      %v1919 = vshrl.u32 %v1702, 16
      %v1921 = vrot.slane %v1919, 4
      %v1922 = vshll.u32 %v1702, 16
      %v1924 = vrot.slane %v1922, 5
      %v1925 = vor.u32 %v1921, %v1924
      %v1926 = vrot.slane %v1925, 4
      %v1928 = vshll.u32 %v1703, 16
      %v1930 = vrot.slane %v1928, 5
      %v1931 = vsel %vm995, %v1926, %v1930
      %v1932 = vshrl.u32 %v1703, 16
      %v1934 = vrot.slane %v1932, 4
      %v1935 = vor.u32 %v1934, %v1930
      %v1936 = vrot.slane %v1935, 4
      %v1938 = vshll.u32 %v1704, 16
      %v1940 = vrot.slane %v1938, 5
      %v1941 = vsel %vm995, %v1936, %v1940
      %v1943 = vshrl.u32 %v1705, 16
      %v1945 = vrot.slane %v1943, 4
      %v1946 = vshll.u32 %v1705, 16
      %v1948 = vrot.slane %v1946, 5
      %v1949 = vor.u32 %v1945, %v1948
      %v1950 = vrot.slane %v1949, 4
      %v1952 = vshll.u32 %v1706, 16
      %v1954 = vrot.slane %v1952, 5
      %v1955 = vsel %vm995, %v1950, %v1954
      %v1956 = vshrl.u32 %v1706, 16
      %v1958 = vrot.slane %v1956, 4
      %v1959 = vor.u32 %v1958, %v1954
      %v1960 = vrot.slane %v1959, 4
      %v1962 = vshll.u32 %v1707, 16
      %v1964 = vrot.slane %v1962, 5
      %v1965 = vsel %vm995, %v1960, %v1964
      %v1967 = vshrl.u32 %v1708, 16
      %v1969 = vrot.slane %v1967, 4
      %v1970 = vshll.u32 %v1708, 16
      %v1972 = vrot.slane %v1970, 5
      %v1973 = vor.u32 %v1969, %v1972
      %v1974 = vrot.slane %v1973, 4
      %v1976 = vshll.u32 %v1709, 16
      %v1978 = vrot.slane %v1976, 5
      %v1979 = vsel %vm995, %v1974, %v1978
      %v1980 = vshrl.u32 %v1709, 16
      %v1982 = vrot.slane %v1980, 4
      %v1983 = vor.u32 %v1982, %v1978
      %v1984 = vrot.slane %v1983, 4
      %v1986 = vshll.u32 %v1710, 16
      %v1988 = vrot.slane %v1986, 5
      %v1989 = vsel %vm995, %v1984, %v1988
      %v1991 = vshrl.u32 %v1711, 16
      %v1993 = vrot.slane %v1991, 4
      %v1994 = vshll.u32 %v1711, 16
      %v1996 = vrot.slane %v1994, 5
      %v1997 = vor.u32 %v1993, %v1996
      %v1998 = vrot.slane %v1997, 4
      %v2000 = vshll.u32 %v1712, 16
      %v2002 = vrot.slane %v2000, 5
      %v2003 = vsel %vm995, %v1998, %v2002
      %v2004 = vshrl.u32 %v1712, 16
      %v2006 = vrot.slane %v2004, 4
      %v2007 = vor.u32 %v2006, %v2002
      %v2008 = vrot.slane %v2007, 4
      %v2010 = vshll.u32 %v1713, 16
      %v2012 = vrot.slane %v2010, 5
      %v2013 = vsel %vm995, %v2008, %v2012
      %v2015 = vshrl.u32 %v1714, 16
      %v2017 = vrot.slane %v2015, 4
      %v2018 = vshll.u32 %v1714, 16
      %v2020 = vrot.slane %v2018, 5
      %v2021 = vor.u32 %v2017, %v2020
      %v2022 = vrot.slane %v2021, 4
      %v2024 = vshll.u32 %v1715, 16
      %v2026 = vrot.slane %v2024, 5
      %v2027 = vsel %vm995, %v2022, %v2026
      %v2028 = vshrl.u32 %v1715, 16
      %v2030 = vrot.slane %v2028, 4
      %v2031 = vor.u32 %v2030, %v2026
      %v2032 = vrot.slane %v2031, 4
      %v2034 = vshll.u32 %v1716, 16
      %v2036 = vrot.slane %v2034, 5
      %v2037 = vsel %vm995, %v2032, %v2036
      %v2039 = vshrl.u32 %v1717, 16
      %v2041 = vrot.slane %v2039, 4
      %v2042 = vshll.u32 %v1717, 16
      %v2044 = vrot.slane %v2042, 5
      %v2045 = vor.u32 %v2041, %v2044
      %v2046 = vrot.slane %v2045, 4
      %v2048 = vshll.u32 %v1718, 16
      %v2050 = vrot.slane %v2048, 5
      %v2051 = vsel %vm995, %v2046, %v2050
      %v2052 = vshrl.u32 %v1718, 16
      %v2054 = vrot.slane %v2052, 4
      %v2055 = vor.u32 %v2054, %v2050
      %v2056 = vrot.slane %v2055, 4
      %v2058 = vshll.u32 %v1719, 16
      %v2060 = vrot.slane %v2058, 5
      %v2061 = vsel %vm995, %v2056, %v2060
      %v2063 = vshrl.u32 %v1720, 16
      %v2065 = vrot.slane %v2063, 4
      %v2066 = vshll.u32 %v1720, 16
      %v2068 = vrot.slane %v2066, 5
      %v2069 = vor.u32 %v2065, %v2068
      %v2070 = vrot.slane %v2069, 4
      %v2072 = vshll.u32 %v1721, 16
      %v2074 = vrot.slane %v2072, 5
      %v2075 = vsel %vm995, %v2070, %v2074
      %v2076 = vshrl.u32 %v1721, 16
      %v2078 = vrot.slane %v2076, 4
      %v2079 = vor.u32 %v2078, %v2074
      %v2080 = vrot.slane %v2079, 4
      %v2082 = vshll.u32 %v1722, 16
      %v2084 = vrot.slane %v2082, 5
      %v2085 = vsel %vm995, %v2080, %v2084
      %v2087 = vshrl.u32 %v1723, 16
      %v2089 = vrot.slane %v2087, 4
      %v2090 = vshll.u32 %v1723, 16
      %v2092 = vrot.slane %v2090, 5
      %v2093 = vor.u32 %v2089, %v2092
      %v2094 = vrot.slane %v2093, 4
      %v2096 = vshll.u32 %v1724, 16
      %v2098 = vrot.slane %v2096, 5
      %v2099 = vsel %vm995, %v2094, %v2098
      %v2100 = vshrl.u32 %v1724, 16
      %v2102 = vrot.slane %v2100, 4
      %v2103 = vor.u32 %v2102, %v2098
      %v2104 = vrot.slane %v2103, 4
      %v2106 = vshll.u32 %v1725, 16
      %v2108 = vrot.slane %v2106, 5
      %v2109 = vsel %vm995, %v2104, %v2108
      %s2110 = scalar_lea.vmem %s3, 16
      %v2111 = vld [vmem:[%s2110] sm:$0xf]
      %v2112 = vld [vmem:[%s2110 + $0x4] sm:$0xf]
      %v2113 = vld [vmem:[%s2110 + $0x8] sm:$0xf]
      %v2114 = vld [vmem:[%s2110 + $0xc] sm:$0xf]
      %v2115 = vunpack.c.l.b16 %v1739
      %v2116 = vunpack.c.l.b16 %v1749
      %v2117 = vunpack.c.l.b16 %v1763
      %v2118 = vunpack.c.l.b16 %v1773
      %v2119 = vunpack.c.l.b16 %v1787
      %v2120 = vunpack.c.l.b16 %v1797
      %v2121 = vunpack.c.l.b16 %v1811
      %v2122 = vunpack.c.l.b16 %v1821
      %v2123 = vunpack.c.l.b16 %v1835
      %v2124 = vunpack.c.l.b16 %v1845
      %v2125 = vunpack.c.l.b16 %v1859
      %v2126 = vunpack.c.l.b16 %v1869
      %v2127 = vunpack.c.l.b16 %v1883
      %v2128 = vunpack.c.l.b16 %v1893
      %v2129 = vunpack.c.l.b16 %v1907
      %v2130 = vunpack.c.l.b16 %v1917
      %v2131 = vunpack.c.l.b16 %v1931
      %v2132 = vunpack.c.l.b16 %v1941
      %v2133 = vunpack.c.l.b16 %v1955
      %v2134 = vunpack.c.l.b16 %v1965
      %v2135 = vunpack.c.l.b16 %v1979
      %v2136 = vunpack.c.l.b16 %v1989
      %v2137 = vunpack.c.l.b16 %v2003
      %v2138 = vunpack.c.l.b16 %v2013
      %v2139 = vunpack.c.l.b16 %v2027
      %v2140 = vunpack.c.l.b16 %v2037
      %v2141 = vunpack.c.l.b16 %v2051
      %v2142 = vunpack.c.l.b16 %v2061
      %v2143 = vunpack.c.l.b16 %v2075
      %v2144 = vunpack.c.l.b16 %v2085
      %v2145 = vunpack.c.l.b16 %v2099
      %v2146 = vunpack.c.l.b16 %v2109
      %v2147 = vpack.c.b16 %v2116, %v2115
      %v2148 = vpack.c.b16 %v2118, %v2117
      %v2149 = vpack.c.b16 %v2120, %v2119
      %v2150 = vpack.c.b16 %v2122, %v2121
      %v2151 = vpack.c.b16 %v2124, %v2123
      %v2152 = vpack.c.b16 %v2126, %v2125
      %v2153 = vpack.c.b16 %v2128, %v2127
      %v2154 = vpack.c.b16 %v2130, %v2129
      %v2155 = vpack.c.b16 %v2132, %v2131
      %v2156 = vpack.c.b16 %v2134, %v2133
      %v2157 = vpack.c.b16 %v2136, %v2135
      %v2158 = vpack.c.b16 %v2138, %v2137
      %v2159 = vpack.c.b16 %v2140, %v2139
      %v2160 = vpack.c.b16 %v2142, %v2141
      %v2161 = vpack.c.b16 %v2144, %v2143
      %v2162 = vpack.c.b16 %v2146, %v2145
      %v2167 = vunpack.c.l.b16 %v2111
      %v2168 = vunpack.c.l.b16 %v2112
      %v2169 = vunpack.c.l.b16 %v2113
      %v2170 = vunpack.c.l.b16 %v2114
      %v2171 = vpack.c.b16 %v2168, %v2167
      %v2172 = vpack.c.b16 %v2170, %v2169
      %v2176 = vsel %vm439, %v2147, 0
      %v2179 = vsel %vm439, %v2148, 0
      %v2182 = vsel %vm439, %v2149, 0
      %v2185 = vsel %vm439, %v2150, 0
      %v2188 = vsel %vm439, %v2151, 0
      %v2191 = vsel %vm439, %v2152, 0
      %v2194 = vsel %vm439, %v2153, 0
      %v2197 = vsel %vm439, %v2154, 0
      %v2200 = vsel %vm439, %v2155, 0
      %v2203 = vsel %vm439, %v2156, 0
      %v2206 = vsel %vm439, %v2157, 0
      %v2209 = vsel %vm439, %v2158, 0
      %v2212 = vsel %vm439, %v2159, 0
      %v2215 = vsel %vm439, %v2160, 0
      %v2218 = vsel %vm439, %v2161, 0
      %v2221 = vsel %vm439, %v2162, 0
      %2223 = vmatprep.subr.bf16.mxu0 0
      %2224 = vmatpush1.bf16.msra.mxu0 0
      %2225 = vmatprep.subr.bf16.mxu0 0
      %2226 = vmatpush1.bf16.msra.mxu0 0
      %2227 = vmatprep.subr.bf16.mxu0 0
      %2228 = vmatpush1.bf16.msra.mxu0 0
      %2229 = vmatprep.subr.bf16.mxu0 0
      %2230 = vmatpush1.bf16.msra.mxu0 0
      %2231 = vmatprep.subr.bf16.mxu0 0
      %2232 = vmatpush1.bf16.msra.mxu0 0
      %2233 = vmatprep.subr.bf16.mxu0 0
      %2234 = vmatpush1.bf16.msra.mxu0 0
      %2235 = vmatprep.subr.bf16.mxu0 0
      %2236 = vmatpush1.bf16.msra.mxu0 %v2172
      %2237 = vmatprep.subr.bf16.mxu0 0
      %2238 = vmatpush1.bf16.msra.mxu0 %v2171
      %2239 = vmatprep.subr.bf16.mxu0 0
      %2240 = vmatpush2.bf16.msra.mxu0 0
      %2241 = vmatprep.subr.bf16.mxu0 0
      %2242 = vmatpush2.bf16.msra.mxu0 0
      %2243 = vmatprep.subr.bf16.mxu0 0
      %2244 = vmatpush2.bf16.msra.mxu0 0
      %2245 = vmatprep.subr.bf16.mxu0 0
      %2246 = vmatpush2.bf16.msra.mxu0 0
      %2247 = vmatprep.subr.bf16.mxu0 0
      %2248 = vmatpush2.bf16.msra.mxu0 0
      %2249 = vmatprep.subr.bf16.mxu0 0
      %2250 = vmatpush2.bf16.msra.mxu0 0
      %2251 = vmatprep.subr.bf16.mxu0 0
      %2252 = vmatpush2.bf16.msra.mxu0 0
      %2253 = vmatprep.subr.bf16.mxu0 0
      %2254 = vmatpush2.bf16.msra.mxu0 0
      %2255 = vmatprep.mubr.bf16.mxu0 0
      %2256 = vmatmul.mubr.bf16.gmra.mxu0 %v2176
      %v2257 = vpop.f32.mrf.mxu0
      %v2258 = vadd.f32 0.0, %v2257
      %v2259 = vpop.f32.mrf.mxu0
      %v2260 = vpop.f32.mrf.mxu0
      %v2261 = vadd.f32 0.0, %v2260
      %v2262 = vpop.f32.mrf.mxu0
      %2263 = vmatprep.mubr.bf16.mxu0 0
      %2264 = vmatmul.mubr.bf16.gmra.mxu0 %v2179
      %v2265 = vpop.f32.mrf.mxu0
      %v2266 = vadd.f32 0.0, %v2265
      %v2267 = vpop.f32.mrf.mxu0
      %v2268 = vpop.f32.mrf.mxu0
      %v2269 = vadd.f32 0.0, %v2268
      %v2270 = vpop.f32.mrf.mxu0
      %2271 = vmatprep.mubr.bf16.mxu0 0
      %2272 = vmatmul.mubr.bf16.gmra.mxu0 %v2182
      %v2273 = vpop.f32.mrf.mxu0
      %v2274 = vadd.f32 0.0, %v2273
      %v2275 = vpop.f32.mrf.mxu0
      %v2276 = vpop.f32.mrf.mxu0
      %v2277 = vadd.f32 0.0, %v2276
      %v2278 = vpop.f32.mrf.mxu0
      %2279 = vmatprep.mubr.bf16.mxu0 0
      %2280 = vmatmul.mubr.bf16.gmra.mxu0 %v2185
      %v2281 = vpop.f32.mrf.mxu0
      %v2282 = vadd.f32 0.0, %v2281
      %v2283 = vpop.f32.mrf.mxu0
      %v2284 = vpop.f32.mrf.mxu0
      %v2285 = vadd.f32 0.0, %v2284
      %v2286 = vpop.f32.mrf.mxu0
      %2287 = vmatprep.mubr.bf16.mxu0 0
      %2288 = vmatmul.mubr.bf16.gmra.mxu0 %v2188
      %v2289 = vpop.f32.mrf.mxu0
      %v2290 = vadd.f32 0.0, %v2289
      %v2291 = vpop.f32.mrf.mxu0
      %v2292 = vpop.f32.mrf.mxu0
      %v2293 = vadd.f32 0.0, %v2292
      %v2294 = vpop.f32.mrf.mxu0
      %2295 = vmatprep.mubr.bf16.mxu0 0
      %2296 = vmatmul.mubr.bf16.gmra.mxu0 %v2191
      %v2297 = vpop.f32.mrf.mxu0
      %v2298 = vadd.f32 0.0, %v2297
      %v2299 = vpop.f32.mrf.mxu0
      %v2300 = vpop.f32.mrf.mxu0
      %v2301 = vadd.f32 0.0, %v2300
      %v2302 = vpop.f32.mrf.mxu0
      %2303 = vmatprep.mubr.bf16.mxu0 0
      %2304 = vmatmul.mubr.bf16.gmra.mxu0 %v2194
      %v2305 = vpop.f32.mrf.mxu0
      %v2306 = vadd.f32 0.0, %v2305
      %v2307 = vpop.f32.mrf.mxu0
      %v2308 = vpop.f32.mrf.mxu0
      %v2309 = vadd.f32 0.0, %v2308
      %v2310 = vpop.f32.mrf.mxu0
      %2311 = vmatprep.mubr.bf16.mxu0 0
      %2312 = vmatmul.mubr.bf16.gmra.mxu0 %v2197
      %v2313 = vpop.f32.mrf.mxu0
      %v2314 = vadd.f32 0.0, %v2313
      %v2315 = vpop.f32.mrf.mxu0
      %v2316 = vpop.f32.mrf.mxu0
      %v2317 = vadd.f32 0.0, %v2316
      %v2318 = vpop.f32.mrf.mxu0
      %2319 = vmatprep.mubr.bf16.mxu0 0
      %2320 = vmatmul.mubr.bf16.gmra.mxu0 %v2200
      %v2321 = vpop.f32.mrf.mxu0
      %v2322 = vadd.f32 0.0, %v2321
      %v2323 = vpop.f32.mrf.mxu0
      %v2324 = vpop.f32.mrf.mxu0
      %v2325 = vadd.f32 0.0, %v2324
      %v2326 = vpop.f32.mrf.mxu0
      %2327 = vmatprep.mubr.bf16.mxu0 0
      %2328 = vmatmul.mubr.bf16.gmra.mxu0 %v2203
      %v2329 = vpop.f32.mrf.mxu0
      %v2330 = vadd.f32 0.0, %v2329
      %v2331 = vpop.f32.mrf.mxu0
      %v2332 = vpop.f32.mrf.mxu0
      %v2333 = vadd.f32 0.0, %v2332
      %v2334 = vpop.f32.mrf.mxu0
      %2335 = vmatprep.mubr.bf16.mxu0 0
      %2336 = vmatmul.mubr.bf16.gmra.mxu0 %v2206
      %v2337 = vpop.f32.mrf.mxu0
      %v2338 = vadd.f32 0.0, %v2337
      %v2339 = vpop.f32.mrf.mxu0
      %v2340 = vpop.f32.mrf.mxu0
      %v2341 = vadd.f32 0.0, %v2340
      %v2342 = vpop.f32.mrf.mxu0
      %2343 = vmatprep.mubr.bf16.mxu0 0
      %2344 = vmatmul.mubr.bf16.gmra.mxu0 %v2209
      %v2345 = vpop.f32.mrf.mxu0
      %v2346 = vadd.f32 0.0, %v2345
      %v2347 = vpop.f32.mrf.mxu0
      %v2348 = vpop.f32.mrf.mxu0
      %v2349 = vadd.f32 0.0, %v2348
      %v2350 = vpop.f32.mrf.mxu0
      %2351 = vmatprep.mubr.bf16.mxu0 0
      %2352 = vmatmul.mubr.bf16.gmra.mxu0 %v2212
      %v2353 = vpop.f32.mrf.mxu0
      %v2354 = vadd.f32 0.0, %v2353
      %v2355 = vpop.f32.mrf.mxu0
      %v2356 = vpop.f32.mrf.mxu0
      %v2357 = vadd.f32 0.0, %v2356
      %v2358 = vpop.f32.mrf.mxu0
      %2359 = vmatprep.mubr.bf16.mxu0 0
      %2360 = vmatmul.mubr.bf16.gmra.mxu0 %v2215
      %v2361 = vpop.f32.mrf.mxu0
      %v2362 = vadd.f32 0.0, %v2361
      %v2363 = vpop.f32.mrf.mxu0
      %v2364 = vpop.f32.mrf.mxu0
      %v2365 = vadd.f32 0.0, %v2364
      %v2366 = vpop.f32.mrf.mxu0
      %2367 = vmatprep.mubr.bf16.mxu0 0
      %2368 = vmatmul.mubr.bf16.gmra.mxu0 %v2218
      %v2369 = vpop.f32.mrf.mxu0
      %v2370 = vadd.f32 0.0, %v2369
      %v2371 = vpop.f32.mrf.mxu0
      %v2372 = vpop.f32.mrf.mxu0
      %v2373 = vadd.f32 0.0, %v2372
      %v2374 = vpop.f32.mrf.mxu0
      %2375 = vmatprep.mubr.bf16.mxu0 0
      %2376 = vmatmul.mubr.bf16.gmra.mxu0 %v2221
      %v2377 = vpop.f32.mrf.mxu0
      %v2378 = vadd.f32 0.0, %v2377
      %v2379 = vpop.f32.mrf.mxu0
      %v2380 = vpop.f32.mrf.mxu0
      %v2381 = vadd.f32 0.0, %v2380
      %v2382 = vpop.f32.mrf.mxu0
      %2383 = vdwg.mxu0
      %v2384 = vadd.f32 %v1646, %v2258
      %v2385 = vadd.f32 %v1647, %v2261
      %v2386 = vadd.f32 %v1648, %v2266
      %v2387 = vadd.f32 %v1649, %v2269
      %v2388 = vadd.f32 %v1650, %v2274
      %v2389 = vadd.f32 %v1651, %v2277
      %v2390 = vadd.f32 %v1652, %v2282
      %v2391 = vadd.f32 %v1653, %v2285
      %v2392 = vadd.f32 %v1654, %v2290
      %v2393 = vadd.f32 %v1655, %v2293
      %v2394 = vadd.f32 %v1656, %v2298
      %v2395 = vadd.f32 %v1657, %v2301
      %v2396 = vadd.f32 %v1658, %v2306
      %v2397 = vadd.f32 %v1659, %v2309
      %v2398 = vadd.f32 %v1660, %v2314
      %v2399 = vadd.f32 %v1661, %v2317
      %v2400 = vadd.f32 %v1662, %v2322
      %v2401 = vadd.f32 %v1663, %v2325
      %v2402 = vadd.f32 %v1664, %v2330
      %v2403 = vadd.f32 %v1665, %v2333
      %v2404 = vadd.f32 %v1666, %v2338
      %v2405 = vadd.f32 %v1667, %v2341
      %v2406 = vadd.f32 %v1668, %v2346
      %v2407 = vadd.f32 %v1669, %v2349
      %v2408 = vadd.f32 %v1670, %v2354
      %v2409 = vadd.f32 %v1671, %v2357
      %v2410 = vadd.f32 %v1672, %v2362
      %v2411 = vadd.f32 %v1673, %v2365
      %v2412 = vadd.f32 %v1674, %v2370
      %v2413 = vadd.f32 %v1675, %v2373
      %v2414 = vadd.f32 %v1676, %v2378
      %v2415 = vadd.f32 %v1677, %v2381
      %v2416 = vld [vmem:[%s274] sm:$0xe]
      %v2417 = vld [vmem:[%s274 + $0xc] sm:$0xe]
      %v2418 = vld [vmem:[%s274 + $0x18] sm:$0xe]
      %v2419 = vld [vmem:[%s274 + $0x24] sm:$0xe]
      %v2420 = vld [vmem:[%s274 + $0x30] sm:$0xe]
      %v2421 = vld [vmem:[%s274 + $0x3c] sm:$0xe]
      %v2422 = vld [vmem:[%s274 + $0x48] sm:$0xe]
      %v2423 = vld [vmem:[%s274 + $0x54] sm:$0xe]
      %v2424 = vld [vmem:[%s274 + $0x60] sm:$0xe]
      %v2425 = vld [vmem:[%s274 + $0x6c] sm:$0xe]
      %v2426 = vld [vmem:[%s274 + $0x78] sm:$0xe]
      %v2427 = vld [vmem:[%s274 + $0x84] sm:$0xe]
      %v2428 = vld [vmem:[%s274 + $0x90] sm:$0xe]
      %v2429 = vld [vmem:[%s274 + $0x9c] sm:$0xe]
      %v2430 = vld [vmem:[%s274 + $0xa8] sm:$0xe]
      %v2431 = vld [vmem:[%s274 + $0xb4] sm:$0xe]
      %vm2480 = vcmask 1042432
      %vm2481 = vcmask 1046532
      %vm2482 = vmor %vm2480, %vm2481
      %v2483 = vrot.slane %v2416, 5
      %v2484 = vrot.slane %v2483, 4
      %v2485 = vrot.slane %v946, 5
      %v2486 = vsel %vm2482, %v2484, %v2485
      %v2487 = vrot.slane %v2485, 4
      %v2488 = vrot.slane %v947, 5
      %v2489 = vsel %vm2482, %v2487, %v2488
      %v2490 = vrot.slane %v2417, 5
      %v2491 = vrot.slane %v2490, 4
      %v2492 = vrot.slane %v949, 5
      %v2493 = vsel %vm2482, %v2491, %v2492
      %v2494 = vrot.slane %v2492, 4
      %v2495 = vrot.slane %v950, 5
      %v2496 = vsel %vm2482, %v2494, %v2495
      %v2497 = vrot.slane %v2418, 5
      %v2498 = vrot.slane %v2497, 4
      %v2499 = vrot.slane %v952, 5
      %v2500 = vsel %vm2482, %v2498, %v2499
      %v2501 = vrot.slane %v2499, 4
      %v2502 = vrot.slane %v953, 5
      %v2503 = vsel %vm2482, %v2501, %v2502
      %v2504 = vrot.slane %v2419, 5
      %v2505 = vrot.slane %v2504, 4
      %v2506 = vrot.slane %v955, 5
      %v2507 = vsel %vm2482, %v2505, %v2506
      %v2508 = vrot.slane %v2506, 4
      %v2509 = vrot.slane %v956, 5
      %v2510 = vsel %vm2482, %v2508, %v2509
      %v2511 = vrot.slane %v2420, 5
      %v2512 = vrot.slane %v2511, 4
      %v2513 = vrot.slane %v958, 5
      %v2514 = vsel %vm2482, %v2512, %v2513
      %v2515 = vrot.slane %v2513, 4
      %v2516 = vrot.slane %v959, 5
      %v2517 = vsel %vm2482, %v2515, %v2516
      %v2518 = vrot.slane %v2421, 5
      %v2519 = vrot.slane %v2518, 4
      %v2520 = vrot.slane %v961, 5
      %v2521 = vsel %vm2482, %v2519, %v2520
      %v2522 = vrot.slane %v2520, 4
      %v2523 = vrot.slane %v962, 5
      %v2524 = vsel %vm2482, %v2522, %v2523
      %v2525 = vrot.slane %v2422, 5
      %v2526 = vrot.slane %v2525, 4
      %v2527 = vrot.slane %v964, 5
      %v2528 = vsel %vm2482, %v2526, %v2527
      %v2529 = vrot.slane %v2527, 4
      %v2530 = vrot.slane %v965, 5
      %v2531 = vsel %vm2482, %v2529, %v2530
      %v2532 = vrot.slane %v2423, 5
      %v2533 = vrot.slane %v2532, 4
      %v2534 = vrot.slane %v967, 5
      %v2535 = vsel %vm2482, %v2533, %v2534
      %v2536 = vrot.slane %v2534, 4
      %v2537 = vrot.slane %v968, 5
      %v2538 = vsel %vm2482, %v2536, %v2537
      %v2539 = vrot.slane %v2424, 5
      %v2540 = vrot.slane %v2539, 4
      %v2541 = vrot.slane %v970, 5
      %v2542 = vsel %vm2482, %v2540, %v2541
      %v2543 = vrot.slane %v2541, 4
      %v2544 = vrot.slane %v971, 5
      %v2545 = vsel %vm2482, %v2543, %v2544
      %v2546 = vrot.slane %v2425, 5
      %v2547 = vrot.slane %v2546, 4
      %v2548 = vrot.slane %v973, 5
      %v2549 = vsel %vm2482, %v2547, %v2548
      %v2550 = vrot.slane %v2548, 4
      %v2551 = vrot.slane %v974, 5
      %v2552 = vsel %vm2482, %v2550, %v2551
      %v2553 = vrot.slane %v2426, 5
      %v2554 = vrot.slane %v2553, 4
      %v2555 = vrot.slane %v976, 5
      %v2556 = vsel %vm2482, %v2554, %v2555
      %v2557 = vrot.slane %v2555, 4
      %v2558 = vrot.slane %v977, 5
      %v2559 = vsel %vm2482, %v2557, %v2558
      %v2560 = vrot.slane %v2427, 5
      %v2561 = vrot.slane %v2560, 4
      %v2562 = vrot.slane %v979, 5
      %v2563 = vsel %vm2482, %v2561, %v2562
      %v2564 = vrot.slane %v2562, 4
      %v2565 = vrot.slane %v980, 5
      %v2566 = vsel %vm2482, %v2564, %v2565
      %v2567 = vrot.slane %v2428, 5
      %v2568 = vrot.slane %v2567, 4
      %v2569 = vrot.slane %v982, 5
      %v2570 = vsel %vm2482, %v2568, %v2569
      %v2571 = vrot.slane %v2569, 4
      %v2572 = vrot.slane %v983, 5
      %v2573 = vsel %vm2482, %v2571, %v2572
      %v2574 = vrot.slane %v2429, 5
      %v2575 = vrot.slane %v2574, 4
      %v2576 = vrot.slane %v985, 5
      %v2577 = vsel %vm2482, %v2575, %v2576
      %v2578 = vrot.slane %v2576, 4
      %v2579 = vrot.slane %v986, 5
      %v2580 = vsel %vm2482, %v2578, %v2579
      %v2581 = vrot.slane %v2430, 5
      %v2582 = vrot.slane %v2581, 4
      %v2583 = vrot.slane %v988, 5
      %v2584 = vsel %vm2482, %v2582, %v2583
      %v2585 = vrot.slane %v2583, 4
      %v2586 = vrot.slane %v989, 5
      %v2587 = vsel %vm2482, %v2585, %v2586
      %v2588 = vrot.slane %v2431, 5
      %v2589 = vrot.slane %v2588, 4
      %v2590 = vrot.slane %v991, 5
      %v2591 = vsel %vm2482, %v2589, %v2590
      %v2592 = vrot.slane %v2590, 4
      %v2593 = vrot.slane %v992, 5
      %v2594 = vsel %vm2482, %v2592, %v2593
      %s2595 = scalar_lea.vmem %s2, 16
      %v2596 = vld [vmem:[%s2595] sm:$0xf]
      %v2597 = vld [vmem:[%s2595 + $0x4] sm:$0xf]
      %v2598 = vunpack.c.l.b16 %v2486
      %v2599 = vunpack.c.l.b16 %v2489
      %v2600 = vunpack.c.l.b16 %v2493
      %v2601 = vunpack.c.l.b16 %v2496
      %v2602 = vunpack.c.l.b16 %v2500
      %v2603 = vunpack.c.l.b16 %v2503
      %v2604 = vunpack.c.l.b16 %v2507
      %v2605 = vunpack.c.l.b16 %v2510
      %v2606 = vunpack.c.l.b16 %v2514
      %v2607 = vunpack.c.l.b16 %v2517
      %v2608 = vunpack.c.l.b16 %v2521
      %v2609 = vunpack.c.l.b16 %v2524
      %v2610 = vunpack.c.l.b16 %v2528
      %v2611 = vunpack.c.l.b16 %v2531
      %v2612 = vunpack.c.l.b16 %v2535
      %v2613 = vunpack.c.l.b16 %v2538
      %v2614 = vunpack.c.l.b16 %v2542
      %v2615 = vunpack.c.l.b16 %v2545
      %v2616 = vunpack.c.l.b16 %v2549
      %v2617 = vunpack.c.l.b16 %v2552
      %v2618 = vunpack.c.l.b16 %v2556
      %v2619 = vunpack.c.l.b16 %v2559
      %v2620 = vunpack.c.l.b16 %v2563
      %v2621 = vunpack.c.l.b16 %v2566
      %v2622 = vunpack.c.l.b16 %v2570
      %v2623 = vunpack.c.l.b16 %v2573
      %v2624 = vunpack.c.l.b16 %v2577
      %v2625 = vunpack.c.l.b16 %v2580
      %v2626 = vunpack.c.l.b16 %v2584
      %v2627 = vunpack.c.l.b16 %v2587
      %v2628 = vunpack.c.l.b16 %v2591
      %v2629 = vunpack.c.l.b16 %v2594
      %v2630 = vpack.c.b16 %v2599, %v2598
      %v2631 = vpack.c.b16 %v2601, %v2600
      %v2632 = vpack.c.b16 %v2603, %v2602
      %v2633 = vpack.c.b16 %v2605, %v2604
      %v2634 = vpack.c.b16 %v2607, %v2606
      %v2635 = vpack.c.b16 %v2609, %v2608
      %v2636 = vpack.c.b16 %v2611, %v2610
      %v2637 = vpack.c.b16 %v2613, %v2612
      %v2638 = vpack.c.b16 %v2615, %v2614
      %v2639 = vpack.c.b16 %v2617, %v2616
      %v2640 = vpack.c.b16 %v2619, %v2618
      %v2641 = vpack.c.b16 %v2621, %v2620
      %v2642 = vpack.c.b16 %v2623, %v2622
      %v2643 = vpack.c.b16 %v2625, %v2624
      %v2644 = vpack.c.b16 %v2627, %v2626
      %v2645 = vpack.c.b16 %v2629, %v2628
      %v2648 = vunpack.c.l.b16 %v2596
      %v2649 = vunpack.c.l.b16 %v2597
      %v2650 = vpack.c.b16 %v2649, %v2648
      %v2653 = vsel %vm735, %v2630, 0
      %v2656 = vsel %vm735, %v2631, 0
      %v2659 = vsel %vm735, %v2632, 0
      %v2662 = vsel %vm735, %v2633, 0
      %v2665 = vsel %vm735, %v2634, 0
      %v2668 = vsel %vm735, %v2635, 0
      %v2671 = vsel %vm735, %v2636, 0
      %v2674 = vsel %vm735, %v2637, 0
      %v2677 = vsel %vm735, %v2638, 0
      %v2680 = vsel %vm735, %v2639, 0
      %v2683 = vsel %vm735, %v2640, 0
      %v2686 = vsel %vm735, %v2641, 0
      %v2689 = vsel %vm735, %v2642, 0
      %v2692 = vsel %vm735, %v2643, 0
      %v2695 = vsel %vm735, %v2644, 0
      %v2698 = vsel %vm735, %v2645, 0
      %2700 = vmatprep.subr.bf16.mxu0 0
      %2701 = vmatpush1.bf16.msra.mxu0 0
      %2702 = vmatprep.subr.bf16.mxu0 0
      %2703 = vmatpush1.bf16.msra.mxu0 0
      %2704 = vmatprep.subr.bf16.mxu0 0
      %2705 = vmatpush1.bf16.msra.mxu0 0
      %2706 = vmatprep.subr.bf16.mxu0 0
      %2707 = vmatpush1.bf16.msra.mxu0 0
      %2708 = vmatprep.subr.bf16.mxu0 0
      %2709 = vmatpush1.bf16.msra.mxu0 0
      %2710 = vmatprep.subr.bf16.mxu0 0
      %2711 = vmatpush1.bf16.msra.mxu0 0
      %2712 = vmatprep.subr.bf16.mxu0 0
      %2713 = vmatpush1.bf16.msra.mxu0 0
      %2714 = vmatprep.subr.bf16.mxu0 0
      %2715 = vmatpush1.bf16.msra.mxu0 %v2650
      %2716 = vmatprep.subr.bf16.mxu0 0
      %2717 = vmatpush2.bf16.msra.mxu0 0
      %2718 = vmatprep.subr.bf16.mxu0 0
      %2719 = vmatpush2.bf16.msra.mxu0 0
      %2720 = vmatprep.subr.bf16.mxu0 0
      %2721 = vmatpush2.bf16.msra.mxu0 0
      %2722 = vmatprep.subr.bf16.mxu0 0
      %2723 = vmatpush2.bf16.msra.mxu0 0
      %2724 = vmatprep.subr.bf16.mxu0 0
      %2725 = vmatpush2.bf16.msra.mxu0 0
      %2726 = vmatprep.subr.bf16.mxu0 0
      %2727 = vmatpush2.bf16.msra.mxu0 0
      %2728 = vmatprep.subr.bf16.mxu0 0
      %2729 = vmatpush2.bf16.msra.mxu0 0
      %2730 = vmatprep.subr.bf16.mxu0 0
      %2731 = vmatpush2.bf16.msra.mxu0 0
      %2732 = vmatprep.mubr.bf16.mxu0 0
      %2733 = vmatmul.mubr.bf16.gmra.mxu0 %v2653
      %v2734 = vpop.f32.mrf.mxu0
      %v2735 = vadd.f32 0.0, %v2734
      %v2736 = vpop.f32.mrf.mxu0
      %v2737 = vpop.f32.mrf.mxu0
      %v2738 = vadd.f32 0.0, %v2737
      %v2739 = vpop.f32.mrf.mxu0
      %2740 = vmatprep.mubr.bf16.mxu0 0
      %2741 = vmatmul.mubr.bf16.gmra.mxu0 %v2656
      %v2742 = vpop.f32.mrf.mxu0
      %v2743 = vadd.f32 0.0, %v2742
      %v2744 = vpop.f32.mrf.mxu0
      %v2745 = vpop.f32.mrf.mxu0
      %v2746 = vadd.f32 0.0, %v2745
      %v2747 = vpop.f32.mrf.mxu0
      %2748 = vmatprep.mubr.bf16.mxu0 0
      %2749 = vmatmul.mubr.bf16.gmra.mxu0 %v2659
      %v2750 = vpop.f32.mrf.mxu0
      %v2751 = vadd.f32 0.0, %v2750
      %v2752 = vpop.f32.mrf.mxu0
      %v2753 = vpop.f32.mrf.mxu0
      %v2754 = vadd.f32 0.0, %v2753
      %v2755 = vpop.f32.mrf.mxu0
      %2756 = vmatprep.mubr.bf16.mxu0 0
      %2757 = vmatmul.mubr.bf16.gmra.mxu0 %v2662
      %v2758 = vpop.f32.mrf.mxu0
      %v2759 = vadd.f32 0.0, %v2758
      %v2760 = vpop.f32.mrf.mxu0
      %v2761 = vpop.f32.mrf.mxu0
      %v2762 = vadd.f32 0.0, %v2761
      %v2763 = vpop.f32.mrf.mxu0
      %2764 = vmatprep.mubr.bf16.mxu0 0
      %2765 = vmatmul.mubr.bf16.gmra.mxu0 %v2665
      %v2766 = vpop.f32.mrf.mxu0
      %v2767 = vadd.f32 0.0, %v2766
      %v2768 = vpop.f32.mrf.mxu0
      %v2769 = vpop.f32.mrf.mxu0
      %v2770 = vadd.f32 0.0, %v2769
      %v2771 = vpop.f32.mrf.mxu0
      %2772 = vmatprep.mubr.bf16.mxu0 0
      %2773 = vmatmul.mubr.bf16.gmra.mxu0 %v2668
      %v2774 = vpop.f32.mrf.mxu0
      %v2775 = vadd.f32 0.0, %v2774
      %v2776 = vpop.f32.mrf.mxu0
      %v2777 = vpop.f32.mrf.mxu0
      %v2778 = vadd.f32 0.0, %v2777
      %v2779 = vpop.f32.mrf.mxu0
      %2780 = vmatprep.mubr.bf16.mxu0 0
      %2781 = vmatmul.mubr.bf16.gmra.mxu0 %v2671
      %v2782 = vpop.f32.mrf.mxu0
      %v2783 = vadd.f32 0.0, %v2782
      %v2784 = vpop.f32.mrf.mxu0
      %v2785 = vpop.f32.mrf.mxu0
      %v2786 = vadd.f32 0.0, %v2785
      %v2787 = vpop.f32.mrf.mxu0
      %2788 = vmatprep.mubr.bf16.mxu0 0
      %2789 = vmatmul.mubr.bf16.gmra.mxu0 %v2674
      %v2790 = vpop.f32.mrf.mxu0
      %v2791 = vadd.f32 0.0, %v2790
      %v2792 = vpop.f32.mrf.mxu0
      %v2793 = vpop.f32.mrf.mxu0
      %v2794 = vadd.f32 0.0, %v2793
      %v2795 = vpop.f32.mrf.mxu0
      %2796 = vmatprep.mubr.bf16.mxu0 0
      %2797 = vmatmul.mubr.bf16.gmra.mxu0 %v2677
      %v2798 = vpop.f32.mrf.mxu0
      %v2799 = vadd.f32 0.0, %v2798
      %v2800 = vpop.f32.mrf.mxu0
      %v2801 = vpop.f32.mrf.mxu0
      %v2802 = vadd.f32 0.0, %v2801
      %v2803 = vpop.f32.mrf.mxu0
      %2804 = vmatprep.mubr.bf16.mxu0 0
      %2805 = vmatmul.mubr.bf16.gmra.mxu0 %v2680
      %v2806 = vpop.f32.mrf.mxu0
      %v2807 = vadd.f32 0.0, %v2806
      %v2808 = vpop.f32.mrf.mxu0
      %v2809 = vpop.f32.mrf.mxu0
      %v2810 = vadd.f32 0.0, %v2809
      %v2811 = vpop.f32.mrf.mxu0
      %2812 = vmatprep.mubr.bf16.mxu0 0
      %2813 = vmatmul.mubr.bf16.gmra.mxu0 %v2683
      %v2814 = vpop.f32.mrf.mxu0
      %v2815 = vadd.f32 0.0, %v2814
      %v2816 = vpop.f32.mrf.mxu0
      %v2817 = vpop.f32.mrf.mxu0
      %v2818 = vadd.f32 0.0, %v2817
      %v2819 = vpop.f32.mrf.mxu0
      %2820 = vmatprep.mubr.bf16.mxu0 0
      %2821 = vmatmul.mubr.bf16.gmra.mxu0 %v2686
      %v2822 = vpop.f32.mrf.mxu0
      %v2823 = vadd.f32 0.0, %v2822
      %v2824 = vpop.f32.mrf.mxu0
      %v2825 = vpop.f32.mrf.mxu0
      %v2826 = vadd.f32 0.0, %v2825
      %v2827 = vpop.f32.mrf.mxu0
      %2828 = vmatprep.mubr.bf16.mxu0 0
      %2829 = vmatmul.mubr.bf16.gmra.mxu0 %v2689
      %v2830 = vpop.f32.mrf.mxu0
      %v2831 = vadd.f32 0.0, %v2830
      %v2832 = vpop.f32.mrf.mxu0
      %v2833 = vpop.f32.mrf.mxu0
      %v2834 = vadd.f32 0.0, %v2833
      %v2835 = vpop.f32.mrf.mxu0
      %2836 = vmatprep.mubr.bf16.mxu0 0
      %2837 = vmatmul.mubr.bf16.gmra.mxu0 %v2692
      %v2838 = vpop.f32.mrf.mxu0
      %v2839 = vadd.f32 0.0, %v2838
      %v2840 = vpop.f32.mrf.mxu0
      %v2841 = vpop.f32.mrf.mxu0
      %v2842 = vadd.f32 0.0, %v2841
      %v2843 = vpop.f32.mrf.mxu0
      %2844 = vmatprep.mubr.bf16.mxu0 0
      %2845 = vmatmul.mubr.bf16.gmra.mxu0 %v2695
      %v2846 = vpop.f32.mrf.mxu0
      %v2847 = vadd.f32 0.0, %v2846
      %v2848 = vpop.f32.mrf.mxu0
      %v2849 = vpop.f32.mrf.mxu0
      %v2850 = vadd.f32 0.0, %v2849
      %v2851 = vpop.f32.mrf.mxu0
      %2852 = vmatprep.mubr.bf16.mxu0 0
      %2853 = vmatmul.mubr.bf16.gmra.mxu0 %v2698
      %v2854 = vpop.f32.mrf.mxu0
      %v2855 = vadd.f32 0.0, %v2854
      %v2856 = vpop.f32.mrf.mxu0
      %v2857 = vpop.f32.mrf.mxu0
      %v2858 = vadd.f32 0.0, %v2857
      %v2859 = vpop.f32.mrf.mxu0
      %2860 = vdwg.mxu0
      %v2861 = vadd.f32 %v2384, %v2735
      %v2862 = vadd.f32 %v2385, %v2738
      %v2863 = vadd.f32 %v2386, %v2743
      %v2864 = vadd.f32 %v2387, %v2746
      %v2865 = vadd.f32 %v2388, %v2751
      %v2866 = vadd.f32 %v2389, %v2754
      %v2867 = vadd.f32 %v2390, %v2759
      %v2868 = vadd.f32 %v2391, %v2762
      %v2869 = vadd.f32 %v2392, %v2767
      %v2870 = vadd.f32 %v2393, %v2770
      %v2871 = vadd.f32 %v2394, %v2775
      %v2872 = vadd.f32 %v2395, %v2778
      %v2873 = vadd.f32 %v2396, %v2783
      %v2874 = vadd.f32 %v2397, %v2786
      %v2875 = vadd.f32 %v2398, %v2791
      %v2876 = vadd.f32 %v2399, %v2794
      %v2877 = vadd.f32 %v2400, %v2799
      %v2878 = vadd.f32 %v2401, %v2802
      %v2879 = vadd.f32 %v2402, %v2807
      %v2880 = vadd.f32 %v2403, %v2810
      %v2881 = vadd.f32 %v2404, %v2815
      %v2882 = vadd.f32 %v2405, %v2818
      %v2883 = vadd.f32 %v2406, %v2823
      %v2884 = vadd.f32 %v2407, %v2826
      %v2885 = vadd.f32 %v2408, %v2831
      %v2886 = vadd.f32 %v2409, %v2834
      %v2887 = vadd.f32 %v2410, %v2839
      %v2888 = vadd.f32 %v2411, %v2842
      %v2889 = vadd.f32 %v2412, %v2847
      %v2890 = vadd.f32 %v2413, %v2850
      %v2891 = vadd.f32 %v2414, %v2855
      %v2892 = vadd.f32 %v2415, %v2858
      %v2893 = vld [vmem:[%s310] sm:$0xe]
      %v2894 = vld [vmem:[%s310 + $0xc] sm:$0xe]
      %v2895 = vld [vmem:[%s310 + $0x18] sm:$0xe]
      %v2896 = vld [vmem:[%s310 + $0x24] sm:$0xe]
      %v2897 = vld [vmem:[%s310 + $0x30] sm:$0xe]
      %v2898 = vld [vmem:[%s310 + $0x3c] sm:$0xe]
      %v2899 = vld [vmem:[%s310 + $0x48] sm:$0xe]
      %v2900 = vld [vmem:[%s310 + $0x54] sm:$0xe]
      %v2901 = vld [vmem:[%s310 + $0x60] sm:$0xe]
      %v2902 = vld [vmem:[%s310 + $0x6c] sm:$0xe]
      %v2903 = vld [vmem:[%s310 + $0x78] sm:$0xe]
      %v2904 = vld [vmem:[%s310 + $0x84] sm:$0xe]
      %v2905 = vld [vmem:[%s310 + $0x90] sm:$0xe]
      %v2906 = vld [vmem:[%s310 + $0x9c] sm:$0xe]
      %v2907 = vld [vmem:[%s310 + $0xa8] sm:$0xe]
      %v2908 = vld [vmem:[%s310 + $0xb4] sm:$0xe]
      %v2957 = vrot.slane %v2893, 5
      %v2958 = vrot.slane %v2957, 4
      %v2959 = vrot.slane %v1679, 5
      %v2960 = vsel %vm2482, %v2958, %v2959
      %v2961 = vrot.slane %v2959, 4
      %v2962 = vrot.slane %v1680, 5
      %v2963 = vsel %vm2482, %v2961, %v2962
      %v2964 = vrot.slane %v2894, 5
      %v2965 = vrot.slane %v2964, 4
      %v2966 = vrot.slane %v1682, 5
      %v2967 = vsel %vm2482, %v2965, %v2966
      %v2968 = vrot.slane %v2966, 4
      %v2969 = vrot.slane %v1683, 5
      %v2970 = vsel %vm2482, %v2968, %v2969
      %v2971 = vrot.slane %v2895, 5
      %v2972 = vrot.slane %v2971, 4
      %v2973 = vrot.slane %v1685, 5
      %v2974 = vsel %vm2482, %v2972, %v2973
      %v2975 = vrot.slane %v2973, 4
      %v2976 = vrot.slane %v1686, 5
      %v2977 = vsel %vm2482, %v2975, %v2976
      %v2978 = vrot.slane %v2896, 5
      %v2979 = vrot.slane %v2978, 4
      %v2980 = vrot.slane %v1688, 5
      %v2981 = vsel %vm2482, %v2979, %v2980
      %v2982 = vrot.slane %v2980, 4
      %v2983 = vrot.slane %v1689, 5
      %v2984 = vsel %vm2482, %v2982, %v2983
      %v2985 = vrot.slane %v2897, 5
      %v2986 = vrot.slane %v2985, 4
      %v2987 = vrot.slane %v1691, 5
      %v2988 = vsel %vm2482, %v2986, %v2987
      %v2989 = vrot.slane %v2987, 4
      %v2990 = vrot.slane %v1692, 5
      %v2991 = vsel %vm2482, %v2989, %v2990
      %v2992 = vrot.slane %v2898, 5
      %v2993 = vrot.slane %v2992, 4
      %v2994 = vrot.slane %v1694, 5
      %v2995 = vsel %vm2482, %v2993, %v2994
      %v2996 = vrot.slane %v2994, 4
      %v2997 = vrot.slane %v1695, 5
      %v2998 = vsel %vm2482, %v2996, %v2997
      %v2999 = vrot.slane %v2899, 5
      %v3000 = vrot.slane %v2999, 4
      %v3001 = vrot.slane %v1697, 5
      %v3002 = vsel %vm2482, %v3000, %v3001
      %v3003 = vrot.slane %v3001, 4
      %v3004 = vrot.slane %v1698, 5
      %v3005 = vsel %vm2482, %v3003, %v3004
      %v3006 = vrot.slane %v2900, 5
      %v3007 = vrot.slane %v3006, 4
      %v3008 = vrot.slane %v1700, 5
      %v3009 = vsel %vm2482, %v3007, %v3008
      %v3010 = vrot.slane %v3008, 4
      %v3011 = vrot.slane %v1701, 5
      %v3012 = vsel %vm2482, %v3010, %v3011
      %v3013 = vrot.slane %v2901, 5
      %v3014 = vrot.slane %v3013, 4
      %v3015 = vrot.slane %v1703, 5
      %v3016 = vsel %vm2482, %v3014, %v3015
      %v3017 = vrot.slane %v3015, 4
      %v3018 = vrot.slane %v1704, 5
      %v3019 = vsel %vm2482, %v3017, %v3018
      %v3020 = vrot.slane %v2902, 5
      %v3021 = vrot.slane %v3020, 4
      %v3022 = vrot.slane %v1706, 5
      %v3023 = vsel %vm2482, %v3021, %v3022
      %v3024 = vrot.slane %v3022, 4
      %v3025 = vrot.slane %v1707, 5
      %v3026 = vsel %vm2482, %v3024, %v3025
      %v3027 = vrot.slane %v2903, 5
      %v3028 = vrot.slane %v3027, 4
      %v3029 = vrot.slane %v1709, 5
      %v3030 = vsel %vm2482, %v3028, %v3029
      %v3031 = vrot.slane %v3029, 4
      %v3032 = vrot.slane %v1710, 5
      %v3033 = vsel %vm2482, %v3031, %v3032
      %v3034 = vrot.slane %v2904, 5
      %v3035 = vrot.slane %v3034, 4
      %v3036 = vrot.slane %v1712, 5
      %v3037 = vsel %vm2482, %v3035, %v3036
      %v3038 = vrot.slane %v3036, 4
      %v3039 = vrot.slane %v1713, 5
      %v3040 = vsel %vm2482, %v3038, %v3039
      %v3041 = vrot.slane %v2905, 5
      %v3042 = vrot.slane %v3041, 4
      %v3043 = vrot.slane %v1715, 5
      %v3044 = vsel %vm2482, %v3042, %v3043
      %v3045 = vrot.slane %v3043, 4
      %v3046 = vrot.slane %v1716, 5
      %v3047 = vsel %vm2482, %v3045, %v3046
      %v3048 = vrot.slane %v2906, 5
      %v3049 = vrot.slane %v3048, 4
      %v3050 = vrot.slane %v1718, 5
      %v3051 = vsel %vm2482, %v3049, %v3050
      %v3052 = vrot.slane %v3050, 4
      %v3053 = vrot.slane %v1719, 5
      %v3054 = vsel %vm2482, %v3052, %v3053
      %v3055 = vrot.slane %v2907, 5
      %v3056 = vrot.slane %v3055, 4
      %v3057 = vrot.slane %v1721, 5
      %v3058 = vsel %vm2482, %v3056, %v3057
      %v3059 = vrot.slane %v3057, 4
      %v3060 = vrot.slane %v1722, 5
      %v3061 = vsel %vm2482, %v3059, %v3060
      %v3062 = vrot.slane %v2908, 5
      %v3063 = vrot.slane %v3062, 4
      %v3064 = vrot.slane %v1724, 5
      %v3065 = vsel %vm2482, %v3063, %v3064
      %v3066 = vrot.slane %v3064, 4
      %v3067 = vrot.slane %v1725, 5
      %v3068 = vsel %vm2482, %v3066, %v3067
      %s3069 = scalar_lea.vmem %s3, 32
      %v3070 = vld [vmem:[%s3069] sm:$0xf]
      %v3071 = vld [vmem:[%s3069 + $0x4] sm:$0xf]
      %v3072 = vld [vmem:[%s3069 + $0x8] sm:$0xf]
      %v3073 = vld [vmem:[%s3069 + $0xc] sm:$0xf]
      %v3074 = vunpack.c.l.b16 %v2960
      %v3075 = vunpack.c.l.b16 %v2963
      %v3076 = vunpack.c.l.b16 %v2967
      %v3077 = vunpack.c.l.b16 %v2970
      %v3078 = vunpack.c.l.b16 %v2974
      %v3079 = vunpack.c.l.b16 %v2977
      %v3080 = vunpack.c.l.b16 %v2981
      %v3081 = vunpack.c.l.b16 %v2984
      %v3082 = vunpack.c.l.b16 %v2988
      %v3083 = vunpack.c.l.b16 %v2991
      %v3084 = vunpack.c.l.b16 %v2995
      %v3085 = vunpack.c.l.b16 %v2998
      %v3086 = vunpack.c.l.b16 %v3002
      %v3087 = vunpack.c.l.b16 %v3005
      %v3088 = vunpack.c.l.b16 %v3009
      %v3089 = vunpack.c.l.b16 %v3012
      %v3090 = vunpack.c.l.b16 %v3016
      %v3091 = vunpack.c.l.b16 %v3019
      %v3092 = vunpack.c.l.b16 %v3023
      %v3093 = vunpack.c.l.b16 %v3026
      %v3094 = vunpack.c.l.b16 %v3030
      %v3095 = vunpack.c.l.b16 %v3033
      %v3096 = vunpack.c.l.b16 %v3037
      %v3097 = vunpack.c.l.b16 %v3040
      %v3098 = vunpack.c.l.b16 %v3044
      %v3099 = vunpack.c.l.b16 %v3047
      %v3100 = vunpack.c.l.b16 %v3051
      %v3101 = vunpack.c.l.b16 %v3054
      %v3102 = vunpack.c.l.b16 %v3058
      %v3103 = vunpack.c.l.b16 %v3061
      %v3104 = vunpack.c.l.b16 %v3065
      %v3105 = vunpack.c.l.b16 %v3068
      %v3106 = vpack.c.b16 %v3075, %v3074
      %v3107 = vpack.c.b16 %v3077, %v3076
      %v3108 = vpack.c.b16 %v3079, %v3078
      %v3109 = vpack.c.b16 %v3081, %v3080
      %v3110 = vpack.c.b16 %v3083, %v3082
      %v3111 = vpack.c.b16 %v3085, %v3084
      %v3112 = vpack.c.b16 %v3087, %v3086
      %v3113 = vpack.c.b16 %v3089, %v3088
      %v3114 = vpack.c.b16 %v3091, %v3090
      %v3115 = vpack.c.b16 %v3093, %v3092
      %v3116 = vpack.c.b16 %v3095, %v3094
      %v3117 = vpack.c.b16 %v3097, %v3096
      %v3118 = vpack.c.b16 %v3099, %v3098
      %v3119 = vpack.c.b16 %v3101, %v3100
      %v3120 = vpack.c.b16 %v3103, %v3102
      %v3121 = vpack.c.b16 %v3105, %v3104
      %v3126 = vunpack.c.l.b16 %v3070
      %v3127 = vunpack.c.l.b16 %v3071
      %v3128 = vunpack.c.l.b16 %v3072
      %v3129 = vunpack.c.l.b16 %v3073
      %v3130 = vpack.c.b16 %v3127, %v3126
      %v3131 = vpack.c.b16 %v3129, %v3128
      %v3135 = vsel %vm439, %v3106, 0
      %v3138 = vsel %vm439, %v3107, 0
      %v3141 = vsel %vm439, %v3108, 0
      %v3144 = vsel %vm439, %v3109, 0
      %v3147 = vsel %vm439, %v3110, 0
      %v3150 = vsel %vm439, %v3111, 0
      %v3153 = vsel %vm439, %v3112, 0
      %v3156 = vsel %vm439, %v3113, 0
      %v3159 = vsel %vm439, %v3114, 0
      %v3162 = vsel %vm439, %v3115, 0
      %v3165 = vsel %vm439, %v3116, 0
      %v3168 = vsel %vm439, %v3117, 0
      %v3171 = vsel %vm439, %v3118, 0
      %v3174 = vsel %vm439, %v3119, 0
      %v3177 = vsel %vm439, %v3120, 0
      %v3180 = vsel %vm439, %v3121, 0
      %3182 = vmatprep.subr.bf16.mxu0 0
      %3183 = vmatpush1.bf16.msra.mxu0 0
      %3184 = vmatprep.subr.bf16.mxu0 0
      %3185 = vmatpush1.bf16.msra.mxu0 0
      %3186 = vmatprep.subr.bf16.mxu0 0
      %3187 = vmatpush1.bf16.msra.mxu0 0
      %3188 = vmatprep.subr.bf16.mxu0 0
      %3189 = vmatpush1.bf16.msra.mxu0 0
      %3190 = vmatprep.subr.bf16.mxu0 0
      %3191 = vmatpush1.bf16.msra.mxu0 0
      %3192 = vmatprep.subr.bf16.mxu0 0
      %3193 = vmatpush1.bf16.msra.mxu0 0
      %3194 = vmatprep.subr.bf16.mxu0 0
      %3195 = vmatpush1.bf16.msra.mxu0 %v3131
      %3196 = vmatprep.subr.bf16.mxu0 0
      %3197 = vmatpush1.bf16.msra.mxu0 %v3130
      %3198 = vmatprep.subr.bf16.mxu0 0
      %3199 = vmatpush2.bf16.msra.mxu0 0
      %3200 = vmatprep.subr.bf16.mxu0 0
      %3201 = vmatpush2.bf16.msra.mxu0 0
      %3202 = vmatprep.subr.bf16.mxu0 0
      %3203 = vmatpush2.bf16.msra.mxu0 0
      %3204 = vmatprep.subr.bf16.mxu0 0
      %3205 = vmatpush2.bf16.msra.mxu0 0
      %3206 = vmatprep.subr.bf16.mxu0 0
      %3207 = vmatpush2.bf16.msra.mxu0 0
      %3208 = vmatprep.subr.bf16.mxu0 0
      %3209 = vmatpush2.bf16.msra.mxu0 0
      %3210 = vmatprep.subr.bf16.mxu0 0
      %3211 = vmatpush2.bf16.msra.mxu0 0
      %3212 = vmatprep.subr.bf16.mxu0 0
      %3213 = vmatpush2.bf16.msra.mxu0 0
      %3214 = vmatprep.mubr.bf16.mxu0 0
      %3215 = vmatmul.mubr.bf16.gmra.mxu0 %v3135
      %v3216 = vpop.f32.mrf.mxu0
      %v3217 = vadd.f32 0.0, %v3216
      %v3218 = vpop.f32.mrf.mxu0
      %v3219 = vpop.f32.mrf.mxu0
      %v3220 = vadd.f32 0.0, %v3219
      %v3221 = vpop.f32.mrf.mxu0
      %3222 = vmatprep.mubr.bf16.mxu0 0
      %3223 = vmatmul.mubr.bf16.gmra.mxu0 %v3138
      %v3224 = vpop.f32.mrf.mxu0
      %v3225 = vadd.f32 0.0, %v3224
      %v3226 = vpop.f32.mrf.mxu0
      %v3227 = vpop.f32.mrf.mxu0
      %v3228 = vadd.f32 0.0, %v3227
      %v3229 = vpop.f32.mrf.mxu0
      %3230 = vmatprep.mubr.bf16.mxu0 0
      %3231 = vmatmul.mubr.bf16.gmra.mxu0 %v3141
      %v3232 = vpop.f32.mrf.mxu0
      %v3233 = vadd.f32 0.0, %v3232
      %v3234 = vpop.f32.mrf.mxu0
      %v3235 = vpop.f32.mrf.mxu0
      %v3236 = vadd.f32 0.0, %v3235
      %v3237 = vpop.f32.mrf.mxu0
      %3238 = vmatprep.mubr.bf16.mxu0 0
      %3239 = vmatmul.mubr.bf16.gmra.mxu0 %v3144
      %v3240 = vpop.f32.mrf.mxu0
      %v3241 = vadd.f32 0.0, %v3240
      %v3242 = vpop.f32.mrf.mxu0
      %v3243 = vpop.f32.mrf.mxu0
      %v3244 = vadd.f32 0.0, %v3243
      %v3245 = vpop.f32.mrf.mxu0
      %3246 = vmatprep.mubr.bf16.mxu0 0
      %3247 = vmatmul.mubr.bf16.gmra.mxu0 %v3147
      %v3248 = vpop.f32.mrf.mxu0
      %v3249 = vadd.f32 0.0, %v3248
      %v3250 = vpop.f32.mrf.mxu0
      %v3251 = vpop.f32.mrf.mxu0
      %v3252 = vadd.f32 0.0, %v3251
      %v3253 = vpop.f32.mrf.mxu0
      %3254 = vmatprep.mubr.bf16.mxu0 0
      %3255 = vmatmul.mubr.bf16.gmra.mxu0 %v3150
      %v3256 = vpop.f32.mrf.mxu0
      %v3257 = vadd.f32 0.0, %v3256
      %v3258 = vpop.f32.mrf.mxu0
      %v3259 = vpop.f32.mrf.mxu0
      %v3260 = vadd.f32 0.0, %v3259
      %v3261 = vpop.f32.mrf.mxu0
      %3262 = vmatprep.mubr.bf16.mxu0 0
      %3263 = vmatmul.mubr.bf16.gmra.mxu0 %v3153
      %v3264 = vpop.f32.mrf.mxu0
      %v3265 = vadd.f32 0.0, %v3264
      %v3266 = vpop.f32.mrf.mxu0
      %v3267 = vpop.f32.mrf.mxu0
      %v3268 = vadd.f32 0.0, %v3267
      %v3269 = vpop.f32.mrf.mxu0
      %3270 = vmatprep.mubr.bf16.mxu0 0
      %3271 = vmatmul.mubr.bf16.gmra.mxu0 %v3156
      %v3272 = vpop.f32.mrf.mxu0
      %v3273 = vadd.f32 0.0, %v3272
      %v3274 = vpop.f32.mrf.mxu0
      %v3275 = vpop.f32.mrf.mxu0
      %v3276 = vadd.f32 0.0, %v3275
      %v3277 = vpop.f32.mrf.mxu0
      %3278 = vmatprep.mubr.bf16.mxu0 0
      %3279 = vmatmul.mubr.bf16.gmra.mxu0 %v3159
      %v3280 = vpop.f32.mrf.mxu0
      %v3281 = vadd.f32 0.0, %v3280
      %v3282 = vpop.f32.mrf.mxu0
      %v3283 = vpop.f32.mrf.mxu0
      %v3284 = vadd.f32 0.0, %v3283
      %v3285 = vpop.f32.mrf.mxu0
      %3286 = vmatprep.mubr.bf16.mxu0 0
      %3287 = vmatmul.mubr.bf16.gmra.mxu0 %v3162
      %v3288 = vpop.f32.mrf.mxu0
      %v3289 = vadd.f32 0.0, %v3288
      %v3290 = vpop.f32.mrf.mxu0
      %v3291 = vpop.f32.mrf.mxu0
      %v3292 = vadd.f32 0.0, %v3291
      %v3293 = vpop.f32.mrf.mxu0
      %3294 = vmatprep.mubr.bf16.mxu0 0
      %3295 = vmatmul.mubr.bf16.gmra.mxu0 %v3165
      %v3296 = vpop.f32.mrf.mxu0
      %v3297 = vadd.f32 0.0, %v3296
      %v3298 = vpop.f32.mrf.mxu0
      %v3299 = vpop.f32.mrf.mxu0
      %v3300 = vadd.f32 0.0, %v3299
      %v3301 = vpop.f32.mrf.mxu0
      %3302 = vmatprep.mubr.bf16.mxu0 0
      %3303 = vmatmul.mubr.bf16.gmra.mxu0 %v3168
      %v3304 = vpop.f32.mrf.mxu0
      %v3305 = vadd.f32 0.0, %v3304
      %v3306 = vpop.f32.mrf.mxu0
      %v3307 = vpop.f32.mrf.mxu0
      %v3308 = vadd.f32 0.0, %v3307
      %v3309 = vpop.f32.mrf.mxu0
      %3310 = vmatprep.mubr.bf16.mxu0 0
      %3311 = vmatmul.mubr.bf16.gmra.mxu0 %v3171
      %v3312 = vpop.f32.mrf.mxu0
      %v3313 = vadd.f32 0.0, %v3312
      %v3314 = vpop.f32.mrf.mxu0
      %v3315 = vpop.f32.mrf.mxu0
      %v3316 = vadd.f32 0.0, %v3315
      %v3317 = vpop.f32.mrf.mxu0
      %3318 = vmatprep.mubr.bf16.mxu0 0
      %3319 = vmatmul.mubr.bf16.gmra.mxu0 %v3174
      %v3320 = vpop.f32.mrf.mxu0
      %v3321 = vadd.f32 0.0, %v3320
      %v3322 = vpop.f32.mrf.mxu0
      %v3323 = vpop.f32.mrf.mxu0
      %v3324 = vadd.f32 0.0, %v3323
      %v3325 = vpop.f32.mrf.mxu0
      %3326 = vmatprep.mubr.bf16.mxu0 0
      %3327 = vmatmul.mubr.bf16.gmra.mxu0 %v3177
      %v3328 = vpop.f32.mrf.mxu0
      %v3329 = vadd.f32 0.0, %v3328
      %v3330 = vpop.f32.mrf.mxu0
      %v3331 = vpop.f32.mrf.mxu0
      %v3332 = vadd.f32 0.0, %v3331
      %v3333 = vpop.f32.mrf.mxu0
      %3334 = vmatprep.mubr.bf16.mxu0 0
      %3335 = vmatmul.mubr.bf16.gmra.mxu0 %v3180
      %v3336 = vpop.f32.mrf.mxu0
      %v3337 = vadd.f32 0.0, %v3336
      %v3338 = vpop.f32.mrf.mxu0
      %v3339 = vpop.f32.mrf.mxu0
      %v3340 = vadd.f32 0.0, %v3339
      %v3341 = vpop.f32.mrf.mxu0
      %3342 = vdwg.mxu0
      %v3343 = vadd.f32 %v2861, %v3217
      %v3344 = vadd.f32 %v2862, %v3220
      %v3345 = vadd.f32 %v2863, %v3225
      %v3346 = vadd.f32 %v2864, %v3228
      %v3347 = vadd.f32 %v2865, %v3233
      %v3348 = vadd.f32 %v2866, %v3236
      %v3349 = vadd.f32 %v2867, %v3241
      %v3350 = vadd.f32 %v2868, %v3244
      %v3351 = vadd.f32 %v2869, %v3249
      %v3352 = vadd.f32 %v2870, %v3252
      %v3353 = vadd.f32 %v2871, %v3257
      %v3354 = vadd.f32 %v2872, %v3260
      %v3355 = vadd.f32 %v2873, %v3265
      %v3356 = vadd.f32 %v2874, %v3268
      %v3357 = vadd.f32 %v2875, %v3273
      %v3358 = vadd.f32 %v2876, %v3276
      %v3359 = vadd.f32 %v2877, %v3281
      %v3360 = vadd.f32 %v2878, %v3284
      %v3361 = vadd.f32 %v2879, %v3289
      %v3362 = vadd.f32 %v2880, %v3292
      %v3363 = vadd.f32 %v2881, %v3297
      %v3364 = vadd.f32 %v2882, %v3300
      %v3365 = vadd.f32 %v2883, %v3305
      %v3366 = vadd.f32 %v2884, %v3308
      %v3367 = vadd.f32 %v2885, %v3313
      %v3368 = vadd.f32 %v2886, %v3316
      %v3369 = vadd.f32 %v2887, %v3321
      %v3370 = vadd.f32 %v2888, %v3324
      %v3371 = vadd.f32 %v2889, %v3329
      %v3372 = vadd.f32 %v2890, %v3332
      %v3373 = vadd.f32 %v2891, %v3337
      %v3374 = vadd.f32 %v2892, %v3340
      %s3375 = sadd.s32 %s271, 1
      %s3376 = smul.u32 %s3375, 3
      %s3377 = smul.addr %s3376, 4
      %s3378 = scalar_lea.vmem %s253, %s3377
      %v3379 = vld [vmem:[%s3378] sm:$0xf]
      %v3380 = vld [vmem:[%s3378 + $0x4] sm:$0xf]
      %v3381 = vld [vmem:[%s3378 + $0xc] sm:$0xf]
      %v3382 = vld [vmem:[%s3378 + $0x10] sm:$0xf]
      %v3383 = vld [vmem:[%s3378 + $0x18] sm:$0xf]
      %v3384 = vld [vmem:[%s3378 + $0x1c] sm:$0xf]
      %v3385 = vld [vmem:[%s3378 + $0x24] sm:$0xf]
      %v3386 = vld [vmem:[%s3378 + $0x28] sm:$0xf]
      %v3387 = vld [vmem:[%s3378 + $0x30] sm:$0xf]
      %v3388 = vld [vmem:[%s3378 + $0x34] sm:$0xf]
      %v3389 = vld [vmem:[%s3378 + $0x3c] sm:$0xf]
      %v3390 = vld [vmem:[%s3378 + $0x40] sm:$0xf]
      %v3391 = vld [vmem:[%s3378 + $0x48] sm:$0xf]
      %v3392 = vld [vmem:[%s3378 + $0x4c] sm:$0xf]
      %v3393 = vld [vmem:[%s3378 + $0x54] sm:$0xf]
      %v3394 = vld [vmem:[%s3378 + $0x58] sm:$0xf]
      %v3395 = vld [vmem:[%s3378 + $0x60] sm:$0xf]
      %v3396 = vld [vmem:[%s3378 + $0x64] sm:$0xf]
      %v3397 = vld [vmem:[%s3378 + $0x6c] sm:$0xf]
      %v3398 = vld [vmem:[%s3378 + $0x70] sm:$0xf]
      %v3399 = vld [vmem:[%s3378 + $0x78] sm:$0xf]
      %v3400 = vld [vmem:[%s3378 + $0x7c] sm:$0xf]
      %v3401 = vld [vmem:[%s3378 + $0x84] sm:$0xf]
      %v3402 = vld [vmem:[%s3378 + $0x88] sm:$0xf]
      %v3403 = vld [vmem:[%s3378 + $0x90] sm:$0xf]
      %v3404 = vld [vmem:[%s3378 + $0x94] sm:$0xf]
      %v3405 = vld [vmem:[%s3378 + $0x9c] sm:$0xf]
      %v3406 = vld [vmem:[%s3378 + $0xa0] sm:$0xf]
      %v3407 = vld [vmem:[%s3378 + $0xa8] sm:$0xf]
      %v3408 = vld [vmem:[%s3378 + $0xac] sm:$0xf]
      %v3409 = vld [vmem:[%s3378 + $0xb4] sm:$0xf]
      %v3410 = vld [vmem:[%s3378 + $0xb8] sm:$0xf]
      %s3411 = scalar_lea.vmem %s2, 24
      %v3412 = vld [vmem:[%s3411] sm:$0xf]
      %v3413 = vld [vmem:[%s3411 + $0x4] sm:$0xf]
      %v3446 = vunpack.c.l.b16 %v3379
      %v3447 = vunpack.c.l.b16 %v3380
      %v3448 = vunpack.c.l.b16 %v3381
      %v3449 = vunpack.c.l.b16 %v3382
      %v3450 = vunpack.c.l.b16 %v3383
      %v3451 = vunpack.c.l.b16 %v3384
      %v3452 = vunpack.c.l.b16 %v3385
      %v3453 = vunpack.c.l.b16 %v3386
      %v3454 = vunpack.c.l.b16 %v3387
      %v3455 = vunpack.c.l.b16 %v3388
      %v3456 = vunpack.c.l.b16 %v3389
      %v3457 = vunpack.c.l.b16 %v3390
      %v3458 = vunpack.c.l.b16 %v3391
      %v3459 = vunpack.c.l.b16 %v3392
      %v3460 = vunpack.c.l.b16 %v3393
      %v3461 = vunpack.c.l.b16 %v3394
      %v3462 = vunpack.c.l.b16 %v3395
      %v3463 = vunpack.c.l.b16 %v3396
      %v3464 = vunpack.c.l.b16 %v3397
      %v3465 = vunpack.c.l.b16 %v3398
      %v3466 = vunpack.c.l.b16 %v3399
      %v3467 = vunpack.c.l.b16 %v3400
      %v3468 = vunpack.c.l.b16 %v3401
      %v3469 = vunpack.c.l.b16 %v3402
      %v3470 = vunpack.c.l.b16 %v3403
      %v3471 = vunpack.c.l.b16 %v3404
      %v3472 = vunpack.c.l.b16 %v3405
      %v3473 = vunpack.c.l.b16 %v3406
      %v3474 = vunpack.c.l.b16 %v3407
      %v3475 = vunpack.c.l.b16 %v3408
      %v3476 = vunpack.c.l.b16 %v3409
      %v3477 = vunpack.c.l.b16 %v3410
      %v3478 = vpack.c.b16 %v3447, %v3446
      %v3479 = vpack.c.b16 %v3449, %v3448
      %v3480 = vpack.c.b16 %v3451, %v3450
      %v3481 = vpack.c.b16 %v3453, %v3452
      %v3482 = vpack.c.b16 %v3455, %v3454
      %v3483 = vpack.c.b16 %v3457, %v3456
      %v3484 = vpack.c.b16 %v3459, %v3458
      %v3485 = vpack.c.b16 %v3461, %v3460
      %v3486 = vpack.c.b16 %v3463, %v3462
      %v3487 = vpack.c.b16 %v3465, %v3464
      %v3488 = vpack.c.b16 %v3467, %v3466
      %v3489 = vpack.c.b16 %v3469, %v3468
      %v3490 = vpack.c.b16 %v3471, %v3470
      %v3491 = vpack.c.b16 %v3473, %v3472
      %v3492 = vpack.c.b16 %v3475, %v3474
      %v3493 = vpack.c.b16 %v3477, %v3476
      %v3496 = vunpack.c.l.b16 %v3412
      %v3497 = vunpack.c.l.b16 %v3413
      %v3498 = vpack.c.b16 %v3497, %v3496
      %v3501 = vsel %vm735, %v3478, 0
      %v3504 = vsel %vm735, %v3479, 0
      %v3507 = vsel %vm735, %v3480, 0
      %v3510 = vsel %vm735, %v3481, 0
      %v3513 = vsel %vm735, %v3482, 0
      %v3516 = vsel %vm735, %v3483, 0
      %v3519 = vsel %vm735, %v3484, 0
      %v3522 = vsel %vm735, %v3485, 0
      %v3525 = vsel %vm735, %v3486, 0
      %v3528 = vsel %vm735, %v3487, 0
      %v3531 = vsel %vm735, %v3488, 0
      %v3534 = vsel %vm735, %v3489, 0
      %v3537 = vsel %vm735, %v3490, 0
      %v3540 = vsel %vm735, %v3491, 0
      %v3543 = vsel %vm735, %v3492, 0
      %v3546 = vsel %vm735, %v3493, 0
      %3548 = vmatprep.subr.bf16.mxu0 0
      %3549 = vmatpush1.bf16.msra.mxu0 0
      %3550 = vmatprep.subr.bf16.mxu0 0
      %3551 = vmatpush1.bf16.msra.mxu0 0
      %3552 = vmatprep.subr.bf16.mxu0 0
      %3553 = vmatpush1.bf16.msra.mxu0 0
      %3554 = vmatprep.subr.bf16.mxu0 0
      %3555 = vmatpush1.bf16.msra.mxu0 0
      %3556 = vmatprep.subr.bf16.mxu0 0
      %3557 = vmatpush1.bf16.msra.mxu0 0
      %3558 = vmatprep.subr.bf16.mxu0 0
      %3559 = vmatpush1.bf16.msra.mxu0 0
      %3560 = vmatprep.subr.bf16.mxu0 0
      %3561 = vmatpush1.bf16.msra.mxu0 0
      %3562 = vmatprep.subr.bf16.mxu0 0
      %3563 = vmatpush1.bf16.msra.mxu0 %v3498
      %3564 = vmatprep.subr.bf16.mxu0 0
      %3565 = vmatpush2.bf16.msra.mxu0 0
      %3566 = vmatprep.subr.bf16.mxu0 0
      %3567 = vmatpush2.bf16.msra.mxu0 0
      %3568 = vmatprep.subr.bf16.mxu0 0
      %3569 = vmatpush2.bf16.msra.mxu0 0
      %3570 = vmatprep.subr.bf16.mxu0 0
      %3571 = vmatpush2.bf16.msra.mxu0 0
      %3572 = vmatprep.subr.bf16.mxu0 0
      %3573 = vmatpush2.bf16.msra.mxu0 0
      %3574 = vmatprep.subr.bf16.mxu0 0
      %3575 = vmatpush2.bf16.msra.mxu0 0
      %3576 = vmatprep.subr.bf16.mxu0 0
      %3577 = vmatpush2.bf16.msra.mxu0 0
      %3578 = vmatprep.subr.bf16.mxu0 0
      %3579 = vmatpush2.bf16.msra.mxu0 0
      %3580 = vmatprep.mubr.bf16.mxu0 0
      %3581 = vmatmul.mubr.bf16.gmra.mxu0 %v3501
      %v3582 = vpop.f32.mrf.mxu0
      %v3583 = vadd.f32 0.0, %v3582
      %v3584 = vpop.f32.mrf.mxu0
      %v3585 = vpop.f32.mrf.mxu0
      %v3586 = vadd.f32 0.0, %v3585
      %v3587 = vpop.f32.mrf.mxu0
      %3588 = vmatprep.mubr.bf16.mxu0 0
      %3589 = vmatmul.mubr.bf16.gmra.mxu0 %v3504
      %v3590 = vpop.f32.mrf.mxu0
      %v3591 = vadd.f32 0.0, %v3590
      %v3592 = vpop.f32.mrf.mxu0
      %v3593 = vpop.f32.mrf.mxu0
      %v3594 = vadd.f32 0.0, %v3593
      %v3595 = vpop.f32.mrf.mxu0
      %3596 = vmatprep.mubr.bf16.mxu0 0
      %3597 = vmatmul.mubr.bf16.gmra.mxu0 %v3507
      %v3598 = vpop.f32.mrf.mxu0
      %v3599 = vadd.f32 0.0, %v3598
      %v3600 = vpop.f32.mrf.mxu0
      %v3601 = vpop.f32.mrf.mxu0
      %v3602 = vadd.f32 0.0, %v3601
      %v3603 = vpop.f32.mrf.mxu0
      %3604 = vmatprep.mubr.bf16.mxu0 0
      %3605 = vmatmul.mubr.bf16.gmra.mxu0 %v3510
      %v3606 = vpop.f32.mrf.mxu0
      %v3607 = vadd.f32 0.0, %v3606
      %v3608 = vpop.f32.mrf.mxu0
      %v3609 = vpop.f32.mrf.mxu0
      %v3610 = vadd.f32 0.0, %v3609
      %v3611 = vpop.f32.mrf.mxu0
      %3612 = vmatprep.mubr.bf16.mxu0 0
      %3613 = vmatmul.mubr.bf16.gmra.mxu0 %v3513
      %v3614 = vpop.f32.mrf.mxu0
      %v3615 = vadd.f32 0.0, %v3614
      %v3616 = vpop.f32.mrf.mxu0
      %v3617 = vpop.f32.mrf.mxu0
      %v3618 = vadd.f32 0.0, %v3617
      %v3619 = vpop.f32.mrf.mxu0
      %3620 = vmatprep.mubr.bf16.mxu0 0
      %3621 = vmatmul.mubr.bf16.gmra.mxu0 %v3516
      %v3622 = vpop.f32.mrf.mxu0
      %v3623 = vadd.f32 0.0, %v3622
      %v3624 = vpop.f32.mrf.mxu0
      %v3625 = vpop.f32.mrf.mxu0
      %v3626 = vadd.f32 0.0, %v3625
      %v3627 = vpop.f32.mrf.mxu0
      %3628 = vmatprep.mubr.bf16.mxu0 0
      %3629 = vmatmul.mubr.bf16.gmra.mxu0 %v3519
      %v3630 = vpop.f32.mrf.mxu0
      %v3631 = vadd.f32 0.0, %v3630
      %v3632 = vpop.f32.mrf.mxu0
      %v3633 = vpop.f32.mrf.mxu0
      %v3634 = vadd.f32 0.0, %v3633
      %v3635 = vpop.f32.mrf.mxu0
      %3636 = vmatprep.mubr.bf16.mxu0 0
      %3637 = vmatmul.mubr.bf16.gmra.mxu0 %v3522
      %v3638 = vpop.f32.mrf.mxu0
      %v3639 = vadd.f32 0.0, %v3638
      %v3640 = vpop.f32.mrf.mxu0
      %v3641 = vpop.f32.mrf.mxu0
      %v3642 = vadd.f32 0.0, %v3641
      %v3643 = vpop.f32.mrf.mxu0
      %3644 = vmatprep.mubr.bf16.mxu0 0
      %3645 = vmatmul.mubr.bf16.gmra.mxu0 %v3525
      %v3646 = vpop.f32.mrf.mxu0
      %v3647 = vadd.f32 0.0, %v3646
      %v3648 = vpop.f32.mrf.mxu0
      %v3649 = vpop.f32.mrf.mxu0
      %v3650 = vadd.f32 0.0, %v3649
      %v3651 = vpop.f32.mrf.mxu0
      %3652 = vmatprep.mubr.bf16.mxu0 0
      %3653 = vmatmul.mubr.bf16.gmra.mxu0 %v3528
      %v3654 = vpop.f32.mrf.mxu0
      %v3655 = vadd.f32 0.0, %v3654
      %v3656 = vpop.f32.mrf.mxu0
      %v3657 = vpop.f32.mrf.mxu0
      %v3658 = vadd.f32 0.0, %v3657
      %v3659 = vpop.f32.mrf.mxu0
      %3660 = vmatprep.mubr.bf16.mxu0 0
      %3661 = vmatmul.mubr.bf16.gmra.mxu0 %v3531
      %v3662 = vpop.f32.mrf.mxu0
      %v3663 = vadd.f32 0.0, %v3662
      %v3664 = vpop.f32.mrf.mxu0
      %v3665 = vpop.f32.mrf.mxu0
      %v3666 = vadd.f32 0.0, %v3665
      %v3667 = vpop.f32.mrf.mxu0
      %3668 = vmatprep.mubr.bf16.mxu0 0
      %3669 = vmatmul.mubr.bf16.gmra.mxu0 %v3534
      %v3670 = vpop.f32.mrf.mxu0
      %v3671 = vadd.f32 0.0, %v3670
      %v3672 = vpop.f32.mrf.mxu0
      %v3673 = vpop.f32.mrf.mxu0
      %v3674 = vadd.f32 0.0, %v3673
      %v3675 = vpop.f32.mrf.mxu0
      %3676 = vmatprep.mubr.bf16.mxu0 0
      %3677 = vmatmul.mubr.bf16.gmra.mxu0 %v3537
      %v3678 = vpop.f32.mrf.mxu0
      %v3679 = vadd.f32 0.0, %v3678
      %v3680 = vpop.f32.mrf.mxu0
      %v3681 = vpop.f32.mrf.mxu0
      %v3682 = vadd.f32 0.0, %v3681
      %v3683 = vpop.f32.mrf.mxu0
      %3684 = vmatprep.mubr.bf16.mxu0 0
      %3685 = vmatmul.mubr.bf16.gmra.mxu0 %v3540
      %v3686 = vpop.f32.mrf.mxu0
      %v3687 = vadd.f32 0.0, %v3686
      %v3688 = vpop.f32.mrf.mxu0
      %v3689 = vpop.f32.mrf.mxu0
      %v3690 = vadd.f32 0.0, %v3689
      %v3691 = vpop.f32.mrf.mxu0
      %3692 = vmatprep.mubr.bf16.mxu0 0
      %3693 = vmatmul.mubr.bf16.gmra.mxu0 %v3543
      %v3694 = vpop.f32.mrf.mxu0
      %v3695 = vadd.f32 0.0, %v3694
      %v3696 = vpop.f32.mrf.mxu0
      %v3697 = vpop.f32.mrf.mxu0
      %v3698 = vadd.f32 0.0, %v3697
      %v3699 = vpop.f32.mrf.mxu0
      %3700 = vmatprep.mubr.bf16.mxu0 0
      %3701 = vmatmul.mubr.bf16.gmra.mxu0 %v3546
      %v3702 = vpop.f32.mrf.mxu0
      %v3703 = vadd.f32 0.0, %v3702
      %v3704 = vpop.f32.mrf.mxu0
      %v3705 = vpop.f32.mrf.mxu0
      %v3706 = vadd.f32 0.0, %v3705
      %v3707 = vpop.f32.mrf.mxu0
      %3708 = vdwg.mxu0
      %v3709 = vadd.f32 %v3343, %v3583
      %v3710 = vadd.f32 %v3344, %v3586
      %v3711 = vadd.f32 %v3345, %v3591
      %v3712 = vadd.f32 %v3346, %v3594
      %v3713 = vadd.f32 %v3347, %v3599
      %v3714 = vadd.f32 %v3348, %v3602
      %v3715 = vadd.f32 %v3349, %v3607
      %v3716 = vadd.f32 %v3350, %v3610
      %v3717 = vadd.f32 %v3351, %v3615
      %v3718 = vadd.f32 %v3352, %v3618
      %v3719 = vadd.f32 %v3353, %v3623
      %v3720 = vadd.f32 %v3354, %v3626
      %v3721 = vadd.f32 %v3355, %v3631
      %v3722 = vadd.f32 %v3356, %v3634
      %v3723 = vadd.f32 %v3357, %v3639
      %v3724 = vadd.f32 %v3358, %v3642
      %v3725 = vadd.f32 %v3359, %v3647
      %v3726 = vadd.f32 %v3360, %v3650
      %v3727 = vadd.f32 %v3361, %v3655
      %v3728 = vadd.f32 %v3362, %v3658
      %v3729 = vadd.f32 %v3363, %v3663
      %v3730 = vadd.f32 %v3364, %v3666
      %v3731 = vadd.f32 %v3365, %v3671
      %v3732 = vadd.f32 %v3366, %v3674
      %v3733 = vadd.f32 %v3367, %v3679
      %v3734 = vadd.f32 %v3368, %v3682
      %v3735 = vadd.f32 %v3369, %v3687
      %v3736 = vadd.f32 %v3370, %v3690
      %v3737 = vadd.f32 %v3371, %v3695
      %v3738 = vadd.f32 %v3372, %v3698
      %v3739 = vadd.f32 %v3373, %v3703
      %v3740 = vadd.f32 %v3374, %v3706
      %s3741 = smul.addr %s3376, 4
      %s3742 = scalar_lea.vmem %s258, %s3741
      %v3743 = vld [vmem:[%s3742] sm:$0xf]
      %v3744 = vld [vmem:[%s3742 + $0x4] sm:$0xf]
      %v3745 = vld [vmem:[%s3742 + $0xc] sm:$0xf]
      %v3746 = vld [vmem:[%s3742 + $0x10] sm:$0xf]
      %v3747 = vld [vmem:[%s3742 + $0x18] sm:$0xf]
      %v3748 = vld [vmem:[%s3742 + $0x1c] sm:$0xf]
      %v3749 = vld [vmem:[%s3742 + $0x24] sm:$0xf]
      %v3750 = vld [vmem:[%s3742 + $0x28] sm:$0xf]
      %v3751 = vld [vmem:[%s3742 + $0x30] sm:$0xf]
      %v3752 = vld [vmem:[%s3742 + $0x34] sm:$0xf]
      %v3753 = vld [vmem:[%s3742 + $0x3c] sm:$0xf]
      %v3754 = vld [vmem:[%s3742 + $0x40] sm:$0xf]
      %v3755 = vld [vmem:[%s3742 + $0x48] sm:$0xf]
      %v3756 = vld [vmem:[%s3742 + $0x4c] sm:$0xf]
      %v3757 = vld [vmem:[%s3742 + $0x54] sm:$0xf]
      %v3758 = vld [vmem:[%s3742 + $0x58] sm:$0xf]
      %v3759 = vld [vmem:[%s3742 + $0x60] sm:$0xf]
      %v3760 = vld [vmem:[%s3742 + $0x64] sm:$0xf]
      %v3761 = vld [vmem:[%s3742 + $0x6c] sm:$0xf]
      %v3762 = vld [vmem:[%s3742 + $0x70] sm:$0xf]
      %v3763 = vld [vmem:[%s3742 + $0x78] sm:$0xf]
      %v3764 = vld [vmem:[%s3742 + $0x7c] sm:$0xf]
      %v3765 = vld [vmem:[%s3742 + $0x84] sm:$0xf]
      %v3766 = vld [vmem:[%s3742 + $0x88] sm:$0xf]
      %v3767 = vld [vmem:[%s3742 + $0x90] sm:$0xf]
      %v3768 = vld [vmem:[%s3742 + $0x94] sm:$0xf]
      %v3769 = vld [vmem:[%s3742 + $0x9c] sm:$0xf]
      %v3770 = vld [vmem:[%s3742 + $0xa0] sm:$0xf]
      %v3771 = vld [vmem:[%s3742 + $0xa8] sm:$0xf]
      %v3772 = vld [vmem:[%s3742 + $0xac] sm:$0xf]
      %v3773 = vld [vmem:[%s3742 + $0xb4] sm:$0xf]
      %v3774 = vld [vmem:[%s3742 + $0xb8] sm:$0xf]
      %s3775 = scalar_lea.vmem %s3, 48
      %v3776 = vld [vmem:[%s3775] sm:$0xf]
      %v3777 = vld [vmem:[%s3775 + $0x4] sm:$0xf]
      %v3778 = vld [vmem:[%s3775 + $0x8] sm:$0xf]
      %v3779 = vld [vmem:[%s3775 + $0xc] sm:$0xf]
      %v3812 = vunpack.c.l.b16 %v3743
      %v3813 = vunpack.c.l.b16 %v3744
      %v3814 = vunpack.c.l.b16 %v3745
      %v3815 = vunpack.c.l.b16 %v3746
      %v3816 = vunpack.c.l.b16 %v3747
      %v3817 = vunpack.c.l.b16 %v3748
      %v3818 = vunpack.c.l.b16 %v3749
      %v3819 = vunpack.c.l.b16 %v3750
      %v3820 = vunpack.c.l.b16 %v3751
      %v3821 = vunpack.c.l.b16 %v3752
      %v3822 = vunpack.c.l.b16 %v3753
      %v3823 = vunpack.c.l.b16 %v3754
      %v3824 = vunpack.c.l.b16 %v3755
      %v3825 = vunpack.c.l.b16 %v3756
      %v3826 = vunpack.c.l.b16 %v3757
      %v3827 = vunpack.c.l.b16 %v3758
      %v3828 = vunpack.c.l.b16 %v3759
      %v3829 = vunpack.c.l.b16 %v3760
      %v3830 = vunpack.c.l.b16 %v3761
      %v3831 = vunpack.c.l.b16 %v3762
      %v3832 = vunpack.c.l.b16 %v3763
      %v3833 = vunpack.c.l.b16 %v3764
      %v3834 = vunpack.c.l.b16 %v3765
      %v3835 = vunpack.c.l.b16 %v3766
      %v3836 = vunpack.c.l.b16 %v3767
      %v3837 = vunpack.c.l.b16 %v3768
      %v3838 = vunpack.c.l.b16 %v3769
      %v3839 = vunpack.c.l.b16 %v3770
      %v3840 = vunpack.c.l.b16 %v3771
      %v3841 = vunpack.c.l.b16 %v3772
      %v3842 = vunpack.c.l.b16 %v3773
      %v3843 = vunpack.c.l.b16 %v3774
      %v3844 = vpack.c.b16 %v3813, %v3812
      %v3845 = vpack.c.b16 %v3815, %v3814
      %v3846 = vpack.c.b16 %v3817, %v3816
      %v3847 = vpack.c.b16 %v3819, %v3818
      %v3848 = vpack.c.b16 %v3821, %v3820
      %v3849 = vpack.c.b16 %v3823, %v3822
      %v3850 = vpack.c.b16 %v3825, %v3824
      %v3851 = vpack.c.b16 %v3827, %v3826
      %v3852 = vpack.c.b16 %v3829, %v3828
      %v3853 = vpack.c.b16 %v3831, %v3830
      %v3854 = vpack.c.b16 %v3833, %v3832
      %v3855 = vpack.c.b16 %v3835, %v3834
      %v3856 = vpack.c.b16 %v3837, %v3836
      %v3857 = vpack.c.b16 %v3839, %v3838
      %v3858 = vpack.c.b16 %v3841, %v3840
      %v3859 = vpack.c.b16 %v3843, %v3842
      %v3864 = vunpack.c.l.b16 %v3776
      %v3865 = vunpack.c.l.b16 %v3777
      %v3866 = vunpack.c.l.b16 %v3778
      %v3867 = vunpack.c.l.b16 %v3779
      %v3868 = vpack.c.b16 %v3865, %v3864
      %v3869 = vpack.c.b16 %v3867, %v3866
      %v3873 = vsel %vm439, %v3844, 0
      %v3876 = vsel %vm439, %v3845, 0
      %v3879 = vsel %vm439, %v3846, 0
      %v3882 = vsel %vm439, %v3847, 0
      %v3885 = vsel %vm439, %v3848, 0
      %v3888 = vsel %vm439, %v3849, 0
      %v3891 = vsel %vm439, %v3850, 0
      %v3894 = vsel %vm439, %v3851, 0
      %v3897 = vsel %vm439, %v3852, 0
      %v3900 = vsel %vm439, %v3853, 0
      %v3903 = vsel %vm439, %v3854, 0
      %v3906 = vsel %vm439, %v3855, 0
      %v3909 = vsel %vm439, %v3856, 0
      %v3912 = vsel %vm439, %v3857, 0
      %v3915 = vsel %vm439, %v3858, 0
      %v3918 = vsel %vm439, %v3859, 0
      %3920 = vmatprep.subr.bf16.mxu0 0
      %3921 = vmatpush1.bf16.msra.mxu0 0
      %3922 = vmatprep.subr.bf16.mxu0 0
      %3923 = vmatpush1.bf16.msra.mxu0 0
      %3924 = vmatprep.subr.bf16.mxu0 0
      %3925 = vmatpush1.bf16.msra.mxu0 0
      %3926 = vmatprep.subr.bf16.mxu0 0
      %3927 = vmatpush1.bf16.msra.mxu0 0
      %3928 = vmatprep.subr.bf16.mxu0 0
      %3929 = vmatpush1.bf16.msra.mxu0 0
      %3930 = vmatprep.subr.bf16.mxu0 0
      %3931 = vmatpush1.bf16.msra.mxu0 0
      %3932 = vmatprep.subr.bf16.mxu0 0
      %3933 = vmatpush1.bf16.msra.mxu0 %v3869
      %3934 = vmatprep.subr.bf16.mxu0 0
      %3935 = vmatpush1.bf16.msra.mxu0 %v3868
      %3936 = vmatprep.subr.bf16.mxu0 0
      %3937 = vmatpush2.bf16.msra.mxu0 0
      %3938 = vmatprep.subr.bf16.mxu0 0
      %3939 = vmatpush2.bf16.msra.mxu0 0
      %3940 = vmatprep.subr.bf16.mxu0 0
      %3941 = vmatpush2.bf16.msra.mxu0 0
      %3942 = vmatprep.subr.bf16.mxu0 0
      %3943 = vmatpush2.bf16.msra.mxu0 0
      %3944 = vmatprep.subr.bf16.mxu0 0
      %3945 = vmatpush2.bf16.msra.mxu0 0
      %3946 = vmatprep.subr.bf16.mxu0 0
      %3947 = vmatpush2.bf16.msra.mxu0 0
      %3948 = vmatprep.subr.bf16.mxu0 0
      %3949 = vmatpush2.bf16.msra.mxu0 0
      %3950 = vmatprep.subr.bf16.mxu0 0
      %3951 = vmatpush2.bf16.msra.mxu0 0
      %3952 = vmatprep.mubr.bf16.mxu0 0
      %3953 = vmatmul.mubr.bf16.gmra.mxu0 %v3873
      %v3954 = vpop.f32.mrf.mxu0
      %v3955 = vadd.f32 0.0, %v3954
      %v3956 = vpop.f32.mrf.mxu0
      %v3957 = vpop.f32.mrf.mxu0
      %v3958 = vadd.f32 0.0, %v3957
      %v3959 = vpop.f32.mrf.mxu0
      %3960 = vmatprep.mubr.bf16.mxu0 0
      %3961 = vmatmul.mubr.bf16.gmra.mxu0 %v3876
      %v3962 = vpop.f32.mrf.mxu0
      %v3963 = vadd.f32 0.0, %v3962
      %v3964 = vpop.f32.mrf.mxu0
      %v3965 = vpop.f32.mrf.mxu0
      %v3966 = vadd.f32 0.0, %v3965
      %v3967 = vpop.f32.mrf.mxu0
      %3968 = vmatprep.mubr.bf16.mxu0 0
      %3969 = vmatmul.mubr.bf16.gmra.mxu0 %v3879
      %v3970 = vpop.f32.mrf.mxu0
      %v3971 = vadd.f32 0.0, %v3970
      %v3972 = vpop.f32.mrf.mxu0
      %v3973 = vpop.f32.mrf.mxu0
      %v3974 = vadd.f32 0.0, %v3973
      %v3975 = vpop.f32.mrf.mxu0
      %3976 = vmatprep.mubr.bf16.mxu0 0
      %3977 = vmatmul.mubr.bf16.gmra.mxu0 %v3882
      %v3978 = vpop.f32.mrf.mxu0
      %v3979 = vadd.f32 0.0, %v3978
      %v3980 = vpop.f32.mrf.mxu0
      %v3981 = vpop.f32.mrf.mxu0
      %v3982 = vadd.f32 0.0, %v3981
      %v3983 = vpop.f32.mrf.mxu0
      %3984 = vmatprep.mubr.bf16.mxu0 0
      %3985 = vmatmul.mubr.bf16.gmra.mxu0 %v3885
      %v3986 = vpop.f32.mrf.mxu0
      %v3987 = vadd.f32 0.0, %v3986
      %v3988 = vpop.f32.mrf.mxu0
      %v3989 = vpop.f32.mrf.mxu0
      %v3990 = vadd.f32 0.0, %v3989
      %v3991 = vpop.f32.mrf.mxu0
      %3992 = vmatprep.mubr.bf16.mxu0 0
      %3993 = vmatmul.mubr.bf16.gmra.mxu0 %v3888
      %v3994 = vpop.f32.mrf.mxu0
      %v3995 = vadd.f32 0.0, %v3994
      %v3996 = vpop.f32.mrf.mxu0
      %v3997 = vpop.f32.mrf.mxu0
      %v3998 = vadd.f32 0.0, %v3997
      %v3999 = vpop.f32.mrf.mxu0
      %4000 = vmatprep.mubr.bf16.mxu0 0
      %4001 = vmatmul.mubr.bf16.gmra.mxu0 %v3891
      %v4002 = vpop.f32.mrf.mxu0
      %v4003 = vadd.f32 0.0, %v4002
      %v4004 = vpop.f32.mrf.mxu0
      %v4005 = vpop.f32.mrf.mxu0
      %v4006 = vadd.f32 0.0, %v4005
      %v4007 = vpop.f32.mrf.mxu0
      %4008 = vmatprep.mubr.bf16.mxu0 0
      %4009 = vmatmul.mubr.bf16.gmra.mxu0 %v3894
      %v4010 = vpop.f32.mrf.mxu0
      %v4011 = vadd.f32 0.0, %v4010
      %v4012 = vpop.f32.mrf.mxu0
      %v4013 = vpop.f32.mrf.mxu0
      %v4014 = vadd.f32 0.0, %v4013
      %v4015 = vpop.f32.mrf.mxu0
      %4016 = vmatprep.mubr.bf16.mxu0 0
      %4017 = vmatmul.mubr.bf16.gmra.mxu0 %v3897
      %v4018 = vpop.f32.mrf.mxu0
      %v4019 = vadd.f32 0.0, %v4018
      %v4020 = vpop.f32.mrf.mxu0
      %v4021 = vpop.f32.mrf.mxu0
      %v4022 = vadd.f32 0.0, %v4021
      %v4023 = vpop.f32.mrf.mxu0
      %4024 = vmatprep.mubr.bf16.mxu0 0
      %4025 = vmatmul.mubr.bf16.gmra.mxu0 %v3900
      %v4026 = vpop.f32.mrf.mxu0
      %v4027 = vadd.f32 0.0, %v4026
      %v4028 = vpop.f32.mrf.mxu0
      %v4029 = vpop.f32.mrf.mxu0
      %v4030 = vadd.f32 0.0, %v4029
      %v4031 = vpop.f32.mrf.mxu0
      %4032 = vmatprep.mubr.bf16.mxu0 0
      %4033 = vmatmul.mubr.bf16.gmra.mxu0 %v3903
      %v4034 = vpop.f32.mrf.mxu0
      %v4035 = vadd.f32 0.0, %v4034
      %v4036 = vpop.f32.mrf.mxu0
      %v4037 = vpop.f32.mrf.mxu0
      %v4038 = vadd.f32 0.0, %v4037
      %v4039 = vpop.f32.mrf.mxu0
      %4040 = vmatprep.mubr.bf16.mxu0 0
      %4041 = vmatmul.mubr.bf16.gmra.mxu0 %v3906
      %v4042 = vpop.f32.mrf.mxu0
      %v4043 = vadd.f32 0.0, %v4042
      %v4044 = vpop.f32.mrf.mxu0
      %v4045 = vpop.f32.mrf.mxu0
      %v4046 = vadd.f32 0.0, %v4045
      %v4047 = vpop.f32.mrf.mxu0
      %4048 = vmatprep.mubr.bf16.mxu0 0
      %4049 = vmatmul.mubr.bf16.gmra.mxu0 %v3909
      %v4050 = vpop.f32.mrf.mxu0
      %v4051 = vadd.f32 0.0, %v4050
      %v4052 = vpop.f32.mrf.mxu0
      %v4053 = vpop.f32.mrf.mxu0
      %v4054 = vadd.f32 0.0, %v4053
      %v4055 = vpop.f32.mrf.mxu0
      %4056 = vmatprep.mubr.bf16.mxu0 0
      %4057 = vmatmul.mubr.bf16.gmra.mxu0 %v3912
      %v4058 = vpop.f32.mrf.mxu0
      %v4059 = vadd.f32 0.0, %v4058
      %v4060 = vpop.f32.mrf.mxu0
      %v4061 = vpop.f32.mrf.mxu0
      %v4062 = vadd.f32 0.0, %v4061
      %v4063 = vpop.f32.mrf.mxu0
      %4064 = vmatprep.mubr.bf16.mxu0 0
      %4065 = vmatmul.mubr.bf16.gmra.mxu0 %v3915
      %v4066 = vpop.f32.mrf.mxu0
      %v4067 = vadd.f32 0.0, %v4066
      %v4068 = vpop.f32.mrf.mxu0
      %v4069 = vpop.f32.mrf.mxu0
      %v4070 = vadd.f32 0.0, %v4069
      %v4071 = vpop.f32.mrf.mxu0
      %4072 = vmatprep.mubr.bf16.mxu0 0
      %4073 = vmatmul.mubr.bf16.gmra.mxu0 %v3918
      %v4074 = vpop.f32.mrf.mxu0
      %v4075 = vadd.f32 0.0, %v4074
      %v4076 = vpop.f32.mrf.mxu0
      %v4077 = vpop.f32.mrf.mxu0
      %v4078 = vadd.f32 0.0, %v4077
      %v4079 = vpop.f32.mrf.mxu0
      %4080 = vdwg.mxu0
      %v4081 = vadd.f32 %v3709, %v3955
      %v4082 = vadd.f32 %v3710, %v3958
      %v4083 = vadd.f32 %v3711, %v3963
      %v4084 = vadd.f32 %v3712, %v3966
      %v4085 = vadd.f32 %v3713, %v3971
      %v4086 = vadd.f32 %v3714, %v3974
      %v4087 = vadd.f32 %v3715, %v3979
      %v4088 = vadd.f32 %v3716, %v3982
      %v4089 = vadd.f32 %v3717, %v3987
      %v4090 = vadd.f32 %v3718, %v3990
      %v4091 = vadd.f32 %v3719, %v3995
      %v4092 = vadd.f32 %v3720, %v3998
      %v4093 = vadd.f32 %v3721, %v4003
      %v4094 = vadd.f32 %v3722, %v4006
      %v4095 = vadd.f32 %v3723, %v4011
      %v4096 = vadd.f32 %v3724, %v4014
      %v4097 = vadd.f32 %v3725, %v4019
      %v4098 = vadd.f32 %v3726, %v4022
      %v4099 = vadd.f32 %v3727, %v4027
      %v4100 = vadd.f32 %v3728, %v4030
      %v4101 = vadd.f32 %v3729, %v4035
      %v4102 = vadd.f32 %v3730, %v4038
      %v4103 = vadd.f32 %v3731, %v4043
      %v4104 = vadd.f32 %v3732, %v4046
      %v4105 = vadd.f32 %v3733, %v4051
      %v4106 = vadd.f32 %v3734, %v4054
      %v4107 = vadd.f32 %v3735, %v4059
      %v4108 = vadd.f32 %v3736, %v4062
      %v4109 = vadd.f32 %v3737, %v4067
      %v4110 = vadd.f32 %v3738, %v4070
      %v4111 = vadd.f32 %v3739, %v4075
      %v4112 = vadd.f32 %v3740, %v4078
      %v4113 = vld [vmem:[%s3378] sm:$0xf]
      %v4114 = vld [vmem:[%s3378 + $0x4] sm:$0xf]
      %v4115 = vld [vmem:[%s3378 + $0x8] sm:$0x1]
      %v4116 = vld [vmem:[%s3378 + $0xc] sm:$0xf]
      %v4117 = vld [vmem:[%s3378 + $0x10] sm:$0xf]
      %v4118 = vld [vmem:[%s3378 + $0x14] sm:$0x1]
      %v4119 = vld [vmem:[%s3378 + $0x18] sm:$0xf]
      %v4120 = vld [vmem:[%s3378 + $0x1c] sm:$0xf]
      %v4121 = vld [vmem:[%s3378 + $0x20] sm:$0x1]
      %v4122 = vld [vmem:[%s3378 + $0x24] sm:$0xf]
      %v4123 = vld [vmem:[%s3378 + $0x28] sm:$0xf]
      %v4124 = vld [vmem:[%s3378 + $0x2c] sm:$0x1]
      %v4125 = vld [vmem:[%s3378 + $0x30] sm:$0xf]
      %v4126 = vld [vmem:[%s3378 + $0x34] sm:$0xf]
      %v4127 = vld [vmem:[%s3378 + $0x38] sm:$0x1]
      %v4128 = vld [vmem:[%s3378 + $0x3c] sm:$0xf]
      %v4129 = vld [vmem:[%s3378 + $0x40] sm:$0xf]
      %v4130 = vld [vmem:[%s3378 + $0x44] sm:$0x1]
      %v4131 = vld [vmem:[%s3378 + $0x48] sm:$0xf]
      %v4132 = vld [vmem:[%s3378 + $0x4c] sm:$0xf]
      %v4133 = vld [vmem:[%s3378 + $0x50] sm:$0x1]
      %v4134 = vld [vmem:[%s3378 + $0x54] sm:$0xf]
      %v4135 = vld [vmem:[%s3378 + $0x58] sm:$0xf]
      %v4136 = vld [vmem:[%s3378 + $0x5c] sm:$0x1]
      %v4137 = vld [vmem:[%s3378 + $0x60] sm:$0xf]
      %v4138 = vld [vmem:[%s3378 + $0x64] sm:$0xf]
      %v4139 = vld [vmem:[%s3378 + $0x68] sm:$0x1]
      %v4140 = vld [vmem:[%s3378 + $0x6c] sm:$0xf]
      %v4141 = vld [vmem:[%s3378 + $0x70] sm:$0xf]
      %v4142 = vld [vmem:[%s3378 + $0x74] sm:$0x1]
      %v4143 = vld [vmem:[%s3378 + $0x78] sm:$0xf]
      %v4144 = vld [vmem:[%s3378 + $0x7c] sm:$0xf]
      %v4145 = vld [vmem:[%s3378 + $0x80] sm:$0x1]
      %v4146 = vld [vmem:[%s3378 + $0x84] sm:$0xf]
      %v4147 = vld [vmem:[%s3378 + $0x88] sm:$0xf]
      %v4148 = vld [vmem:[%s3378 + $0x8c] sm:$0x1]
      %v4149 = vld [vmem:[%s3378 + $0x90] sm:$0xf]
      %v4150 = vld [vmem:[%s3378 + $0x94] sm:$0xf]
      %v4151 = vld [vmem:[%s3378 + $0x98] sm:$0x1]
      %v4152 = vld [vmem:[%s3378 + $0x9c] sm:$0xf]
      %v4153 = vld [vmem:[%s3378 + $0xa0] sm:$0xf]
      %v4154 = vld [vmem:[%s3378 + $0xa4] sm:$0x1]
      %v4155 = vld [vmem:[%s3378 + $0xa8] sm:$0xf]
      %v4156 = vld [vmem:[%s3378 + $0xac] sm:$0xf]
      %v4157 = vld [vmem:[%s3378 + $0xb0] sm:$0x1]
      %v4158 = vld [vmem:[%s3378 + $0xb4] sm:$0xf]
      %v4159 = vld [vmem:[%s3378 + $0xb8] sm:$0xf]
      %v4160 = vld [vmem:[%s3378 + $0xbc] sm:$0x1]
      %v4162 = vshrl.u32 %v4113, 16
      %v4164 = vrot.slane %v4162, 4
      %v4165 = vshll.u32 %v4113, 16
      %v4167 = vrot.slane %v4165, 5
      %v4168 = vor.u32 %v4164, %v4167
      %v4169 = vrot.slane %v4168, 4
      %v4171 = vshll.u32 %v4114, 16
      %v4173 = vrot.slane %v4171, 5
      %v4174 = vsel %vm995, %v4169, %v4173
      %v4175 = vshrl.u32 %v4114, 16
      %v4177 = vrot.slane %v4175, 4
      %v4178 = vor.u32 %v4177, %v4173
      %v4179 = vrot.slane %v4178, 4
      %v4181 = vshll.u32 %v4115, 16
      %v4183 = vrot.slane %v4181, 5
      %v4184 = vsel %vm995, %v4179, %v4183
      %v4186 = vshrl.u32 %v4116, 16
      %v4188 = vrot.slane %v4186, 4
      %v4189 = vshll.u32 %v4116, 16
      %v4191 = vrot.slane %v4189, 5
      %v4192 = vor.u32 %v4188, %v4191
      %v4193 = vrot.slane %v4192, 4
      %v4195 = vshll.u32 %v4117, 16
      %v4197 = vrot.slane %v4195, 5
      %v4198 = vsel %vm995, %v4193, %v4197
      %v4199 = vshrl.u32 %v4117, 16
      %v4201 = vrot.slane %v4199, 4
      %v4202 = vor.u32 %v4201, %v4197
      %v4203 = vrot.slane %v4202, 4
      %v4205 = vshll.u32 %v4118, 16
      %v4207 = vrot.slane %v4205, 5
      %v4208 = vsel %vm995, %v4203, %v4207
      %v4210 = vshrl.u32 %v4119, 16
      %v4212 = vrot.slane %v4210, 4
      %v4213 = vshll.u32 %v4119, 16
      %v4215 = vrot.slane %v4213, 5
      %v4216 = vor.u32 %v4212, %v4215
      %v4217 = vrot.slane %v4216, 4
      %v4219 = vshll.u32 %v4120, 16
      %v4221 = vrot.slane %v4219, 5
      %v4222 = vsel %vm995, %v4217, %v4221
      %v4223 = vshrl.u32 %v4120, 16
      %v4225 = vrot.slane %v4223, 4
      %v4226 = vor.u32 %v4225, %v4221
      %v4227 = vrot.slane %v4226, 4
      %v4229 = vshll.u32 %v4121, 16
      %v4231 = vrot.slane %v4229, 5
      %v4232 = vsel %vm995, %v4227, %v4231
      %v4234 = vshrl.u32 %v4122, 16
      %v4236 = vrot.slane %v4234, 4
      %v4237 = vshll.u32 %v4122, 16
      %v4239 = vrot.slane %v4237, 5
      %v4240 = vor.u32 %v4236, %v4239
      %v4241 = vrot.slane %v4240, 4
      %v4243 = vshll.u32 %v4123, 16
      %v4245 = vrot.slane %v4243, 5
      %v4246 = vsel %vm995, %v4241, %v4245
      %v4247 = vshrl.u32 %v4123, 16
      %v4249 = vrot.slane %v4247, 4
      %v4250 = vor.u32 %v4249, %v4245
      %v4251 = vrot.slane %v4250, 4
      %v4253 = vshll.u32 %v4124, 16
      %v4255 = vrot.slane %v4253, 5
      %v4256 = vsel %vm995, %v4251, %v4255
      %v4258 = vshrl.u32 %v4125, 16
      %v4260 = vrot.slane %v4258, 4
      %v4261 = vshll.u32 %v4125, 16
      %v4263 = vrot.slane %v4261, 5
      %v4264 = vor.u32 %v4260, %v4263
      %v4265 = vrot.slane %v4264, 4
      %v4267 = vshll.u32 %v4126, 16
      %v4269 = vrot.slane %v4267, 5
      %v4270 = vsel %vm995, %v4265, %v4269
      %v4271 = vshrl.u32 %v4126, 16
      %v4273 = vrot.slane %v4271, 4
      %v4274 = vor.u32 %v4273, %v4269
      %v4275 = vrot.slane %v4274, 4
      %v4277 = vshll.u32 %v4127, 16
      %v4279 = vrot.slane %v4277, 5
      %v4280 = vsel %vm995, %v4275, %v4279
      %v4282 = vshrl.u32 %v4128, 16
      %v4284 = vrot.slane %v4282, 4
      %v4285 = vshll.u32 %v4128, 16
      %v4287 = vrot.slane %v4285, 5
      %v4288 = vor.u32 %v4284, %v4287
      %v4289 = vrot.slane %v4288, 4
      %v4291 = vshll.u32 %v4129, 16
      %v4293 = vrot.slane %v4291, 5
      %v4294 = vsel %vm995, %v4289, %v4293
      %v4295 = vshrl.u32 %v4129, 16
      %v4297 = vrot.slane %v4295, 4
      %v4298 = vor.u32 %v4297, %v4293
      %v4299 = vrot.slane %v4298, 4
      %v4301 = vshll.u32 %v4130, 16
      %v4303 = vrot.slane %v4301, 5
      %v4304 = vsel %vm995, %v4299, %v4303
      %v4306 = vshrl.u32 %v4131, 16
      %v4308 = vrot.slane %v4306, 4
      %v4309 = vshll.u32 %v4131, 16
      %v4311 = vrot.slane %v4309, 5
      %v4312 = vor.u32 %v4308, %v4311
      %v4313 = vrot.slane %v4312, 4
      %v4315 = vshll.u32 %v4132, 16
      %v4317 = vrot.slane %v4315, 5
      %v4318 = vsel %vm995, %v4313, %v4317
      %v4319 = vshrl.u32 %v4132, 16
      %v4321 = vrot.slane %v4319, 4
      %v4322 = vor.u32 %v4321, %v4317
      %v4323 = vrot.slane %v4322, 4
      %v4325 = vshll.u32 %v4133, 16
      %v4327 = vrot.slane %v4325, 5
      %v4328 = vsel %vm995, %v4323, %v4327
      %v4330 = vshrl.u32 %v4134, 16
      %v4332 = vrot.slane %v4330, 4
      %v4333 = vshll.u32 %v4134, 16
      %v4335 = vrot.slane %v4333, 5
      %v4336 = vor.u32 %v4332, %v4335
      %v4337 = vrot.slane %v4336, 4
      %v4339 = vshll.u32 %v4135, 16
      %v4341 = vrot.slane %v4339, 5
      %v4342 = vsel %vm995, %v4337, %v4341
      %v4343 = vshrl.u32 %v4135, 16
      %v4345 = vrot.slane %v4343, 4
      %v4346 = vor.u32 %v4345, %v4341
      %v4347 = vrot.slane %v4346, 4
      %v4349 = vshll.u32 %v4136, 16
      %v4351 = vrot.slane %v4349, 5
      %v4352 = vsel %vm995, %v4347, %v4351
      %v4354 = vshrl.u32 %v4137, 16
      %v4356 = vrot.slane %v4354, 4
      %v4357 = vshll.u32 %v4137, 16
      %v4359 = vrot.slane %v4357, 5
      %v4360 = vor.u32 %v4356, %v4359
      %v4361 = vrot.slane %v4360, 4
      %v4363 = vshll.u32 %v4138, 16
      %v4365 = vrot.slane %v4363, 5
      %v4366 = vsel %vm995, %v4361, %v4365
      %v4367 = vshrl.u32 %v4138, 16
      %v4369 = vrot.slane %v4367, 4
      %v4370 = vor.u32 %v4369, %v4365
      %v4371 = vrot.slane %v4370, 4
      %v4373 = vshll.u32 %v4139, 16
      %v4375 = vrot.slane %v4373, 5
      %v4376 = vsel %vm995, %v4371, %v4375
      %v4378 = vshrl.u32 %v4140, 16
      %v4380 = vrot.slane %v4378, 4
      %v4381 = vshll.u32 %v4140, 16
      %v4383 = vrot.slane %v4381, 5
      %v4384 = vor.u32 %v4380, %v4383
      %v4385 = vrot.slane %v4384, 4
      %v4387 = vshll.u32 %v4141, 16
      %v4389 = vrot.slane %v4387, 5
      %v4390 = vsel %vm995, %v4385, %v4389
      %v4391 = vshrl.u32 %v4141, 16
      %v4393 = vrot.slane %v4391, 4
      %v4394 = vor.u32 %v4393, %v4389
      %v4395 = vrot.slane %v4394, 4
      %v4397 = vshll.u32 %v4142, 16
      %v4399 = vrot.slane %v4397, 5
      %v4400 = vsel %vm995, %v4395, %v4399
      %v4402 = vshrl.u32 %v4143, 16
      %v4404 = vrot.slane %v4402, 4
      %v4405 = vshll.u32 %v4143, 16
      %v4407 = vrot.slane %v4405, 5
      %v4408 = vor.u32 %v4404, %v4407
      %v4409 = vrot.slane %v4408, 4
      %v4411 = vshll.u32 %v4144, 16
      %v4413 = vrot.slane %v4411, 5
      %v4414 = vsel %vm995, %v4409, %v4413
      %v4415 = vshrl.u32 %v4144, 16
      %v4417 = vrot.slane %v4415, 4
      %v4418 = vor.u32 %v4417, %v4413
      %v4419 = vrot.slane %v4418, 4
      %v4421 = vshll.u32 %v4145, 16
      %v4423 = vrot.slane %v4421, 5
      %v4424 = vsel %vm995, %v4419, %v4423
      %v4426 = vshrl.u32 %v4146, 16
      %v4428 = vrot.slane %v4426, 4
      %v4429 = vshll.u32 %v4146, 16
      %v4431 = vrot.slane %v4429, 5
      %v4432 = vor.u32 %v4428, %v4431
      %v4433 = vrot.slane %v4432, 4
      %v4435 = vshll.u32 %v4147, 16
      %v4437 = vrot.slane %v4435, 5
      %v4438 = vsel %vm995, %v4433, %v4437
      %v4439 = vshrl.u32 %v4147, 16
      %v4441 = vrot.slane %v4439, 4
      %v4442 = vor.u32 %v4441, %v4437
      %v4443 = vrot.slane %v4442, 4
      %v4445 = vshll.u32 %v4148, 16
      %v4447 = vrot.slane %v4445, 5
      %v4448 = vsel %vm995, %v4443, %v4447
      %v4450 = vshrl.u32 %v4149, 16
      %v4452 = vrot.slane %v4450, 4
      %v4453 = vshll.u32 %v4149, 16
      %v4455 = vrot.slane %v4453, 5
      %v4456 = vor.u32 %v4452, %v4455
      %v4457 = vrot.slane %v4456, 4
      %v4459 = vshll.u32 %v4150, 16
      %v4461 = vrot.slane %v4459, 5
      %v4462 = vsel %vm995, %v4457, %v4461
      %v4463 = vshrl.u32 %v4150, 16
      %v4465 = vrot.slane %v4463, 4
      %v4466 = vor.u32 %v4465, %v4461
      %v4467 = vrot.slane %v4466, 4
      %v4469 = vshll.u32 %v4151, 16
      %v4471 = vrot.slane %v4469, 5
      %v4472 = vsel %vm995, %v4467, %v4471
      %v4474 = vshrl.u32 %v4152, 16
      %v4476 = vrot.slane %v4474, 4
      %v4477 = vshll.u32 %v4152, 16
      %v4479 = vrot.slane %v4477, 5
      %v4480 = vor.u32 %v4476, %v4479
      %v4481 = vrot.slane %v4480, 4
      %v4483 = vshll.u32 %v4153, 16
      %v4485 = vrot.slane %v4483, 5
      %v4486 = vsel %vm995, %v4481, %v4485
      %v4487 = vshrl.u32 %v4153, 16
      %v4489 = vrot.slane %v4487, 4
      %v4490 = vor.u32 %v4489, %v4485
      %v4491 = vrot.slane %v4490, 4
      %v4493 = vshll.u32 %v4154, 16
      %v4495 = vrot.slane %v4493, 5
      %v4496 = vsel %vm995, %v4491, %v4495
      %v4498 = vshrl.u32 %v4155, 16
      %v4500 = vrot.slane %v4498, 4
      %v4501 = vshll.u32 %v4155, 16
      %v4503 = vrot.slane %v4501, 5
      %v4504 = vor.u32 %v4500, %v4503
      %v4505 = vrot.slane %v4504, 4
      %v4507 = vshll.u32 %v4156, 16
      %v4509 = vrot.slane %v4507, 5
      %v4510 = vsel %vm995, %v4505, %v4509
      %v4511 = vshrl.u32 %v4156, 16
      %v4513 = vrot.slane %v4511, 4
      %v4514 = vor.u32 %v4513, %v4509
      %v4515 = vrot.slane %v4514, 4
      %v4517 = vshll.u32 %v4157, 16
      %v4519 = vrot.slane %v4517, 5
      %v4520 = vsel %vm995, %v4515, %v4519
      %v4522 = vshrl.u32 %v4158, 16
      %v4524 = vrot.slane %v4522, 4
      %v4525 = vshll.u32 %v4158, 16
      %v4527 = vrot.slane %v4525, 5
      %v4528 = vor.u32 %v4524, %v4527
      %v4529 = vrot.slane %v4528, 4
      %v4531 = vshll.u32 %v4159, 16
      %v4533 = vrot.slane %v4531, 5
      %v4534 = vsel %vm995, %v4529, %v4533
      %v4535 = vshrl.u32 %v4159, 16
      %v4537 = vrot.slane %v4535, 4
      %v4538 = vor.u32 %v4537, %v4533
      %v4539 = vrot.slane %v4538, 4
      %v4541 = vshll.u32 %v4160, 16
      %v4543 = vrot.slane %v4541, 5
      %v4544 = vsel %vm995, %v4539, %v4543
      %s4545 = scalar_lea.vmem %s2, 32
      %v4546 = vld [vmem:[%s4545] sm:$0xf]
      %v4547 = vld [vmem:[%s4545 + $0x4] sm:$0xf]
      %v4548 = vunpack.c.l.b16 %v4174
      %v4549 = vunpack.c.l.b16 %v4184
      %v4550 = vunpack.c.l.b16 %v4198
      %v4551 = vunpack.c.l.b16 %v4208
      %v4552 = vunpack.c.l.b16 %v4222
      %v4553 = vunpack.c.l.b16 %v4232
      %v4554 = vunpack.c.l.b16 %v4246
      %v4555 = vunpack.c.l.b16 %v4256
      %v4556 = vunpack.c.l.b16 %v4270
      %v4557 = vunpack.c.l.b16 %v4280
      %v4558 = vunpack.c.l.b16 %v4294
      %v4559 = vunpack.c.l.b16 %v4304
      %v4560 = vunpack.c.l.b16 %v4318
      %v4561 = vunpack.c.l.b16 %v4328
      %v4562 = vunpack.c.l.b16 %v4342
      %v4563 = vunpack.c.l.b16 %v4352
      %v4564 = vunpack.c.l.b16 %v4366
      %v4565 = vunpack.c.l.b16 %v4376
      %v4566 = vunpack.c.l.b16 %v4390
      %v4567 = vunpack.c.l.b16 %v4400
      %v4568 = vunpack.c.l.b16 %v4414
      %v4569 = vunpack.c.l.b16 %v4424
      %v4570 = vunpack.c.l.b16 %v4438
      %v4571 = vunpack.c.l.b16 %v4448
      %v4572 = vunpack.c.l.b16 %v4462
      %v4573 = vunpack.c.l.b16 %v4472
      %v4574 = vunpack.c.l.b16 %v4486
      %v4575 = vunpack.c.l.b16 %v4496
      %v4576 = vunpack.c.l.b16 %v4510
      %v4577 = vunpack.c.l.b16 %v4520
      %v4578 = vunpack.c.l.b16 %v4534
      %v4579 = vunpack.c.l.b16 %v4544
      %v4580 = vpack.c.b16 %v4549, %v4548
      %v4581 = vpack.c.b16 %v4551, %v4550
      %v4582 = vpack.c.b16 %v4553, %v4552
      %v4583 = vpack.c.b16 %v4555, %v4554
      %v4584 = vpack.c.b16 %v4557, %v4556
      %v4585 = vpack.c.b16 %v4559, %v4558
      %v4586 = vpack.c.b16 %v4561, %v4560
      %v4587 = vpack.c.b16 %v4563, %v4562
      %v4588 = vpack.c.b16 %v4565, %v4564
      %v4589 = vpack.c.b16 %v4567, %v4566
      %v4590 = vpack.c.b16 %v4569, %v4568
      %v4591 = vpack.c.b16 %v4571, %v4570
      %v4592 = vpack.c.b16 %v4573, %v4572
      %v4593 = vpack.c.b16 %v4575, %v4574
      %v4594 = vpack.c.b16 %v4577, %v4576
      %v4595 = vpack.c.b16 %v4579, %v4578
      %v4598 = vunpack.c.l.b16 %v4546
      %v4599 = vunpack.c.l.b16 %v4547
      %v4600 = vpack.c.b16 %v4599, %v4598
      %v4603 = vsel %vm735, %v4580, 0
      %v4606 = vsel %vm735, %v4581, 0
      %v4609 = vsel %vm735, %v4582, 0
      %v4612 = vsel %vm735, %v4583, 0
      %v4615 = vsel %vm735, %v4584, 0
      %v4618 = vsel %vm735, %v4585, 0
      %v4621 = vsel %vm735, %v4586, 0
      %v4624 = vsel %vm735, %v4587, 0
      %v4627 = vsel %vm735, %v4588, 0
      %v4630 = vsel %vm735, %v4589, 0
      %v4633 = vsel %vm735, %v4590, 0
      %v4636 = vsel %vm735, %v4591, 0
      %v4639 = vsel %vm735, %v4592, 0
      %v4642 = vsel %vm735, %v4593, 0
      %v4645 = vsel %vm735, %v4594, 0
      %v4648 = vsel %vm735, %v4595, 0
      %4650 = vmatprep.subr.bf16.mxu0 0
      %4651 = vmatpush1.bf16.msra.mxu0 0
      %4652 = vmatprep.subr.bf16.mxu0 0
      %4653 = vmatpush1.bf16.msra.mxu0 0
      %4654 = vmatprep.subr.bf16.mxu0 0
      %4655 = vmatpush1.bf16.msra.mxu0 0
      %4656 = vmatprep.subr.bf16.mxu0 0
      %4657 = vmatpush1.bf16.msra.mxu0 0
      %4658 = vmatprep.subr.bf16.mxu0 0
      %4659 = vmatpush1.bf16.msra.mxu0 0
      %4660 = vmatprep.subr.bf16.mxu0 0
      %4661 = vmatpush1.bf16.msra.mxu0 0
      %4662 = vmatprep.subr.bf16.mxu0 0
      %4663 = vmatpush1.bf16.msra.mxu0 0
      %4664 = vmatprep.subr.bf16.mxu0 0
      %4665 = vmatpush1.bf16.msra.mxu0 %v4600
      %4666 = vmatprep.subr.bf16.mxu0 0
      %4667 = vmatpush2.bf16.msra.mxu0 0
      %4668 = vmatprep.subr.bf16.mxu0 0
      %4669 = vmatpush2.bf16.msra.mxu0 0
      %4670 = vmatprep.subr.bf16.mxu0 0
      %4671 = vmatpush2.bf16.msra.mxu0 0
      %4672 = vmatprep.subr.bf16.mxu0 0
      %4673 = vmatpush2.bf16.msra.mxu0 0
      %4674 = vmatprep.subr.bf16.mxu0 0
      %4675 = vmatpush2.bf16.msra.mxu0 0
      %4676 = vmatprep.subr.bf16.mxu0 0
      %4677 = vmatpush2.bf16.msra.mxu0 0
      %4678 = vmatprep.subr.bf16.mxu0 0
      %4679 = vmatpush2.bf16.msra.mxu0 0
      %4680 = vmatprep.subr.bf16.mxu0 0
      %4681 = vmatpush2.bf16.msra.mxu0 0
      %4682 = vmatprep.mubr.bf16.mxu0 0
      %4683 = vmatmul.mubr.bf16.gmra.mxu0 %v4603
      %v4684 = vpop.f32.mrf.mxu0
      %v4685 = vadd.f32 0.0, %v4684
      %v4686 = vpop.f32.mrf.mxu0
      %v4687 = vpop.f32.mrf.mxu0
      %v4688 = vadd.f32 0.0, %v4687
      %v4689 = vpop.f32.mrf.mxu0
      %4690 = vmatprep.mubr.bf16.mxu0 0
      %4691 = vmatmul.mubr.bf16.gmra.mxu0 %v4606
      %v4692 = vpop.f32.mrf.mxu0
      %v4693 = vadd.f32 0.0, %v4692
      %v4694 = vpop.f32.mrf.mxu0
      %v4695 = vpop.f32.mrf.mxu0
      %v4696 = vadd.f32 0.0, %v4695
      %v4697 = vpop.f32.mrf.mxu0
      %4698 = vmatprep.mubr.bf16.mxu0 0
      %4699 = vmatmul.mubr.bf16.gmra.mxu0 %v4609
      %v4700 = vpop.f32.mrf.mxu0
      %v4701 = vadd.f32 0.0, %v4700
      %v4702 = vpop.f32.mrf.mxu0
      %v4703 = vpop.f32.mrf.mxu0
      %v4704 = vadd.f32 0.0, %v4703
      %v4705 = vpop.f32.mrf.mxu0
      %4706 = vmatprep.mubr.bf16.mxu0 0
      %4707 = vmatmul.mubr.bf16.gmra.mxu0 %v4612
      %v4708 = vpop.f32.mrf.mxu0
      %v4709 = vadd.f32 0.0, %v4708
      %v4710 = vpop.f32.mrf.mxu0
      %v4711 = vpop.f32.mrf.mxu0
      %v4712 = vadd.f32 0.0, %v4711
      %v4713 = vpop.f32.mrf.mxu0
      %4714 = vmatprep.mubr.bf16.mxu0 0
      %4715 = vmatmul.mubr.bf16.gmra.mxu0 %v4615
      %v4716 = vpop.f32.mrf.mxu0
      %v4717 = vadd.f32 0.0, %v4716
      %v4718 = vpop.f32.mrf.mxu0
      %v4719 = vpop.f32.mrf.mxu0
      %v4720 = vadd.f32 0.0, %v4719
      %v4721 = vpop.f32.mrf.mxu0
      %4722 = vmatprep.mubr.bf16.mxu0 0
      %4723 = vmatmul.mubr.bf16.gmra.mxu0 %v4618
      %v4724 = vpop.f32.mrf.mxu0
      %v4725 = vadd.f32 0.0, %v4724
      %v4726 = vpop.f32.mrf.mxu0
      %v4727 = vpop.f32.mrf.mxu0
      %v4728 = vadd.f32 0.0, %v4727
      %v4729 = vpop.f32.mrf.mxu0
      %4730 = vmatprep.mubr.bf16.mxu0 0
      %4731 = vmatmul.mubr.bf16.gmra.mxu0 %v4621
      %v4732 = vpop.f32.mrf.mxu0
      %v4733 = vadd.f32 0.0, %v4732
      %v4734 = vpop.f32.mrf.mxu0
      %v4735 = vpop.f32.mrf.mxu0
      %v4736 = vadd.f32 0.0, %v4735
      %v4737 = vpop.f32.mrf.mxu0
      %4738 = vmatprep.mubr.bf16.mxu0 0
      %4739 = vmatmul.mubr.bf16.gmra.mxu0 %v4624
      %v4740 = vpop.f32.mrf.mxu0
      %v4741 = vadd.f32 0.0, %v4740
      %v4742 = vpop.f32.mrf.mxu0
      %v4743 = vpop.f32.mrf.mxu0
      %v4744 = vadd.f32 0.0, %v4743
      %v4745 = vpop.f32.mrf.mxu0
      %4746 = vmatprep.mubr.bf16.mxu0 0
      %4747 = vmatmul.mubr.bf16.gmra.mxu0 %v4627
      %v4748 = vpop.f32.mrf.mxu0
      %v4749 = vadd.f32 0.0, %v4748
      %v4750 = vpop.f32.mrf.mxu0
      %v4751 = vpop.f32.mrf.mxu0
      %v4752 = vadd.f32 0.0, %v4751
      %v4753 = vpop.f32.mrf.mxu0
      %4754 = vmatprep.mubr.bf16.mxu0 0
      %4755 = vmatmul.mubr.bf16.gmra.mxu0 %v4630
      %v4756 = vpop.f32.mrf.mxu0
      %v4757 = vadd.f32 0.0, %v4756
      %v4758 = vpop.f32.mrf.mxu0
      %v4759 = vpop.f32.mrf.mxu0
      %v4760 = vadd.f32 0.0, %v4759
      %v4761 = vpop.f32.mrf.mxu0
      %4762 = vmatprep.mubr.bf16.mxu0 0
      %4763 = vmatmul.mubr.bf16.gmra.mxu0 %v4633
      %v4764 = vpop.f32.mrf.mxu0
      %v4765 = vadd.f32 0.0, %v4764
      %v4766 = vpop.f32.mrf.mxu0
      %v4767 = vpop.f32.mrf.mxu0
      %v4768 = vadd.f32 0.0, %v4767
      %v4769 = vpop.f32.mrf.mxu0
      %4770 = vmatprep.mubr.bf16.mxu0 0
      %4771 = vmatmul.mubr.bf16.gmra.mxu0 %v4636
      %v4772 = vpop.f32.mrf.mxu0
      %v4773 = vadd.f32 0.0, %v4772
      %v4774 = vpop.f32.mrf.mxu0
      %v4775 = vpop.f32.mrf.mxu0
      %v4776 = vadd.f32 0.0, %v4775
      %v4777 = vpop.f32.mrf.mxu0
      %4778 = vmatprep.mubr.bf16.mxu0 0
      %4779 = vmatmul.mubr.bf16.gmra.mxu0 %v4639
      %v4780 = vpop.f32.mrf.mxu0
      %v4781 = vadd.f32 0.0, %v4780
      %v4782 = vpop.f32.mrf.mxu0
      %v4783 = vpop.f32.mrf.mxu0
      %v4784 = vadd.f32 0.0, %v4783
      %v4785 = vpop.f32.mrf.mxu0
      %4786 = vmatprep.mubr.bf16.mxu0 0
      %4787 = vmatmul.mubr.bf16.gmra.mxu0 %v4642
      %v4788 = vpop.f32.mrf.mxu0
      %v4789 = vadd.f32 0.0, %v4788
      %v4790 = vpop.f32.mrf.mxu0
      %v4791 = vpop.f32.mrf.mxu0
      %v4792 = vadd.f32 0.0, %v4791
      %v4793 = vpop.f32.mrf.mxu0
      %4794 = vmatprep.mubr.bf16.mxu0 0
      %4795 = vmatmul.mubr.bf16.gmra.mxu0 %v4645
      %v4796 = vpop.f32.mrf.mxu0
      %v4797 = vadd.f32 0.0, %v4796
      %v4798 = vpop.f32.mrf.mxu0
      %v4799 = vpop.f32.mrf.mxu0
      %v4800 = vadd.f32 0.0, %v4799
      %v4801 = vpop.f32.mrf.mxu0
      %4802 = vmatprep.mubr.bf16.mxu0 0
      %4803 = vmatmul.mubr.bf16.gmra.mxu0 %v4648
      %v4804 = vpop.f32.mrf.mxu0
      %v4805 = vadd.f32 0.0, %v4804
      %v4806 = vpop.f32.mrf.mxu0
      %v4807 = vpop.f32.mrf.mxu0
      %v4808 = vadd.f32 0.0, %v4807
      %v4809 = vpop.f32.mrf.mxu0
      %4810 = vdwg.mxu0
      %v4811 = vadd.f32 %v4081, %v4685
      %v4812 = vadd.f32 %v4082, %v4688
      %v4813 = vadd.f32 %v4083, %v4693
      %v4814 = vadd.f32 %v4084, %v4696
      %v4815 = vadd.f32 %v4085, %v4701
      %v4816 = vadd.f32 %v4086, %v4704
      %v4817 = vadd.f32 %v4087, %v4709
      %v4818 = vadd.f32 %v4088, %v4712
      %v4819 = vadd.f32 %v4089, %v4717
      %v4820 = vadd.f32 %v4090, %v4720
      %v4821 = vadd.f32 %v4091, %v4725
      %v4822 = vadd.f32 %v4092, %v4728
      %v4823 = vadd.f32 %v4093, %v4733
      %v4824 = vadd.f32 %v4094, %v4736
      %v4825 = vadd.f32 %v4095, %v4741
      %v4826 = vadd.f32 %v4096, %v4744
      %v4827 = vadd.f32 %v4097, %v4749
      %v4828 = vadd.f32 %v4098, %v4752
      %v4829 = vadd.f32 %v4099, %v4757
      %v4830 = vadd.f32 %v4100, %v4760
      %v4831 = vadd.f32 %v4101, %v4765
      %v4832 = vadd.f32 %v4102, %v4768
      %v4833 = vadd.f32 %v4103, %v4773
      %v4834 = vadd.f32 %v4104, %v4776
      %v4835 = vadd.f32 %v4105, %v4781
      %v4836 = vadd.f32 %v4106, %v4784
      %v4837 = vadd.f32 %v4107, %v4789
      %v4838 = vadd.f32 %v4108, %v4792
      %v4839 = vadd.f32 %v4109, %v4797
      %v4840 = vadd.f32 %v4110, %v4800
      %v4841 = vadd.f32 %v4111, %v4805
      %v4842 = vadd.f32 %v4112, %v4808
      %v4843 = vld [vmem:[%s3742] sm:$0xf]
      %v4844 = vld [vmem:[%s3742 + $0x4] sm:$0xf]
      %v4845 = vld [vmem:[%s3742 + $0x8] sm:$0x1]
      %v4846 = vld [vmem:[%s3742 + $0xc] sm:$0xf]
      %v4847 = vld [vmem:[%s3742 + $0x10] sm:$0xf]
      %v4848 = vld [vmem:[%s3742 + $0x14] sm:$0x1]
      %v4849 = vld [vmem:[%s3742 + $0x18] sm:$0xf]
      %v4850 = vld [vmem:[%s3742 + $0x1c] sm:$0xf]
      %v4851 = vld [vmem:[%s3742 + $0x20] sm:$0x1]
      %v4852 = vld [vmem:[%s3742 + $0x24] sm:$0xf]
      %v4853 = vld [vmem:[%s3742 + $0x28] sm:$0xf]
      %v4854 = vld [vmem:[%s3742 + $0x2c] sm:$0x1]
      %v4855 = vld [vmem:[%s3742 + $0x30] sm:$0xf]
      %v4856 = vld [vmem:[%s3742 + $0x34] sm:$0xf]
      %v4857 = vld [vmem:[%s3742 + $0x38] sm:$0x1]
      %v4858 = vld [vmem:[%s3742 + $0x3c] sm:$0xf]
      %v4859 = vld [vmem:[%s3742 + $0x40] sm:$0xf]
      %v4860 = vld [vmem:[%s3742 + $0x44] sm:$0x1]
      %v4861 = vld [vmem:[%s3742 + $0x48] sm:$0xf]
      %v4862 = vld [vmem:[%s3742 + $0x4c] sm:$0xf]
      %v4863 = vld [vmem:[%s3742 + $0x50] sm:$0x1]
      %v4864 = vld [vmem:[%s3742 + $0x54] sm:$0xf]
      %v4865 = vld [vmem:[%s3742 + $0x58] sm:$0xf]
      %v4866 = vld [vmem:[%s3742 + $0x5c] sm:$0x1]
      %v4867 = vld [vmem:[%s3742 + $0x60] sm:$0xf]
      %v4868 = vld [vmem:[%s3742 + $0x64] sm:$0xf]
      %v4869 = vld [vmem:[%s3742 + $0x68] sm:$0x1]
      %v4870 = vld [vmem:[%s3742 + $0x6c] sm:$0xf]
      %v4871 = vld [vmem:[%s3742 + $0x70] sm:$0xf]
      %v4872 = vld [vmem:[%s3742 + $0x74] sm:$0x1]
      %v4873 = vld [vmem:[%s3742 + $0x78] sm:$0xf]
      %v4874 = vld [vmem:[%s3742 + $0x7c] sm:$0xf]
      %v4875 = vld [vmem:[%s3742 + $0x80] sm:$0x1]
      %v4876 = vld [vmem:[%s3742 + $0x84] sm:$0xf]
      %v4877 = vld [vmem:[%s3742 + $0x88] sm:$0xf]
      %v4878 = vld [vmem:[%s3742 + $0x8c] sm:$0x1]
      %v4879 = vld [vmem:[%s3742 + $0x90] sm:$0xf]
      %v4880 = vld [vmem:[%s3742 + $0x94] sm:$0xf]
      %v4881 = vld [vmem:[%s3742 + $0x98] sm:$0x1]
      %v4882 = vld [vmem:[%s3742 + $0x9c] sm:$0xf]
      %v4883 = vld [vmem:[%s3742 + $0xa0] sm:$0xf]
      %v4884 = vld [vmem:[%s3742 + $0xa4] sm:$0x1]
      %v4885 = vld [vmem:[%s3742 + $0xa8] sm:$0xf]
      %v4886 = vld [vmem:[%s3742 + $0xac] sm:$0xf]
      %v4887 = vld [vmem:[%s3742 + $0xb0] sm:$0x1]
      %v4888 = vld [vmem:[%s3742 + $0xb4] sm:$0xf]
      %v4889 = vld [vmem:[%s3742 + $0xb8] sm:$0xf]
      %v4890 = vld [vmem:[%s3742 + $0xbc] sm:$0x1]
      %v4892 = vshrl.u32 %v4843, 16
      %v4894 = vrot.slane %v4892, 4
      %v4895 = vshll.u32 %v4843, 16
      %v4897 = vrot.slane %v4895, 5
      %v4898 = vor.u32 %v4894, %v4897
      %v4899 = vrot.slane %v4898, 4
      %v4901 = vshll.u32 %v4844, 16
      %v4903 = vrot.slane %v4901, 5
      %v4904 = vsel %vm995, %v4899, %v4903
      %v4905 = vshrl.u32 %v4844, 16
      %v4907 = vrot.slane %v4905, 4
      %v4908 = vor.u32 %v4907, %v4903
      %v4909 = vrot.slane %v4908, 4
      %v4911 = vshll.u32 %v4845, 16
      %v4913 = vrot.slane %v4911, 5
      %v4914 = vsel %vm995, %v4909, %v4913
      %v4916 = vshrl.u32 %v4846, 16
      %v4918 = vrot.slane %v4916, 4
      %v4919 = vshll.u32 %v4846, 16
      %v4921 = vrot.slane %v4919, 5
      %v4922 = vor.u32 %v4918, %v4921
      %v4923 = vrot.slane %v4922, 4
      %v4925 = vshll.u32 %v4847, 16
      %v4927 = vrot.slane %v4925, 5
      %v4928 = vsel %vm995, %v4923, %v4927
      %v4929 = vshrl.u32 %v4847, 16
      %v4931 = vrot.slane %v4929, 4
      %v4932 = vor.u32 %v4931, %v4927
      %v4933 = vrot.slane %v4932, 4
      %v4935 = vshll.u32 %v4848, 16
      %v4937 = vrot.slane %v4935, 5
      %v4938 = vsel %vm995, %v4933, %v4937
      %v4940 = vshrl.u32 %v4849, 16
      %v4942 = vrot.slane %v4940, 4
      %v4943 = vshll.u32 %v4849, 16
      %v4945 = vrot.slane %v4943, 5
      %v4946 = vor.u32 %v4942, %v4945
      %v4947 = vrot.slane %v4946, 4
      %v4949 = vshll.u32 %v4850, 16
      %v4951 = vrot.slane %v4949, 5
      %v4952 = vsel %vm995, %v4947, %v4951
      %v4953 = vshrl.u32 %v4850, 16
      %v4955 = vrot.slane %v4953, 4
      %v4956 = vor.u32 %v4955, %v4951
      %v4957 = vrot.slane %v4956, 4
      %v4959 = vshll.u32 %v4851, 16
      %v4961 = vrot.slane %v4959, 5
      %v4962 = vsel %vm995, %v4957, %v4961
      %v4964 = vshrl.u32 %v4852, 16
      %v4966 = vrot.slane %v4964, 4
      %v4967 = vshll.u32 %v4852, 16
      %v4969 = vrot.slane %v4967, 5
      %v4970 = vor.u32 %v4966, %v4969
      %v4971 = vrot.slane %v4970, 4
      %v4973 = vshll.u32 %v4853, 16
      %v4975 = vrot.slane %v4973, 5
      %v4976 = vsel %vm995, %v4971, %v4975
      %v4977 = vshrl.u32 %v4853, 16
      %v4979 = vrot.slane %v4977, 4
      %v4980 = vor.u32 %v4979, %v4975
      %v4981 = vrot.slane %v4980, 4
      %v4983 = vshll.u32 %v4854, 16
      %v4985 = vrot.slane %v4983, 5
      %v4986 = vsel %vm995, %v4981, %v4985
      %v4988 = vshrl.u32 %v4855, 16
      %v4990 = vrot.slane %v4988, 4
      %v4991 = vshll.u32 %v4855, 16
      %v4993 = vrot.slane %v4991, 5
      %v4994 = vor.u32 %v4990, %v4993
      %v4995 = vrot.slane %v4994, 4
      %v4997 = vshll.u32 %v4856, 16
      %v4999 = vrot.slane %v4997, 5
      %v5000 = vsel %vm995, %v4995, %v4999
      %v5001 = vshrl.u32 %v4856, 16
      %v5003 = vrot.slane %v5001, 4
      %v5004 = vor.u32 %v5003, %v4999
      %v5005 = vrot.slane %v5004, 4
      %v5007 = vshll.u32 %v4857, 16
      %v5009 = vrot.slane %v5007, 5
      %v5010 = vsel %vm995, %v5005, %v5009
      %v5012 = vshrl.u32 %v4858, 16
      %v5014 = vrot.slane %v5012, 4
      %v5015 = vshll.u32 %v4858, 16
      %v5017 = vrot.slane %v5015, 5
      %v5018 = vor.u32 %v5014, %v5017
      %v5019 = vrot.slane %v5018, 4
      %v5021 = vshll.u32 %v4859, 16
      %v5023 = vrot.slane %v5021, 5
      %v5024 = vsel %vm995, %v5019, %v5023
      %v5025 = vshrl.u32 %v4859, 16
      %v5027 = vrot.slane %v5025, 4
      %v5028 = vor.u32 %v5027, %v5023
      %v5029 = vrot.slane %v5028, 4
      %v5031 = vshll.u32 %v4860, 16
      %v5033 = vrot.slane %v5031, 5
      %v5034 = vsel %vm995, %v5029, %v5033
      %v5036 = vshrl.u32 %v4861, 16
      %v5038 = vrot.slane %v5036, 4
      %v5039 = vshll.u32 %v4861, 16
      %v5041 = vrot.slane %v5039, 5
      %v5042 = vor.u32 %v5038, %v5041
      %v5043 = vrot.slane %v5042, 4
      %v5045 = vshll.u32 %v4862, 16
      %v5047 = vrot.slane %v5045, 5
      %v5048 = vsel %vm995, %v5043, %v5047
      %v5049 = vshrl.u32 %v4862, 16
      %v5051 = vrot.slane %v5049, 4
      %v5052 = vor.u32 %v5051, %v5047
      %v5053 = vrot.slane %v5052, 4
      %v5055 = vshll.u32 %v4863, 16
      %v5057 = vrot.slane %v5055, 5
      %v5058 = vsel %vm995, %v5053, %v5057
      %v5060 = vshrl.u32 %v4864, 16
      %v5062 = vrot.slane %v5060, 4
      %v5063 = vshll.u32 %v4864, 16
      %v5065 = vrot.slane %v5063, 5
      %v5066 = vor.u32 %v5062, %v5065
      %v5067 = vrot.slane %v5066, 4
      %v5069 = vshll.u32 %v4865, 16
      %v5071 = vrot.slane %v5069, 5
      %v5072 = vsel %vm995, %v5067, %v5071
      %v5073 = vshrl.u32 %v4865, 16
      %v5075 = vrot.slane %v5073, 4
      %v5076 = vor.u32 %v5075, %v5071
      %v5077 = vrot.slane %v5076, 4
      %v5079 = vshll.u32 %v4866, 16
      %v5081 = vrot.slane %v5079, 5
      %v5082 = vsel %vm995, %v5077, %v5081
      %v5084 = vshrl.u32 %v4867, 16
      %v5086 = vrot.slane %v5084, 4
      %v5087 = vshll.u32 %v4867, 16
      %v5089 = vrot.slane %v5087, 5
      %v5090 = vor.u32 %v5086, %v5089
      %v5091 = vrot.slane %v5090, 4
      %v5093 = vshll.u32 %v4868, 16
      %v5095 = vrot.slane %v5093, 5
      %v5096 = vsel %vm995, %v5091, %v5095
      %v5097 = vshrl.u32 %v4868, 16
      %v5099 = vrot.slane %v5097, 4
      %v5100 = vor.u32 %v5099, %v5095
      %v5101 = vrot.slane %v5100, 4
      %v5103 = vshll.u32 %v4869, 16
      %v5105 = vrot.slane %v5103, 5
      %v5106 = vsel %vm995, %v5101, %v5105
      %v5108 = vshrl.u32 %v4870, 16
      %v5110 = vrot.slane %v5108, 4
      %v5111 = vshll.u32 %v4870, 16
      %v5113 = vrot.slane %v5111, 5
      %v5114 = vor.u32 %v5110, %v5113
      %v5115 = vrot.slane %v5114, 4
      %v5117 = vshll.u32 %v4871, 16
      %v5119 = vrot.slane %v5117, 5
      %v5120 = vsel %vm995, %v5115, %v5119
      %v5121 = vshrl.u32 %v4871, 16
      %v5123 = vrot.slane %v5121, 4
      %v5124 = vor.u32 %v5123, %v5119
      %v5125 = vrot.slane %v5124, 4
      %v5127 = vshll.u32 %v4872, 16
      %v5129 = vrot.slane %v5127, 5
      %v5130 = vsel %vm995, %v5125, %v5129
      %v5132 = vshrl.u32 %v4873, 16
      %v5134 = vrot.slane %v5132, 4
      %v5135 = vshll.u32 %v4873, 16
      %v5137 = vrot.slane %v5135, 5
      %v5138 = vor.u32 %v5134, %v5137
      %v5139 = vrot.slane %v5138, 4
      %v5141 = vshll.u32 %v4874, 16
      %v5143 = vrot.slane %v5141, 5
      %v5144 = vsel %vm995, %v5139, %v5143
      %v5145 = vshrl.u32 %v4874, 16
      %v5147 = vrot.slane %v5145, 4
      %v5148 = vor.u32 %v5147, %v5143
      %v5149 = vrot.slane %v5148, 4
      %v5151 = vshll.u32 %v4875, 16
      %v5153 = vrot.slane %v5151, 5
      %v5154 = vsel %vm995, %v5149, %v5153
      %v5156 = vshrl.u32 %v4876, 16
      %v5158 = vrot.slane %v5156, 4
      %v5159 = vshll.u32 %v4876, 16
      %v5161 = vrot.slane %v5159, 5
      %v5162 = vor.u32 %v5158, %v5161
      %v5163 = vrot.slane %v5162, 4
      %v5165 = vshll.u32 %v4877, 16
      %v5167 = vrot.slane %v5165, 5
      %v5168 = vsel %vm995, %v5163, %v5167
      %v5169 = vshrl.u32 %v4877, 16
      %v5171 = vrot.slane %v5169, 4
      %v5172 = vor.u32 %v5171, %v5167
      %v5173 = vrot.slane %v5172, 4
      %v5175 = vshll.u32 %v4878, 16
      %v5177 = vrot.slane %v5175, 5
      %v5178 = vsel %vm995, %v5173, %v5177
      %v5180 = vshrl.u32 %v4879, 16
      %v5182 = vrot.slane %v5180, 4
      %v5183 = vshll.u32 %v4879, 16
      %v5185 = vrot.slane %v5183, 5
      %v5186 = vor.u32 %v5182, %v5185
      %v5187 = vrot.slane %v5186, 4
      %v5189 = vshll.u32 %v4880, 16
      %v5191 = vrot.slane %v5189, 5
      %v5192 = vsel %vm995, %v5187, %v5191
      %v5193 = vshrl.u32 %v4880, 16
      %v5195 = vrot.slane %v5193, 4
      %v5196 = vor.u32 %v5195, %v5191
      %v5197 = vrot.slane %v5196, 4
      %v5199 = vshll.u32 %v4881, 16
      %v5201 = vrot.slane %v5199, 5
      %v5202 = vsel %vm995, %v5197, %v5201
      %v5204 = vshrl.u32 %v4882, 16
      %v5206 = vrot.slane %v5204, 4
      %v5207 = vshll.u32 %v4882, 16
      %v5209 = vrot.slane %v5207, 5
      %v5210 = vor.u32 %v5206, %v5209
      %v5211 = vrot.slane %v5210, 4
      %v5213 = vshll.u32 %v4883, 16
      %v5215 = vrot.slane %v5213, 5
      %v5216 = vsel %vm995, %v5211, %v5215
      %v5217 = vshrl.u32 %v4883, 16
      %v5219 = vrot.slane %v5217, 4
      %v5220 = vor.u32 %v5219, %v5215
      %v5221 = vrot.slane %v5220, 4
      %v5223 = vshll.u32 %v4884, 16
      %v5225 = vrot.slane %v5223, 5
      %v5226 = vsel %vm995, %v5221, %v5225
      %v5228 = vshrl.u32 %v4885, 16
      %v5230 = vrot.slane %v5228, 4
      %v5231 = vshll.u32 %v4885, 16
      %v5233 = vrot.slane %v5231, 5
      %v5234 = vor.u32 %v5230, %v5233
      %v5235 = vrot.slane %v5234, 4
      %v5237 = vshll.u32 %v4886, 16
      %v5239 = vrot.slane %v5237, 5
      %v5240 = vsel %vm995, %v5235, %v5239
      %v5241 = vshrl.u32 %v4886, 16
      %v5243 = vrot.slane %v5241, 4
      %v5244 = vor.u32 %v5243, %v5239
      %v5245 = vrot.slane %v5244, 4
      %v5247 = vshll.u32 %v4887, 16
      %v5249 = vrot.slane %v5247, 5
      %v5250 = vsel %vm995, %v5245, %v5249
      %v5252 = vshrl.u32 %v4888, 16
      %v5254 = vrot.slane %v5252, 4
      %v5255 = vshll.u32 %v4888, 16
      %v5257 = vrot.slane %v5255, 5
      %v5258 = vor.u32 %v5254, %v5257
      %v5259 = vrot.slane %v5258, 4
      %v5261 = vshll.u32 %v4889, 16
      %v5263 = vrot.slane %v5261, 5
      %v5264 = vsel %vm995, %v5259, %v5263
      %v5265 = vshrl.u32 %v4889, 16
      %v5267 = vrot.slane %v5265, 4
      %v5268 = vor.u32 %v5267, %v5263
      %v5269 = vrot.slane %v5268, 4
      %v5271 = vshll.u32 %v4890, 16
      %v5273 = vrot.slane %v5271, 5
      %v5274 = vsel %vm995, %v5269, %v5273
      %s5275 = scalar_lea.vmem %s3, 64
      %v5276 = vld [vmem:[%s5275] sm:$0xf]
      %v5277 = vld [vmem:[%s5275 + $0x4] sm:$0xf]
      %v5278 = vld [vmem:[%s5275 + $0x8] sm:$0xf]
      %v5279 = vld [vmem:[%s5275 + $0xc] sm:$0xf]
      %v5280 = vunpack.c.l.b16 %v4904
      %v5281 = vunpack.c.l.b16 %v4914
      %v5282 = vunpack.c.l.b16 %v4928
      %v5283 = vunpack.c.l.b16 %v4938
      %v5284 = vunpack.c.l.b16 %v4952
      %v5285 = vunpack.c.l.b16 %v4962
      %v5286 = vunpack.c.l.b16 %v4976
      %v5287 = vunpack.c.l.b16 %v4986
      %v5288 = vunpack.c.l.b16 %v5000
      %v5289 = vunpack.c.l.b16 %v5010
      %v5290 = vunpack.c.l.b16 %v5024
      %v5291 = vunpack.c.l.b16 %v5034
      %v5292 = vunpack.c.l.b16 %v5048
      %v5293 = vunpack.c.l.b16 %v5058
      %v5294 = vunpack.c.l.b16 %v5072
      %v5295 = vunpack.c.l.b16 %v5082
      %v5296 = vunpack.c.l.b16 %v5096
      %v5297 = vunpack.c.l.b16 %v5106
      %v5298 = vunpack.c.l.b16 %v5120
      %v5299 = vunpack.c.l.b16 %v5130
      %v5300 = vunpack.c.l.b16 %v5144
      %v5301 = vunpack.c.l.b16 %v5154
      %v5302 = vunpack.c.l.b16 %v5168
      %v5303 = vunpack.c.l.b16 %v5178
      %v5304 = vunpack.c.l.b16 %v5192
      %v5305 = vunpack.c.l.b16 %v5202
      %v5306 = vunpack.c.l.b16 %v5216
      %v5307 = vunpack.c.l.b16 %v5226
      %v5308 = vunpack.c.l.b16 %v5240
      %v5309 = vunpack.c.l.b16 %v5250
      %v5310 = vunpack.c.l.b16 %v5264
      %v5311 = vunpack.c.l.b16 %v5274
      %v5312 = vpack.c.b16 %v5281, %v5280
      %v5313 = vpack.c.b16 %v5283, %v5282
      %v5314 = vpack.c.b16 %v5285, %v5284
      %v5315 = vpack.c.b16 %v5287, %v5286
      %v5316 = vpack.c.b16 %v5289, %v5288
      %v5317 = vpack.c.b16 %v5291, %v5290
      %v5318 = vpack.c.b16 %v5293, %v5292
      %v5319 = vpack.c.b16 %v5295, %v5294
      %v5320 = vpack.c.b16 %v5297, %v5296
      %v5321 = vpack.c.b16 %v5299, %v5298
      %v5322 = vpack.c.b16 %v5301, %v5300
      %v5323 = vpack.c.b16 %v5303, %v5302
      %v5324 = vpack.c.b16 %v5305, %v5304
      %v5325 = vpack.c.b16 %v5307, %v5306
      %v5326 = vpack.c.b16 %v5309, %v5308
      %v5327 = vpack.c.b16 %v5311, %v5310
      %v5332 = vunpack.c.l.b16 %v5276
      %v5333 = vunpack.c.l.b16 %v5277
      %v5334 = vunpack.c.l.b16 %v5278
      %v5335 = vunpack.c.l.b16 %v5279
      %v5336 = vpack.c.b16 %v5333, %v5332
      %v5337 = vpack.c.b16 %v5335, %v5334
      %v5341 = vsel %vm439, %v5312, 0
      %v5344 = vsel %vm439, %v5313, 0
      %v5347 = vsel %vm439, %v5314, 0
      %v5350 = vsel %vm439, %v5315, 0
      %v5353 = vsel %vm439, %v5316, 0
      %v5356 = vsel %vm439, %v5317, 0
      %v5359 = vsel %vm439, %v5318, 0
      %v5362 = vsel %vm439, %v5319, 0
      %v5365 = vsel %vm439, %v5320, 0
      %v5368 = vsel %vm439, %v5321, 0
      %v5371 = vsel %vm439, %v5322, 0
      %v5374 = vsel %vm439, %v5323, 0
      %v5377 = vsel %vm439, %v5324, 0
      %v5380 = vsel %vm439, %v5325, 0
      %v5383 = vsel %vm439, %v5326, 0
      %v5386 = vsel %vm439, %v5327, 0
      %5388 = vmatprep.subr.bf16.mxu0 0
      %5389 = vmatpush1.bf16.msra.mxu0 0
      %5390 = vmatprep.subr.bf16.mxu0 0
      %5391 = vmatpush1.bf16.msra.mxu0 0
      %5392 = vmatprep.subr.bf16.mxu0 0
      %5393 = vmatpush1.bf16.msra.mxu0 0
      %5394 = vmatprep.subr.bf16.mxu0 0
      %5395 = vmatpush1.bf16.msra.mxu0 0
      %5396 = vmatprep.subr.bf16.mxu0 0
      %5397 = vmatpush1.bf16.msra.mxu0 0
      %5398 = vmatprep.subr.bf16.mxu0 0
      %5399 = vmatpush1.bf16.msra.mxu0 0
      %5400 = vmatprep.subr.bf16.mxu0 0
      %5401 = vmatpush1.bf16.msra.mxu0 %v5337
      %5402 = vmatprep.subr.bf16.mxu0 0
      %5403 = vmatpush1.bf16.msra.mxu0 %v5336
      %5404 = vmatprep.subr.bf16.mxu0 0
      %5405 = vmatpush2.bf16.msra.mxu0 0
      %5406 = vmatprep.subr.bf16.mxu0 0
      %5407 = vmatpush2.bf16.msra.mxu0 0
      %5408 = vmatprep.subr.bf16.mxu0 0
      %5409 = vmatpush2.bf16.msra.mxu0 0
      %5410 = vmatprep.subr.bf16.mxu0 0
      %5411 = vmatpush2.bf16.msra.mxu0 0
      %5412 = vmatprep.subr.bf16.mxu0 0
      %5413 = vmatpush2.bf16.msra.mxu0 0
      %5414 = vmatprep.subr.bf16.mxu0 0
      %5415 = vmatpush2.bf16.msra.mxu0 0
      %5416 = vmatprep.subr.bf16.mxu0 0
      %5417 = vmatpush2.bf16.msra.mxu0 0
      %5418 = vmatprep.subr.bf16.mxu0 0
      %5419 = vmatpush2.bf16.msra.mxu0 0
      %5420 = vmatprep.mubr.bf16.mxu0 0
      %5421 = vmatmul.mubr.bf16.gmra.mxu0 %v5341
      %v5422 = vpop.f32.mrf.mxu0
      %v5423 = vadd.f32 0.0, %v5422
      %v5424 = vpop.f32.mrf.mxu0
      %v5425 = vpop.f32.mrf.mxu0
      %v5426 = vadd.f32 0.0, %v5425
      %v5427 = vpop.f32.mrf.mxu0
      %5428 = vmatprep.mubr.bf16.mxu0 0
      %5429 = vmatmul.mubr.bf16.gmra.mxu0 %v5344
      %v5430 = vpop.f32.mrf.mxu0
      %v5431 = vadd.f32 0.0, %v5430
      %v5432 = vpop.f32.mrf.mxu0
      %v5433 = vpop.f32.mrf.mxu0
      %v5434 = vadd.f32 0.0, %v5433
      %v5435 = vpop.f32.mrf.mxu0
      %5436 = vmatprep.mubr.bf16.mxu0 0
      %5437 = vmatmul.mubr.bf16.gmra.mxu0 %v5347
      %v5438 = vpop.f32.mrf.mxu0
      %v5439 = vadd.f32 0.0, %v5438
      %v5440 = vpop.f32.mrf.mxu0
      %v5441 = vpop.f32.mrf.mxu0
      %v5442 = vadd.f32 0.0, %v5441
      %v5443 = vpop.f32.mrf.mxu0
      %5444 = vmatprep.mubr.bf16.mxu0 0
      %5445 = vmatmul.mubr.bf16.gmra.mxu0 %v5350
      %v5446 = vpop.f32.mrf.mxu0
      %v5447 = vadd.f32 0.0, %v5446
      %v5448 = vpop.f32.mrf.mxu0
      %v5449 = vpop.f32.mrf.mxu0
      %v5450 = vadd.f32 0.0, %v5449
      %v5451 = vpop.f32.mrf.mxu0
      %5452 = vmatprep.mubr.bf16.mxu0 0
      %5453 = vmatmul.mubr.bf16.gmra.mxu0 %v5353
      %v5454 = vpop.f32.mrf.mxu0
      %v5455 = vadd.f32 0.0, %v5454
      %v5456 = vpop.f32.mrf.mxu0
      %v5457 = vpop.f32.mrf.mxu0
      %v5458 = vadd.f32 0.0, %v5457
      %v5459 = vpop.f32.mrf.mxu0
      %5460 = vmatprep.mubr.bf16.mxu0 0
      %5461 = vmatmul.mubr.bf16.gmra.mxu0 %v5356
      %v5462 = vpop.f32.mrf.mxu0
      %v5463 = vadd.f32 0.0, %v5462
      %v5464 = vpop.f32.mrf.mxu0
      %v5465 = vpop.f32.mrf.mxu0
      %v5466 = vadd.f32 0.0, %v5465
      %v5467 = vpop.f32.mrf.mxu0
      %5468 = vmatprep.mubr.bf16.mxu0 0
      %5469 = vmatmul.mubr.bf16.gmra.mxu0 %v5359
      %v5470 = vpop.f32.mrf.mxu0
      %v5471 = vadd.f32 0.0, %v5470
      %v5472 = vpop.f32.mrf.mxu0
      %v5473 = vpop.f32.mrf.mxu0
      %v5474 = vadd.f32 0.0, %v5473
      %v5475 = vpop.f32.mrf.mxu0
      %5476 = vmatprep.mubr.bf16.mxu0 0
      %5477 = vmatmul.mubr.bf16.gmra.mxu0 %v5362
      %v5478 = vpop.f32.mrf.mxu0
      %v5479 = vadd.f32 0.0, %v5478
      %v5480 = vpop.f32.mrf.mxu0
      %v5481 = vpop.f32.mrf.mxu0
      %v5482 = vadd.f32 0.0, %v5481
      %v5483 = vpop.f32.mrf.mxu0
      %5484 = vmatprep.mubr.bf16.mxu0 0
      %5485 = vmatmul.mubr.bf16.gmra.mxu0 %v5365
      %v5486 = vpop.f32.mrf.mxu0
      %v5487 = vadd.f32 0.0, %v5486
      %v5488 = vpop.f32.mrf.mxu0
      %v5489 = vpop.f32.mrf.mxu0
      %v5490 = vadd.f32 0.0, %v5489
      %v5491 = vpop.f32.mrf.mxu0
      %5492 = vmatprep.mubr.bf16.mxu0 0
      %5493 = vmatmul.mubr.bf16.gmra.mxu0 %v5368
      %v5494 = vpop.f32.mrf.mxu0
      %v5495 = vadd.f32 0.0, %v5494
      %v5496 = vpop.f32.mrf.mxu0
      %v5497 = vpop.f32.mrf.mxu0
      %v5498 = vadd.f32 0.0, %v5497
      %v5499 = vpop.f32.mrf.mxu0
      %5500 = vmatprep.mubr.bf16.mxu0 0
      %5501 = vmatmul.mubr.bf16.gmra.mxu0 %v5371
      %v5502 = vpop.f32.mrf.mxu0
      %v5503 = vadd.f32 0.0, %v5502
      %v5504 = vpop.f32.mrf.mxu0
      %v5505 = vpop.f32.mrf.mxu0
      %v5506 = vadd.f32 0.0, %v5505
      %v5507 = vpop.f32.mrf.mxu0
      %5508 = vmatprep.mubr.bf16.mxu0 0
      %5509 = vmatmul.mubr.bf16.gmra.mxu0 %v5374
      %v5510 = vpop.f32.mrf.mxu0
      %v5511 = vadd.f32 0.0, %v5510
      %v5512 = vpop.f32.mrf.mxu0
      %v5513 = vpop.f32.mrf.mxu0
      %v5514 = vadd.f32 0.0, %v5513
      %v5515 = vpop.f32.mrf.mxu0
      %5516 = vmatprep.mubr.bf16.mxu0 0
      %5517 = vmatmul.mubr.bf16.gmra.mxu0 %v5377
      %v5518 = vpop.f32.mrf.mxu0
      %v5519 = vadd.f32 0.0, %v5518
      %v5520 = vpop.f32.mrf.mxu0
      %v5521 = vpop.f32.mrf.mxu0
      %v5522 = vadd.f32 0.0, %v5521
      %v5523 = vpop.f32.mrf.mxu0
      %5524 = vmatprep.mubr.bf16.mxu0 0
      %5525 = vmatmul.mubr.bf16.gmra.mxu0 %v5380
      %v5526 = vpop.f32.mrf.mxu0
      %v5527 = vadd.f32 0.0, %v5526
      %v5528 = vpop.f32.mrf.mxu0
      %v5529 = vpop.f32.mrf.mxu0
      %v5530 = vadd.f32 0.0, %v5529
      %v5531 = vpop.f32.mrf.mxu0
      %5532 = vmatprep.mubr.bf16.mxu0 0
      %5533 = vmatmul.mubr.bf16.gmra.mxu0 %v5383
      %v5534 = vpop.f32.mrf.mxu0
      %v5535 = vadd.f32 0.0, %v5534
      %v5536 = vpop.f32.mrf.mxu0
      %v5537 = vpop.f32.mrf.mxu0
      %v5538 = vadd.f32 0.0, %v5537
      %v5539 = vpop.f32.mrf.mxu0
      %5540 = vmatprep.mubr.bf16.mxu0 0
      %5541 = vmatmul.mubr.bf16.gmra.mxu0 %v5386
      %v5542 = vpop.f32.mrf.mxu0
      %v5543 = vadd.f32 0.0, %v5542
      %v5544 = vpop.f32.mrf.mxu0
      %v5545 = vpop.f32.mrf.mxu0
      %v5546 = vadd.f32 0.0, %v5545
      %v5547 = vpop.f32.mrf.mxu0
      %5548 = vdwg.mxu0
      %v5549 = vadd.f32 %v4811, %v5423
      %v5550 = vadd.f32 %v4812, %v5426
      %v5551 = vadd.f32 %v4813, %v5431
      %v5552 = vadd.f32 %v4814, %v5434
      %v5553 = vadd.f32 %v4815, %v5439
      %v5554 = vadd.f32 %v4816, %v5442
      %v5555 = vadd.f32 %v4817, %v5447
      %v5556 = vadd.f32 %v4818, %v5450
      %v5557 = vadd.f32 %v4819, %v5455
      %v5558 = vadd.f32 %v4820, %v5458
      %v5559 = vadd.f32 %v4821, %v5463
      %v5560 = vadd.f32 %v4822, %v5466
      %v5561 = vadd.f32 %v4823, %v5471
      %v5562 = vadd.f32 %v4824, %v5474
      %v5563 = vadd.f32 %v4825, %v5479
      %v5564 = vadd.f32 %v4826, %v5482
      %v5565 = vadd.f32 %v4827, %v5487
      %v5566 = vadd.f32 %v4828, %v5490
      %v5567 = vadd.f32 %v4829, %v5495
      %v5568 = vadd.f32 %v4830, %v5498
      %v5569 = vadd.f32 %v4831, %v5503
      %v5570 = vadd.f32 %v4832, %v5506
      %v5571 = vadd.f32 %v4833, %v5511
      %v5572 = vadd.f32 %v4834, %v5514
      %v5573 = vadd.f32 %v4835, %v5519
      %v5574 = vadd.f32 %v4836, %v5522
      %v5575 = vadd.f32 %v4837, %v5527
      %v5576 = vadd.f32 %v4838, %v5530
      %v5577 = vadd.f32 %v4839, %v5535
      %v5578 = vadd.f32 %v4840, %v5538
      %v5579 = vadd.f32 %v4841, %v5543
      %v5580 = vadd.f32 %v4842, %v5546
      %v5581 = vld [vmem:[%s3378] sm:$0xe]
      %v5582 = vld [vmem:[%s3378 + $0xc] sm:$0xe]
      %v5583 = vld [vmem:[%s3378 + $0x18] sm:$0xe]
      %v5584 = vld [vmem:[%s3378 + $0x24] sm:$0xe]
      %v5585 = vld [vmem:[%s3378 + $0x30] sm:$0xe]
      %v5586 = vld [vmem:[%s3378 + $0x3c] sm:$0xe]
      %v5587 = vld [vmem:[%s3378 + $0x48] sm:$0xe]
      %v5588 = vld [vmem:[%s3378 + $0x54] sm:$0xe]
      %v5589 = vld [vmem:[%s3378 + $0x60] sm:$0xe]
      %v5590 = vld [vmem:[%s3378 + $0x6c] sm:$0xe]
      %v5591 = vld [vmem:[%s3378 + $0x78] sm:$0xe]
      %v5592 = vld [vmem:[%s3378 + $0x84] sm:$0xe]
      %v5593 = vld [vmem:[%s3378 + $0x90] sm:$0xe]
      %v5594 = vld [vmem:[%s3378 + $0x9c] sm:$0xe]
      %v5595 = vld [vmem:[%s3378 + $0xa8] sm:$0xe]
      %v5596 = vld [vmem:[%s3378 + $0xb4] sm:$0xe]
      %v5645 = vrot.slane %v5581, 5
      %v5646 = vrot.slane %v5645, 4
      %v5647 = vrot.slane %v4114, 5
      %v5648 = vsel %vm2482, %v5646, %v5647
      %v5649 = vrot.slane %v5647, 4
      %v5650 = vrot.slane %v4115, 5
      %v5651 = vsel %vm2482, %v5649, %v5650
      %v5652 = vrot.slane %v5582, 5
      %v5653 = vrot.slane %v5652, 4
      %v5654 = vrot.slane %v4117, 5
      %v5655 = vsel %vm2482, %v5653, %v5654
      %v5656 = vrot.slane %v5654, 4
      %v5657 = vrot.slane %v4118, 5
      %v5658 = vsel %vm2482, %v5656, %v5657
      %v5659 = vrot.slane %v5583, 5
      %v5660 = vrot.slane %v5659, 4
      %v5661 = vrot.slane %v4120, 5
      %v5662 = vsel %vm2482, %v5660, %v5661
      %v5663 = vrot.slane %v5661, 4
      %v5664 = vrot.slane %v4121, 5
      %v5665 = vsel %vm2482, %v5663, %v5664
      %v5666 = vrot.slane %v5584, 5
      %v5667 = vrot.slane %v5666, 4
      %v5668 = vrot.slane %v4123, 5
      %v5669 = vsel %vm2482, %v5667, %v5668
      %v5670 = vrot.slane %v5668, 4
      %v5671 = vrot.slane %v4124, 5
      %v5672 = vsel %vm2482, %v5670, %v5671
      %v5673 = vrot.slane %v5585, 5
      %v5674 = vrot.slane %v5673, 4
      %v5675 = vrot.slane %v4126, 5
      %v5676 = vsel %vm2482, %v5674, %v5675
      %v5677 = vrot.slane %v5675, 4
      %v5678 = vrot.slane %v4127, 5
      %v5679 = vsel %vm2482, %v5677, %v5678
      %v5680 = vrot.slane %v5586, 5
      %v5681 = vrot.slane %v5680, 4
      %v5682 = vrot.slane %v4129, 5
      %v5683 = vsel %vm2482, %v5681, %v5682
      %v5684 = vrot.slane %v5682, 4
      %v5685 = vrot.slane %v4130, 5
      %v5686 = vsel %vm2482, %v5684, %v5685
      %v5687 = vrot.slane %v5587, 5
      %v5688 = vrot.slane %v5687, 4
      %v5689 = vrot.slane %v4132, 5
      %v5690 = vsel %vm2482, %v5688, %v5689
      %v5691 = vrot.slane %v5689, 4
      %v5692 = vrot.slane %v4133, 5
      %v5693 = vsel %vm2482, %v5691, %v5692
      %v5694 = vrot.slane %v5588, 5
      %v5695 = vrot.slane %v5694, 4
      %v5696 = vrot.slane %v4135, 5
      %v5697 = vsel %vm2482, %v5695, %v5696
      %v5698 = vrot.slane %v5696, 4
      %v5699 = vrot.slane %v4136, 5
      %v5700 = vsel %vm2482, %v5698, %v5699
      %v5701 = vrot.slane %v5589, 5
      %v5702 = vrot.slane %v5701, 4
      %v5703 = vrot.slane %v4138, 5
      %v5704 = vsel %vm2482, %v5702, %v5703
      %v5705 = vrot.slane %v5703, 4
      %v5706 = vrot.slane %v4139, 5
      %v5707 = vsel %vm2482, %v5705, %v5706
      %v5708 = vrot.slane %v5590, 5
      %v5709 = vrot.slane %v5708, 4
      %v5710 = vrot.slane %v4141, 5
      %v5711 = vsel %vm2482, %v5709, %v5710
      %v5712 = vrot.slane %v5710, 4
      %v5713 = vrot.slane %v4142, 5
      %v5714 = vsel %vm2482, %v5712, %v5713
      %v5715 = vrot.slane %v5591, 5
      %v5716 = vrot.slane %v5715, 4
      %v5717 = vrot.slane %v4144, 5
      %v5718 = vsel %vm2482, %v5716, %v5717
      %v5719 = vrot.slane %v5717, 4
      %v5720 = vrot.slane %v4145, 5
      %v5721 = vsel %vm2482, %v5719, %v5720
      %v5722 = vrot.slane %v5592, 5
      %v5723 = vrot.slane %v5722, 4
      %v5724 = vrot.slane %v4147, 5
      %v5725 = vsel %vm2482, %v5723, %v5724
      %v5726 = vrot.slane %v5724, 4
      %v5727 = vrot.slane %v4148, 5
      %v5728 = vsel %vm2482, %v5726, %v5727
      %v5729 = vrot.slane %v5593, 5
      %v5730 = vrot.slane %v5729, 4
      %v5731 = vrot.slane %v4150, 5
      %v5732 = vsel %vm2482, %v5730, %v5731
      %v5733 = vrot.slane %v5731, 4
      %v5734 = vrot.slane %v4151, 5
      %v5735 = vsel %vm2482, %v5733, %v5734
      %v5736 = vrot.slane %v5594, 5
      %v5737 = vrot.slane %v5736, 4
      %v5738 = vrot.slane %v4153, 5
      %v5739 = vsel %vm2482, %v5737, %v5738
      %v5740 = vrot.slane %v5738, 4
      %v5741 = vrot.slane %v4154, 5
      %v5742 = vsel %vm2482, %v5740, %v5741
      %v5743 = vrot.slane %v5595, 5
      %v5744 = vrot.slane %v5743, 4
      %v5745 = vrot.slane %v4156, 5
      %v5746 = vsel %vm2482, %v5744, %v5745
      %v5747 = vrot.slane %v5745, 4
      %v5748 = vrot.slane %v4157, 5
      %v5749 = vsel %vm2482, %v5747, %v5748
      %v5750 = vrot.slane %v5596, 5
      %v5751 = vrot.slane %v5750, 4
      %v5752 = vrot.slane %v4159, 5
      %v5753 = vsel %vm2482, %v5751, %v5752
      %v5754 = vrot.slane %v5752, 4
      %v5755 = vrot.slane %v4160, 5
      %v5756 = vsel %vm2482, %v5754, %v5755
      %s5757 = scalar_lea.vmem %s2, 40
      %v5758 = vld [vmem:[%s5757] sm:$0xf]
      %v5759 = vld [vmem:[%s5757 + $0x4] sm:$0xf]
      %v5760 = vunpack.c.l.b16 %v5648
      %v5761 = vunpack.c.l.b16 %v5651
      %v5762 = vunpack.c.l.b16 %v5655
      %v5763 = vunpack.c.l.b16 %v5658
      %v5764 = vunpack.c.l.b16 %v5662
      %v5765 = vunpack.c.l.b16 %v5665
      %v5766 = vunpack.c.l.b16 %v5669
      %v5767 = vunpack.c.l.b16 %v5672
      %v5768 = vunpack.c.l.b16 %v5676
      %v5769 = vunpack.c.l.b16 %v5679
      %v5770 = vunpack.c.l.b16 %v5683
      %v5771 = vunpack.c.l.b16 %v5686
      %v5772 = vunpack.c.l.b16 %v5690
      %v5773 = vunpack.c.l.b16 %v5693
      %v5774 = vunpack.c.l.b16 %v5697
      %v5775 = vunpack.c.l.b16 %v5700
      %v5776 = vunpack.c.l.b16 %v5704
      %v5777 = vunpack.c.l.b16 %v5707
      %v5778 = vunpack.c.l.b16 %v5711
      %v5779 = vunpack.c.l.b16 %v5714
      %v5780 = vunpack.c.l.b16 %v5718
      %v5781 = vunpack.c.l.b16 %v5721
      %v5782 = vunpack.c.l.b16 %v5725
      %v5783 = vunpack.c.l.b16 %v5728
      %v5784 = vunpack.c.l.b16 %v5732
      %v5785 = vunpack.c.l.b16 %v5735
      %v5786 = vunpack.c.l.b16 %v5739
      %v5787 = vunpack.c.l.b16 %v5742
      %v5788 = vunpack.c.l.b16 %v5746
      %v5789 = vunpack.c.l.b16 %v5749
      %v5790 = vunpack.c.l.b16 %v5753
      %v5791 = vunpack.c.l.b16 %v5756
      %v5792 = vpack.c.b16 %v5761, %v5760
      %v5793 = vpack.c.b16 %v5763, %v5762
      %v5794 = vpack.c.b16 %v5765, %v5764
      %v5795 = vpack.c.b16 %v5767, %v5766
      %v5796 = vpack.c.b16 %v5769, %v5768
      %v5797 = vpack.c.b16 %v5771, %v5770
      %v5798 = vpack.c.b16 %v5773, %v5772
      %v5799 = vpack.c.b16 %v5775, %v5774
      %v5800 = vpack.c.b16 %v5777, %v5776
      %v5801 = vpack.c.b16 %v5779, %v5778
      %v5802 = vpack.c.b16 %v5781, %v5780
      %v5803 = vpack.c.b16 %v5783, %v5782
      %v5804 = vpack.c.b16 %v5785, %v5784
      %v5805 = vpack.c.b16 %v5787, %v5786
      %v5806 = vpack.c.b16 %v5789, %v5788
      %v5807 = vpack.c.b16 %v5791, %v5790
      %v5810 = vunpack.c.l.b16 %v5758
      %v5811 = vunpack.c.l.b16 %v5759
      %v5812 = vpack.c.b16 %v5811, %v5810
      %v5815 = vsel %vm735, %v5792, 0
      %v5818 = vsel %vm735, %v5793, 0
      %v5821 = vsel %vm735, %v5794, 0
      %v5824 = vsel %vm735, %v5795, 0
      %v5827 = vsel %vm735, %v5796, 0
      %v5830 = vsel %vm735, %v5797, 0
      %v5833 = vsel %vm735, %v5798, 0
      %v5836 = vsel %vm735, %v5799, 0
      %v5839 = vsel %vm735, %v5800, 0
      %v5842 = vsel %vm735, %v5801, 0
      %v5845 = vsel %vm735, %v5802, 0
      %v5848 = vsel %vm735, %v5803, 0
      %v5851 = vsel %vm735, %v5804, 0
      %v5854 = vsel %vm735, %v5805, 0
      %v5857 = vsel %vm735, %v5806, 0
      %v5860 = vsel %vm735, %v5807, 0
      %5862 = vmatprep.subr.bf16.mxu0 0
      %5863 = vmatpush1.bf16.msra.mxu0 0
      %5864 = vmatprep.subr.bf16.mxu0 0
      %5865 = vmatpush1.bf16.msra.mxu0 0
      %5866 = vmatprep.subr.bf16.mxu0 0
      %5867 = vmatpush1.bf16.msra.mxu0 0
      %5868 = vmatprep.subr.bf16.mxu0 0
      %5869 = vmatpush1.bf16.msra.mxu0 0
      %5870 = vmatprep.subr.bf16.mxu0 0
      %5871 = vmatpush1.bf16.msra.mxu0 0
      %5872 = vmatprep.subr.bf16.mxu0 0
      %5873 = vmatpush1.bf16.msra.mxu0 0
      %5874 = vmatprep.subr.bf16.mxu0 0
      %5875 = vmatpush1.bf16.msra.mxu0 0
      %5876 = vmatprep.subr.bf16.mxu0 0
      %5877 = vmatpush1.bf16.msra.mxu0 %v5812
      %5878 = vmatprep.subr.bf16.mxu0 0
      %5879 = vmatpush2.bf16.msra.mxu0 0
      %5880 = vmatprep.subr.bf16.mxu0 0
      %5881 = vmatpush2.bf16.msra.mxu0 0
      %5882 = vmatprep.subr.bf16.mxu0 0
      %5883 = vmatpush2.bf16.msra.mxu0 0
      %5884 = vmatprep.subr.bf16.mxu0 0
      %5885 = vmatpush2.bf16.msra.mxu0 0
      %5886 = vmatprep.subr.bf16.mxu0 0
      %5887 = vmatpush2.bf16.msra.mxu0 0
      %5888 = vmatprep.subr.bf16.mxu0 0
      %5889 = vmatpush2.bf16.msra.mxu0 0
      %5890 = vmatprep.subr.bf16.mxu0 0
      %5891 = vmatpush2.bf16.msra.mxu0 0
      %5892 = vmatprep.subr.bf16.mxu0 0
      %5893 = vmatpush2.bf16.msra.mxu0 0
      %5894 = vmatprep.mubr.bf16.mxu0 0
      %5895 = vmatmul.mubr.bf16.gmra.mxu0 %v5815
      %v5896 = vpop.f32.mrf.mxu0
      %v5897 = vadd.f32 0.0, %v5896
      %v5898 = vpop.f32.mrf.mxu0
      %v5899 = vpop.f32.mrf.mxu0
      %v5900 = vadd.f32 0.0, %v5899
      %v5901 = vpop.f32.mrf.mxu0
      %5902 = vmatprep.mubr.bf16.mxu0 0
      %5903 = vmatmul.mubr.bf16.gmra.mxu0 %v5818
      %v5904 = vpop.f32.mrf.mxu0
      %v5905 = vadd.f32 0.0, %v5904
      %v5906 = vpop.f32.mrf.mxu0
      %v5907 = vpop.f32.mrf.mxu0
      %v5908 = vadd.f32 0.0, %v5907
      %v5909 = vpop.f32.mrf.mxu0
      %5910 = vmatprep.mubr.bf16.mxu0 0
      %5911 = vmatmul.mubr.bf16.gmra.mxu0 %v5821
      %v5912 = vpop.f32.mrf.mxu0
      %v5913 = vadd.f32 0.0, %v5912
      %v5914 = vpop.f32.mrf.mxu0
      %v5915 = vpop.f32.mrf.mxu0
      %v5916 = vadd.f32 0.0, %v5915
      %v5917 = vpop.f32.mrf.mxu0
      %5918 = vmatprep.mubr.bf16.mxu0 0
      %5919 = vmatmul.mubr.bf16.gmra.mxu0 %v5824
      %v5920 = vpop.f32.mrf.mxu0
      %v5921 = vadd.f32 0.0, %v5920
      %v5922 = vpop.f32.mrf.mxu0
      %v5923 = vpop.f32.mrf.mxu0
      %v5924 = vadd.f32 0.0, %v5923
      %v5925 = vpop.f32.mrf.mxu0
      %5926 = vmatprep.mubr.bf16.mxu0 0
      %5927 = vmatmul.mubr.bf16.gmra.mxu0 %v5827
      %v5928 = vpop.f32.mrf.mxu0
      %v5929 = vadd.f32 0.0, %v5928
      %v5930 = vpop.f32.mrf.mxu0
      %v5931 = vpop.f32.mrf.mxu0
      %v5932 = vadd.f32 0.0, %v5931
      %v5933 = vpop.f32.mrf.mxu0
      %5934 = vmatprep.mubr.bf16.mxu0 0
      %5935 = vmatmul.mubr.bf16.gmra.mxu0 %v5830
      %v5936 = vpop.f32.mrf.mxu0
      %v5937 = vadd.f32 0.0, %v5936
      %v5938 = vpop.f32.mrf.mxu0
      %v5939 = vpop.f32.mrf.mxu0
      %v5940 = vadd.f32 0.0, %v5939
      %v5941 = vpop.f32.mrf.mxu0
      %5942 = vmatprep.mubr.bf16.mxu0 0
      %5943 = vmatmul.mubr.bf16.gmra.mxu0 %v5833
      %v5944 = vpop.f32.mrf.mxu0
      %v5945 = vadd.f32 0.0, %v5944
      %v5946 = vpop.f32.mrf.mxu0
      %v5947 = vpop.f32.mrf.mxu0
      %v5948 = vadd.f32 0.0, %v5947
      %v5949 = vpop.f32.mrf.mxu0
      %5950 = vmatprep.mubr.bf16.mxu0 0
      %5951 = vmatmul.mubr.bf16.gmra.mxu0 %v5836
      %v5952 = vpop.f32.mrf.mxu0
      %v5953 = vadd.f32 0.0, %v5952
      %v5954 = vpop.f32.mrf.mxu0
      %v5955 = vpop.f32.mrf.mxu0
      %v5956 = vadd.f32 0.0, %v5955
      %v5957 = vpop.f32.mrf.mxu0
      %5958 = vmatprep.mubr.bf16.mxu0 0
      %5959 = vmatmul.mubr.bf16.gmra.mxu0 %v5839
      %v5960 = vpop.f32.mrf.mxu0
      %v5961 = vadd.f32 0.0, %v5960
      %v5962 = vpop.f32.mrf.mxu0
      %v5963 = vpop.f32.mrf.mxu0
      %v5964 = vadd.f32 0.0, %v5963
      %v5965 = vpop.f32.mrf.mxu0
      %5966 = vmatprep.mubr.bf16.mxu0 0
      %5967 = vmatmul.mubr.bf16.gmra.mxu0 %v5842
      %v5968 = vpop.f32.mrf.mxu0
      %v5969 = vadd.f32 0.0, %v5968
      %v5970 = vpop.f32.mrf.mxu0
      %v5971 = vpop.f32.mrf.mxu0
      %v5972 = vadd.f32 0.0, %v5971
      %v5973 = vpop.f32.mrf.mxu0
      %5974 = vmatprep.mubr.bf16.mxu0 0
      %5975 = vmatmul.mubr.bf16.gmra.mxu0 %v5845
      %v5976 = vpop.f32.mrf.mxu0
      %v5977 = vadd.f32 0.0, %v5976
      %v5978 = vpop.f32.mrf.mxu0
      %v5979 = vpop.f32.mrf.mxu0
      %v5980 = vadd.f32 0.0, %v5979
      %v5981 = vpop.f32.mrf.mxu0
      %5982 = vmatprep.mubr.bf16.mxu0 0
      %5983 = vmatmul.mubr.bf16.gmra.mxu0 %v5848
      %v5984 = vpop.f32.mrf.mxu0
      %v5985 = vadd.f32 0.0, %v5984
      %v5986 = vpop.f32.mrf.mxu0
      %v5987 = vpop.f32.mrf.mxu0
      %v5988 = vadd.f32 0.0, %v5987
      %v5989 = vpop.f32.mrf.mxu0
      %5990 = vmatprep.mubr.bf16.mxu0 0
      %5991 = vmatmul.mubr.bf16.gmra.mxu0 %v5851
      %v5992 = vpop.f32.mrf.mxu0
      %v5993 = vadd.f32 0.0, %v5992
      %v5994 = vpop.f32.mrf.mxu0
      %v5995 = vpop.f32.mrf.mxu0
      %v5996 = vadd.f32 0.0, %v5995
      %v5997 = vpop.f32.mrf.mxu0
      %5998 = vmatprep.mubr.bf16.mxu0 0
      %5999 = vmatmul.mubr.bf16.gmra.mxu0 %v5854
      %v6000 = vpop.f32.mrf.mxu0
      %v6001 = vadd.f32 0.0, %v6000
      %v6002 = vpop.f32.mrf.mxu0
      %v6003 = vpop.f32.mrf.mxu0
      %v6004 = vadd.f32 0.0, %v6003
      %v6005 = vpop.f32.mrf.mxu0
      %6006 = vmatprep.mubr.bf16.mxu0 0
      %6007 = vmatmul.mubr.bf16.gmra.mxu0 %v5857
      %v6008 = vpop.f32.mrf.mxu0
      %v6009 = vadd.f32 0.0, %v6008
      %v6010 = vpop.f32.mrf.mxu0
      %v6011 = vpop.f32.mrf.mxu0
      %v6012 = vadd.f32 0.0, %v6011
      %v6013 = vpop.f32.mrf.mxu0
      %6014 = vmatprep.mubr.bf16.mxu0 0
      %6015 = vmatmul.mubr.bf16.gmra.mxu0 %v5860
      %v6016 = vpop.f32.mrf.mxu0
      %v6017 = vadd.f32 0.0, %v6016
      %v6018 = vpop.f32.mrf.mxu0
      %v6019 = vpop.f32.mrf.mxu0
      %v6020 = vadd.f32 0.0, %v6019
      %v6021 = vpop.f32.mrf.mxu0
      %6022 = vdwg.mxu0
      %v6023 = vadd.f32 %v5549, %v5897
      %v6024 = vadd.f32 %v5550, %v5900
      %v6025 = vadd.f32 %v5551, %v5905
      %v6026 = vadd.f32 %v5552, %v5908
      %v6027 = vadd.f32 %v5553, %v5913
      %v6028 = vadd.f32 %v5554, %v5916
      %v6029 = vadd.f32 %v5555, %v5921
      %v6030 = vadd.f32 %v5556, %v5924
      %v6031 = vadd.f32 %v5557, %v5929
      %v6032 = vadd.f32 %v5558, %v5932
      %v6033 = vadd.f32 %v5559, %v5937
      %v6034 = vadd.f32 %v5560, %v5940
      %v6035 = vadd.f32 %v5561, %v5945
      %v6036 = vadd.f32 %v5562, %v5948
      %v6037 = vadd.f32 %v5563, %v5953
      %v6038 = vadd.f32 %v5564, %v5956
      %v6039 = vadd.f32 %v5565, %v5961
      %v6040 = vadd.f32 %v5566, %v5964
      %v6041 = vadd.f32 %v5567, %v5969
      %v6042 = vadd.f32 %v5568, %v5972
      %v6043 = vadd.f32 %v5569, %v5977
      %v6044 = vadd.f32 %v5570, %v5980
      %v6045 = vadd.f32 %v5571, %v5985
      %v6046 = vadd.f32 %v5572, %v5988
      %v6047 = vadd.f32 %v5573, %v5993
      %v6048 = vadd.f32 %v5574, %v5996
      %v6049 = vadd.f32 %v5575, %v6001
      %v6050 = vadd.f32 %v5576, %v6004
      %v6051 = vadd.f32 %v5577, %v6009
      %v6052 = vadd.f32 %v5578, %v6012
      %v6053 = vadd.f32 %v5579, %v6017
      %v6054 = vadd.f32 %v5580, %v6020
      %v6055 = vld [vmem:[%s3742] sm:$0xe]
      %v6056 = vld [vmem:[%s3742 + $0xc] sm:$0xe]
      %v6057 = vld [vmem:[%s3742 + $0x18] sm:$0xe]
      %v6058 = vld [vmem:[%s3742 + $0x24] sm:$0xe]
      %v6059 = vld [vmem:[%s3742 + $0x30] sm:$0xe]
      %v6060 = vld [vmem:[%s3742 + $0x3c] sm:$0xe]
      %v6061 = vld [vmem:[%s3742 + $0x48] sm:$0xe]
      %v6062 = vld [vmem:[%s3742 + $0x54] sm:$0xe]
      %v6063 = vld [vmem:[%s3742 + $0x60] sm:$0xe]
      %v6064 = vld [vmem:[%s3742 + $0x6c] sm:$0xe]
      %v6065 = vld [vmem:[%s3742 + $0x78] sm:$0xe]
      %v6066 = vld [vmem:[%s3742 + $0x84] sm:$0xe]
      %v6067 = vld [vmem:[%s3742 + $0x90] sm:$0xe]
      %v6068 = vld [vmem:[%s3742 + $0x9c] sm:$0xe]
      %v6069 = vld [vmem:[%s3742 + $0xa8] sm:$0xe]
      %v6070 = vld [vmem:[%s3742 + $0xb4] sm:$0xe]
      %v6119 = vrot.slane %v6055, 5
      %v6120 = vrot.slane %v6119, 4
      %v6121 = vrot.slane %v4844, 5
      %v6122 = vsel %vm2482, %v6120, %v6121
      %v6123 = vrot.slane %v6121, 4
      %v6124 = vrot.slane %v4845, 5
      %v6125 = vsel %vm2482, %v6123, %v6124
      %v6126 = vrot.slane %v6056, 5
      %v6127 = vrot.slane %v6126, 4
      %v6128 = vrot.slane %v4847, 5
      %v6129 = vsel %vm2482, %v6127, %v6128
      %v6130 = vrot.slane %v6128, 4
      %v6131 = vrot.slane %v4848, 5
      %v6132 = vsel %vm2482, %v6130, %v6131
      %v6133 = vrot.slane %v6057, 5
      %v6134 = vrot.slane %v6133, 4
      %v6135 = vrot.slane %v4850, 5
      %v6136 = vsel %vm2482, %v6134, %v6135
      %v6137 = vrot.slane %v6135, 4
      %v6138 = vrot.slane %v4851, 5
      %v6139 = vsel %vm2482, %v6137, %v6138
      %v6140 = vrot.slane %v6058, 5
      %v6141 = vrot.slane %v6140, 4
      %v6142 = vrot.slane %v4853, 5
      %v6143 = vsel %vm2482, %v6141, %v6142
      %v6144 = vrot.slane %v6142, 4
      %v6145 = vrot.slane %v4854, 5
      %v6146 = vsel %vm2482, %v6144, %v6145
      %v6147 = vrot.slane %v6059, 5
      %v6148 = vrot.slane %v6147, 4
      %v6149 = vrot.slane %v4856, 5
      %v6150 = vsel %vm2482, %v6148, %v6149
      %v6151 = vrot.slane %v6149, 4
      %v6152 = vrot.slane %v4857, 5
      %v6153 = vsel %vm2482, %v6151, %v6152
      %v6154 = vrot.slane %v6060, 5
      %v6155 = vrot.slane %v6154, 4
      %v6156 = vrot.slane %v4859, 5
      %v6157 = vsel %vm2482, %v6155, %v6156
      %v6158 = vrot.slane %v6156, 4
      %v6159 = vrot.slane %v4860, 5
      %v6160 = vsel %vm2482, %v6158, %v6159
      %v6161 = vrot.slane %v6061, 5
      %v6162 = vrot.slane %v6161, 4
      %v6163 = vrot.slane %v4862, 5
      %v6164 = vsel %vm2482, %v6162, %v6163
      %v6165 = vrot.slane %v6163, 4
      %v6166 = vrot.slane %v4863, 5
      %v6167 = vsel %vm2482, %v6165, %v6166
      %v6168 = vrot.slane %v6062, 5
      %v6169 = vrot.slane %v6168, 4
      %v6170 = vrot.slane %v4865, 5
      %v6171 = vsel %vm2482, %v6169, %v6170
      %v6172 = vrot.slane %v6170, 4
      %v6173 = vrot.slane %v4866, 5
      %v6174 = vsel %vm2482, %v6172, %v6173
      %v6175 = vrot.slane %v6063, 5
      %v6176 = vrot.slane %v6175, 4
      %v6177 = vrot.slane %v4868, 5
      %v6178 = vsel %vm2482, %v6176, %v6177
      %v6179 = vrot.slane %v6177, 4
      %v6180 = vrot.slane %v4869, 5
      %v6181 = vsel %vm2482, %v6179, %v6180
      %v6182 = vrot.slane %v6064, 5
      %v6183 = vrot.slane %v6182, 4
      %v6184 = vrot.slane %v4871, 5
      %v6185 = vsel %vm2482, %v6183, %v6184
      %v6186 = vrot.slane %v6184, 4
      %v6187 = vrot.slane %v4872, 5
      %v6188 = vsel %vm2482, %v6186, %v6187
      %v6189 = vrot.slane %v6065, 5
      %v6190 = vrot.slane %v6189, 4
      %v6191 = vrot.slane %v4874, 5
      %v6192 = vsel %vm2482, %v6190, %v6191
      %v6193 = vrot.slane %v6191, 4
      %v6194 = vrot.slane %v4875, 5
      %v6195 = vsel %vm2482, %v6193, %v6194
      %v6196 = vrot.slane %v6066, 5
      %v6197 = vrot.slane %v6196, 4
      %v6198 = vrot.slane %v4877, 5
      %v6199 = vsel %vm2482, %v6197, %v6198
      %v6200 = vrot.slane %v6198, 4
      %v6201 = vrot.slane %v4878, 5
      %v6202 = vsel %vm2482, %v6200, %v6201
      %v6203 = vrot.slane %v6067, 5
      %v6204 = vrot.slane %v6203, 4
      %v6205 = vrot.slane %v4880, 5
      %v6206 = vsel %vm2482, %v6204, %v6205
      %v6207 = vrot.slane %v6205, 4
      %v6208 = vrot.slane %v4881, 5
      %v6209 = vsel %vm2482, %v6207, %v6208
      %v6210 = vrot.slane %v6068, 5
      %v6211 = vrot.slane %v6210, 4
      %v6212 = vrot.slane %v4883, 5
      %v6213 = vsel %vm2482, %v6211, %v6212
      %v6214 = vrot.slane %v6212, 4
      %v6215 = vrot.slane %v4884, 5
      %v6216 = vsel %vm2482, %v6214, %v6215
      %v6217 = vrot.slane %v6069, 5
      %v6218 = vrot.slane %v6217, 4
      %v6219 = vrot.slane %v4886, 5
      %v6220 = vsel %vm2482, %v6218, %v6219
      %v6221 = vrot.slane %v6219, 4
      %v6222 = vrot.slane %v4887, 5
      %v6223 = vsel %vm2482, %v6221, %v6222
      %v6224 = vrot.slane %v6070, 5
      %v6225 = vrot.slane %v6224, 4
      %v6226 = vrot.slane %v4889, 5
      %v6227 = vsel %vm2482, %v6225, %v6226
      %v6228 = vrot.slane %v6226, 4
      %v6229 = vrot.slane %v4890, 5
      %v6230 = vsel %vm2482, %v6228, %v6229
      %s6231 = scalar_lea.vmem %s3, 80
      %v6232 = vld [vmem:[%s6231] sm:$0xf]
      %v6233 = vld [vmem:[%s6231 + $0x4] sm:$0xf]
      %v6234 = vld [vmem:[%s6231 + $0x8] sm:$0xf]
      %v6235 = vld [vmem:[%s6231 + $0xc] sm:$0xf]
      %v6236 = vunpack.c.l.b16 %v6122
      %v6237 = vunpack.c.l.b16 %v6125
      %v6238 = vunpack.c.l.b16 %v6129
      %v6239 = vunpack.c.l.b16 %v6132
      %v6240 = vunpack.c.l.b16 %v6136
      %v6241 = vunpack.c.l.b16 %v6139
      %v6242 = vunpack.c.l.b16 %v6143
      %v6243 = vunpack.c.l.b16 %v6146
      %v6244 = vunpack.c.l.b16 %v6150
      %v6245 = vunpack.c.l.b16 %v6153
      %v6246 = vunpack.c.l.b16 %v6157
      %v6247 = vunpack.c.l.b16 %v6160
      %v6248 = vunpack.c.l.b16 %v6164
      %v6249 = vunpack.c.l.b16 %v6167
      %v6250 = vunpack.c.l.b16 %v6171
      %v6251 = vunpack.c.l.b16 %v6174
      %v6252 = vunpack.c.l.b16 %v6178
      %v6253 = vunpack.c.l.b16 %v6181
      %v6254 = vunpack.c.l.b16 %v6185
      %v6255 = vunpack.c.l.b16 %v6188
      %v6256 = vunpack.c.l.b16 %v6192
      %v6257 = vunpack.c.l.b16 %v6195
      %v6258 = vunpack.c.l.b16 %v6199
      %v6259 = vunpack.c.l.b16 %v6202
      %v6260 = vunpack.c.l.b16 %v6206
      %v6261 = vunpack.c.l.b16 %v6209
      %v6262 = vunpack.c.l.b16 %v6213
      %v6263 = vunpack.c.l.b16 %v6216
      %v6264 = vunpack.c.l.b16 %v6220
      %v6265 = vunpack.c.l.b16 %v6223
      %v6266 = vunpack.c.l.b16 %v6227
      %v6267 = vunpack.c.l.b16 %v6230
      %v6268 = vpack.c.b16 %v6237, %v6236
      %v6269 = vpack.c.b16 %v6239, %v6238
      %v6270 = vpack.c.b16 %v6241, %v6240
      %v6271 = vpack.c.b16 %v6243, %v6242
      %v6272 = vpack.c.b16 %v6245, %v6244
      %v6273 = vpack.c.b16 %v6247, %v6246
      %v6274 = vpack.c.b16 %v6249, %v6248
      %v6275 = vpack.c.b16 %v6251, %v6250
      %v6276 = vpack.c.b16 %v6253, %v6252
      %v6277 = vpack.c.b16 %v6255, %v6254
      %v6278 = vpack.c.b16 %v6257, %v6256
      %v6279 = vpack.c.b16 %v6259, %v6258
      %v6280 = vpack.c.b16 %v6261, %v6260
      %v6281 = vpack.c.b16 %v6263, %v6262
      %v6282 = vpack.c.b16 %v6265, %v6264
      %v6283 = vpack.c.b16 %v6267, %v6266
      %v6288 = vunpack.c.l.b16 %v6232
      %v6289 = vunpack.c.l.b16 %v6233
      %v6290 = vunpack.c.l.b16 %v6234
      %v6291 = vunpack.c.l.b16 %v6235
      %v6292 = vpack.c.b16 %v6289, %v6288
      %v6293 = vpack.c.b16 %v6291, %v6290
      %v6297 = vsel %vm439, %v6268, 0
      %v6300 = vsel %vm439, %v6269, 0
      %v6303 = vsel %vm439, %v6270, 0
      %v6306 = vsel %vm439, %v6271, 0
      %v6309 = vsel %vm439, %v6272, 0
      %v6312 = vsel %vm439, %v6273, 0
      %v6315 = vsel %vm439, %v6274, 0
      %v6318 = vsel %vm439, %v6275, 0
      %v6321 = vsel %vm439, %v6276, 0
      %v6324 = vsel %vm439, %v6277, 0
      %v6327 = vsel %vm439, %v6278, 0
      %v6330 = vsel %vm439, %v6279, 0
      %v6333 = vsel %vm439, %v6280, 0
      %v6336 = vsel %vm439, %v6281, 0
      %v6339 = vsel %vm439, %v6282, 0
      %v6342 = vsel %vm439, %v6283, 0
      %6344 = vmatprep.subr.bf16.mxu0 0
      %6345 = vmatpush1.bf16.msra.mxu0 0
      %6346 = vmatprep.subr.bf16.mxu0 0
      %6347 = vmatpush1.bf16.msra.mxu0 0
      %6348 = vmatprep.subr.bf16.mxu0 0
      %6349 = vmatpush1.bf16.msra.mxu0 0
      %6350 = vmatprep.subr.bf16.mxu0 0
      %6351 = vmatpush1.bf16.msra.mxu0 0
      %6352 = vmatprep.subr.bf16.mxu0 0
      %6353 = vmatpush1.bf16.msra.mxu0 0
      %6354 = vmatprep.subr.bf16.mxu0 0
      %6355 = vmatpush1.bf16.msra.mxu0 0
      %6356 = vmatprep.subr.bf16.mxu0 0
      %6357 = vmatpush1.bf16.msra.mxu0 %v6293
      %6358 = vmatprep.subr.bf16.mxu0 0
      %6359 = vmatpush1.bf16.msra.mxu0 %v6292
      %6360 = vmatprep.subr.bf16.mxu0 0
      %6361 = vmatpush2.bf16.msra.mxu0 0
      %6362 = vmatprep.subr.bf16.mxu0 0
      %6363 = vmatpush2.bf16.msra.mxu0 0
      %6364 = vmatprep.subr.bf16.mxu0 0
      %6365 = vmatpush2.bf16.msra.mxu0 0
      %6366 = vmatprep.subr.bf16.mxu0 0
      %6367 = vmatpush2.bf16.msra.mxu0 0
      %6368 = vmatprep.subr.bf16.mxu0 0
      %6369 = vmatpush2.bf16.msra.mxu0 0
      %6370 = vmatprep.subr.bf16.mxu0 0
      %6371 = vmatpush2.bf16.msra.mxu0 0
      %6372 = vmatprep.subr.bf16.mxu0 0
      %6373 = vmatpush2.bf16.msra.mxu0 0
      %6374 = vmatprep.subr.bf16.mxu0 0
      %6375 = vmatpush2.bf16.msra.mxu0 0
      %6376 = vmatprep.mubr.bf16.mxu0 0
      %6377 = vmatmul.mubr.bf16.gmra.mxu0 %v6297
      %v6378 = vpop.f32.mrf.mxu0
      %v6379 = vadd.f32 0.0, %v6378
      %v6380 = vpop.f32.mrf.mxu0
      %v6381 = vpop.f32.mrf.mxu0
      %v6382 = vadd.f32 0.0, %v6381
      %v6383 = vpop.f32.mrf.mxu0
      %6384 = vmatprep.mubr.bf16.mxu0 0
      %6385 = vmatmul.mubr.bf16.gmra.mxu0 %v6300
      %v6386 = vpop.f32.mrf.mxu0
      %v6387 = vadd.f32 0.0, %v6386
      %v6388 = vpop.f32.mrf.mxu0
      %v6389 = vpop.f32.mrf.mxu0
      %v6390 = vadd.f32 0.0, %v6389
      %v6391 = vpop.f32.mrf.mxu0
      %6392 = vmatprep.mubr.bf16.mxu0 0
      %6393 = vmatmul.mubr.bf16.gmra.mxu0 %v6303
      %v6394 = vpop.f32.mrf.mxu0
      %v6395 = vadd.f32 0.0, %v6394
      %v6396 = vpop.f32.mrf.mxu0
      %v6397 = vpop.f32.mrf.mxu0
      %v6398 = vadd.f32 0.0, %v6397
      %v6399 = vpop.f32.mrf.mxu0
      %6400 = vmatprep.mubr.bf16.mxu0 0
      %6401 = vmatmul.mubr.bf16.gmra.mxu0 %v6306
      %v6402 = vpop.f32.mrf.mxu0
      %v6403 = vadd.f32 0.0, %v6402
      %v6404 = vpop.f32.mrf.mxu0
      %v6405 = vpop.f32.mrf.mxu0
      %v6406 = vadd.f32 0.0, %v6405
      %v6407 = vpop.f32.mrf.mxu0
      %6408 = vmatprep.mubr.bf16.mxu0 0
      %6409 = vmatmul.mubr.bf16.gmra.mxu0 %v6309
      %v6410 = vpop.f32.mrf.mxu0
      %v6411 = vadd.f32 0.0, %v6410
      %v6412 = vpop.f32.mrf.mxu0
      %v6413 = vpop.f32.mrf.mxu0
      %v6414 = vadd.f32 0.0, %v6413
      %v6415 = vpop.f32.mrf.mxu0
      %6416 = vmatprep.mubr.bf16.mxu0 0
      %6417 = vmatmul.mubr.bf16.gmra.mxu0 %v6312
      %v6418 = vpop.f32.mrf.mxu0
      %v6419 = vadd.f32 0.0, %v6418
      %v6420 = vpop.f32.mrf.mxu0
      %v6421 = vpop.f32.mrf.mxu0
      %v6422 = vadd.f32 0.0, %v6421
      %v6423 = vpop.f32.mrf.mxu0
      %6424 = vmatprep.mubr.bf16.mxu0 0
      %6425 = vmatmul.mubr.bf16.gmra.mxu0 %v6315
      %v6426 = vpop.f32.mrf.mxu0
      %v6427 = vadd.f32 0.0, %v6426
      %v6428 = vpop.f32.mrf.mxu0
      %v6429 = vpop.f32.mrf.mxu0
      %v6430 = vadd.f32 0.0, %v6429
      %v6431 = vpop.f32.mrf.mxu0
      %6432 = vmatprep.mubr.bf16.mxu0 0
      %6433 = vmatmul.mubr.bf16.gmra.mxu0 %v6318
      %v6434 = vpop.f32.mrf.mxu0
      %v6435 = vadd.f32 0.0, %v6434
      %v6436 = vpop.f32.mrf.mxu0
      %v6437 = vpop.f32.mrf.mxu0
      %v6438 = vadd.f32 0.0, %v6437
      %v6439 = vpop.f32.mrf.mxu0
      %6440 = vmatprep.mubr.bf16.mxu0 0
      %6441 = vmatmul.mubr.bf16.gmra.mxu0 %v6321
      %v6442 = vpop.f32.mrf.mxu0
      %v6443 = vadd.f32 0.0, %v6442
      %v6444 = vpop.f32.mrf.mxu0
      %v6445 = vpop.f32.mrf.mxu0
      %v6446 = vadd.f32 0.0, %v6445
      %v6447 = vpop.f32.mrf.mxu0
      %6448 = vmatprep.mubr.bf16.mxu0 0
      %6449 = vmatmul.mubr.bf16.gmra.mxu0 %v6324
      %v6450 = vpop.f32.mrf.mxu0
      %v6451 = vadd.f32 0.0, %v6450
      %v6452 = vpop.f32.mrf.mxu0
      %v6453 = vpop.f32.mrf.mxu0
      %v6454 = vadd.f32 0.0, %v6453
      %v6455 = vpop.f32.mrf.mxu0
      %6456 = vmatprep.mubr.bf16.mxu0 0
      %6457 = vmatmul.mubr.bf16.gmra.mxu0 %v6327
      %v6458 = vpop.f32.mrf.mxu0
      %v6459 = vadd.f32 0.0, %v6458
      %v6460 = vpop.f32.mrf.mxu0
      %v6461 = vpop.f32.mrf.mxu0
      %v6462 = vadd.f32 0.0, %v6461
      %v6463 = vpop.f32.mrf.mxu0
      %6464 = vmatprep.mubr.bf16.mxu0 0
      %6465 = vmatmul.mubr.bf16.gmra.mxu0 %v6330
      %v6466 = vpop.f32.mrf.mxu0
      %v6467 = vadd.f32 0.0, %v6466
      %v6468 = vpop.f32.mrf.mxu0
      %v6469 = vpop.f32.mrf.mxu0
      %v6470 = vadd.f32 0.0, %v6469
      %v6471 = vpop.f32.mrf.mxu0
      %6472 = vmatprep.mubr.bf16.mxu0 0
      %6473 = vmatmul.mubr.bf16.gmra.mxu0 %v6333
      %v6474 = vpop.f32.mrf.mxu0
      %v6475 = vadd.f32 0.0, %v6474
      %v6476 = vpop.f32.mrf.mxu0
      %v6477 = vpop.f32.mrf.mxu0
      %v6478 = vadd.f32 0.0, %v6477
      %v6479 = vpop.f32.mrf.mxu0
      %6480 = vmatprep.mubr.bf16.mxu0 0
      %6481 = vmatmul.mubr.bf16.gmra.mxu0 %v6336
      %v6482 = vpop.f32.mrf.mxu0
      %v6483 = vadd.f32 0.0, %v6482
      %v6484 = vpop.f32.mrf.mxu0
      %v6485 = vpop.f32.mrf.mxu0
      %v6486 = vadd.f32 0.0, %v6485
      %v6487 = vpop.f32.mrf.mxu0
      %6488 = vmatprep.mubr.bf16.mxu0 0
      %6489 = vmatmul.mubr.bf16.gmra.mxu0 %v6339
      %v6490 = vpop.f32.mrf.mxu0
      %v6491 = vadd.f32 0.0, %v6490
      %v6492 = vpop.f32.mrf.mxu0
      %v6493 = vpop.f32.mrf.mxu0
      %v6494 = vadd.f32 0.0, %v6493
      %v6495 = vpop.f32.mrf.mxu0
      %6496 = vmatprep.mubr.bf16.mxu0 0
      %6497 = vmatmul.mubr.bf16.gmra.mxu0 %v6342
      %v6498 = vpop.f32.mrf.mxu0
      %v6499 = vadd.f32 0.0, %v6498
      %v6500 = vpop.f32.mrf.mxu0
      %v6501 = vpop.f32.mrf.mxu0
      %v6502 = vadd.f32 0.0, %v6501
      %v6503 = vpop.f32.mrf.mxu0
      %6504 = vdwg.mxu0
      %v6505 = vadd.f32 %v6023, %v6379
      %v6506 = vadd.f32 %v6024, %v6382
      %v6507 = vadd.f32 %v6025, %v6387
      %v6508 = vadd.f32 %v6026, %v6390
      %v6509 = vadd.f32 %v6027, %v6395
      %v6510 = vadd.f32 %v6028, %v6398
      %v6511 = vadd.f32 %v6029, %v6403
      %v6512 = vadd.f32 %v6030, %v6406
      %v6513 = vadd.f32 %v6031, %v6411
      %v6514 = vadd.f32 %v6032, %v6414
      %v6515 = vadd.f32 %v6033, %v6419
      %v6516 = vadd.f32 %v6034, %v6422
      %v6517 = vadd.f32 %v6035, %v6427
      %v6518 = vadd.f32 %v6036, %v6430
      %v6519 = vadd.f32 %v6037, %v6435
      %v6520 = vadd.f32 %v6038, %v6438
      %v6521 = vadd.f32 %v6039, %v6443
      %v6522 = vadd.f32 %v6040, %v6446
      %v6523 = vadd.f32 %v6041, %v6451
      %v6524 = vadd.f32 %v6042, %v6454
      %v6525 = vadd.f32 %v6043, %v6459
      %v6526 = vadd.f32 %v6044, %v6462
      %v6527 = vadd.f32 %v6045, %v6467
      %v6528 = vadd.f32 %v6046, %v6470
      %v6529 = vadd.f32 %v6047, %v6475
      %v6530 = vadd.f32 %v6048, %v6478
      %v6531 = vadd.f32 %v6049, %v6483
      %v6532 = vadd.f32 %v6050, %v6486
      %v6533 = vadd.f32 %v6051, %v6491
      %v6534 = vadd.f32 %v6052, %v6494
      %v6535 = vadd.f32 %v6053, %v6499
      %v6536 = vadd.f32 %v6054, %v6502
      %s6537 = sadd.s32 %s271, 2
      %s6538 = smul.u32 %s6537, 3
      %s6539 = smul.addr %s6538, 4
      %s6540 = scalar_lea.vmem %s253, %s6539
      %v6541 = vld [vmem:[%s6540] sm:$0xf]
      %v6542 = vld [vmem:[%s6540 + $0x4] sm:$0xf]
      %v6543 = vld [vmem:[%s6540 + $0xc] sm:$0xf]
      %v6544 = vld [vmem:[%s6540 + $0x10] sm:$0xf]
      %v6545 = vld [vmem:[%s6540 + $0x18] sm:$0xf]
      %v6546 = vld [vmem:[%s6540 + $0x1c] sm:$0xf]
      %v6547 = vld [vmem:[%s6540 + $0x24] sm:$0xf]
      %v6548 = vld [vmem:[%s6540 + $0x28] sm:$0xf]
      %v6549 = vld [vmem:[%s6540 + $0x30] sm:$0xf]
      %v6550 = vld [vmem:[%s6540 + $0x34] sm:$0xf]
      %v6551 = vld [vmem:[%s6540 + $0x3c] sm:$0xf]
      %v6552 = vld [vmem:[%s6540 + $0x40] sm:$0xf]
      %v6553 = vld [vmem:[%s6540 + $0x48] sm:$0xf]
      %v6554 = vld [vmem:[%s6540 + $0x4c] sm:$0xf]
      %v6555 = vld [vmem:[%s6540 + $0x54] sm:$0xf]
      %v6556 = vld [vmem:[%s6540 + $0x58] sm:$0xf]
      %v6557 = vld [vmem:[%s6540 + $0x60] sm:$0xf]
      %v6558 = vld [vmem:[%s6540 + $0x64] sm:$0xf]
      %v6559 = vld [vmem:[%s6540 + $0x6c] sm:$0xf]
      %v6560 = vld [vmem:[%s6540 + $0x70] sm:$0xf]
      %v6561 = vld [vmem:[%s6540 + $0x78] sm:$0xf]
      %v6562 = vld [vmem:[%s6540 + $0x7c] sm:$0xf]
      %v6563 = vld [vmem:[%s6540 + $0x84] sm:$0xf]
      %v6564 = vld [vmem:[%s6540 + $0x88] sm:$0xf]
      %v6565 = vld [vmem:[%s6540 + $0x90] sm:$0xf]
      %v6566 = vld [vmem:[%s6540 + $0x94] sm:$0xf]
      %v6567 = vld [vmem:[%s6540 + $0x9c] sm:$0xf]
      %v6568 = vld [vmem:[%s6540 + $0xa0] sm:$0xf]
      %v6569 = vld [vmem:[%s6540 + $0xa8] sm:$0xf]
      %v6570 = vld [vmem:[%s6540 + $0xac] sm:$0xf]
      %v6571 = vld [vmem:[%s6540 + $0xb4] sm:$0xf]
      %v6572 = vld [vmem:[%s6540 + $0xb8] sm:$0xf]
      %s6573 = scalar_lea.vmem %s2, 48
      %v6574 = vld [vmem:[%s6573] sm:$0xf]
      %v6575 = vld [vmem:[%s6573 + $0x4] sm:$0xf]
      %v6608 = vunpack.c.l.b16 %v6541
      %v6609 = vunpack.c.l.b16 %v6542
      %v6610 = vunpack.c.l.b16 %v6543
      %v6611 = vunpack.c.l.b16 %v6544
      %v6612 = vunpack.c.l.b16 %v6545
      %v6613 = vunpack.c.l.b16 %v6546
      %v6614 = vunpack.c.l.b16 %v6547
      %v6615 = vunpack.c.l.b16 %v6548
      %v6616 = vunpack.c.l.b16 %v6549
      %v6617 = vunpack.c.l.b16 %v6550
      %v6618 = vunpack.c.l.b16 %v6551
      %v6619 = vunpack.c.l.b16 %v6552
      %v6620 = vunpack.c.l.b16 %v6553
      %v6621 = vunpack.c.l.b16 %v6554
      %v6622 = vunpack.c.l.b16 %v6555
      %v6623 = vunpack.c.l.b16 %v6556
      %v6624 = vunpack.c.l.b16 %v6557
      %v6625 = vunpack.c.l.b16 %v6558
      %v6626 = vunpack.c.l.b16 %v6559
      %v6627 = vunpack.c.l.b16 %v6560
      %v6628 = vunpack.c.l.b16 %v6561
      %v6629 = vunpack.c.l.b16 %v6562
      %v6630 = vunpack.c.l.b16 %v6563
      %v6631 = vunpack.c.l.b16 %v6564
      %v6632 = vunpack.c.l.b16 %v6565
      %v6633 = vunpack.c.l.b16 %v6566
      %v6634 = vunpack.c.l.b16 %v6567
      %v6635 = vunpack.c.l.b16 %v6568
      %v6636 = vunpack.c.l.b16 %v6569
      %v6637 = vunpack.c.l.b16 %v6570
      %v6638 = vunpack.c.l.b16 %v6571
      %v6639 = vunpack.c.l.b16 %v6572
      %v6640 = vpack.c.b16 %v6609, %v6608
      %v6641 = vpack.c.b16 %v6611, %v6610
      %v6642 = vpack.c.b16 %v6613, %v6612
      %v6643 = vpack.c.b16 %v6615, %v6614
      %v6644 = vpack.c.b16 %v6617, %v6616
      %v6645 = vpack.c.b16 %v6619, %v6618
      %v6646 = vpack.c.b16 %v6621, %v6620
      %v6647 = vpack.c.b16 %v6623, %v6622
      %v6648 = vpack.c.b16 %v6625, %v6624
      %v6649 = vpack.c.b16 %v6627, %v6626
      %v6650 = vpack.c.b16 %v6629, %v6628
      %v6651 = vpack.c.b16 %v6631, %v6630
      %v6652 = vpack.c.b16 %v6633, %v6632
      %v6653 = vpack.c.b16 %v6635, %v6634
      %v6654 = vpack.c.b16 %v6637, %v6636
      %v6655 = vpack.c.b16 %v6639, %v6638
      %v6658 = vunpack.c.l.b16 %v6574
      %v6659 = vunpack.c.l.b16 %v6575
      %v6660 = vpack.c.b16 %v6659, %v6658
      %v6663 = vsel %vm735, %v6640, 0
      %v6666 = vsel %vm735, %v6641, 0
      %v6669 = vsel %vm735, %v6642, 0
      %v6672 = vsel %vm735, %v6643, 0
      %v6675 = vsel %vm735, %v6644, 0
      %v6678 = vsel %vm735, %v6645, 0
      %v6681 = vsel %vm735, %v6646, 0
      %v6684 = vsel %vm735, %v6647, 0
      %v6687 = vsel %vm735, %v6648, 0
      %v6690 = vsel %vm735, %v6649, 0
      %v6693 = vsel %vm735, %v6650, 0
      %v6696 = vsel %vm735, %v6651, 0
      %v6699 = vsel %vm735, %v6652, 0
      %v6702 = vsel %vm735, %v6653, 0
      %v6705 = vsel %vm735, %v6654, 0
      %v6708 = vsel %vm735, %v6655, 0
      %6710 = vmatprep.subr.bf16.mxu0 0
      %6711 = vmatpush1.bf16.msra.mxu0 0
      %6712 = vmatprep.subr.bf16.mxu0 0
      %6713 = vmatpush1.bf16.msra.mxu0 0
      %6714 = vmatprep.subr.bf16.mxu0 0
      %6715 = vmatpush1.bf16.msra.mxu0 0
      %6716 = vmatprep.subr.bf16.mxu0 0
      %6717 = vmatpush1.bf16.msra.mxu0 0
      %6718 = vmatprep.subr.bf16.mxu0 0
      %6719 = vmatpush1.bf16.msra.mxu0 0
      %6720 = vmatprep.subr.bf16.mxu0 0
      %6721 = vmatpush1.bf16.msra.mxu0 0
      %6722 = vmatprep.subr.bf16.mxu0 0
      %6723 = vmatpush1.bf16.msra.mxu0 0
      %6724 = vmatprep.subr.bf16.mxu0 0
      %6725 = vmatpush1.bf16.msra.mxu0 %v6660
      %6726 = vmatprep.subr.bf16.mxu0 0
      %6727 = vmatpush2.bf16.msra.mxu0 0
      %6728 = vmatprep.subr.bf16.mxu0 0
      %6729 = vmatpush2.bf16.msra.mxu0 0
      %6730 = vmatprep.subr.bf16.mxu0 0
      %6731 = vmatpush2.bf16.msra.mxu0 0
      %6732 = vmatprep.subr.bf16.mxu0 0
      %6733 = vmatpush2.bf16.msra.mxu0 0
      %6734 = vmatprep.subr.bf16.mxu0 0
      %6735 = vmatpush2.bf16.msra.mxu0 0
      %6736 = vmatprep.subr.bf16.mxu0 0
      %6737 = vmatpush2.bf16.msra.mxu0 0
      %6738 = vmatprep.subr.bf16.mxu0 0
      %6739 = vmatpush2.bf16.msra.mxu0 0
      %6740 = vmatprep.subr.bf16.mxu0 0
      %6741 = vmatpush2.bf16.msra.mxu0 0
      %6742 = vmatprep.mubr.bf16.mxu0 0
      %6743 = vmatmul.mubr.bf16.gmra.mxu0 %v6663
      %v6744 = vpop.f32.mrf.mxu0
      %v6745 = vadd.f32 0.0, %v6744
      %v6746 = vpop.f32.mrf.mxu0
      %v6747 = vpop.f32.mrf.mxu0
      %v6748 = vadd.f32 0.0, %v6747
      %v6749 = vpop.f32.mrf.mxu0
      %6750 = vmatprep.mubr.bf16.mxu0 0
      %6751 = vmatmul.mubr.bf16.gmra.mxu0 %v6666
      %v6752 = vpop.f32.mrf.mxu0
      %v6753 = vadd.f32 0.0, %v6752
      %v6754 = vpop.f32.mrf.mxu0
      %v6755 = vpop.f32.mrf.mxu0
      %v6756 = vadd.f32 0.0, %v6755
      %v6757 = vpop.f32.mrf.mxu0
      %6758 = vmatprep.mubr.bf16.mxu0 0
      %6759 = vmatmul.mubr.bf16.gmra.mxu0 %v6669
      %v6760 = vpop.f32.mrf.mxu0
      %v6761 = vadd.f32 0.0, %v6760
      %v6762 = vpop.f32.mrf.mxu0
      %v6763 = vpop.f32.mrf.mxu0
      %v6764 = vadd.f32 0.0, %v6763
      %v6765 = vpop.f32.mrf.mxu0
      %6766 = vmatprep.mubr.bf16.mxu0 0
      %6767 = vmatmul.mubr.bf16.gmra.mxu0 %v6672
      %v6768 = vpop.f32.mrf.mxu0
      %v6769 = vadd.f32 0.0, %v6768
      %v6770 = vpop.f32.mrf.mxu0
      %v6771 = vpop.f32.mrf.mxu0
      %v6772 = vadd.f32 0.0, %v6771
      %v6773 = vpop.f32.mrf.mxu0
      %6774 = vmatprep.mubr.bf16.mxu0 0
      %6775 = vmatmul.mubr.bf16.gmra.mxu0 %v6675
      %v6776 = vpop.f32.mrf.mxu0
      %v6777 = vadd.f32 0.0, %v6776
      %v6778 = vpop.f32.mrf.mxu0
      %v6779 = vpop.f32.mrf.mxu0
      %v6780 = vadd.f32 0.0, %v6779
      %v6781 = vpop.f32.mrf.mxu0
      %6782 = vmatprep.mubr.bf16.mxu0 0
      %6783 = vmatmul.mubr.bf16.gmra.mxu0 %v6678
      %v6784 = vpop.f32.mrf.mxu0
      %v6785 = vadd.f32 0.0, %v6784
      %v6786 = vpop.f32.mrf.mxu0
      %v6787 = vpop.f32.mrf.mxu0
      %v6788 = vadd.f32 0.0, %v6787
      %v6789 = vpop.f32.mrf.mxu0
      %6790 = vmatprep.mubr.bf16.mxu0 0
      %6791 = vmatmul.mubr.bf16.gmra.mxu0 %v6681
      %v6792 = vpop.f32.mrf.mxu0
      %v6793 = vadd.f32 0.0, %v6792
      %v6794 = vpop.f32.mrf.mxu0
      %v6795 = vpop.f32.mrf.mxu0
      %v6796 = vadd.f32 0.0, %v6795
      %v6797 = vpop.f32.mrf.mxu0
      %6798 = vmatprep.mubr.bf16.mxu0 0
      %6799 = vmatmul.mubr.bf16.gmra.mxu0 %v6684
      %v6800 = vpop.f32.mrf.mxu0
      %v6801 = vadd.f32 0.0, %v6800
      %v6802 = vpop.f32.mrf.mxu0
      %v6803 = vpop.f32.mrf.mxu0
      %v6804 = vadd.f32 0.0, %v6803
      %v6805 = vpop.f32.mrf.mxu0
      %6806 = vmatprep.mubr.bf16.mxu0 0
      %6807 = vmatmul.mubr.bf16.gmra.mxu0 %v6687
      %v6808 = vpop.f32.mrf.mxu0
      %v6809 = vadd.f32 0.0, %v6808
      %v6810 = vpop.f32.mrf.mxu0
      %v6811 = vpop.f32.mrf.mxu0
      %v6812 = vadd.f32 0.0, %v6811
      %v6813 = vpop.f32.mrf.mxu0
      %6814 = vmatprep.mubr.bf16.mxu0 0
      %6815 = vmatmul.mubr.bf16.gmra.mxu0 %v6690
      %v6816 = vpop.f32.mrf.mxu0
      %v6817 = vadd.f32 0.0, %v6816
      %v6818 = vpop.f32.mrf.mxu0
      %v6819 = vpop.f32.mrf.mxu0
      %v6820 = vadd.f32 0.0, %v6819
      %v6821 = vpop.f32.mrf.mxu0
      %6822 = vmatprep.mubr.bf16.mxu0 0
      %6823 = vmatmul.mubr.bf16.gmra.mxu0 %v6693
      %v6824 = vpop.f32.mrf.mxu0
      %v6825 = vadd.f32 0.0, %v6824
      %v6826 = vpop.f32.mrf.mxu0
      %v6827 = vpop.f32.mrf.mxu0
      %v6828 = vadd.f32 0.0, %v6827
      %v6829 = vpop.f32.mrf.mxu0
      %6830 = vmatprep.mubr.bf16.mxu0 0
      %6831 = vmatmul.mubr.bf16.gmra.mxu0 %v6696
      %v6832 = vpop.f32.mrf.mxu0
      %v6833 = vadd.f32 0.0, %v6832
      %v6834 = vpop.f32.mrf.mxu0
      %v6835 = vpop.f32.mrf.mxu0
      %v6836 = vadd.f32 0.0, %v6835
      %v6837 = vpop.f32.mrf.mxu0
      %6838 = vmatprep.mubr.bf16.mxu0 0
      %6839 = vmatmul.mubr.bf16.gmra.mxu0 %v6699
      %v6840 = vpop.f32.mrf.mxu0
      %v6841 = vadd.f32 0.0, %v6840
      %v6842 = vpop.f32.mrf.mxu0
      %v6843 = vpop.f32.mrf.mxu0
      %v6844 = vadd.f32 0.0, %v6843
      %v6845 = vpop.f32.mrf.mxu0
      %6846 = vmatprep.mubr.bf16.mxu0 0
      %6847 = vmatmul.mubr.bf16.gmra.mxu0 %v6702
      %v6848 = vpop.f32.mrf.mxu0
      %v6849 = vadd.f32 0.0, %v6848
      %v6850 = vpop.f32.mrf.mxu0
      %v6851 = vpop.f32.mrf.mxu0
      %v6852 = vadd.f32 0.0, %v6851
      %v6853 = vpop.f32.mrf.mxu0
      %6854 = vmatprep.mubr.bf16.mxu0 0
      %6855 = vmatmul.mubr.bf16.gmra.mxu0 %v6705
      %v6856 = vpop.f32.mrf.mxu0
      %v6857 = vadd.f32 0.0, %v6856
      %v6858 = vpop.f32.mrf.mxu0
      %v6859 = vpop.f32.mrf.mxu0
      %v6860 = vadd.f32 0.0, %v6859
      %v6861 = vpop.f32.mrf.mxu0
      %6862 = vmatprep.mubr.bf16.mxu0 0
      %6863 = vmatmul.mubr.bf16.gmra.mxu0 %v6708
      %v6864 = vpop.f32.mrf.mxu0
      %v6865 = vadd.f32 0.0, %v6864
      %v6866 = vpop.f32.mrf.mxu0
      %v6867 = vpop.f32.mrf.mxu0
      %v6868 = vadd.f32 0.0, %v6867
      %v6869 = vpop.f32.mrf.mxu0
      %6870 = vdwg.mxu0
      %v6871 = vadd.f32 %v6505, %v6745
      %v6872 = vadd.f32 %v6506, %v6748
      %v6873 = vadd.f32 %v6507, %v6753
      %v6874 = vadd.f32 %v6508, %v6756
      %v6875 = vadd.f32 %v6509, %v6761
      %v6876 = vadd.f32 %v6510, %v6764
      %v6877 = vadd.f32 %v6511, %v6769
      %v6878 = vadd.f32 %v6512, %v6772
      %v6879 = vadd.f32 %v6513, %v6777
      %v6880 = vadd.f32 %v6514, %v6780
      %v6881 = vadd.f32 %v6515, %v6785
      %v6882 = vadd.f32 %v6516, %v6788
      %v6883 = vadd.f32 %v6517, %v6793
      %v6884 = vadd.f32 %v6518, %v6796
      %v6885 = vadd.f32 %v6519, %v6801
      %v6886 = vadd.f32 %v6520, %v6804
      %v6887 = vadd.f32 %v6521, %v6809
      %v6888 = vadd.f32 %v6522, %v6812
      %v6889 = vadd.f32 %v6523, %v6817
      %v6890 = vadd.f32 %v6524, %v6820
      %v6891 = vadd.f32 %v6525, %v6825
      %v6892 = vadd.f32 %v6526, %v6828
      %v6893 = vadd.f32 %v6527, %v6833
      %v6894 = vadd.f32 %v6528, %v6836
      %v6895 = vadd.f32 %v6529, %v6841
      %v6896 = vadd.f32 %v6530, %v6844
      %v6897 = vadd.f32 %v6531, %v6849
      %v6898 = vadd.f32 %v6532, %v6852
      %v6899 = vadd.f32 %v6533, %v6857
      %v6900 = vadd.f32 %v6534, %v6860
      %v6901 = vadd.f32 %v6535, %v6865
      %v6902 = vadd.f32 %v6536, %v6868
      %s6903 = smul.addr %s6538, 4
      %s6904 = scalar_lea.vmem %s258, %s6903
      %v6905 = vld [vmem:[%s6904] sm:$0xf]
      %v6906 = vld [vmem:[%s6904 + $0x4] sm:$0xf]
      %v6907 = vld [vmem:[%s6904 + $0xc] sm:$0xf]
      %v6908 = vld [vmem:[%s6904 + $0x10] sm:$0xf]
      %v6909 = vld [vmem:[%s6904 + $0x18] sm:$0xf]
      %v6910 = vld [vmem:[%s6904 + $0x1c] sm:$0xf]
      %v6911 = vld [vmem:[%s6904 + $0x24] sm:$0xf]
      %v6912 = vld [vmem:[%s6904 + $0x28] sm:$0xf]
      %v6913 = vld [vmem:[%s6904 + $0x30] sm:$0xf]
      %v6914 = vld [vmem:[%s6904 + $0x34] sm:$0xf]
      %v6915 = vld [vmem:[%s6904 + $0x3c] sm:$0xf]
      %v6916 = vld [vmem:[%s6904 + $0x40] sm:$0xf]
      %v6917 = vld [vmem:[%s6904 + $0x48] sm:$0xf]
      %v6918 = vld [vmem:[%s6904 + $0x4c] sm:$0xf]
      %v6919 = vld [vmem:[%s6904 + $0x54] sm:$0xf]
      %v6920 = vld [vmem:[%s6904 + $0x58] sm:$0xf]
      %v6921 = vld [vmem:[%s6904 + $0x60] sm:$0xf]
      %v6922 = vld [vmem:[%s6904 + $0x64] sm:$0xf]
      %v6923 = vld [vmem:[%s6904 + $0x6c] sm:$0xf]
      %v6924 = vld [vmem:[%s6904 + $0x70] sm:$0xf]
      %v6925 = vld [vmem:[%s6904 + $0x78] sm:$0xf]
      %v6926 = vld [vmem:[%s6904 + $0x7c] sm:$0xf]
      %v6927 = vld [vmem:[%s6904 + $0x84] sm:$0xf]
      %v6928 = vld [vmem:[%s6904 + $0x88] sm:$0xf]
      %v6929 = vld [vmem:[%s6904 + $0x90] sm:$0xf]
      %v6930 = vld [vmem:[%s6904 + $0x94] sm:$0xf]
      %v6931 = vld [vmem:[%s6904 + $0x9c] sm:$0xf]
      %v6932 = vld [vmem:[%s6904 + $0xa0] sm:$0xf]
      %v6933 = vld [vmem:[%s6904 + $0xa8] sm:$0xf]
      %v6934 = vld [vmem:[%s6904 + $0xac] sm:$0xf]
      %v6935 = vld [vmem:[%s6904 + $0xb4] sm:$0xf]
      %v6936 = vld [vmem:[%s6904 + $0xb8] sm:$0xf]
      %s6937 = scalar_lea.vmem %s3, 96
      %v6938 = vld [vmem:[%s6937] sm:$0xf]
      %v6939 = vld [vmem:[%s6937 + $0x4] sm:$0xf]
      %v6940 = vld [vmem:[%s6937 + $0x8] sm:$0xf]
      %v6941 = vld [vmem:[%s6937 + $0xc] sm:$0xf]
      %v6974 = vunpack.c.l.b16 %v6905
      %v6975 = vunpack.c.l.b16 %v6906
      %v6976 = vunpack.c.l.b16 %v6907
      %v6977 = vunpack.c.l.b16 %v6908
      %v6978 = vunpack.c.l.b16 %v6909
      %v6979 = vunpack.c.l.b16 %v6910
      %v6980 = vunpack.c.l.b16 %v6911
      %v6981 = vunpack.c.l.b16 %v6912
      %v6982 = vunpack.c.l.b16 %v6913
      %v6983 = vunpack.c.l.b16 %v6914
      %v6984 = vunpack.c.l.b16 %v6915
      %v6985 = vunpack.c.l.b16 %v6916
      %v6986 = vunpack.c.l.b16 %v6917
      %v6987 = vunpack.c.l.b16 %v6918
      %v6988 = vunpack.c.l.b16 %v6919
      %v6989 = vunpack.c.l.b16 %v6920
      %v6990 = vunpack.c.l.b16 %v6921
      %v6991 = vunpack.c.l.b16 %v6922
      %v6992 = vunpack.c.l.b16 %v6923
      %v6993 = vunpack.c.l.b16 %v6924
      %v6994 = vunpack.c.l.b16 %v6925
      %v6995 = vunpack.c.l.b16 %v6926
      %v6996 = vunpack.c.l.b16 %v6927
      %v6997 = vunpack.c.l.b16 %v6928
      %v6998 = vunpack.c.l.b16 %v6929
      %v6999 = vunpack.c.l.b16 %v6930
      %v7000 = vunpack.c.l.b16 %v6931
      %v7001 = vunpack.c.l.b16 %v6932
      %v7002 = vunpack.c.l.b16 %v6933
      %v7003 = vunpack.c.l.b16 %v6934
      %v7004 = vunpack.c.l.b16 %v6935
      %v7005 = vunpack.c.l.b16 %v6936
      %v7006 = vpack.c.b16 %v6975, %v6974
      %v7007 = vpack.c.b16 %v6977, %v6976
      %v7008 = vpack.c.b16 %v6979, %v6978
      %v7009 = vpack.c.b16 %v6981, %v6980
      %v7010 = vpack.c.b16 %v6983, %v6982
      %v7011 = vpack.c.b16 %v6985, %v6984
      %v7012 = vpack.c.b16 %v6987, %v6986
      %v7013 = vpack.c.b16 %v6989, %v6988
      %v7014 = vpack.c.b16 %v6991, %v6990
      %v7015 = vpack.c.b16 %v6993, %v6992
      %v7016 = vpack.c.b16 %v6995, %v6994
      %v7017 = vpack.c.b16 %v6997, %v6996
      %v7018 = vpack.c.b16 %v6999, %v6998
      %v7019 = vpack.c.b16 %v7001, %v7000
      %v7020 = vpack.c.b16 %v7003, %v7002
      %v7021 = vpack.c.b16 %v7005, %v7004
      %v7026 = vunpack.c.l.b16 %v6938
      %v7027 = vunpack.c.l.b16 %v6939
      %v7028 = vunpack.c.l.b16 %v6940
      %v7029 = vunpack.c.l.b16 %v6941
      %v7030 = vpack.c.b16 %v7027, %v7026
      %v7031 = vpack.c.b16 %v7029, %v7028
      %v7035 = vsel %vm439, %v7006, 0
      %v7038 = vsel %vm439, %v7007, 0
      %v7041 = vsel %vm439, %v7008, 0
      %v7044 = vsel %vm439, %v7009, 0
      %v7047 = vsel %vm439, %v7010, 0
      %v7050 = vsel %vm439, %v7011, 0
      %v7053 = vsel %vm439, %v7012, 0
      %v7056 = vsel %vm439, %v7013, 0
      %v7059 = vsel %vm439, %v7014, 0
      %v7062 = vsel %vm439, %v7015, 0
      %v7065 = vsel %vm439, %v7016, 0
      %v7068 = vsel %vm439, %v7017, 0
      %v7071 = vsel %vm439, %v7018, 0
      %v7074 = vsel %vm439, %v7019, 0
      %v7077 = vsel %vm439, %v7020, 0
      %v7080 = vsel %vm439, %v7021, 0
      %7082 = vmatprep.subr.bf16.mxu0 0
      %7083 = vmatpush1.bf16.msra.mxu0 0
      %7084 = vmatprep.subr.bf16.mxu0 0
      %7085 = vmatpush1.bf16.msra.mxu0 0
      %7086 = vmatprep.subr.bf16.mxu0 0
      %7087 = vmatpush1.bf16.msra.mxu0 0
      %7088 = vmatprep.subr.bf16.mxu0 0
      %7089 = vmatpush1.bf16.msra.mxu0 0
      %7090 = vmatprep.subr.bf16.mxu0 0
      %7091 = vmatpush1.bf16.msra.mxu0 0
      %7092 = vmatprep.subr.bf16.mxu0 0
      %7093 = vmatpush1.bf16.msra.mxu0 0
      %7094 = vmatprep.subr.bf16.mxu0 0
      %7095 = vmatpush1.bf16.msra.mxu0 %v7031
      %7096 = vmatprep.subr.bf16.mxu0 0
      %7097 = vmatpush1.bf16.msra.mxu0 %v7030
      %7098 = vmatprep.subr.bf16.mxu0 0
      %7099 = vmatpush2.bf16.msra.mxu0 0
      %7100 = vmatprep.subr.bf16.mxu0 0
      %7101 = vmatpush2.bf16.msra.mxu0 0
      %7102 = vmatprep.subr.bf16.mxu0 0
      %7103 = vmatpush2.bf16.msra.mxu0 0
      %7104 = vmatprep.subr.bf16.mxu0 0
      %7105 = vmatpush2.bf16.msra.mxu0 0
      %7106 = vmatprep.subr.bf16.mxu0 0
      %7107 = vmatpush2.bf16.msra.mxu0 0
      %7108 = vmatprep.subr.bf16.mxu0 0
      %7109 = vmatpush2.bf16.msra.mxu0 0
      %7110 = vmatprep.subr.bf16.mxu0 0
      %7111 = vmatpush2.bf16.msra.mxu0 0
      %7112 = vmatprep.subr.bf16.mxu0 0
      %7113 = vmatpush2.bf16.msra.mxu0 0
      %7114 = vmatprep.mubr.bf16.mxu0 0
      %7115 = vmatmul.mubr.bf16.gmra.mxu0 %v7035
      %v7116 = vpop.f32.mrf.mxu0
      %v7117 = vadd.f32 0.0, %v7116
      %v7118 = vpop.f32.mrf.mxu0
      %v7119 = vpop.f32.mrf.mxu0
      %v7120 = vadd.f32 0.0, %v7119
      %v7121 = vpop.f32.mrf.mxu0
      %7122 = vmatprep.mubr.bf16.mxu0 0
      %7123 = vmatmul.mubr.bf16.gmra.mxu0 %v7038
      %v7124 = vpop.f32.mrf.mxu0
      %v7125 = vadd.f32 0.0, %v7124
      %v7126 = vpop.f32.mrf.mxu0
      %v7127 = vpop.f32.mrf.mxu0
      %v7128 = vadd.f32 0.0, %v7127
      %v7129 = vpop.f32.mrf.mxu0
      %7130 = vmatprep.mubr.bf16.mxu0 0
      %7131 = vmatmul.mubr.bf16.gmra.mxu0 %v7041
      %v7132 = vpop.f32.mrf.mxu0
      %v7133 = vadd.f32 0.0, %v7132
      %v7134 = vpop.f32.mrf.mxu0
      %v7135 = vpop.f32.mrf.mxu0
      %v7136 = vadd.f32 0.0, %v7135
      %v7137 = vpop.f32.mrf.mxu0
      %7138 = vmatprep.mubr.bf16.mxu0 0
      %7139 = vmatmul.mubr.bf16.gmra.mxu0 %v7044
      %v7140 = vpop.f32.mrf.mxu0
      %v7141 = vadd.f32 0.0, %v7140
      %v7142 = vpop.f32.mrf.mxu0
      %v7143 = vpop.f32.mrf.mxu0
      %v7144 = vadd.f32 0.0, %v7143
      %v7145 = vpop.f32.mrf.mxu0
      %7146 = vmatprep.mubr.bf16.mxu0 0
      %7147 = vmatmul.mubr.bf16.gmra.mxu0 %v7047
      %v7148 = vpop.f32.mrf.mxu0
      %v7149 = vadd.f32 0.0, %v7148
      %v7150 = vpop.f32.mrf.mxu0
      %v7151 = vpop.f32.mrf.mxu0
      %v7152 = vadd.f32 0.0, %v7151
      %v7153 = vpop.f32.mrf.mxu0
      %7154 = vmatprep.mubr.bf16.mxu0 0
      %7155 = vmatmul.mubr.bf16.gmra.mxu0 %v7050
      %v7156 = vpop.f32.mrf.mxu0
      %v7157 = vadd.f32 0.0, %v7156
      %v7158 = vpop.f32.mrf.mxu0
      %v7159 = vpop.f32.mrf.mxu0
      %v7160 = vadd.f32 0.0, %v7159
      %v7161 = vpop.f32.mrf.mxu0
      %7162 = vmatprep.mubr.bf16.mxu0 0
      %7163 = vmatmul.mubr.bf16.gmra.mxu0 %v7053
      %v7164 = vpop.f32.mrf.mxu0
      %v7165 = vadd.f32 0.0, %v7164
      %v7166 = vpop.f32.mrf.mxu0
      %v7167 = vpop.f32.mrf.mxu0
      %v7168 = vadd.f32 0.0, %v7167
      %v7169 = vpop.f32.mrf.mxu0
      %7170 = vmatprep.mubr.bf16.mxu0 0
      %7171 = vmatmul.mubr.bf16.gmra.mxu0 %v7056
      %v7172 = vpop.f32.mrf.mxu0
      %v7173 = vadd.f32 0.0, %v7172
      %v7174 = vpop.f32.mrf.mxu0
      %v7175 = vpop.f32.mrf.mxu0
      %v7176 = vadd.f32 0.0, %v7175
      %v7177 = vpop.f32.mrf.mxu0
      %7178 = vmatprep.mubr.bf16.mxu0 0
      %7179 = vmatmul.mubr.bf16.gmra.mxu0 %v7059
      %v7180 = vpop.f32.mrf.mxu0
      %v7181 = vadd.f32 0.0, %v7180
      %v7182 = vpop.f32.mrf.mxu0
      %v7183 = vpop.f32.mrf.mxu0
      %v7184 = vadd.f32 0.0, %v7183
      %v7185 = vpop.f32.mrf.mxu0
      %7186 = vmatprep.mubr.bf16.mxu0 0
      %7187 = vmatmul.mubr.bf16.gmra.mxu0 %v7062
      %v7188 = vpop.f32.mrf.mxu0
      %v7189 = vadd.f32 0.0, %v7188
      %v7190 = vpop.f32.mrf.mxu0
      %v7191 = vpop.f32.mrf.mxu0
      %v7192 = vadd.f32 0.0, %v7191
      %v7193 = vpop.f32.mrf.mxu0
      %7194 = vmatprep.mubr.bf16.mxu0 0
      %7195 = vmatmul.mubr.bf16.gmra.mxu0 %v7065
      %v7196 = vpop.f32.mrf.mxu0
      %v7197 = vadd.f32 0.0, %v7196
      %v7198 = vpop.f32.mrf.mxu0
      %v7199 = vpop.f32.mrf.mxu0
      %v7200 = vadd.f32 0.0, %v7199
      %v7201 = vpop.f32.mrf.mxu0
      %7202 = vmatprep.mubr.bf16.mxu0 0
      %7203 = vmatmul.mubr.bf16.gmra.mxu0 %v7068
      %v7204 = vpop.f32.mrf.mxu0
      %v7205 = vadd.f32 0.0, %v7204
      %v7206 = vpop.f32.mrf.mxu0
      %v7207 = vpop.f32.mrf.mxu0
      %v7208 = vadd.f32 0.0, %v7207
      %v7209 = vpop.f32.mrf.mxu0
      %7210 = vmatprep.mubr.bf16.mxu0 0
      %7211 = vmatmul.mubr.bf16.gmra.mxu0 %v7071
      %v7212 = vpop.f32.mrf.mxu0
      %v7213 = vadd.f32 0.0, %v7212
      %v7214 = vpop.f32.mrf.mxu0
      %v7215 = vpop.f32.mrf.mxu0
      %v7216 = vadd.f32 0.0, %v7215
      %v7217 = vpop.f32.mrf.mxu0
      %7218 = vmatprep.mubr.bf16.mxu0 0
      %7219 = vmatmul.mubr.bf16.gmra.mxu0 %v7074
      %v7220 = vpop.f32.mrf.mxu0
      %v7221 = vadd.f32 0.0, %v7220
      %v7222 = vpop.f32.mrf.mxu0
      %v7223 = vpop.f32.mrf.mxu0
      %v7224 = vadd.f32 0.0, %v7223
      %v7225 = vpop.f32.mrf.mxu0
      %7226 = vmatprep.mubr.bf16.mxu0 0
      %7227 = vmatmul.mubr.bf16.gmra.mxu0 %v7077
      %v7228 = vpop.f32.mrf.mxu0
      %v7229 = vadd.f32 0.0, %v7228
      %v7230 = vpop.f32.mrf.mxu0
      %v7231 = vpop.f32.mrf.mxu0
      %v7232 = vadd.f32 0.0, %v7231
      %v7233 = vpop.f32.mrf.mxu0
      %7234 = vmatprep.mubr.bf16.mxu0 0
      %7235 = vmatmul.mubr.bf16.gmra.mxu0 %v7080
      %v7236 = vpop.f32.mrf.mxu0
      %v7237 = vadd.f32 0.0, %v7236
      %v7238 = vpop.f32.mrf.mxu0
      %v7239 = vpop.f32.mrf.mxu0
      %v7240 = vadd.f32 0.0, %v7239
      %v7241 = vpop.f32.mrf.mxu0
      %7242 = vdwg.mxu0
      %v7243 = vadd.f32 %v6871, %v7117
      %v7244 = vadd.f32 %v6872, %v7120
      %v7245 = vadd.f32 %v6873, %v7125
      %v7246 = vadd.f32 %v6874, %v7128
      %v7247 = vadd.f32 %v6875, %v7133
      %v7248 = vadd.f32 %v6876, %v7136
      %v7249 = vadd.f32 %v6877, %v7141
      %v7250 = vadd.f32 %v6878, %v7144
      %v7251 = vadd.f32 %v6879, %v7149
      %v7252 = vadd.f32 %v6880, %v7152
      %v7253 = vadd.f32 %v6881, %v7157
      %v7254 = vadd.f32 %v6882, %v7160
      %v7255 = vadd.f32 %v6883, %v7165
      %v7256 = vadd.f32 %v6884, %v7168
      %v7257 = vadd.f32 %v6885, %v7173
      %v7258 = vadd.f32 %v6886, %v7176
      %v7259 = vadd.f32 %v6887, %v7181
      %v7260 = vadd.f32 %v6888, %v7184
      %v7261 = vadd.f32 %v6889, %v7189
      %v7262 = vadd.f32 %v6890, %v7192
      %v7263 = vadd.f32 %v6891, %v7197
      %v7264 = vadd.f32 %v6892, %v7200
      %v7265 = vadd.f32 %v6893, %v7205
      %v7266 = vadd.f32 %v6894, %v7208
      %v7267 = vadd.f32 %v6895, %v7213
      %v7268 = vadd.f32 %v6896, %v7216
      %v7269 = vadd.f32 %v6897, %v7221
      %v7270 = vadd.f32 %v6898, %v7224
      %v7271 = vadd.f32 %v6899, %v7229
      %v7272 = vadd.f32 %v6900, %v7232
      %v7273 = vadd.f32 %v6901, %v7237
      %v7274 = vadd.f32 %v6902, %v7240
      %v7275 = vld [vmem:[%s6540] sm:$0xf]
      %v7276 = vld [vmem:[%s6540 + $0x4] sm:$0xf]
      %v7277 = vld [vmem:[%s6540 + $0x8] sm:$0x1]
      %v7278 = vld [vmem:[%s6540 + $0xc] sm:$0xf]
      %v7279 = vld [vmem:[%s6540 + $0x10] sm:$0xf]
      %v7280 = vld [vmem:[%s6540 + $0x14] sm:$0x1]
      %v7281 = vld [vmem:[%s6540 + $0x18] sm:$0xf]
      %v7282 = vld [vmem:[%s6540 + $0x1c] sm:$0xf]
      %v7283 = vld [vmem:[%s6540 + $0x20] sm:$0x1]
      %v7284 = vld [vmem:[%s6540 + $0x24] sm:$0xf]
      %v7285 = vld [vmem:[%s6540 + $0x28] sm:$0xf]
      %v7286 = vld [vmem:[%s6540 + $0x2c] sm:$0x1]
      %v7287 = vld [vmem:[%s6540 + $0x30] sm:$0xf]
      %v7288 = vld [vmem:[%s6540 + $0x34] sm:$0xf]
      %v7289 = vld [vmem:[%s6540 + $0x38] sm:$0x1]
      %v7290 = vld [vmem:[%s6540 + $0x3c] sm:$0xf]
      %v7291 = vld [vmem:[%s6540 + $0x40] sm:$0xf]
      %v7292 = vld [vmem:[%s6540 + $0x44] sm:$0x1]
      %v7293 = vld [vmem:[%s6540 + $0x48] sm:$0xf]
      %v7294 = vld [vmem:[%s6540 + $0x4c] sm:$0xf]
      %v7295 = vld [vmem:[%s6540 + $0x50] sm:$0x1]
      %v7296 = vld [vmem:[%s6540 + $0x54] sm:$0xf]
      %v7297 = vld [vmem:[%s6540 + $0x58] sm:$0xf]
      %v7298 = vld [vmem:[%s6540 + $0x5c] sm:$0x1]
      %v7299 = vld [vmem:[%s6540 + $0x60] sm:$0xf]
      %v7300 = vld [vmem:[%s6540 + $0x64] sm:$0xf]
      %v7301 = vld [vmem:[%s6540 + $0x68] sm:$0x1]
      %v7302 = vld [vmem:[%s6540 + $0x6c] sm:$0xf]
      %v7303 = vld [vmem:[%s6540 + $0x70] sm:$0xf]
      %v7304 = vld [vmem:[%s6540 + $0x74] sm:$0x1]
      %v7305 = vld [vmem:[%s6540 + $0x78] sm:$0xf]
      %v7306 = vld [vmem:[%s6540 + $0x7c] sm:$0xf]
      %v7307 = vld [vmem:[%s6540 + $0x80] sm:$0x1]
      %v7308 = vld [vmem:[%s6540 + $0x84] sm:$0xf]
      %v7309 = vld [vmem:[%s6540 + $0x88] sm:$0xf]
      %v7310 = vld [vmem:[%s6540 + $0x8c] sm:$0x1]
      %v7311 = vld [vmem:[%s6540 + $0x90] sm:$0xf]
      %v7312 = vld [vmem:[%s6540 + $0x94] sm:$0xf]
      %v7313 = vld [vmem:[%s6540 + $0x98] sm:$0x1]
      %v7314 = vld [vmem:[%s6540 + $0x9c] sm:$0xf]
      %v7315 = vld [vmem:[%s6540 + $0xa0] sm:$0xf]
      %v7316 = vld [vmem:[%s6540 + $0xa4] sm:$0x1]
      %v7317 = vld [vmem:[%s6540 + $0xa8] sm:$0xf]
      %v7318 = vld [vmem:[%s6540 + $0xac] sm:$0xf]
      %v7319 = vld [vmem:[%s6540 + $0xb0] sm:$0x1]
      %v7320 = vld [vmem:[%s6540 + $0xb4] sm:$0xf]
      %v7321 = vld [vmem:[%s6540 + $0xb8] sm:$0xf]
      %v7322 = vld [vmem:[%s6540 + $0xbc] sm:$0x1]
      %v7324 = vshrl.u32 %v7275, 16
      %v7326 = vrot.slane %v7324, 4
      %v7327 = vshll.u32 %v7275, 16
      %v7329 = vrot.slane %v7327, 5
      %v7330 = vor.u32 %v7326, %v7329
      %v7331 = vrot.slane %v7330, 4
      %v7333 = vshll.u32 %v7276, 16
      %v7335 = vrot.slane %v7333, 5
      %v7336 = vsel %vm995, %v7331, %v7335
      %v7337 = vshrl.u32 %v7276, 16
      %v7339 = vrot.slane %v7337, 4
      %v7340 = vor.u32 %v7339, %v7335
      %v7341 = vrot.slane %v7340, 4
      %v7343 = vshll.u32 %v7277, 16
      %v7345 = vrot.slane %v7343, 5
      %v7346 = vsel %vm995, %v7341, %v7345
      %v7348 = vshrl.u32 %v7278, 16
      %v7350 = vrot.slane %v7348, 4
      %v7351 = vshll.u32 %v7278, 16
      %v7353 = vrot.slane %v7351, 5
      %v7354 = vor.u32 %v7350, %v7353
      %v7355 = vrot.slane %v7354, 4
      %v7357 = vshll.u32 %v7279, 16
      %v7359 = vrot.slane %v7357, 5
      %v7360 = vsel %vm995, %v7355, %v7359
      %v7361 = vshrl.u32 %v7279, 16
      %v7363 = vrot.slane %v7361, 4
      %v7364 = vor.u32 %v7363, %v7359
      %v7365 = vrot.slane %v7364, 4
      %v7367 = vshll.u32 %v7280, 16
      %v7369 = vrot.slane %v7367, 5
      %v7370 = vsel %vm995, %v7365, %v7369
      %v7372 = vshrl.u32 %v7281, 16
      %v7374 = vrot.slane %v7372, 4
      %v7375 = vshll.u32 %v7281, 16
      %v7377 = vrot.slane %v7375, 5
      %v7378 = vor.u32 %v7374, %v7377
      %v7379 = vrot.slane %v7378, 4
      %v7381 = vshll.u32 %v7282, 16
      %v7383 = vrot.slane %v7381, 5
      %v7384 = vsel %vm995, %v7379, %v7383
      %v7385 = vshrl.u32 %v7282, 16
      %v7387 = vrot.slane %v7385, 4
      %v7388 = vor.u32 %v7387, %v7383
      %v7389 = vrot.slane %v7388, 4
      %v7391 = vshll.u32 %v7283, 16
      %v7393 = vrot.slane %v7391, 5
      %v7394 = vsel %vm995, %v7389, %v7393
      %v7396 = vshrl.u32 %v7284, 16
      %v7398 = vrot.slane %v7396, 4
      %v7399 = vshll.u32 %v7284, 16
      %v7401 = vrot.slane %v7399, 5
      %v7402 = vor.u32 %v7398, %v7401
      %v7403 = vrot.slane %v7402, 4
      %v7405 = vshll.u32 %v7285, 16
      %v7407 = vrot.slane %v7405, 5
      %v7408 = vsel %vm995, %v7403, %v7407
      %v7409 = vshrl.u32 %v7285, 16
      %v7411 = vrot.slane %v7409, 4
      %v7412 = vor.u32 %v7411, %v7407
      %v7413 = vrot.slane %v7412, 4
      %v7415 = vshll.u32 %v7286, 16
      %v7417 = vrot.slane %v7415, 5
      %v7418 = vsel %vm995, %v7413, %v7417
      %v7420 = vshrl.u32 %v7287, 16
      %v7422 = vrot.slane %v7420, 4
      %v7423 = vshll.u32 %v7287, 16
      %v7425 = vrot.slane %v7423, 5
      %v7426 = vor.u32 %v7422, %v7425
      %v7427 = vrot.slane %v7426, 4
      %v7429 = vshll.u32 %v7288, 16
      %v7431 = vrot.slane %v7429, 5
      %v7432 = vsel %vm995, %v7427, %v7431
      %v7433 = vshrl.u32 %v7288, 16
      %v7435 = vrot.slane %v7433, 4
      %v7436 = vor.u32 %v7435, %v7431
      %v7437 = vrot.slane %v7436, 4
      %v7439 = vshll.u32 %v7289, 16
      %v7441 = vrot.slane %v7439, 5
      %v7442 = vsel %vm995, %v7437, %v7441
      %v7444 = vshrl.u32 %v7290, 16
      %v7446 = vrot.slane %v7444, 4
      %v7447 = vshll.u32 %v7290, 16
      %v7449 = vrot.slane %v7447, 5
      %v7450 = vor.u32 %v7446, %v7449
      %v7451 = vrot.slane %v7450, 4
      %v7453 = vshll.u32 %v7291, 16
      %v7455 = vrot.slane %v7453, 5
      %v7456 = vsel %vm995, %v7451, %v7455
      %v7457 = vshrl.u32 %v7291, 16
      %v7459 = vrot.slane %v7457, 4
      %v7460 = vor.u32 %v7459, %v7455
      %v7461 = vrot.slane %v7460, 4
      %v7463 = vshll.u32 %v7292, 16
      %v7465 = vrot.slane %v7463, 5
      %v7466 = vsel %vm995, %v7461, %v7465
      %v7468 = vshrl.u32 %v7293, 16
      %v7470 = vrot.slane %v7468, 4
      %v7471 = vshll.u32 %v7293, 16
      %v7473 = vrot.slane %v7471, 5
      %v7474 = vor.u32 %v7470, %v7473
      %v7475 = vrot.slane %v7474, 4
      %v7477 = vshll.u32 %v7294, 16
      %v7479 = vrot.slane %v7477, 5
      %v7480 = vsel %vm995, %v7475, %v7479
      %v7481 = vshrl.u32 %v7294, 16
      %v7483 = vrot.slane %v7481, 4
      %v7484 = vor.u32 %v7483, %v7479
      %v7485 = vrot.slane %v7484, 4
      %v7487 = vshll.u32 %v7295, 16
      %v7489 = vrot.slane %v7487, 5
      %v7490 = vsel %vm995, %v7485, %v7489
      %v7492 = vshrl.u32 %v7296, 16
      %v7494 = vrot.slane %v7492, 4
      %v7495 = vshll.u32 %v7296, 16
      %v7497 = vrot.slane %v7495, 5
      %v7498 = vor.u32 %v7494, %v7497
      %v7499 = vrot.slane %v7498, 4
      %v7501 = vshll.u32 %v7297, 16
      %v7503 = vrot.slane %v7501, 5
      %v7504 = vsel %vm995, %v7499, %v7503
      %v7505 = vshrl.u32 %v7297, 16
      %v7507 = vrot.slane %v7505, 4
      %v7508 = vor.u32 %v7507, %v7503
      %v7509 = vrot.slane %v7508, 4
      %v7511 = vshll.u32 %v7298, 16
      %v7513 = vrot.slane %v7511, 5
      %v7514 = vsel %vm995, %v7509, %v7513
      %v7516 = vshrl.u32 %v7299, 16
      %v7518 = vrot.slane %v7516, 4
      %v7519 = vshll.u32 %v7299, 16
      %v7521 = vrot.slane %v7519, 5
      %v7522 = vor.u32 %v7518, %v7521
      %v7523 = vrot.slane %v7522, 4
      %v7525 = vshll.u32 %v7300, 16
      %v7527 = vrot.slane %v7525, 5
      %v7528 = vsel %vm995, %v7523, %v7527
      %v7529 = vshrl.u32 %v7300, 16
      %v7531 = vrot.slane %v7529, 4
      %v7532 = vor.u32 %v7531, %v7527
      %v7533 = vrot.slane %v7532, 4
      %v7535 = vshll.u32 %v7301, 16
      %v7537 = vrot.slane %v7535, 5
      %v7538 = vsel %vm995, %v7533, %v7537
      %v7540 = vshrl.u32 %v7302, 16
      %v7542 = vrot.slane %v7540, 4
      %v7543 = vshll.u32 %v7302, 16
      %v7545 = vrot.slane %v7543, 5
      %v7546 = vor.u32 %v7542, %v7545
      %v7547 = vrot.slane %v7546, 4
      %v7549 = vshll.u32 %v7303, 16
      %v7551 = vrot.slane %v7549, 5
      %v7552 = vsel %vm995, %v7547, %v7551
      %v7553 = vshrl.u32 %v7303, 16
      %v7555 = vrot.slane %v7553, 4
      %v7556 = vor.u32 %v7555, %v7551
      %v7557 = vrot.slane %v7556, 4
      %v7559 = vshll.u32 %v7304, 16
      %v7561 = vrot.slane %v7559, 5
      %v7562 = vsel %vm995, %v7557, %v7561
      %v7564 = vshrl.u32 %v7305, 16
      %v7566 = vrot.slane %v7564, 4
      %v7567 = vshll.u32 %v7305, 16
      %v7569 = vrot.slane %v7567, 5
      %v7570 = vor.u32 %v7566, %v7569
      %v7571 = vrot.slane %v7570, 4
      %v7573 = vshll.u32 %v7306, 16
      %v7575 = vrot.slane %v7573, 5
      %v7576 = vsel %vm995, %v7571, %v7575
      %v7577 = vshrl.u32 %v7306, 16
      %v7579 = vrot.slane %v7577, 4
      %v7580 = vor.u32 %v7579, %v7575
      %v7581 = vrot.slane %v7580, 4
      %v7583 = vshll.u32 %v7307, 16
      %v7585 = vrot.slane %v7583, 5
      %v7586 = vsel %vm995, %v7581, %v7585
      %v7588 = vshrl.u32 %v7308, 16
      %v7590 = vrot.slane %v7588, 4
      %v7591 = vshll.u32 %v7308, 16
      %v7593 = vrot.slane %v7591, 5
      %v7594 = vor.u32 %v7590, %v7593
      %v7595 = vrot.slane %v7594, 4
      %v7597 = vshll.u32 %v7309, 16
      %v7599 = vrot.slane %v7597, 5
      %v7600 = vsel %vm995, %v7595, %v7599
      %v7601 = vshrl.u32 %v7309, 16
      %v7603 = vrot.slane %v7601, 4
      %v7604 = vor.u32 %v7603, %v7599
      %v7605 = vrot.slane %v7604, 4
      %v7607 = vshll.u32 %v7310, 16
      %v7609 = vrot.slane %v7607, 5
      %v7610 = vsel %vm995, %v7605, %v7609
      %v7612 = vshrl.u32 %v7311, 16
      %v7614 = vrot.slane %v7612, 4
      %v7615 = vshll.u32 %v7311, 16
      %v7617 = vrot.slane %v7615, 5
      %v7618 = vor.u32 %v7614, %v7617
      %v7619 = vrot.slane %v7618, 4
      %v7621 = vshll.u32 %v7312, 16
      %v7623 = vrot.slane %v7621, 5
      %v7624 = vsel %vm995, %v7619, %v7623
      %v7625 = vshrl.u32 %v7312, 16
      %v7627 = vrot.slane %v7625, 4
      %v7628 = vor.u32 %v7627, %v7623
      %v7629 = vrot.slane %v7628, 4
      %v7631 = vshll.u32 %v7313, 16
      %v7633 = vrot.slane %v7631, 5
      %v7634 = vsel %vm995, %v7629, %v7633
      %v7636 = vshrl.u32 %v7314, 16
      %v7638 = vrot.slane %v7636, 4
      %v7639 = vshll.u32 %v7314, 16
      %v7641 = vrot.slane %v7639, 5
      %v7642 = vor.u32 %v7638, %v7641
      %v7643 = vrot.slane %v7642, 4
      %v7645 = vshll.u32 %v7315, 16
      %v7647 = vrot.slane %v7645, 5
      %v7648 = vsel %vm995, %v7643, %v7647
      %v7649 = vshrl.u32 %v7315, 16
      %v7651 = vrot.slane %v7649, 4
      %v7652 = vor.u32 %v7651, %v7647
      %v7653 = vrot.slane %v7652, 4
      %v7655 = vshll.u32 %v7316, 16
      %v7657 = vrot.slane %v7655, 5
      %v7658 = vsel %vm995, %v7653, %v7657
      %v7660 = vshrl.u32 %v7317, 16
      %v7662 = vrot.slane %v7660, 4
      %v7663 = vshll.u32 %v7317, 16
      %v7665 = vrot.slane %v7663, 5
      %v7666 = vor.u32 %v7662, %v7665
      %v7667 = vrot.slane %v7666, 4
      %v7669 = vshll.u32 %v7318, 16
      %v7671 = vrot.slane %v7669, 5
      %v7672 = vsel %vm995, %v7667, %v7671
      %v7673 = vshrl.u32 %v7318, 16
      %v7675 = vrot.slane %v7673, 4
      %v7676 = vor.u32 %v7675, %v7671
      %v7677 = vrot.slane %v7676, 4
      %v7679 = vshll.u32 %v7319, 16
      %v7681 = vrot.slane %v7679, 5
      %v7682 = vsel %vm995, %v7677, %v7681
      %v7684 = vshrl.u32 %v7320, 16
      %v7686 = vrot.slane %v7684, 4
      %v7687 = vshll.u32 %v7320, 16
      %v7689 = vrot.slane %v7687, 5
      %v7690 = vor.u32 %v7686, %v7689
      %v7691 = vrot.slane %v7690, 4
      %v7693 = vshll.u32 %v7321, 16
      %v7695 = vrot.slane %v7693, 5
      %v7696 = vsel %vm995, %v7691, %v7695
      %v7697 = vshrl.u32 %v7321, 16
      %v7699 = vrot.slane %v7697, 4
      %v7700 = vor.u32 %v7699, %v7695
      %v7701 = vrot.slane %v7700, 4
      %v7703 = vshll.u32 %v7322, 16
      %v7705 = vrot.slane %v7703, 5
      %v7706 = vsel %vm995, %v7701, %v7705
      %s7707 = scalar_lea.vmem %s2, 56
      %v7708 = vld [vmem:[%s7707] sm:$0xf]
      %v7709 = vld [vmem:[%s7707 + $0x4] sm:$0xf]
      %v7710 = vunpack.c.l.b16 %v7336
      %v7711 = vunpack.c.l.b16 %v7346
      %v7712 = vunpack.c.l.b16 %v7360
      %v7713 = vunpack.c.l.b16 %v7370
      %v7714 = vunpack.c.l.b16 %v7384
      %v7715 = vunpack.c.l.b16 %v7394
      %v7716 = vunpack.c.l.b16 %v7408
      %v7717 = vunpack.c.l.b16 %v7418
      %v7718 = vunpack.c.l.b16 %v7432
      %v7719 = vunpack.c.l.b16 %v7442
      %v7720 = vunpack.c.l.b16 %v7456
      %v7721 = vunpack.c.l.b16 %v7466
      %v7722 = vunpack.c.l.b16 %v7480
      %v7723 = vunpack.c.l.b16 %v7490
      %v7724 = vunpack.c.l.b16 %v7504
      %v7725 = vunpack.c.l.b16 %v7514
      %v7726 = vunpack.c.l.b16 %v7528
      %v7727 = vunpack.c.l.b16 %v7538
      %v7728 = vunpack.c.l.b16 %v7552
      %v7729 = vunpack.c.l.b16 %v7562
      %v7730 = vunpack.c.l.b16 %v7576
      %v7731 = vunpack.c.l.b16 %v7586
      %v7732 = vunpack.c.l.b16 %v7600
      %v7733 = vunpack.c.l.b16 %v7610
      %v7734 = vunpack.c.l.b16 %v7624
      %v7735 = vunpack.c.l.b16 %v7634
      %v7736 = vunpack.c.l.b16 %v7648
      %v7737 = vunpack.c.l.b16 %v7658
      %v7738 = vunpack.c.l.b16 %v7672
      %v7739 = vunpack.c.l.b16 %v7682
      %v7740 = vunpack.c.l.b16 %v7696
      %v7741 = vunpack.c.l.b16 %v7706
      %v7742 = vpack.c.b16 %v7711, %v7710
      %v7743 = vpack.c.b16 %v7713, %v7712
      %v7744 = vpack.c.b16 %v7715, %v7714
      %v7745 = vpack.c.b16 %v7717, %v7716
      %v7746 = vpack.c.b16 %v7719, %v7718
      %v7747 = vpack.c.b16 %v7721, %v7720
      %v7748 = vpack.c.b16 %v7723, %v7722
      %v7749 = vpack.c.b16 %v7725, %v7724
      %v7750 = vpack.c.b16 %v7727, %v7726
      %v7751 = vpack.c.b16 %v7729, %v7728
      %v7752 = vpack.c.b16 %v7731, %v7730
      %v7753 = vpack.c.b16 %v7733, %v7732
      %v7754 = vpack.c.b16 %v7735, %v7734
      %v7755 = vpack.c.b16 %v7737, %v7736
      %v7756 = vpack.c.b16 %v7739, %v7738
      %v7757 = vpack.c.b16 %v7741, %v7740
      %v7760 = vunpack.c.l.b16 %v7708
      %v7761 = vunpack.c.l.b16 %v7709
      %v7762 = vpack.c.b16 %v7761, %v7760
      %v7765 = vsel %vm735, %v7742, 0
      %v7768 = vsel %vm735, %v7743, 0
      %v7771 = vsel %vm735, %v7744, 0
      %v7774 = vsel %vm735, %v7745, 0
      %v7777 = vsel %vm735, %v7746, 0
      %v7780 = vsel %vm735, %v7747, 0
      %v7783 = vsel %vm735, %v7748, 0
      %v7786 = vsel %vm735, %v7749, 0
      %v7789 = vsel %vm735, %v7750, 0
      %v7792 = vsel %vm735, %v7751, 0
      %v7795 = vsel %vm735, %v7752, 0
      %v7798 = vsel %vm735, %v7753, 0
      %v7801 = vsel %vm735, %v7754, 0
      %v7804 = vsel %vm735, %v7755, 0
      %v7807 = vsel %vm735, %v7756, 0
      %v7810 = vsel %vm735, %v7757, 0
      %7812 = vmatprep.subr.bf16.mxu0 0
      %7813 = vmatpush1.bf16.msra.mxu0 0
      %7814 = vmatprep.subr.bf16.mxu0 0
      %7815 = vmatpush1.bf16.msra.mxu0 0
      %7816 = vmatprep.subr.bf16.mxu0 0
      %7817 = vmatpush1.bf16.msra.mxu0 0
      %7818 = vmatprep.subr.bf16.mxu0 0
      %7819 = vmatpush1.bf16.msra.mxu0 0
      %7820 = vmatprep.subr.bf16.mxu0 0
      %7821 = vmatpush1.bf16.msra.mxu0 0
      %7822 = vmatprep.subr.bf16.mxu0 0
      %7823 = vmatpush1.bf16.msra.mxu0 0
      %7824 = vmatprep.subr.bf16.mxu0 0
      %7825 = vmatpush1.bf16.msra.mxu0 0
      %7826 = vmatprep.subr.bf16.mxu0 0
      %7827 = vmatpush1.bf16.msra.mxu0 %v7762
      %7828 = vmatprep.subr.bf16.mxu0 0
      %7829 = vmatpush2.bf16.msra.mxu0 0
      %7830 = vmatprep.subr.bf16.mxu0 0
      %7831 = vmatpush2.bf16.msra.mxu0 0
      %7832 = vmatprep.subr.bf16.mxu0 0
      %7833 = vmatpush2.bf16.msra.mxu0 0
      %7834 = vmatprep.subr.bf16.mxu0 0
      %7835 = vmatpush2.bf16.msra.mxu0 0
      %7836 = vmatprep.subr.bf16.mxu0 0
      %7837 = vmatpush2.bf16.msra.mxu0 0
      %7838 = vmatprep.subr.bf16.mxu0 0
      %7839 = vmatpush2.bf16.msra.mxu0 0
      %7840 = vmatprep.subr.bf16.mxu0 0
      %7841 = vmatpush2.bf16.msra.mxu0 0
      %7842 = vmatprep.subr.bf16.mxu0 0
      %7843 = vmatpush2.bf16.msra.mxu0 0
      %7844 = vmatprep.mubr.bf16.mxu0 0
      %7845 = vmatmul.mubr.bf16.gmra.mxu0 %v7765
      %v7846 = vpop.f32.mrf.mxu0
      %v7847 = vadd.f32 0.0, %v7846
      %v7848 = vpop.f32.mrf.mxu0
      %v7849 = vpop.f32.mrf.mxu0
      %v7850 = vadd.f32 0.0, %v7849
      %v7851 = vpop.f32.mrf.mxu0
      %7852 = vmatprep.mubr.bf16.mxu0 0
      %7853 = vmatmul.mubr.bf16.gmra.mxu0 %v7768
      %v7854 = vpop.f32.mrf.mxu0
      %v7855 = vadd.f32 0.0, %v7854
      %v7856 = vpop.f32.mrf.mxu0
      %v7857 = vpop.f32.mrf.mxu0
      %v7858 = vadd.f32 0.0, %v7857
      %v7859 = vpop.f32.mrf.mxu0
      %7860 = vmatprep.mubr.bf16.mxu0 0
      %7861 = vmatmul.mubr.bf16.gmra.mxu0 %v7771
      %v7862 = vpop.f32.mrf.mxu0
      %v7863 = vadd.f32 0.0, %v7862
      %v7864 = vpop.f32.mrf.mxu0
      %v7865 = vpop.f32.mrf.mxu0
      %v7866 = vadd.f32 0.0, %v7865
      %v7867 = vpop.f32.mrf.mxu0
      %7868 = vmatprep.mubr.bf16.mxu0 0
      %7869 = vmatmul.mubr.bf16.gmra.mxu0 %v7774
      %v7870 = vpop.f32.mrf.mxu0
      %v7871 = vadd.f32 0.0, %v7870
      %v7872 = vpop.f32.mrf.mxu0
      %v7873 = vpop.f32.mrf.mxu0
      %v7874 = vadd.f32 0.0, %v7873
      %v7875 = vpop.f32.mrf.mxu0
      %7876 = vmatprep.mubr.bf16.mxu0 0
      %7877 = vmatmul.mubr.bf16.gmra.mxu0 %v7777
      %v7878 = vpop.f32.mrf.mxu0
      %v7879 = vadd.f32 0.0, %v7878
      %v7880 = vpop.f32.mrf.mxu0
      %v7881 = vpop.f32.mrf.mxu0
      %v7882 = vadd.f32 0.0, %v7881
      %v7883 = vpop.f32.mrf.mxu0
      %7884 = vmatprep.mubr.bf16.mxu0 0
      %7885 = vmatmul.mubr.bf16.gmra.mxu0 %v7780
      %v7886 = vpop.f32.mrf.mxu0
      %v7887 = vadd.f32 0.0, %v7886
      %v7888 = vpop.f32.mrf.mxu0
      %v7889 = vpop.f32.mrf.mxu0
      %v7890 = vadd.f32 0.0, %v7889
      %v7891 = vpop.f32.mrf.mxu0
      %7892 = vmatprep.mubr.bf16.mxu0 0
      %7893 = vmatmul.mubr.bf16.gmra.mxu0 %v7783
      %v7894 = vpop.f32.mrf.mxu0
      %v7895 = vadd.f32 0.0, %v7894
      %v7896 = vpop.f32.mrf.mxu0
      %v7897 = vpop.f32.mrf.mxu0
      %v7898 = vadd.f32 0.0, %v7897
      %v7899 = vpop.f32.mrf.mxu0
      %7900 = vmatprep.mubr.bf16.mxu0 0
      %7901 = vmatmul.mubr.bf16.gmra.mxu0 %v7786
      %v7902 = vpop.f32.mrf.mxu0
      %v7903 = vadd.f32 0.0, %v7902
      %v7904 = vpop.f32.mrf.mxu0
      %v7905 = vpop.f32.mrf.mxu0
      %v7906 = vadd.f32 0.0, %v7905
      %v7907 = vpop.f32.mrf.mxu0
      %7908 = vmatprep.mubr.bf16.mxu0 0
      %7909 = vmatmul.mubr.bf16.gmra.mxu0 %v7789
      %v7910 = vpop.f32.mrf.mxu0
      %v7911 = vadd.f32 0.0, %v7910
      %v7912 = vpop.f32.mrf.mxu0
      %v7913 = vpop.f32.mrf.mxu0
      %v7914 = vadd.f32 0.0, %v7913
      %v7915 = vpop.f32.mrf.mxu0
      %7916 = vmatprep.mubr.bf16.mxu0 0
      %7917 = vmatmul.mubr.bf16.gmra.mxu0 %v7792
      %v7918 = vpop.f32.mrf.mxu0
      %v7919 = vadd.f32 0.0, %v7918
      %v7920 = vpop.f32.mrf.mxu0
      %v7921 = vpop.f32.mrf.mxu0
      %v7922 = vadd.f32 0.0, %v7921
      %v7923 = vpop.f32.mrf.mxu0
      %7924 = vmatprep.mubr.bf16.mxu0 0
      %7925 = vmatmul.mubr.bf16.gmra.mxu0 %v7795
      %v7926 = vpop.f32.mrf.mxu0
      %v7927 = vadd.f32 0.0, %v7926
      %v7928 = vpop.f32.mrf.mxu0
      %v7929 = vpop.f32.mrf.mxu0
      %v7930 = vadd.f32 0.0, %v7929
      %v7931 = vpop.f32.mrf.mxu0
      %7932 = vmatprep.mubr.bf16.mxu0 0
      %7933 = vmatmul.mubr.bf16.gmra.mxu0 %v7798
      %v7934 = vpop.f32.mrf.mxu0
      %v7935 = vadd.f32 0.0, %v7934
      %v7936 = vpop.f32.mrf.mxu0
      %v7937 = vpop.f32.mrf.mxu0
      %v7938 = vadd.f32 0.0, %v7937
      %v7939 = vpop.f32.mrf.mxu0
      %7940 = vmatprep.mubr.bf16.mxu0 0
      %7941 = vmatmul.mubr.bf16.gmra.mxu0 %v7801
      %v7942 = vpop.f32.mrf.mxu0
      %v7943 = vadd.f32 0.0, %v7942
      %v7944 = vpop.f32.mrf.mxu0
      %v7945 = vpop.f32.mrf.mxu0
      %v7946 = vadd.f32 0.0, %v7945
      %v7947 = vpop.f32.mrf.mxu0
      %7948 = vmatprep.mubr.bf16.mxu0 0
      %7949 = vmatmul.mubr.bf16.gmra.mxu0 %v7804
      %v7950 = vpop.f32.mrf.mxu0
      %v7951 = vadd.f32 0.0, %v7950
      %v7952 = vpop.f32.mrf.mxu0
      %v7953 = vpop.f32.mrf.mxu0
      %v7954 = vadd.f32 0.0, %v7953
      %v7955 = vpop.f32.mrf.mxu0
      %7956 = vmatprep.mubr.bf16.mxu0 0
      %7957 = vmatmul.mubr.bf16.gmra.mxu0 %v7807
      %v7958 = vpop.f32.mrf.mxu0
      %v7959 = vadd.f32 0.0, %v7958
      %v7960 = vpop.f32.mrf.mxu0
      %v7961 = vpop.f32.mrf.mxu0
      %v7962 = vadd.f32 0.0, %v7961
      %v7963 = vpop.f32.mrf.mxu0
      %7964 = vmatprep.mubr.bf16.mxu0 0
      %7965 = vmatmul.mubr.bf16.gmra.mxu0 %v7810
      %v7966 = vpop.f32.mrf.mxu0
      %v7967 = vadd.f32 0.0, %v7966
      %v7968 = vpop.f32.mrf.mxu0
      %v7969 = vpop.f32.mrf.mxu0
      %v7970 = vadd.f32 0.0, %v7969
      %v7971 = vpop.f32.mrf.mxu0
      %7972 = vdwg.mxu0
      %v7973 = vadd.f32 %v7243, %v7847
      %v7974 = vadd.f32 %v7244, %v7850
      %v7975 = vadd.f32 %v7245, %v7855
      %v7976 = vadd.f32 %v7246, %v7858
      %v7977 = vadd.f32 %v7247, %v7863
      %v7978 = vadd.f32 %v7248, %v7866
      %v7979 = vadd.f32 %v7249, %v7871
      %v7980 = vadd.f32 %v7250, %v7874
      %v7981 = vadd.f32 %v7251, %v7879
      %v7982 = vadd.f32 %v7252, %v7882
      %v7983 = vadd.f32 %v7253, %v7887
      %v7984 = vadd.f32 %v7254, %v7890
      %v7985 = vadd.f32 %v7255, %v7895
      %v7986 = vadd.f32 %v7256, %v7898
      %v7987 = vadd.f32 %v7257, %v7903
      %v7988 = vadd.f32 %v7258, %v7906
      %v7989 = vadd.f32 %v7259, %v7911
      %v7990 = vadd.f32 %v7260, %v7914
      %v7991 = vadd.f32 %v7261, %v7919
      %v7992 = vadd.f32 %v7262, %v7922
      %v7993 = vadd.f32 %v7263, %v7927
      %v7994 = vadd.f32 %v7264, %v7930
      %v7995 = vadd.f32 %v7265, %v7935
      %v7996 = vadd.f32 %v7266, %v7938
      %v7997 = vadd.f32 %v7267, %v7943
      %v7998 = vadd.f32 %v7268, %v7946
      %v7999 = vadd.f32 %v7269, %v7951
      %v8000 = vadd.f32 %v7270, %v7954
      %v8001 = vadd.f32 %v7271, %v7959
      %v8002 = vadd.f32 %v7272, %v7962
      %v8003 = vadd.f32 %v7273, %v7967
      %v8004 = vadd.f32 %v7274, %v7970
      %v8005 = vld [vmem:[%s6904] sm:$0xf]
      %v8006 = vld [vmem:[%s6904 + $0x4] sm:$0xf]
      %v8007 = vld [vmem:[%s6904 + $0x8] sm:$0x1]
      %v8008 = vld [vmem:[%s6904 + $0xc] sm:$0xf]
      %v8009 = vld [vmem:[%s6904 + $0x10] sm:$0xf]
      %v8010 = vld [vmem:[%s6904 + $0x14] sm:$0x1]
      %v8011 = vld [vmem:[%s6904 + $0x18] sm:$0xf]
      %v8012 = vld [vmem:[%s6904 + $0x1c] sm:$0xf]
      %v8013 = vld [vmem:[%s6904 + $0x20] sm:$0x1]
      %v8014 = vld [vmem:[%s6904 + $0x24] sm:$0xf]
      %v8015 = vld [vmem:[%s6904 + $0x28] sm:$0xf]
      %v8016 = vld [vmem:[%s6904 + $0x2c] sm:$0x1]
      %v8017 = vld [vmem:[%s6904 + $0x30] sm:$0xf]
      %v8018 = vld [vmem:[%s6904 + $0x34] sm:$0xf]
      %v8019 = vld [vmem:[%s6904 + $0x38] sm:$0x1]
      %v8020 = vld [vmem:[%s6904 + $0x3c] sm:$0xf]
      %v8021 = vld [vmem:[%s6904 + $0x40] sm:$0xf]
      %v8022 = vld [vmem:[%s6904 + $0x44] sm:$0x1]
      %v8023 = vld [vmem:[%s6904 + $0x48] sm:$0xf]
      %v8024 = vld [vmem:[%s6904 + $0x4c] sm:$0xf]
      %v8025 = vld [vmem:[%s6904 + $0x50] sm:$0x1]
      %v8026 = vld [vmem:[%s6904 + $0x54] sm:$0xf]
      %v8027 = vld [vmem:[%s6904 + $0x58] sm:$0xf]
      %v8028 = vld [vmem:[%s6904 + $0x5c] sm:$0x1]
      %v8029 = vld [vmem:[%s6904 + $0x60] sm:$0xf]
      %v8030 = vld [vmem:[%s6904 + $0x64] sm:$0xf]
      %v8031 = vld [vmem:[%s6904 + $0x68] sm:$0x1]
      %v8032 = vld [vmem:[%s6904 + $0x6c] sm:$0xf]
      %v8033 = vld [vmem:[%s6904 + $0x70] sm:$0xf]
      %v8034 = vld [vmem:[%s6904 + $0x74] sm:$0x1]
      %v8035 = vld [vmem:[%s6904 + $0x78] sm:$0xf]
      %v8036 = vld [vmem:[%s6904 + $0x7c] sm:$0xf]
      %v8037 = vld [vmem:[%s6904 + $0x80] sm:$0x1]
      %v8038 = vld [vmem:[%s6904 + $0x84] sm:$0xf]
      %v8039 = vld [vmem:[%s6904 + $0x88] sm:$0xf]
      %v8040 = vld [vmem:[%s6904 + $0x8c] sm:$0x1]
      %v8041 = vld [vmem:[%s6904 + $0x90] sm:$0xf]
      %v8042 = vld [vmem:[%s6904 + $0x94] sm:$0xf]
      %v8043 = vld [vmem:[%s6904 + $0x98] sm:$0x1]
      %v8044 = vld [vmem:[%s6904 + $0x9c] sm:$0xf]
      %v8045 = vld [vmem:[%s6904 + $0xa0] sm:$0xf]
      %v8046 = vld [vmem:[%s6904 + $0xa4] sm:$0x1]
      %v8047 = vld [vmem:[%s6904 + $0xa8] sm:$0xf]
      %v8048 = vld [vmem:[%s6904 + $0xac] sm:$0xf]
      %v8049 = vld [vmem:[%s6904 + $0xb0] sm:$0x1]
      %v8050 = vld [vmem:[%s6904 + $0xb4] sm:$0xf]
      %v8051 = vld [vmem:[%s6904 + $0xb8] sm:$0xf]
      %v8052 = vld [vmem:[%s6904 + $0xbc] sm:$0x1]
      %v8054 = vshrl.u32 %v8005, 16
      %v8056 = vrot.slane %v8054, 4
      %v8057 = vshll.u32 %v8005, 16
      %v8059 = vrot.slane %v8057, 5
      %v8060 = vor.u32 %v8056, %v8059
      %v8061 = vrot.slane %v8060, 4
      %v8063 = vshll.u32 %v8006, 16
      %v8065 = vrot.slane %v8063, 5
      %v8066 = vsel %vm995, %v8061, %v8065
      %v8067 = vshrl.u32 %v8006, 16
      %v8069 = vrot.slane %v8067, 4
      %v8070 = vor.u32 %v8069, %v8065
      %v8071 = vrot.slane %v8070, 4
      %v8073 = vshll.u32 %v8007, 16
      %v8075 = vrot.slane %v8073, 5
      %v8076 = vsel %vm995, %v8071, %v8075
      %v8078 = vshrl.u32 %v8008, 16
      %v8080 = vrot.slane %v8078, 4
      %v8081 = vshll.u32 %v8008, 16
      %v8083 = vrot.slane %v8081, 5
      %v8084 = vor.u32 %v8080, %v8083
      %v8085 = vrot.slane %v8084, 4
      %v8087 = vshll.u32 %v8009, 16
      %v8089 = vrot.slane %v8087, 5
      %v8090 = vsel %vm995, %v8085, %v8089
      %v8091 = vshrl.u32 %v8009, 16
      %v8093 = vrot.slane %v8091, 4
      %v8094 = vor.u32 %v8093, %v8089
      %v8095 = vrot.slane %v8094, 4
      %v8097 = vshll.u32 %v8010, 16
      %v8099 = vrot.slane %v8097, 5
      %v8100 = vsel %vm995, %v8095, %v8099
      %v8102 = vshrl.u32 %v8011, 16
      %v8104 = vrot.slane %v8102, 4
      %v8105 = vshll.u32 %v8011, 16
      %v8107 = vrot.slane %v8105, 5
      %v8108 = vor.u32 %v8104, %v8107
      %v8109 = vrot.slane %v8108, 4
      %v8111 = vshll.u32 %v8012, 16
      %v8113 = vrot.slane %v8111, 5
      %v8114 = vsel %vm995, %v8109, %v8113
      %v8115 = vshrl.u32 %v8012, 16
      %v8117 = vrot.slane %v8115, 4
      %v8118 = vor.u32 %v8117, %v8113
      %v8119 = vrot.slane %v8118, 4
      %v8121 = vshll.u32 %v8013, 16
      %v8123 = vrot.slane %v8121, 5
      %v8124 = vsel %vm995, %v8119, %v8123
      %v8126 = vshrl.u32 %v8014, 16
      %v8128 = vrot.slane %v8126, 4
      %v8129 = vshll.u32 %v8014, 16
      %v8131 = vrot.slane %v8129, 5
      %v8132 = vor.u32 %v8128, %v8131
      %v8133 = vrot.slane %v8132, 4
      %v8135 = vshll.u32 %v8015, 16
      %v8137 = vrot.slane %v8135, 5
      %v8138 = vsel %vm995, %v8133, %v8137
      %v8139 = vshrl.u32 %v8015, 16
      %v8141 = vrot.slane %v8139, 4
      %v8142 = vor.u32 %v8141, %v8137
      %v8143 = vrot.slane %v8142, 4
      %v8145 = vshll.u32 %v8016, 16
      %v8147 = vrot.slane %v8145, 5
      %v8148 = vsel %vm995, %v8143, %v8147
      %v8150 = vshrl.u32 %v8017, 16
      %v8152 = vrot.slane %v8150, 4
      %v8153 = vshll.u32 %v8017, 16
      %v8155 = vrot.slane %v8153, 5
      %v8156 = vor.u32 %v8152, %v8155
      %v8157 = vrot.slane %v8156, 4
      %v8159 = vshll.u32 %v8018, 16
      %v8161 = vrot.slane %v8159, 5
      %v8162 = vsel %vm995, %v8157, %v8161
      %v8163 = vshrl.u32 %v8018, 16
      %v8165 = vrot.slane %v8163, 4
      %v8166 = vor.u32 %v8165, %v8161
      %v8167 = vrot.slane %v8166, 4
      %v8169 = vshll.u32 %v8019, 16
      %v8171 = vrot.slane %v8169, 5
      %v8172 = vsel %vm995, %v8167, %v8171
      %v8174 = vshrl.u32 %v8020, 16
      %v8176 = vrot.slane %v8174, 4
      %v8177 = vshll.u32 %v8020, 16
      %v8179 = vrot.slane %v8177, 5
      %v8180 = vor.u32 %v8176, %v8179
      %v8181 = vrot.slane %v8180, 4
      %v8183 = vshll.u32 %v8021, 16
      %v8185 = vrot.slane %v8183, 5
      %v8186 = vsel %vm995, %v8181, %v8185
      %v8187 = vshrl.u32 %v8021, 16
      %v8189 = vrot.slane %v8187, 4
      %v8190 = vor.u32 %v8189, %v8185
      %v8191 = vrot.slane %v8190, 4
      %v8193 = vshll.u32 %v8022, 16
      %v8195 = vrot.slane %v8193, 5
      %v8196 = vsel %vm995, %v8191, %v8195
      %v8198 = vshrl.u32 %v8023, 16
      %v8200 = vrot.slane %v8198, 4
      %v8201 = vshll.u32 %v8023, 16
      %v8203 = vrot.slane %v8201, 5
      %v8204 = vor.u32 %v8200, %v8203
      %v8205 = vrot.slane %v8204, 4
      %v8207 = vshll.u32 %v8024, 16
      %v8209 = vrot.slane %v8207, 5
      %v8210 = vsel %vm995, %v8205, %v8209
      %v8211 = vshrl.u32 %v8024, 16
      %v8213 = vrot.slane %v8211, 4
      %v8214 = vor.u32 %v8213, %v8209
      %v8215 = vrot.slane %v8214, 4
      %v8217 = vshll.u32 %v8025, 16
      %v8219 = vrot.slane %v8217, 5
      %v8220 = vsel %vm995, %v8215, %v8219
      %v8222 = vshrl.u32 %v8026, 16
      %v8224 = vrot.slane %v8222, 4
      %v8225 = vshll.u32 %v8026, 16
      %v8227 = vrot.slane %v8225, 5
      %v8228 = vor.u32 %v8224, %v8227
      %v8229 = vrot.slane %v8228, 4
      %v8231 = vshll.u32 %v8027, 16
      %v8233 = vrot.slane %v8231, 5
      %v8234 = vsel %vm995, %v8229, %v8233
      %v8235 = vshrl.u32 %v8027, 16
      %v8237 = vrot.slane %v8235, 4
      %v8238 = vor.u32 %v8237, %v8233
      %v8239 = vrot.slane %v8238, 4
      %v8241 = vshll.u32 %v8028, 16
      %v8243 = vrot.slane %v8241, 5
      %v8244 = vsel %vm995, %v8239, %v8243
      %v8246 = vshrl.u32 %v8029, 16
      %v8248 = vrot.slane %v8246, 4
      %v8249 = vshll.u32 %v8029, 16
      %v8251 = vrot.slane %v8249, 5
      %v8252 = vor.u32 %v8248, %v8251
      %v8253 = vrot.slane %v8252, 4
      %v8255 = vshll.u32 %v8030, 16
      %v8257 = vrot.slane %v8255, 5
      %v8258 = vsel %vm995, %v8253, %v8257
      %v8259 = vshrl.u32 %v8030, 16
      %v8261 = vrot.slane %v8259, 4
      %v8262 = vor.u32 %v8261, %v8257
      %v8263 = vrot.slane %v8262, 4
      %v8265 = vshll.u32 %v8031, 16
      %v8267 = vrot.slane %v8265, 5
      %v8268 = vsel %vm995, %v8263, %v8267
      %v8270 = vshrl.u32 %v8032, 16
      %v8272 = vrot.slane %v8270, 4
      %v8273 = vshll.u32 %v8032, 16
      %v8275 = vrot.slane %v8273, 5
      %v8276 = vor.u32 %v8272, %v8275
      %v8277 = vrot.slane %v8276, 4
      %v8279 = vshll.u32 %v8033, 16
      %v8281 = vrot.slane %v8279, 5
      %v8282 = vsel %vm995, %v8277, %v8281
      %v8283 = vshrl.u32 %v8033, 16
      %v8285 = vrot.slane %v8283, 4
      %v8286 = vor.u32 %v8285, %v8281
      %v8287 = vrot.slane %v8286, 4
      %v8289 = vshll.u32 %v8034, 16
      %v8291 = vrot.slane %v8289, 5
      %v8292 = vsel %vm995, %v8287, %v8291
      %v8294 = vshrl.u32 %v8035, 16
      %v8296 = vrot.slane %v8294, 4
      %v8297 = vshll.u32 %v8035, 16
      %v8299 = vrot.slane %v8297, 5
      %v8300 = vor.u32 %v8296, %v8299
      %v8301 = vrot.slane %v8300, 4
      %v8303 = vshll.u32 %v8036, 16
      %v8305 = vrot.slane %v8303, 5
      %v8306 = vsel %vm995, %v8301, %v8305
      %v8307 = vshrl.u32 %v8036, 16
      %v8309 = vrot.slane %v8307, 4
      %v8310 = vor.u32 %v8309, %v8305
      %v8311 = vrot.slane %v8310, 4
      %v8313 = vshll.u32 %v8037, 16
      %v8315 = vrot.slane %v8313, 5
      %v8316 = vsel %vm995, %v8311, %v8315
      %v8318 = vshrl.u32 %v8038, 16
      %v8320 = vrot.slane %v8318, 4
      %v8321 = vshll.u32 %v8038, 16
      %v8323 = vrot.slane %v8321, 5
      %v8324 = vor.u32 %v8320, %v8323
      %v8325 = vrot.slane %v8324, 4
      %v8327 = vshll.u32 %v8039, 16
      %v8329 = vrot.slane %v8327, 5
      %v8330 = vsel %vm995, %v8325, %v8329
      %v8331 = vshrl.u32 %v8039, 16
      %v8333 = vrot.slane %v8331, 4
      %v8334 = vor.u32 %v8333, %v8329
      %v8335 = vrot.slane %v8334, 4
      %v8337 = vshll.u32 %v8040, 16
      %v8339 = vrot.slane %v8337, 5
      %v8340 = vsel %vm995, %v8335, %v8339
      %v8342 = vshrl.u32 %v8041, 16
      %v8344 = vrot.slane %v8342, 4
      %v8345 = vshll.u32 %v8041, 16
      %v8347 = vrot.slane %v8345, 5
      %v8348 = vor.u32 %v8344, %v8347
      %v8349 = vrot.slane %v8348, 4
      %v8351 = vshll.u32 %v8042, 16
      %v8353 = vrot.slane %v8351, 5
      %v8354 = vsel %vm995, %v8349, %v8353
      %v8355 = vshrl.u32 %v8042, 16
      %v8357 = vrot.slane %v8355, 4
      %v8358 = vor.u32 %v8357, %v8353
      %v8359 = vrot.slane %v8358, 4
      %v8361 = vshll.u32 %v8043, 16
      %v8363 = vrot.slane %v8361, 5
      %v8364 = vsel %vm995, %v8359, %v8363
      %v8366 = vshrl.u32 %v8044, 16
      %v8368 = vrot.slane %v8366, 4
      %v8369 = vshll.u32 %v8044, 16
      %v8371 = vrot.slane %v8369, 5
      %v8372 = vor.u32 %v8368, %v8371
      %v8373 = vrot.slane %v8372, 4
      %v8375 = vshll.u32 %v8045, 16
      %v8377 = vrot.slane %v8375, 5
      %v8378 = vsel %vm995, %v8373, %v8377
      %v8379 = vshrl.u32 %v8045, 16
      %v8381 = vrot.slane %v8379, 4
      %v8382 = vor.u32 %v8381, %v8377
      %v8383 = vrot.slane %v8382, 4
      %v8385 = vshll.u32 %v8046, 16
      %v8387 = vrot.slane %v8385, 5
      %v8388 = vsel %vm995, %v8383, %v8387
      %v8390 = vshrl.u32 %v8047, 16
      %v8392 = vrot.slane %v8390, 4
      %v8393 = vshll.u32 %v8047, 16
      %v8395 = vrot.slane %v8393, 5
      %v8396 = vor.u32 %v8392, %v8395
      %v8397 = vrot.slane %v8396, 4
      %v8399 = vshll.u32 %v8048, 16
      %v8401 = vrot.slane %v8399, 5
      %v8402 = vsel %vm995, %v8397, %v8401
      %v8403 = vshrl.u32 %v8048, 16
      %v8405 = vrot.slane %v8403, 4
      %v8406 = vor.u32 %v8405, %v8401
      %v8407 = vrot.slane %v8406, 4
      %v8409 = vshll.u32 %v8049, 16
      %v8411 = vrot.slane %v8409, 5
      %v8412 = vsel %vm995, %v8407, %v8411
      %v8414 = vshrl.u32 %v8050, 16
      %v8416 = vrot.slane %v8414, 4
      %v8417 = vshll.u32 %v8050, 16
      %v8419 = vrot.slane %v8417, 5
      %v8420 = vor.u32 %v8416, %v8419
      %v8421 = vrot.slane %v8420, 4
      %v8423 = vshll.u32 %v8051, 16
      %v8425 = vrot.slane %v8423, 5
      %v8426 = vsel %vm995, %v8421, %v8425
      %v8427 = vshrl.u32 %v8051, 16
      %v8429 = vrot.slane %v8427, 4
      %v8430 = vor.u32 %v8429, %v8425
      %v8431 = vrot.slane %v8430, 4
      %v8433 = vshll.u32 %v8052, 16
      %v8435 = vrot.slane %v8433, 5
      %v8436 = vsel %vm995, %v8431, %v8435
      %s8437 = scalar_lea.vmem %s3, 112
      %v8438 = vld [vmem:[%s8437] sm:$0xf]
      %v8439 = vld [vmem:[%s8437 + $0x4] sm:$0xf]
      %v8440 = vld [vmem:[%s8437 + $0x8] sm:$0xf]
      %v8441 = vld [vmem:[%s8437 + $0xc] sm:$0xf]
      %v8442 = vunpack.c.l.b16 %v8066
      %v8443 = vunpack.c.l.b16 %v8076
      %v8444 = vunpack.c.l.b16 %v8090
      %v8445 = vunpack.c.l.b16 %v8100
      %v8446 = vunpack.c.l.b16 %v8114
      %v8447 = vunpack.c.l.b16 %v8124
      %v8448 = vunpack.c.l.b16 %v8138
      %v8449 = vunpack.c.l.b16 %v8148
      %v8450 = vunpack.c.l.b16 %v8162
      %v8451 = vunpack.c.l.b16 %v8172
      %v8452 = vunpack.c.l.b16 %v8186
      %v8453 = vunpack.c.l.b16 %v8196
      %v8454 = vunpack.c.l.b16 %v8210
      %v8455 = vunpack.c.l.b16 %v8220
      %v8456 = vunpack.c.l.b16 %v8234
      %v8457 = vunpack.c.l.b16 %v8244
      %v8458 = vunpack.c.l.b16 %v8258
      %v8459 = vunpack.c.l.b16 %v8268
      %v8460 = vunpack.c.l.b16 %v8282
      %v8461 = vunpack.c.l.b16 %v8292
      %v8462 = vunpack.c.l.b16 %v8306
      %v8463 = vunpack.c.l.b16 %v8316
      %v8464 = vunpack.c.l.b16 %v8330
      %v8465 = vunpack.c.l.b16 %v8340
      %v8466 = vunpack.c.l.b16 %v8354
      %v8467 = vunpack.c.l.b16 %v8364
      %v8468 = vunpack.c.l.b16 %v8378
      %v8469 = vunpack.c.l.b16 %v8388
      %v8470 = vunpack.c.l.b16 %v8402
      %v8471 = vunpack.c.l.b16 %v8412
      %v8472 = vunpack.c.l.b16 %v8426
      %v8473 = vunpack.c.l.b16 %v8436
      %v8474 = vpack.c.b16 %v8443, %v8442
      %v8475 = vpack.c.b16 %v8445, %v8444
      %v8476 = vpack.c.b16 %v8447, %v8446
      %v8477 = vpack.c.b16 %v8449, %v8448
      %v8478 = vpack.c.b16 %v8451, %v8450
      %v8479 = vpack.c.b16 %v8453, %v8452
      %v8480 = vpack.c.b16 %v8455, %v8454
      %v8481 = vpack.c.b16 %v8457, %v8456
      %v8482 = vpack.c.b16 %v8459, %v8458
      %v8483 = vpack.c.b16 %v8461, %v8460
      %v8484 = vpack.c.b16 %v8463, %v8462
      %v8485 = vpack.c.b16 %v8465, %v8464
      %v8486 = vpack.c.b16 %v8467, %v8466
      %v8487 = vpack.c.b16 %v8469, %v8468
      %v8488 = vpack.c.b16 %v8471, %v8470
      %v8489 = vpack.c.b16 %v8473, %v8472
      %v8494 = vunpack.c.l.b16 %v8438
      %v8495 = vunpack.c.l.b16 %v8439
      %v8496 = vunpack.c.l.b16 %v8440
      %v8497 = vunpack.c.l.b16 %v8441
      %v8498 = vpack.c.b16 %v8495, %v8494
      %v8499 = vpack.c.b16 %v8497, %v8496
      %v8503 = vsel %vm439, %v8474, 0
      %v8506 = vsel %vm439, %v8475, 0
      %v8509 = vsel %vm439, %v8476, 0
      %v8512 = vsel %vm439, %v8477, 0
      %v8515 = vsel %vm439, %v8478, 0
      %v8518 = vsel %vm439, %v8479, 0
      %v8521 = vsel %vm439, %v8480, 0
      %v8524 = vsel %vm439, %v8481, 0
      %v8527 = vsel %vm439, %v8482, 0
      %v8530 = vsel %vm439, %v8483, 0
      %v8533 = vsel %vm439, %v8484, 0
      %v8536 = vsel %vm439, %v8485, 0
      %v8539 = vsel %vm439, %v8486, 0
      %v8542 = vsel %vm439, %v8487, 0
      %v8545 = vsel %vm439, %v8488, 0
      %v8548 = vsel %vm439, %v8489, 0
      %8550 = vmatprep.subr.bf16.mxu0 0
      %8551 = vmatpush1.bf16.msra.mxu0 0
      %8552 = vmatprep.subr.bf16.mxu0 0
      %8553 = vmatpush1.bf16.msra.mxu0 0
      %8554 = vmatprep.subr.bf16.mxu0 0
      %8555 = vmatpush1.bf16.msra.mxu0 0
      %8556 = vmatprep.subr.bf16.mxu0 0
      %8557 = vmatpush1.bf16.msra.mxu0 0
      %8558 = vmatprep.subr.bf16.mxu0 0
      %8559 = vmatpush1.bf16.msra.mxu0 0
      %8560 = vmatprep.subr.bf16.mxu0 0
      %8561 = vmatpush1.bf16.msra.mxu0 0
      %8562 = vmatprep.subr.bf16.mxu0 0
      %8563 = vmatpush1.bf16.msra.mxu0 %v8499
      %8564 = vmatprep.subr.bf16.mxu0 0
      %8565 = vmatpush1.bf16.msra.mxu0 %v8498
      %8566 = vmatprep.subr.bf16.mxu0 0
      %8567 = vmatpush2.bf16.msra.mxu0 0
      %8568 = vmatprep.subr.bf16.mxu0 0
      %8569 = vmatpush2.bf16.msra.mxu0 0
      %8570 = vmatprep.subr.bf16.mxu0 0
      %8571 = vmatpush2.bf16.msra.mxu0 0
      %8572 = vmatprep.subr.bf16.mxu0 0
      %8573 = vmatpush2.bf16.msra.mxu0 0
      %8574 = vmatprep.subr.bf16.mxu0 0
      %8575 = vmatpush2.bf16.msra.mxu0 0
      %8576 = vmatprep.subr.bf16.mxu0 0
      %8577 = vmatpush2.bf16.msra.mxu0 0
      %8578 = vmatprep.subr.bf16.mxu0 0
      %8579 = vmatpush2.bf16.msra.mxu0 0
      %8580 = vmatprep.subr.bf16.mxu0 0
      %8581 = vmatpush2.bf16.msra.mxu0 0
      %8582 = vmatprep.mubr.bf16.mxu0 0
      %8583 = vmatmul.mubr.bf16.gmra.mxu0 %v8503
      %v8584 = vpop.f32.mrf.mxu0
      %v8585 = vadd.f32 0.0, %v8584
      %v8586 = vpop.f32.mrf.mxu0
      %v8587 = vpop.f32.mrf.mxu0
      %v8588 = vadd.f32 0.0, %v8587
      %v8589 = vpop.f32.mrf.mxu0
      %8590 = vmatprep.mubr.bf16.mxu0 0
      %8591 = vmatmul.mubr.bf16.gmra.mxu0 %v8506
      %v8592 = vpop.f32.mrf.mxu0
      %v8593 = vadd.f32 0.0, %v8592
      %v8594 = vpop.f32.mrf.mxu0
      %v8595 = vpop.f32.mrf.mxu0
      %v8596 = vadd.f32 0.0, %v8595
      %v8597 = vpop.f32.mrf.mxu0
      %8598 = vmatprep.mubr.bf16.mxu0 0
      %8599 = vmatmul.mubr.bf16.gmra.mxu0 %v8509
      %v8600 = vpop.f32.mrf.mxu0
      %v8601 = vadd.f32 0.0, %v8600
      %v8602 = vpop.f32.mrf.mxu0
      %v8603 = vpop.f32.mrf.mxu0
      %v8604 = vadd.f32 0.0, %v8603
      %v8605 = vpop.f32.mrf.mxu0
      %8606 = vmatprep.mubr.bf16.mxu0 0
      %8607 = vmatmul.mubr.bf16.gmra.mxu0 %v8512
      %v8608 = vpop.f32.mrf.mxu0
      %v8609 = vadd.f32 0.0, %v8608
      %v8610 = vpop.f32.mrf.mxu0
      %v8611 = vpop.f32.mrf.mxu0
      %v8612 = vadd.f32 0.0, %v8611
      %v8613 = vpop.f32.mrf.mxu0
      %8614 = vmatprep.mubr.bf16.mxu0 0
      %8615 = vmatmul.mubr.bf16.gmra.mxu0 %v8515
      %v8616 = vpop.f32.mrf.mxu0
      %v8617 = vadd.f32 0.0, %v8616
      %v8618 = vpop.f32.mrf.mxu0
      %v8619 = vpop.f32.mrf.mxu0
      %v8620 = vadd.f32 0.0, %v8619
      %v8621 = vpop.f32.mrf.mxu0
      %8622 = vmatprep.mubr.bf16.mxu0 0
      %8623 = vmatmul.mubr.bf16.gmra.mxu0 %v8518
      %v8624 = vpop.f32.mrf.mxu0
      %v8625 = vadd.f32 0.0, %v8624
      %v8626 = vpop.f32.mrf.mxu0
      %v8627 = vpop.f32.mrf.mxu0
      %v8628 = vadd.f32 0.0, %v8627
      %v8629 = vpop.f32.mrf.mxu0
      %8630 = vmatprep.mubr.bf16.mxu0 0
      %8631 = vmatmul.mubr.bf16.gmra.mxu0 %v8521
      %v8632 = vpop.f32.mrf.mxu0
      %v8633 = vadd.f32 0.0, %v8632
      %v8634 = vpop.f32.mrf.mxu0
      %v8635 = vpop.f32.mrf.mxu0
      %v8636 = vadd.f32 0.0, %v8635
      %v8637 = vpop.f32.mrf.mxu0
      %8638 = vmatprep.mubr.bf16.mxu0 0
      %8639 = vmatmul.mubr.bf16.gmra.mxu0 %v8524
      %v8640 = vpop.f32.mrf.mxu0
      %v8641 = vadd.f32 0.0, %v8640
      %v8642 = vpop.f32.mrf.mxu0
      %v8643 = vpop.f32.mrf.mxu0
      %v8644 = vadd.f32 0.0, %v8643
      %v8645 = vpop.f32.mrf.mxu0
      %8646 = vmatprep.mubr.bf16.mxu0 0
      %8647 = vmatmul.mubr.bf16.gmra.mxu0 %v8527
      %v8648 = vpop.f32.mrf.mxu0
      %v8649 = vadd.f32 0.0, %v8648
      %v8650 = vpop.f32.mrf.mxu0
      %v8651 = vpop.f32.mrf.mxu0
      %v8652 = vadd.f32 0.0, %v8651
      %v8653 = vpop.f32.mrf.mxu0
      %8654 = vmatprep.mubr.bf16.mxu0 0
      %8655 = vmatmul.mubr.bf16.gmra.mxu0 %v8530
      %v8656 = vpop.f32.mrf.mxu0
      %v8657 = vadd.f32 0.0, %v8656
      %v8658 = vpop.f32.mrf.mxu0
      %v8659 = vpop.f32.mrf.mxu0
      %v8660 = vadd.f32 0.0, %v8659
      %v8661 = vpop.f32.mrf.mxu0
      %8662 = vmatprep.mubr.bf16.mxu0 0
      %8663 = vmatmul.mubr.bf16.gmra.mxu0 %v8533
      %v8664 = vpop.f32.mrf.mxu0
      %v8665 = vadd.f32 0.0, %v8664
      %v8666 = vpop.f32.mrf.mxu0
      %v8667 = vpop.f32.mrf.mxu0
      %v8668 = vadd.f32 0.0, %v8667
      %v8669 = vpop.f32.mrf.mxu0
      %8670 = vmatprep.mubr.bf16.mxu0 0
      %8671 = vmatmul.mubr.bf16.gmra.mxu0 %v8536
      %v8672 = vpop.f32.mrf.mxu0
      %v8673 = vadd.f32 0.0, %v8672
      %v8674 = vpop.f32.mrf.mxu0
      %v8675 = vpop.f32.mrf.mxu0
      %v8676 = vadd.f32 0.0, %v8675
      %v8677 = vpop.f32.mrf.mxu0
      %8678 = vmatprep.mubr.bf16.mxu0 0
      %8679 = vmatmul.mubr.bf16.gmra.mxu0 %v8539
      %v8680 = vpop.f32.mrf.mxu0
      %v8681 = vadd.f32 0.0, %v8680
      %v8682 = vpop.f32.mrf.mxu0
      %v8683 = vpop.f32.mrf.mxu0
      %v8684 = vadd.f32 0.0, %v8683
      %v8685 = vpop.f32.mrf.mxu0
      %8686 = vmatprep.mubr.bf16.mxu0 0
      %8687 = vmatmul.mubr.bf16.gmra.mxu0 %v8542
      %v8688 = vpop.f32.mrf.mxu0
      %v8689 = vadd.f32 0.0, %v8688
      %v8690 = vpop.f32.mrf.mxu0
      %v8691 = vpop.f32.mrf.mxu0
      %v8692 = vadd.f32 0.0, %v8691
      %v8693 = vpop.f32.mrf.mxu0
      %8694 = vmatprep.mubr.bf16.mxu0 0
      %8695 = vmatmul.mubr.bf16.gmra.mxu0 %v8545
      %v8696 = vpop.f32.mrf.mxu0
      %v8697 = vadd.f32 0.0, %v8696
      %v8698 = vpop.f32.mrf.mxu0
      %v8699 = vpop.f32.mrf.mxu0
      %v8700 = vadd.f32 0.0, %v8699
      %v8701 = vpop.f32.mrf.mxu0
      %8702 = vmatprep.mubr.bf16.mxu0 0
      %8703 = vmatmul.mubr.bf16.gmra.mxu0 %v8548
      %v8704 = vpop.f32.mrf.mxu0
      %v8705 = vadd.f32 0.0, %v8704
      %v8706 = vpop.f32.mrf.mxu0
      %v8707 = vpop.f32.mrf.mxu0
      %v8708 = vadd.f32 0.0, %v8707
      %v8709 = vpop.f32.mrf.mxu0
      %8710 = vdwg.mxu0
      %v8711 = vadd.f32 %v7973, %v8585
      %v8712 = vadd.f32 %v7974, %v8588
      %v8713 = vadd.f32 %v7975, %v8593
      %v8714 = vadd.f32 %v7976, %v8596
      %v8715 = vadd.f32 %v7977, %v8601
      %v8716 = vadd.f32 %v7978, %v8604
      %v8717 = vadd.f32 %v7979, %v8609
      %v8718 = vadd.f32 %v7980, %v8612
      %v8719 = vadd.f32 %v7981, %v8617
      %v8720 = vadd.f32 %v7982, %v8620
      %v8721 = vadd.f32 %v7983, %v8625
      %v8722 = vadd.f32 %v7984, %v8628
      %v8723 = vadd.f32 %v7985, %v8633
      %v8724 = vadd.f32 %v7986, %v8636
      %v8725 = vadd.f32 %v7987, %v8641
      %v8726 = vadd.f32 %v7988, %v8644
      %v8727 = vadd.f32 %v7989, %v8649
      %v8728 = vadd.f32 %v7990, %v8652
      %v8729 = vadd.f32 %v7991, %v8657
      %v8730 = vadd.f32 %v7992, %v8660
      %v8731 = vadd.f32 %v7993, %v8665
      %v8732 = vadd.f32 %v7994, %v8668
      %v8733 = vadd.f32 %v7995, %v8673
      %v8734 = vadd.f32 %v7996, %v8676
      %v8735 = vadd.f32 %v7997, %v8681
      %v8736 = vadd.f32 %v7998, %v8684
      %v8737 = vadd.f32 %v7999, %v8689
      %v8738 = vadd.f32 %v8000, %v8692
      %v8739 = vadd.f32 %v8001, %v8697
      %v8740 = vadd.f32 %v8002, %v8700
      %v8741 = vadd.f32 %v8003, %v8705
      %v8742 = vadd.f32 %v8004, %v8708
      %v8743 = vld [vmem:[%s6540] sm:$0xe]
      %v8744 = vld [vmem:[%s6540 + $0xc] sm:$0xe]
      %v8745 = vld [vmem:[%s6540 + $0x18] sm:$0xe]
      %v8746 = vld [vmem:[%s6540 + $0x24] sm:$0xe]
      %v8747 = vld [vmem:[%s6540 + $0x30] sm:$0xe]
      %v8748 = vld [vmem:[%s6540 + $0x3c] sm:$0xe]
      %v8749 = vld [vmem:[%s6540 + $0x48] sm:$0xe]
      %v8750 = vld [vmem:[%s6540 + $0x54] sm:$0xe]
      %v8751 = vld [vmem:[%s6540 + $0x60] sm:$0xe]
      %v8752 = vld [vmem:[%s6540 + $0x6c] sm:$0xe]
      %v8753 = vld [vmem:[%s6540 + $0x78] sm:$0xe]
      %v8754 = vld [vmem:[%s6540 + $0x84] sm:$0xe]
      %v8755 = vld [vmem:[%s6540 + $0x90] sm:$0xe]
      %v8756 = vld [vmem:[%s6540 + $0x9c] sm:$0xe]
      %v8757 = vld [vmem:[%s6540 + $0xa8] sm:$0xe]
      %v8758 = vld [vmem:[%s6540 + $0xb4] sm:$0xe]
      %v8807 = vrot.slane %v8743, 5
      %v8808 = vrot.slane %v8807, 4
      %v8809 = vrot.slane %v7276, 5
      %v8810 = vsel %vm2482, %v8808, %v8809
      %v8811 = vrot.slane %v8809, 4
      %v8812 = vrot.slane %v7277, 5
      %v8813 = vsel %vm2482, %v8811, %v8812
      %v8814 = vrot.slane %v8744, 5
      %v8815 = vrot.slane %v8814, 4
      %v8816 = vrot.slane %v7279, 5
      %v8817 = vsel %vm2482, %v8815, %v8816
      %v8818 = vrot.slane %v8816, 4
      %v8819 = vrot.slane %v7280, 5
      %v8820 = vsel %vm2482, %v8818, %v8819
      %v8821 = vrot.slane %v8745, 5
      %v8822 = vrot.slane %v8821, 4
      %v8823 = vrot.slane %v7282, 5
      %v8824 = vsel %vm2482, %v8822, %v8823
      %v8825 = vrot.slane %v8823, 4
      %v8826 = vrot.slane %v7283, 5
      %v8827 = vsel %vm2482, %v8825, %v8826
      %v8828 = vrot.slane %v8746, 5
      %v8829 = vrot.slane %v8828, 4
      %v8830 = vrot.slane %v7285, 5
      %v8831 = vsel %vm2482, %v8829, %v8830
      %v8832 = vrot.slane %v8830, 4
      %v8833 = vrot.slane %v7286, 5
      %v8834 = vsel %vm2482, %v8832, %v8833
      %v8835 = vrot.slane %v8747, 5
      %v8836 = vrot.slane %v8835, 4
      %v8837 = vrot.slane %v7288, 5
      %v8838 = vsel %vm2482, %v8836, %v8837
      %v8839 = vrot.slane %v8837, 4
      %v8840 = vrot.slane %v7289, 5
      %v8841 = vsel %vm2482, %v8839, %v8840
      %v8842 = vrot.slane %v8748, 5
      %v8843 = vrot.slane %v8842, 4
      %v8844 = vrot.slane %v7291, 5
      %v8845 = vsel %vm2482, %v8843, %v8844
      %v8846 = vrot.slane %v8844, 4
      %v8847 = vrot.slane %v7292, 5
      %v8848 = vsel %vm2482, %v8846, %v8847
      %v8849 = vrot.slane %v8749, 5
      %v8850 = vrot.slane %v8849, 4
      %v8851 = vrot.slane %v7294, 5
      %v8852 = vsel %vm2482, %v8850, %v8851
      %v8853 = vrot.slane %v8851, 4
      %v8854 = vrot.slane %v7295, 5
      %v8855 = vsel %vm2482, %v8853, %v8854
      %v8856 = vrot.slane %v8750, 5
      %v8857 = vrot.slane %v8856, 4
      %v8858 = vrot.slane %v7297, 5
      %v8859 = vsel %vm2482, %v8857, %v8858
      %v8860 = vrot.slane %v8858, 4
      %v8861 = vrot.slane %v7298, 5
      %v8862 = vsel %vm2482, %v8860, %v8861
      %v8863 = vrot.slane %v8751, 5
      %v8864 = vrot.slane %v8863, 4
      %v8865 = vrot.slane %v7300, 5
      %v8866 = vsel %vm2482, %v8864, %v8865
      %v8867 = vrot.slane %v8865, 4
      %v8868 = vrot.slane %v7301, 5
      %v8869 = vsel %vm2482, %v8867, %v8868
      %v8870 = vrot.slane %v8752, 5
      %v8871 = vrot.slane %v8870, 4
      %v8872 = vrot.slane %v7303, 5
      %v8873 = vsel %vm2482, %v8871, %v8872
      %v8874 = vrot.slane %v8872, 4
      %v8875 = vrot.slane %v7304, 5
      %v8876 = vsel %vm2482, %v8874, %v8875
      %v8877 = vrot.slane %v8753, 5
      %v8878 = vrot.slane %v8877, 4
      %v8879 = vrot.slane %v7306, 5
      %v8880 = vsel %vm2482, %v8878, %v8879
      %v8881 = vrot.slane %v8879, 4
      %v8882 = vrot.slane %v7307, 5
      %v8883 = vsel %vm2482, %v8881, %v8882
      %v8884 = vrot.slane %v8754, 5
      %v8885 = vrot.slane %v8884, 4
      %v8886 = vrot.slane %v7309, 5
      %v8887 = vsel %vm2482, %v8885, %v8886
      %v8888 = vrot.slane %v8886, 4
      %v8889 = vrot.slane %v7310, 5
      %v8890 = vsel %vm2482, %v8888, %v8889
      %v8891 = vrot.slane %v8755, 5
      %v8892 = vrot.slane %v8891, 4
      %v8893 = vrot.slane %v7312, 5
      %v8894 = vsel %vm2482, %v8892, %v8893
      %v8895 = vrot.slane %v8893, 4
      %v8896 = vrot.slane %v7313, 5
      %v8897 = vsel %vm2482, %v8895, %v8896
      %v8898 = vrot.slane %v8756, 5
      %v8899 = vrot.slane %v8898, 4
      %v8900 = vrot.slane %v7315, 5
      %v8901 = vsel %vm2482, %v8899, %v8900
      %v8902 = vrot.slane %v8900, 4
      %v8903 = vrot.slane %v7316, 5
      %v8904 = vsel %vm2482, %v8902, %v8903
      %v8905 = vrot.slane %v8757, 5
      %v8906 = vrot.slane %v8905, 4
      %v8907 = vrot.slane %v7318, 5
      %v8908 = vsel %vm2482, %v8906, %v8907
      %v8909 = vrot.slane %v8907, 4
      %v8910 = vrot.slane %v7319, 5
      %v8911 = vsel %vm2482, %v8909, %v8910
      %v8912 = vrot.slane %v8758, 5
      %v8913 = vrot.slane %v8912, 4
      %v8914 = vrot.slane %v7321, 5
      %v8915 = vsel %vm2482, %v8913, %v8914
      %v8916 = vrot.slane %v8914, 4
      %v8917 = vrot.slane %v7322, 5
      %v8918 = vsel %vm2482, %v8916, %v8917
      %s8919 = scalar_lea.vmem %s2, 64
      %v8920 = vld [vmem:[%s8919] sm:$0xf]
      %v8921 = vld [vmem:[%s8919 + $0x4] sm:$0xf]
      %v8922 = vunpack.c.l.b16 %v8810
      %v8923 = vunpack.c.l.b16 %v8813
      %v8924 = vunpack.c.l.b16 %v8817
      %v8925 = vunpack.c.l.b16 %v8820
      %v8926 = vunpack.c.l.b16 %v8824
      %v8927 = vunpack.c.l.b16 %v8827
      %v8928 = vunpack.c.l.b16 %v8831
      %v8929 = vunpack.c.l.b16 %v8834
      %v8930 = vunpack.c.l.b16 %v8838
      %v8931 = vunpack.c.l.b16 %v8841
      %v8932 = vunpack.c.l.b16 %v8845
      %v8933 = vunpack.c.l.b16 %v8848
      %v8934 = vunpack.c.l.b16 %v8852
      %v8935 = vunpack.c.l.b16 %v8855
      %v8936 = vunpack.c.l.b16 %v8859
      %v8937 = vunpack.c.l.b16 %v8862
      %v8938 = vunpack.c.l.b16 %v8866
      %v8939 = vunpack.c.l.b16 %v8869
      %v8940 = vunpack.c.l.b16 %v8873
      %v8941 = vunpack.c.l.b16 %v8876
      %v8942 = vunpack.c.l.b16 %v8880
      %v8943 = vunpack.c.l.b16 %v8883
      %v8944 = vunpack.c.l.b16 %v8887
      %v8945 = vunpack.c.l.b16 %v8890
      %v8946 = vunpack.c.l.b16 %v8894
      %v8947 = vunpack.c.l.b16 %v8897
      %v8948 = vunpack.c.l.b16 %v8901
      %v8949 = vunpack.c.l.b16 %v8904
      %v8950 = vunpack.c.l.b16 %v8908
      %v8951 = vunpack.c.l.b16 %v8911
      %v8952 = vunpack.c.l.b16 %v8915
      %v8953 = vunpack.c.l.b16 %v8918
      %v8954 = vpack.c.b16 %v8923, %v8922
      %v8955 = vpack.c.b16 %v8925, %v8924
      %v8956 = vpack.c.b16 %v8927, %v8926
      %v8957 = vpack.c.b16 %v8929, %v8928
      %v8958 = vpack.c.b16 %v8931, %v8930
      %v8959 = vpack.c.b16 %v8933, %v8932
      %v8960 = vpack.c.b16 %v8935, %v8934
      %v8961 = vpack.c.b16 %v8937, %v8936
      %v8962 = vpack.c.b16 %v8939, %v8938
      %v8963 = vpack.c.b16 %v8941, %v8940
      %v8964 = vpack.c.b16 %v8943, %v8942
      %v8965 = vpack.c.b16 %v8945, %v8944
      %v8966 = vpack.c.b16 %v8947, %v8946
      %v8967 = vpack.c.b16 %v8949, %v8948
      %v8968 = vpack.c.b16 %v8951, %v8950
      %v8969 = vpack.c.b16 %v8953, %v8952
      %v8972 = vunpack.c.l.b16 %v8920
      %v8973 = vunpack.c.l.b16 %v8921
      %v8974 = vpack.c.b16 %v8973, %v8972
      %v8977 = vsel %vm735, %v8954, 0
      %v8980 = vsel %vm735, %v8955, 0
      %v8983 = vsel %vm735, %v8956, 0
      %v8986 = vsel %vm735, %v8957, 0
      %v8989 = vsel %vm735, %v8958, 0
      %v8992 = vsel %vm735, %v8959, 0
      %v8995 = vsel %vm735, %v8960, 0
      %v8998 = vsel %vm735, %v8961, 0
      %v9001 = vsel %vm735, %v8962, 0
      %v9004 = vsel %vm735, %v8963, 0
      %v9007 = vsel %vm735, %v8964, 0
      %v9010 = vsel %vm735, %v8965, 0
      %v9013 = vsel %vm735, %v8966, 0
      %v9016 = vsel %vm735, %v8967, 0
      %v9019 = vsel %vm735, %v8968, 0
      %v9022 = vsel %vm735, %v8969, 0
      %9024 = vmatprep.subr.bf16.mxu0 0
      %9025 = vmatpush1.bf16.msra.mxu0 0
      %9026 = vmatprep.subr.bf16.mxu0 0
      %9027 = vmatpush1.bf16.msra.mxu0 0
      %9028 = vmatprep.subr.bf16.mxu0 0
      %9029 = vmatpush1.bf16.msra.mxu0 0
      %9030 = vmatprep.subr.bf16.mxu0 0
      %9031 = vmatpush1.bf16.msra.mxu0 0
      %9032 = vmatprep.subr.bf16.mxu0 0
      %9033 = vmatpush1.bf16.msra.mxu0 0
      %9034 = vmatprep.subr.bf16.mxu0 0
      %9035 = vmatpush1.bf16.msra.mxu0 0
      %9036 = vmatprep.subr.bf16.mxu0 0
      %9037 = vmatpush1.bf16.msra.mxu0 0
      %9038 = vmatprep.subr.bf16.mxu0 0
      %9039 = vmatpush1.bf16.msra.mxu0 %v8974
      %9040 = vmatprep.subr.bf16.mxu0 0
      %9041 = vmatpush2.bf16.msra.mxu0 0
      %9042 = vmatprep.subr.bf16.mxu0 0
      %9043 = vmatpush2.bf16.msra.mxu0 0
      %9044 = vmatprep.subr.bf16.mxu0 0
      %9045 = vmatpush2.bf16.msra.mxu0 0
      %9046 = vmatprep.subr.bf16.mxu0 0
      %9047 = vmatpush2.bf16.msra.mxu0 0
      %9048 = vmatprep.subr.bf16.mxu0 0
      %9049 = vmatpush2.bf16.msra.mxu0 0
      %9050 = vmatprep.subr.bf16.mxu0 0
      %9051 = vmatpush2.bf16.msra.mxu0 0
      %9052 = vmatprep.subr.bf16.mxu0 0
      %9053 = vmatpush2.bf16.msra.mxu0 0
      %9054 = vmatprep.subr.bf16.mxu0 0
      %9055 = vmatpush2.bf16.msra.mxu0 0
      %9056 = vmatprep.mubr.bf16.mxu0 0
      %9057 = vmatmul.mubr.bf16.gmra.mxu0 %v8977
      %v9058 = vpop.f32.mrf.mxu0
      %v9059 = vadd.f32 0.0, %v9058
      %v9060 = vpop.f32.mrf.mxu0
      %v9061 = vpop.f32.mrf.mxu0
      %v9062 = vadd.f32 0.0, %v9061
      %v9063 = vpop.f32.mrf.mxu0
      %9064 = vmatprep.mubr.bf16.mxu0 0
      %9065 = vmatmul.mubr.bf16.gmra.mxu0 %v8980
      %v9066 = vpop.f32.mrf.mxu0
      %v9067 = vadd.f32 0.0, %v9066
      %v9068 = vpop.f32.mrf.mxu0
      %v9069 = vpop.f32.mrf.mxu0
      %v9070 = vadd.f32 0.0, %v9069
      %v9071 = vpop.f32.mrf.mxu0
      %9072 = vmatprep.mubr.bf16.mxu0 0
      %9073 = vmatmul.mubr.bf16.gmra.mxu0 %v8983
      %v9074 = vpop.f32.mrf.mxu0
      %v9075 = vadd.f32 0.0, %v9074
      %v9076 = vpop.f32.mrf.mxu0
      %v9077 = vpop.f32.mrf.mxu0
      %v9078 = vadd.f32 0.0, %v9077
      %v9079 = vpop.f32.mrf.mxu0
      %9080 = vmatprep.mubr.bf16.mxu0 0
      %9081 = vmatmul.mubr.bf16.gmra.mxu0 %v8986
      %v9082 = vpop.f32.mrf.mxu0
      %v9083 = vadd.f32 0.0, %v9082
      %v9084 = vpop.f32.mrf.mxu0
      %v9085 = vpop.f32.mrf.mxu0
      %v9086 = vadd.f32 0.0, %v9085
      %v9087 = vpop.f32.mrf.mxu0
      %9088 = vmatprep.mubr.bf16.mxu0 0
      %9089 = vmatmul.mubr.bf16.gmra.mxu0 %v8989
      %v9090 = vpop.f32.mrf.mxu0
      %v9091 = vadd.f32 0.0, %v9090
      %v9092 = vpop.f32.mrf.mxu0
      %v9093 = vpop.f32.mrf.mxu0
      %v9094 = vadd.f32 0.0, %v9093
      %v9095 = vpop.f32.mrf.mxu0
      %9096 = vmatprep.mubr.bf16.mxu0 0
      %9097 = vmatmul.mubr.bf16.gmra.mxu0 %v8992
      %v9098 = vpop.f32.mrf.mxu0
      %v9099 = vadd.f32 0.0, %v9098
      %v9100 = vpop.f32.mrf.mxu0
      %v9101 = vpop.f32.mrf.mxu0
      %v9102 = vadd.f32 0.0, %v9101
      %v9103 = vpop.f32.mrf.mxu0
      %9104 = vmatprep.mubr.bf16.mxu0 0
      %9105 = vmatmul.mubr.bf16.gmra.mxu0 %v8995
      %v9106 = vpop.f32.mrf.mxu0
      %v9107 = vadd.f32 0.0, %v9106
      %v9108 = vpop.f32.mrf.mxu0
      %v9109 = vpop.f32.mrf.mxu0
      %v9110 = vadd.f32 0.0, %v9109
      %v9111 = vpop.f32.mrf.mxu0
      %9112 = vmatprep.mubr.bf16.mxu0 0
      %9113 = vmatmul.mubr.bf16.gmra.mxu0 %v8998
      %v9114 = vpop.f32.mrf.mxu0
      %v9115 = vadd.f32 0.0, %v9114
      %v9116 = vpop.f32.mrf.mxu0
      %v9117 = vpop.f32.mrf.mxu0
      %v9118 = vadd.f32 0.0, %v9117
      %v9119 = vpop.f32.mrf.mxu0
      %9120 = vmatprep.mubr.bf16.mxu0 0
      %9121 = vmatmul.mubr.bf16.gmra.mxu0 %v9001
      %v9122 = vpop.f32.mrf.mxu0
      %v9123 = vadd.f32 0.0, %v9122
      %v9124 = vpop.f32.mrf.mxu0
      %v9125 = vpop.f32.mrf.mxu0
      %v9126 = vadd.f32 0.0, %v9125
      %v9127 = vpop.f32.mrf.mxu0
      %9128 = vmatprep.mubr.bf16.mxu0 0
      %9129 = vmatmul.mubr.bf16.gmra.mxu0 %v9004
      %v9130 = vpop.f32.mrf.mxu0
      %v9131 = vadd.f32 0.0, %v9130
      %v9132 = vpop.f32.mrf.mxu0
      %v9133 = vpop.f32.mrf.mxu0
      %v9134 = vadd.f32 0.0, %v9133
      %v9135 = vpop.f32.mrf.mxu0
      %9136 = vmatprep.mubr.bf16.mxu0 0
      %9137 = vmatmul.mubr.bf16.gmra.mxu0 %v9007
      %v9138 = vpop.f32.mrf.mxu0
      %v9139 = vadd.f32 0.0, %v9138
      %v9140 = vpop.f32.mrf.mxu0
      %v9141 = vpop.f32.mrf.mxu0
      %v9142 = vadd.f32 0.0, %v9141
      %v9143 = vpop.f32.mrf.mxu0
      %9144 = vmatprep.mubr.bf16.mxu0 0
      %9145 = vmatmul.mubr.bf16.gmra.mxu0 %v9010
      %v9146 = vpop.f32.mrf.mxu0
      %v9147 = vadd.f32 0.0, %v9146
      %v9148 = vpop.f32.mrf.mxu0
      %v9149 = vpop.f32.mrf.mxu0
      %v9150 = vadd.f32 0.0, %v9149
      %v9151 = vpop.f32.mrf.mxu0
      %9152 = vmatprep.mubr.bf16.mxu0 0
      %9153 = vmatmul.mubr.bf16.gmra.mxu0 %v9013
      %v9154 = vpop.f32.mrf.mxu0
      %v9155 = vadd.f32 0.0, %v9154
      %v9156 = vpop.f32.mrf.mxu0
      %v9157 = vpop.f32.mrf.mxu0
      %v9158 = vadd.f32 0.0, %v9157
      %v9159 = vpop.f32.mrf.mxu0
      %9160 = vmatprep.mubr.bf16.mxu0 0
      %9161 = vmatmul.mubr.bf16.gmra.mxu0 %v9016
      %v9162 = vpop.f32.mrf.mxu0
      %v9163 = vadd.f32 0.0, %v9162
      %v9164 = vpop.f32.mrf.mxu0
      %v9165 = vpop.f32.mrf.mxu0
      %v9166 = vadd.f32 0.0, %v9165
      %v9167 = vpop.f32.mrf.mxu0
      %9168 = vmatprep.mubr.bf16.mxu0 0
      %9169 = vmatmul.mubr.bf16.gmra.mxu0 %v9019
      %v9170 = vpop.f32.mrf.mxu0
      %v9171 = vadd.f32 0.0, %v9170
      %v9172 = vpop.f32.mrf.mxu0
      %v9173 = vpop.f32.mrf.mxu0
      %v9174 = vadd.f32 0.0, %v9173
      %v9175 = vpop.f32.mrf.mxu0
      %9176 = vmatprep.mubr.bf16.mxu0 0
      %9177 = vmatmul.mubr.bf16.gmra.mxu0 %v9022
      %v9178 = vpop.f32.mrf.mxu0
      %v9179 = vadd.f32 0.0, %v9178
      %v9180 = vpop.f32.mrf.mxu0
      %v9181 = vpop.f32.mrf.mxu0
      %v9182 = vadd.f32 0.0, %v9181
      %v9183 = vpop.f32.mrf.mxu0
      %9184 = vdwg.mxu0
      %v9185 = vadd.f32 %v8711, %v9059
      %v9186 = vadd.f32 %v8712, %v9062
      %v9187 = vadd.f32 %v8713, %v9067
      %v9188 = vadd.f32 %v8714, %v9070
      %v9189 = vadd.f32 %v8715, %v9075
      %v9190 = vadd.f32 %v8716, %v9078
      %v9191 = vadd.f32 %v8717, %v9083
      %v9192 = vadd.f32 %v8718, %v9086
      %v9193 = vadd.f32 %v8719, %v9091
      %v9194 = vadd.f32 %v8720, %v9094
      %v9195 = vadd.f32 %v8721, %v9099
      %v9196 = vadd.f32 %v8722, %v9102
      %v9197 = vadd.f32 %v8723, %v9107
      %v9198 = vadd.f32 %v8724, %v9110
      %v9199 = vadd.f32 %v8725, %v9115
      %v9200 = vadd.f32 %v8726, %v9118
      %v9201 = vadd.f32 %v8727, %v9123
      %v9202 = vadd.f32 %v8728, %v9126
      %v9203 = vadd.f32 %v8729, %v9131
      %v9204 = vadd.f32 %v8730, %v9134
      %v9205 = vadd.f32 %v8731, %v9139
      %v9206 = vadd.f32 %v8732, %v9142
      %v9207 = vadd.f32 %v8733, %v9147
      %v9208 = vadd.f32 %v8734, %v9150
      %v9209 = vadd.f32 %v8735, %v9155
      %v9210 = vadd.f32 %v8736, %v9158
      %v9211 = vadd.f32 %v8737, %v9163
      %v9212 = vadd.f32 %v8738, %v9166
      %v9213 = vadd.f32 %v8739, %v9171
      %v9214 = vadd.f32 %v8740, %v9174
      %v9215 = vadd.f32 %v8741, %v9179
      %v9216 = vadd.f32 %v8742, %v9182
      %v9217 = vld [vmem:[%s6904] sm:$0xe]
      %v9218 = vld [vmem:[%s6904 + $0xc] sm:$0xe]
      %v9219 = vld [vmem:[%s6904 + $0x18] sm:$0xe]
      %v9220 = vld [vmem:[%s6904 + $0x24] sm:$0xe]
      %v9221 = vld [vmem:[%s6904 + $0x30] sm:$0xe]
      %v9222 = vld [vmem:[%s6904 + $0x3c] sm:$0xe]
      %v9223 = vld [vmem:[%s6904 + $0x48] sm:$0xe]
      %v9224 = vld [vmem:[%s6904 + $0x54] sm:$0xe]
      %v9225 = vld [vmem:[%s6904 + $0x60] sm:$0xe]
      %v9226 = vld [vmem:[%s6904 + $0x6c] sm:$0xe]
      %v9227 = vld [vmem:[%s6904 + $0x78] sm:$0xe]
      %v9228 = vld [vmem:[%s6904 + $0x84] sm:$0xe]
      %v9229 = vld [vmem:[%s6904 + $0x90] sm:$0xe]
      %v9230 = vld [vmem:[%s6904 + $0x9c] sm:$0xe]
      %v9231 = vld [vmem:[%s6904 + $0xa8] sm:$0xe]
      %v9232 = vld [vmem:[%s6904 + $0xb4] sm:$0xe]
      %v9281 = vrot.slane %v9217, 5
      %v9282 = vrot.slane %v9281, 4
      %v9283 = vrot.slane %v8006, 5
      %v9284 = vsel %vm2482, %v9282, %v9283
      %v9285 = vrot.slane %v9283, 4
      %v9286 = vrot.slane %v8007, 5
      %v9287 = vsel %vm2482, %v9285, %v9286
      %v9288 = vrot.slane %v9218, 5
      %v9289 = vrot.slane %v9288, 4
      %v9290 = vrot.slane %v8009, 5
      %v9291 = vsel %vm2482, %v9289, %v9290
      %v9292 = vrot.slane %v9290, 4
      %v9293 = vrot.slane %v8010, 5
      %v9294 = vsel %vm2482, %v9292, %v9293
      %v9295 = vrot.slane %v9219, 5
      %v9296 = vrot.slane %v9295, 4
      %v9297 = vrot.slane %v8012, 5
      %v9298 = vsel %vm2482, %v9296, %v9297
      %v9299 = vrot.slane %v9297, 4
      %v9300 = vrot.slane %v8013, 5
      %v9301 = vsel %vm2482, %v9299, %v9300
      %v9302 = vrot.slane %v9220, 5
      %v9303 = vrot.slane %v9302, 4
      %v9304 = vrot.slane %v8015, 5
      %v9305 = vsel %vm2482, %v9303, %v9304
      %v9306 = vrot.slane %v9304, 4
      %v9307 = vrot.slane %v8016, 5
      %v9308 = vsel %vm2482, %v9306, %v9307
      %v9309 = vrot.slane %v9221, 5
      %v9310 = vrot.slane %v9309, 4
      %v9311 = vrot.slane %v8018, 5
      %v9312 = vsel %vm2482, %v9310, %v9311
      %v9313 = vrot.slane %v9311, 4
      %v9314 = vrot.slane %v8019, 5
      %v9315 = vsel %vm2482, %v9313, %v9314
      %v9316 = vrot.slane %v9222, 5
      %v9317 = vrot.slane %v9316, 4
      %v9318 = vrot.slane %v8021, 5
      %v9319 = vsel %vm2482, %v9317, %v9318
      %v9320 = vrot.slane %v9318, 4
      %v9321 = vrot.slane %v8022, 5
      %v9322 = vsel %vm2482, %v9320, %v9321
      %v9323 = vrot.slane %v9223, 5
      %v9324 = vrot.slane %v9323, 4
      %v9325 = vrot.slane %v8024, 5
      %v9326 = vsel %vm2482, %v9324, %v9325
      %v9327 = vrot.slane %v9325, 4
      %v9328 = vrot.slane %v8025, 5
      %v9329 = vsel %vm2482, %v9327, %v9328
      %v9330 = vrot.slane %v9224, 5
      %v9331 = vrot.slane %v9330, 4
      %v9332 = vrot.slane %v8027, 5
      %v9333 = vsel %vm2482, %v9331, %v9332
      %v9334 = vrot.slane %v9332, 4
      %v9335 = vrot.slane %v8028, 5
      %v9336 = vsel %vm2482, %v9334, %v9335
      %v9337 = vrot.slane %v9225, 5
      %v9338 = vrot.slane %v9337, 4
      %v9339 = vrot.slane %v8030, 5
      %v9340 = vsel %vm2482, %v9338, %v9339
      %v9341 = vrot.slane %v9339, 4
      %v9342 = vrot.slane %v8031, 5
      %v9343 = vsel %vm2482, %v9341, %v9342
      %v9344 = vrot.slane %v9226, 5
      %v9345 = vrot.slane %v9344, 4
      %v9346 = vrot.slane %v8033, 5
      %v9347 = vsel %vm2482, %v9345, %v9346
      %v9348 = vrot.slane %v9346, 4
      %v9349 = vrot.slane %v8034, 5
      %v9350 = vsel %vm2482, %v9348, %v9349
      %v9351 = vrot.slane %v9227, 5
      %v9352 = vrot.slane %v9351, 4
      %v9353 = vrot.slane %v8036, 5
      %v9354 = vsel %vm2482, %v9352, %v9353
      %v9355 = vrot.slane %v9353, 4
      %v9356 = vrot.slane %v8037, 5
      %v9357 = vsel %vm2482, %v9355, %v9356
      %v9358 = vrot.slane %v9228, 5
      %v9359 = vrot.slane %v9358, 4
      %v9360 = vrot.slane %v8039, 5
      %v9361 = vsel %vm2482, %v9359, %v9360
      %v9362 = vrot.slane %v9360, 4
      %v9363 = vrot.slane %v8040, 5
      %v9364 = vsel %vm2482, %v9362, %v9363
      %v9365 = vrot.slane %v9229, 5
      %v9366 = vrot.slane %v9365, 4
      %v9367 = vrot.slane %v8042, 5
      %v9368 = vsel %vm2482, %v9366, %v9367
      %v9369 = vrot.slane %v9367, 4
      %v9370 = vrot.slane %v8043, 5
      %v9371 = vsel %vm2482, %v9369, %v9370
      %v9372 = vrot.slane %v9230, 5
      %v9373 = vrot.slane %v9372, 4
      %v9374 = vrot.slane %v8045, 5
      %v9375 = vsel %vm2482, %v9373, %v9374
      %v9376 = vrot.slane %v9374, 4
      %v9377 = vrot.slane %v8046, 5
      %v9378 = vsel %vm2482, %v9376, %v9377
      %v9379 = vrot.slane %v9231, 5
      %v9380 = vrot.slane %v9379, 4
      %v9381 = vrot.slane %v8048, 5
      %v9382 = vsel %vm2482, %v9380, %v9381
      %v9383 = vrot.slane %v9381, 4
      %v9384 = vrot.slane %v8049, 5
      %v9385 = vsel %vm2482, %v9383, %v9384
      %v9386 = vrot.slane %v9232, 5
      %v9387 = vrot.slane %v9386, 4
      %v9388 = vrot.slane %v8051, 5
      %v9389 = vsel %vm2482, %v9387, %v9388
      %v9390 = vrot.slane %v9388, 4
      %v9391 = vrot.slane %v8052, 5
      %v9392 = vsel %vm2482, %v9390, %v9391
      %s9393 = scalar_lea.vmem %s3, 128
      %v9394 = vld [vmem:[%s9393] sm:$0xf]
      %v9395 = vld [vmem:[%s9393 + $0x4] sm:$0xf]
      %v9396 = vld [vmem:[%s9393 + $0x8] sm:$0xf]
      %v9397 = vld [vmem:[%s9393 + $0xc] sm:$0xf]
      %v9398 = vunpack.c.l.b16 %v9284
      %v9399 = vunpack.c.l.b16 %v9287
      %v9400 = vunpack.c.l.b16 %v9291
      %v9401 = vunpack.c.l.b16 %v9294
      %v9402 = vunpack.c.l.b16 %v9298
      %v9403 = vunpack.c.l.b16 %v9301
      %v9404 = vunpack.c.l.b16 %v9305
      %v9405 = vunpack.c.l.b16 %v9308
      %v9406 = vunpack.c.l.b16 %v9312
      %v9407 = vunpack.c.l.b16 %v9315
      %v9408 = vunpack.c.l.b16 %v9319
      %v9409 = vunpack.c.l.b16 %v9322
      %v9410 = vunpack.c.l.b16 %v9326
      %v9411 = vunpack.c.l.b16 %v9329
      %v9412 = vunpack.c.l.b16 %v9333
      %v9413 = vunpack.c.l.b16 %v9336
      %v9414 = vunpack.c.l.b16 %v9340
      %v9415 = vunpack.c.l.b16 %v9343
      %v9416 = vunpack.c.l.b16 %v9347
      %v9417 = vunpack.c.l.b16 %v9350
      %v9418 = vunpack.c.l.b16 %v9354
      %v9419 = vunpack.c.l.b16 %v9357
      %v9420 = vunpack.c.l.b16 %v9361
      %v9421 = vunpack.c.l.b16 %v9364
      %v9422 = vunpack.c.l.b16 %v9368
      %v9423 = vunpack.c.l.b16 %v9371
      %v9424 = vunpack.c.l.b16 %v9375
      %v9425 = vunpack.c.l.b16 %v9378
      %v9426 = vunpack.c.l.b16 %v9382
      %v9427 = vunpack.c.l.b16 %v9385
      %v9428 = vunpack.c.l.b16 %v9389
      %v9429 = vunpack.c.l.b16 %v9392
      %v9430 = vpack.c.b16 %v9399, %v9398
      %v9431 = vpack.c.b16 %v9401, %v9400
      %v9432 = vpack.c.b16 %v9403, %v9402
      %v9433 = vpack.c.b16 %v9405, %v9404
      %v9434 = vpack.c.b16 %v9407, %v9406
      %v9435 = vpack.c.b16 %v9409, %v9408
      %v9436 = vpack.c.b16 %v9411, %v9410
      %v9437 = vpack.c.b16 %v9413, %v9412
      %v9438 = vpack.c.b16 %v9415, %v9414
      %v9439 = vpack.c.b16 %v9417, %v9416
      %v9440 = vpack.c.b16 %v9419, %v9418
      %v9441 = vpack.c.b16 %v9421, %v9420
      %v9442 = vpack.c.b16 %v9423, %v9422
      %v9443 = vpack.c.b16 %v9425, %v9424
      %v9444 = vpack.c.b16 %v9427, %v9426
      %v9445 = vpack.c.b16 %v9429, %v9428
      %v9450 = vunpack.c.l.b16 %v9394
      %v9451 = vunpack.c.l.b16 %v9395
      %v9452 = vunpack.c.l.b16 %v9396
      %v9453 = vunpack.c.l.b16 %v9397
      %v9454 = vpack.c.b16 %v9451, %v9450
      %v9455 = vpack.c.b16 %v9453, %v9452
      %v9459 = vsel %vm439, %v9430, 0
      %v9462 = vsel %vm439, %v9431, 0
      %v9465 = vsel %vm439, %v9432, 0
      %v9468 = vsel %vm439, %v9433, 0
      %v9471 = vsel %vm439, %v9434, 0
      %v9474 = vsel %vm439, %v9435, 0
      %v9477 = vsel %vm439, %v9436, 0
      %v9480 = vsel %vm439, %v9437, 0
      %v9483 = vsel %vm439, %v9438, 0
      %v9486 = vsel %vm439, %v9439, 0
      %v9489 = vsel %vm439, %v9440, 0
      %v9492 = vsel %vm439, %v9441, 0
      %v9495 = vsel %vm439, %v9442, 0
      %v9498 = vsel %vm439, %v9443, 0
      %v9501 = vsel %vm439, %v9444, 0
      %v9504 = vsel %vm439, %v9445, 0
      %9506 = vmatprep.subr.bf16.mxu0 0
      %9507 = vmatpush1.bf16.msra.mxu0 0
      %9508 = vmatprep.subr.bf16.mxu0 0
      %9509 = vmatpush1.bf16.msra.mxu0 0
      %9510 = vmatprep.subr.bf16.mxu0 0
      %9511 = vmatpush1.bf16.msra.mxu0 0
      %9512 = vmatprep.subr.bf16.mxu0 0
      %9513 = vmatpush1.bf16.msra.mxu0 0
      %9514 = vmatprep.subr.bf16.mxu0 0
      %9515 = vmatpush1.bf16.msra.mxu0 0
      %9516 = vmatprep.subr.bf16.mxu0 0
      %9517 = vmatpush1.bf16.msra.mxu0 0
      %9518 = vmatprep.subr.bf16.mxu0 0
      %9519 = vmatpush1.bf16.msra.mxu0 %v9455
      %9520 = vmatprep.subr.bf16.mxu0 0
      %9521 = vmatpush1.bf16.msra.mxu0 %v9454
      %9522 = vmatprep.subr.bf16.mxu0 0
      %9523 = vmatpush2.bf16.msra.mxu0 0
      %9524 = vmatprep.subr.bf16.mxu0 0
      %9525 = vmatpush2.bf16.msra.mxu0 0
      %9526 = vmatprep.subr.bf16.mxu0 0
      %9527 = vmatpush2.bf16.msra.mxu0 0
      %9528 = vmatprep.subr.bf16.mxu0 0
      %9529 = vmatpush2.bf16.msra.mxu0 0
      %9530 = vmatprep.subr.bf16.mxu0 0
      %9531 = vmatpush2.bf16.msra.mxu0 0
      %9532 = vmatprep.subr.bf16.mxu0 0
      %9533 = vmatpush2.bf16.msra.mxu0 0
      %9534 = vmatprep.subr.bf16.mxu0 0
      %9535 = vmatpush2.bf16.msra.mxu0 0
      %9536 = vmatprep.subr.bf16.mxu0 0
      %9537 = vmatpush2.bf16.msra.mxu0 0
      %9538 = vmatprep.mubr.bf16.mxu0 0
      %9539 = vmatmul.mubr.bf16.gmra.mxu0 %v9459
      %v9540 = vpop.f32.mrf.mxu0
      %v9541 = vadd.f32 0.0, %v9540
      %v9542 = vpop.f32.mrf.mxu0
      %v9543 = vpop.f32.mrf.mxu0
      %v9544 = vadd.f32 0.0, %v9543
      %v9545 = vpop.f32.mrf.mxu0
      %9546 = vmatprep.mubr.bf16.mxu0 0
      %9547 = vmatmul.mubr.bf16.gmra.mxu0 %v9462
      %v9548 = vpop.f32.mrf.mxu0
      %v9549 = vadd.f32 0.0, %v9548
      %v9550 = vpop.f32.mrf.mxu0
      %v9551 = vpop.f32.mrf.mxu0
      %v9552 = vadd.f32 0.0, %v9551
      %v9553 = vpop.f32.mrf.mxu0
      %9554 = vmatprep.mubr.bf16.mxu0 0
      %9555 = vmatmul.mubr.bf16.gmra.mxu0 %v9465
      %v9556 = vpop.f32.mrf.mxu0
      %v9557 = vadd.f32 0.0, %v9556
      %v9558 = vpop.f32.mrf.mxu0
      %v9559 = vpop.f32.mrf.mxu0
      %v9560 = vadd.f32 0.0, %v9559
      %v9561 = vpop.f32.mrf.mxu0
      %9562 = vmatprep.mubr.bf16.mxu0 0
      %9563 = vmatmul.mubr.bf16.gmra.mxu0 %v9468
      %v9564 = vpop.f32.mrf.mxu0
      %v9565 = vadd.f32 0.0, %v9564
      %v9566 = vpop.f32.mrf.mxu0
      %v9567 = vpop.f32.mrf.mxu0
      %v9568 = vadd.f32 0.0, %v9567
      %v9569 = vpop.f32.mrf.mxu0
      %9570 = vmatprep.mubr.bf16.mxu0 0
      %9571 = vmatmul.mubr.bf16.gmra.mxu0 %v9471
      %v9572 = vpop.f32.mrf.mxu0
      %v9573 = vadd.f32 0.0, %v9572
      %v9574 = vpop.f32.mrf.mxu0
      %v9575 = vpop.f32.mrf.mxu0
      %v9576 = vadd.f32 0.0, %v9575
      %v9577 = vpop.f32.mrf.mxu0
      %9578 = vmatprep.mubr.bf16.mxu0 0
      %9579 = vmatmul.mubr.bf16.gmra.mxu0 %v9474
      %v9580 = vpop.f32.mrf.mxu0
      %v9581 = vadd.f32 0.0, %v9580
      %v9582 = vpop.f32.mrf.mxu0
      %v9583 = vpop.f32.mrf.mxu0
      %v9584 = vadd.f32 0.0, %v9583
      %v9585 = vpop.f32.mrf.mxu0
      %9586 = vmatprep.mubr.bf16.mxu0 0
      %9587 = vmatmul.mubr.bf16.gmra.mxu0 %v9477
      %v9588 = vpop.f32.mrf.mxu0
      %v9589 = vadd.f32 0.0, %v9588
      %v9590 = vpop.f32.mrf.mxu0
      %v9591 = vpop.f32.mrf.mxu0
      %v9592 = vadd.f32 0.0, %v9591
      %v9593 = vpop.f32.mrf.mxu0
      %9594 = vmatprep.mubr.bf16.mxu0 0
      %9595 = vmatmul.mubr.bf16.gmra.mxu0 %v9480
      %v9596 = vpop.f32.mrf.mxu0
      %v9597 = vadd.f32 0.0, %v9596
      %v9598 = vpop.f32.mrf.mxu0
      %v9599 = vpop.f32.mrf.mxu0
      %v9600 = vadd.f32 0.0, %v9599
      %v9601 = vpop.f32.mrf.mxu0
      %9602 = vmatprep.mubr.bf16.mxu0 0
      %9603 = vmatmul.mubr.bf16.gmra.mxu0 %v9483
      %v9604 = vpop.f32.mrf.mxu0
      %v9605 = vadd.f32 0.0, %v9604
      %v9606 = vpop.f32.mrf.mxu0
      %v9607 = vpop.f32.mrf.mxu0
      %v9608 = vadd.f32 0.0, %v9607
      %v9609 = vpop.f32.mrf.mxu0
      %9610 = vmatprep.mubr.bf16.mxu0 0
      %9611 = vmatmul.mubr.bf16.gmra.mxu0 %v9486
      %v9612 = vpop.f32.mrf.mxu0
      %v9613 = vadd.f32 0.0, %v9612
      %v9614 = vpop.f32.mrf.mxu0
      %v9615 = vpop.f32.mrf.mxu0
      %v9616 = vadd.f32 0.0, %v9615
      %v9617 = vpop.f32.mrf.mxu0
      %9618 = vmatprep.mubr.bf16.mxu0 0
      %9619 = vmatmul.mubr.bf16.gmra.mxu0 %v9489
      %v9620 = vpop.f32.mrf.mxu0
      %v9621 = vadd.f32 0.0, %v9620
      %v9622 = vpop.f32.mrf.mxu0
      %v9623 = vpop.f32.mrf.mxu0
      %v9624 = vadd.f32 0.0, %v9623
      %v9625 = vpop.f32.mrf.mxu0
      %9626 = vmatprep.mubr.bf16.mxu0 0
      %9627 = vmatmul.mubr.bf16.gmra.mxu0 %v9492
      %v9628 = vpop.f32.mrf.mxu0
      %v9629 = vadd.f32 0.0, %v9628
      %v9630 = vpop.f32.mrf.mxu0
      %v9631 = vpop.f32.mrf.mxu0
      %v9632 = vadd.f32 0.0, %v9631
      %v9633 = vpop.f32.mrf.mxu0
      %9634 = vmatprep.mubr.bf16.mxu0 0
      %9635 = vmatmul.mubr.bf16.gmra.mxu0 %v9495
      %v9636 = vpop.f32.mrf.mxu0
      %v9637 = vadd.f32 0.0, %v9636
      %v9638 = vpop.f32.mrf.mxu0
      %v9639 = vpop.f32.mrf.mxu0
      %v9640 = vadd.f32 0.0, %v9639
      %v9641 = vpop.f32.mrf.mxu0
      %9642 = vmatprep.mubr.bf16.mxu0 0
      %9643 = vmatmul.mubr.bf16.gmra.mxu0 %v9498
      %v9644 = vpop.f32.mrf.mxu0
      %v9645 = vadd.f32 0.0, %v9644
      %v9646 = vpop.f32.mrf.mxu0
      %v9647 = vpop.f32.mrf.mxu0
      %v9648 = vadd.f32 0.0, %v9647
      %v9649 = vpop.f32.mrf.mxu0
      %9650 = vmatprep.mubr.bf16.mxu0 0
      %9651 = vmatmul.mubr.bf16.gmra.mxu0 %v9501
      %v9652 = vpop.f32.mrf.mxu0
      %v9653 = vadd.f32 0.0, %v9652
      %v9654 = vpop.f32.mrf.mxu0
      %v9655 = vpop.f32.mrf.mxu0
      %v9656 = vadd.f32 0.0, %v9655
      %v9657 = vpop.f32.mrf.mxu0
      %9658 = vmatprep.mubr.bf16.mxu0 0
      %9659 = vmatmul.mubr.bf16.gmra.mxu0 %v9504
      %v9660 = vpop.f32.mrf.mxu0
      %v9661 = vadd.f32 0.0, %v9660
      %v9662 = vpop.f32.mrf.mxu0
      %v9663 = vpop.f32.mrf.mxu0
      %v9664 = vadd.f32 0.0, %v9663
      %v9665 = vpop.f32.mrf.mxu0
      %9666 = vdwg.mxu0
      %v9667 = vadd.f32 %v9185, %v9541
      %v9668 = vadd.f32 %v9186, %v9544
      %v9669 = vadd.f32 %v9187, %v9549
      %v9670 = vadd.f32 %v9188, %v9552
      %v9671 = vadd.f32 %v9189, %v9557
      %v9672 = vadd.f32 %v9190, %v9560
      %v9673 = vadd.f32 %v9191, %v9565
      %v9674 = vadd.f32 %v9192, %v9568
      %v9675 = vadd.f32 %v9193, %v9573
      %v9676 = vadd.f32 %v9194, %v9576
      %v9677 = vadd.f32 %v9195, %v9581
      %v9678 = vadd.f32 %v9196, %v9584
      %v9679 = vadd.f32 %v9197, %v9589
      %v9680 = vadd.f32 %v9198, %v9592
      %v9681 = vadd.f32 %v9199, %v9597
      %v9682 = vadd.f32 %v9200, %v9600
      %v9683 = vadd.f32 %v9201, %v9605
      %v9684 = vadd.f32 %v9202, %v9608
      %v9685 = vadd.f32 %v9203, %v9613
      %v9686 = vadd.f32 %v9204, %v9616
      %v9687 = vadd.f32 %v9205, %v9621
      %v9688 = vadd.f32 %v9206, %v9624
      %v9689 = vadd.f32 %v9207, %v9629
      %v9690 = vadd.f32 %v9208, %v9632
      %v9691 = vadd.f32 %v9209, %v9637
      %v9692 = vadd.f32 %v9210, %v9640
      %v9693 = vadd.f32 %v9211, %v9645
      %v9694 = vadd.f32 %v9212, %v9648
      %v9695 = vadd.f32 %v9213, %v9653
      %v9696 = vadd.f32 %v9214, %v9656
      %v9697 = vadd.f32 %v9215, %v9661
      %v9698 = vadd.f32 %v9216, %v9664
      %v9699 = vld [vmem:[%s4] sm:$0x1]
      %v9701 = vlaneseq
      %v9702 = vshrl.u32 %v9701, 7
      %v9703 = vsub.s32 0, %v9702
      %v9704 = vrot.slane %v9699, %v9703
      %v9706 = vadd.f32 %v9667, %v9704
      %v9707 = vadd.f32 %v9668, %v9704
      %v9708 = vadd.f32 %v9669, %v9704
      %v9709 = vadd.f32 %v9670, %v9704
      %v9710 = vadd.f32 %v9671, %v9704
      %v9711 = vadd.f32 %v9672, %v9704
      %v9712 = vadd.f32 %v9673, %v9704
      %v9713 = vadd.f32 %v9674, %v9704
      %v9714 = vadd.f32 %v9675, %v9704
      %v9715 = vadd.f32 %v9676, %v9704
      %v9716 = vadd.f32 %v9677, %v9704
      %v9717 = vadd.f32 %v9678, %v9704
      %v9718 = vadd.f32 %v9679, %v9704
      %v9719 = vadd.f32 %v9680, %v9704
      %v9720 = vadd.f32 %v9681, %v9704
      %v9721 = vadd.f32 %v9682, %v9704
      %v9722 = vadd.f32 %v9683, %v9704
      %v9723 = vadd.f32 %v9684, %v9704
      %v9724 = vadd.f32 %v9685, %v9704
      %v9725 = vadd.f32 %v9686, %v9704
      %v9726 = vadd.f32 %v9687, %v9704
      %v9727 = vadd.f32 %v9688, %v9704
      %v9728 = vadd.f32 %v9689, %v9704
      %v9729 = vadd.f32 %v9690, %v9704
      %v9730 = vadd.f32 %v9691, %v9704
      %v9731 = vadd.f32 %v9692, %v9704
      %v9732 = vadd.f32 %v9693, %v9704
      %v9733 = vadd.f32 %v9694, %v9704
      %v9734 = vadd.f32 %v9695, %v9704
      %v9735 = vadd.f32 %v9696, %v9704
      %v9736 = vadd.f32 %v9697, %v9704
      %v9737 = vadd.f32 %v9698, %v9704
      %v9738 = vmax.f32 %v9706, 0.0
      %v9739 = vmax.f32 %v9707, 0.0
      %v9740 = vmax.f32 %v9708, 0.0
      %v9741 = vmax.f32 %v9709, 0.0
      %v9742 = vmax.f32 %v9710, 0.0
      %v9743 = vmax.f32 %v9711, 0.0
      %v9744 = vmax.f32 %v9712, 0.0
      %v9745 = vmax.f32 %v9713, 0.0
      %v9746 = vmax.f32 %v9714, 0.0
      %v9747 = vmax.f32 %v9715, 0.0
      %v9748 = vmax.f32 %v9716, 0.0
      %v9749 = vmax.f32 %v9717, 0.0
      %v9750 = vmax.f32 %v9718, 0.0
      %v9751 = vmax.f32 %v9719, 0.0
      %v9752 = vmax.f32 %v9720, 0.0
      %v9753 = vmax.f32 %v9721, 0.0
      %v9754 = vmax.f32 %v9722, 0.0
      %v9755 = vmax.f32 %v9723, 0.0
      %v9756 = vmax.f32 %v9724, 0.0
      %v9757 = vmax.f32 %v9725, 0.0
      %v9758 = vmax.f32 %v9726, 0.0
      %v9759 = vmax.f32 %v9727, 0.0
      %v9760 = vmax.f32 %v9728, 0.0
      %v9761 = vmax.f32 %v9729, 0.0
      %v9762 = vmax.f32 %v9730, 0.0
      %v9763 = vmax.f32 %v9731, 0.0
      %v9764 = vmax.f32 %v9732, 0.0
      %v9765 = vmax.f32 %v9733, 0.0
      %v9766 = vmax.f32 %v9734, 0.0
      %v9767 = vmax.f32 %v9735, 0.0
      %v9768 = vmax.f32 %v9736, 0.0
      %v9769 = vmax.f32 %v9737, 0.0
      %vm9770 = vcmask 785408
      %9771 = vst.msk [vmem:[%s268] sm:$0xff] %vm9770, %v9738
      %9772 = vst.msk [vmem:[%s268 + $0x8] sm:$0xff] %vm9770, %v9739
      %9773 = vst.msk [vmem:[%s268 + $0x10] sm:$0xff] %vm9770, %v9740
      %9774 = vst.msk [vmem:[%s268 + $0x18] sm:$0xff] %vm9770, %v9741
      %9775 = vst.msk [vmem:[%s268 + $0x20] sm:$0xff] %vm9770, %v9742
      %9776 = vst.msk [vmem:[%s268 + $0x28] sm:$0xff] %vm9770, %v9743
      %9777 = vst.msk [vmem:[%s268 + $0x30] sm:$0xff] %vm9770, %v9744
      %9778 = vst.msk [vmem:[%s268 + $0x38] sm:$0xff] %vm9770, %v9745
      %9779 = vst.msk [vmem:[%s268 + $0x40] sm:$0xff] %vm9770, %v9746
      %9780 = vst.msk [vmem:[%s268 + $0x48] sm:$0xff] %vm9770, %v9747
      %9781 = vst.msk [vmem:[%s268 + $0x50] sm:$0xff] %vm9770, %v9748
      %9782 = vst.msk [vmem:[%s268 + $0x58] sm:$0xff] %vm9770, %v9749
      %9783 = vst.msk [vmem:[%s268 + $0x60] sm:$0xff] %vm9770, %v9750
      %9784 = vst.msk [vmem:[%s268 + $0x68] sm:$0xff] %vm9770, %v9751
      %9785 = vst.msk [vmem:[%s268 + $0x70] sm:$0xff] %vm9770, %v9752
      %9786 = vst.msk [vmem:[%s268 + $0x78] sm:$0xff] %vm9770, %v9753
      %9787 = vst.msk [vmem:[%s268 + $0x80] sm:$0xff] %vm9770, %v9754
      %9788 = vst.msk [vmem:[%s268 + $0x88] sm:$0xff] %vm9770, %v9755
      %9789 = vst.msk [vmem:[%s268 + $0x90] sm:$0xff] %vm9770, %v9756
      %9790 = vst.msk [vmem:[%s268 + $0x98] sm:$0xff] %vm9770, %v9757
      %9791 = vst.msk [vmem:[%s268 + $0xa0] sm:$0xff] %vm9770, %v9758
      %9792 = vst.msk [vmem:[%s268 + $0xa8] sm:$0xff] %vm9770, %v9759
      %9793 = vst.msk [vmem:[%s268 + $0xb0] sm:$0xff] %vm9770, %v9760
      %9794 = vst.msk [vmem:[%s268 + $0xb8] sm:$0xff] %vm9770, %v9761
      %9795 = vst.msk [vmem:[%s268 + $0xc0] sm:$0xff] %vm9770, %v9762
      %9796 = vst.msk [vmem:[%s268 + $0xc8] sm:$0xff] %vm9770, %v9763
      %9797 = vst.msk [vmem:[%s268 + $0xd0] sm:$0xff] %vm9770, %v9764
      %9798 = vst.msk [vmem:[%s268 + $0xd8] sm:$0xff] %vm9770, %v9765
      %9799 = vst.msk [vmem:[%s268 + $0xe0] sm:$0xff] %vm9770, %v9766
      %9800 = vst.msk [vmem:[%s268 + $0xe8] sm:$0xff] %vm9770, %v9767
      %9801 = vst.msk [vmem:[%s268 + $0xf0] sm:$0xff] %vm9770, %v9768
      %9802 = vst.msk [vmem:[%s268 + $0xf8] sm:$0xff] %vm9770, %v9769
      %s9803 = smul.u32 16, %s21
      %p9804 = scmp.lt.s32.totalorder %s20, 1
      %s9805 = scalar_select %p9804, %s20, 1
      %p9806 = scmp.lt.s32.totalorder %s9803, 15
      %s9807 = scalar_select %p9806, %s9803, 15
      %s9808 = smul.addr %s9807, 2
      %s9809 = smul.addr %s9805, 32
      %s9810 = sadd.s32 %s9808, %s9809
      %s9811 = smul.addr %s9810, 8
      %s9812 = scalar_lea.vmem %s5, %s9811
      // Predicated region
      $region41: #{simple_madf_forward.1} parent=39 // pred_check
        %p9813 = pneg %p163
      $region42: #{simple_madf_forward.1} parent=39 // pred_check_branch
        %9815 = sbr.rel (%p9813) target = $region44
      $region43: #{simple_madf_forward.1} parent=39 // pred_region
        %s9816 = smul.u32 16, %s21
      $region44: #{simple_madf_forward.1} parent=39 // pred_fallthru
        _
    $region40: #{simple_madf_forward.1} parent=5 // pred_fallthru
      _
    %p9817 = scmp.le.s32.totalorder 2, %s11
    // Predicated region
    $region45: #{simple_madf_forward.1} parent=5 // pred_check
      %p9818 = pneg %p9817
    $region46: #{simple_madf_forward.1} parent=5 // pred_check_branch
      %9820 = sbr.rel (%p9818) target = $region48
    $region47: #{simple_madf_forward.1} parent=5 // pred_region
      %s9821 = ssub.s32 %s11, 2
      // Predicated region
      $region49: #{simple_madf_forward.1} parent=47 // pred_check
        %p9822 = pneg %p169
      $region50: #{simple_madf_forward.1} parent=47 // pred_check_branch
        %9824 = sbr.rel (%p9822) target = $region52
      $region51: #{simple_madf_forward.1} parent=47 // pred_region
        %s9825 = smul.u32 16, %s23
        %p9826 = scmp.lt.s32.totalorder %s22, 1
        %s9827 = scalar_select %p9826, %s22, 1
        %p9828 = scmp.lt.s32.totalorder %s9825, 15
        %s9829 = scalar_select %p9828, %s9825, 15
        %s9830 = smul.addr %s9829, 2
        %s9831 = smul.addr %s9827, 32
        %s9832 = sadd.s32 %s9830, %s9831
        %s9833 = smul.addr %s9832, 8
        %s9834 = scalar_lea.vmem %s5, %s9833
      $region52: #{simple_madf_forward.1} parent=47 // pred_fallthru
        _
    $region48: #{simple_madf_forward.1} parent=5 // pred_fallthru
      _
  $region6: #{simple_madf_forward.1} parent=0 // loop_footer
    %s15 = sadd.s32 1, %s11
  $region7: #{simple_madf_forward.1} parent=0 // loop_footer_branch
    %10 = sbr.rel target = $region3
  $region8: #{simple_madf_forward.1} parent=0 // loop_exit
    _

</llo_original>
